<compile_context>
chip_gen: v5e
topology: v5e:2x2
jax: 0.10.0
libtpu: 0.0.40
codegen_flags: <defaults>
</compile_context>

<pallas_src>
import functools

import jax
import jax.numpy as jnp
from jax.experimental import pallas as pl
from jax.experimental.pallas import tpu as pltpu

BN_EPS = 1e-5


# ----------------------------------------------------------------------------
# Pallas kernel: direct KHxKW conv (any stride, via phases) + folded-BN bias
# (+ residual) (+ ReLU)
# ----------------------------------------------------------------------------
def _conv_bn_kernel(x_ref, w_ref, b_ref, *rest, KH, KW, stride, TH, Wo,
                    apply_relu, has_res):
    """Grid = (batch, output-row tile, Cin tile); Cin tile axis is the reduction axis.

    x_ref   : (1, P, WSr, Wph, TCK) bf16  stride-phase row windows (P = phases)
    w_ref   : (KH*KW, TCK, Cout)    bf16  per-tap weights, BN scale pre-folded
    b_ref   : (1, Cout)             f32   folded BN bias
    res_ref : (1, TH*Wo, Cout)      f32   (optional residual)
    o_ref   : (1, TH*Wo, Cout)            output
    acc_ref : (TH*Wo, Cout)         f32   VMEM accumulator scratch
    """
    if has_res:
        res_ref, o_ref, acc_ref = rest
    else:
        o_ref, acc_ref = rest
        res_ref = None

    k = pl.program_id(2)

    @pl.when(k == 0)
    def _init():
        acc_ref[...] = jnp.zeros_like(acc_ref)

    tck = x_ref.shape[-1]
    PC = min(stride, KW)
    acc = acc_ref[...]
    for kh in range(KH):                 # static unroll: KH*KW shifted MXU matmuls
        p, a = kh % stride, kh // stride
        for kw in range(KW):
            q, bb = kw % stride, kw // stride
            patch = x_ref[0, p * PC + q, a:a + TH, bb:bb + Wo, :]   # (TH, Wo, TCK)
            acc = acc + jnp.dot(patch.reshape(TH * Wo, tck),
                                w_ref[kh * KW + kw],
                                preferred_element_type=jnp.float32)
    acc_ref[...] = acc

    @pl.when(k == pl.num_programs(2) - 1)
    def _finalize():
        out = acc_ref[...] + b_ref[...]
        if res_ref is not None:
            out = out + res_ref[0]
        if apply_relu:
            out = jnp.maximum(out, 0.0)
        o_ref[0] = out.astype(o_ref.dtype)


# ----------------------------------------------------------------------------
# Wrapper: padding, stride-phase decomposition, row windows, BlockSpecs / grid
# ----------------------------------------------------------------------------
def _pick_row_tile(ho, wo, target_rows=512):
    """Largest divisor of ho such that the M tile (th*wo rows) stays MXU/VMEM friendly."""
    th = 1
    for cand in range(1, ho + 1):
        if ho % cand == 0 and cand * wo <= max(target_rows, wo):
            th = cand
    return th


def _pick_cin_tile(cin):
    if cin <= 512 or cin % 128 != 0:
        return cin
    for t in (512, 256, 128):
        if cin % t == 0:
            return t
    return cin


def conv_bn(x_nhwc, wt, bias, *, kernel_size, stride=1, pad=0,
            residual=None, apply_relu=True, out_dtype=jnp.float32):
    """Conv2d(bias=False) + folded BatchNorm [+ residual] [+ ReLU] as one Pallas kernel."""
    B, H, W, Cin = x_nhwc.shape
    KH = KW = kernel_size
    assert wt.shape[0] == KH * KW and wt.shape[1] == Cin
    Cout = wt.shape[2]
    Ho = (H + 2 * pad - KH) // stride + 1
    Wo = (W + 2 * pad - KW) // stride + 1

    TH = _pick_row_tile(Ho, Wo)
    nr = Ho // TH

    # Stride-phase decomposition: tap (kh, kw) of a stride-s conv reads phase
    # (kh % s, kw % s) at unit-stride offset (kh // s, kw // s).
    PR, PC = min(stride, KH), min(stride, KW)
    AR, AC = (KH - 1) // stride, (KW - 1) // stride
    WSr, Wph = TH + AR, Wo + AC          # per-tile rows (incl. halo) / cols per phase
    Hph = Ho + AR

    xp = x_nhwc.astype(jnp.bfloat16)     # bf16 MXU operands, halves HBM traffic
    if pad:
        xp = jnp.pad(xp, ((0, 0), (pad, pad), (pad, pad), (0, 0)))

    phases = []
    for p in range(PR):
        for q in range(PC):
            ph = xp[:, p::stride, q::stride, :]
            ph = ph[:, :Hph, :Wph, :]
            dr, dc = Hph - ph.shape[1], Wph - ph.shape[2]
            if dr or dc:                 # zero rows/cols here are never read by the kernel
                ph = jnp.pad(ph, ((0, 0), (0, dr), (0, dc), (0, 0)))
            phases.append(ph)
    xph = jnp.stack(phases, axis=1)      # (B, PR*PC, Hph, Wph, Cin)

    # Overlapping output-row-tile windows (halo = AR rows per tile).
    wins = [jax.lax.slice_in_dim(xph, r * TH, r * TH + WSr, axis=2) for r in range(nr)]
    xwin = jnp.stack(wins, axis=1).reshape(B * nr, PR * PC, WSr, Wph, Cin)

    TCK = _pick_cin_tile(Cin)
    nk = Cin // TCK

    in_specs = [
        pl.BlockSpec((1, PR * PC, WSr, Wph, TCK),
                     lambda b, r, k: (b * nr + r, 0, 0, 0, k)),
        pl.BlockSpec((KH * KW, TCK, Cout), lambda b, r, k: (0, k, 0)),
        pl.BlockSpec((1, Cout), lambda b, r, k: (0, 0)),
    ]
    args = [xwin, wt, bias]
    io_aliases = {}
    if residual is not None:
        res = residual.astype(jnp.float32).reshape(B * nr, TH * Wo, Cout)
        args.append(res)
        in_specs.append(
            pl.BlockSpec((1, TH * Wo, Cout), lambda b, r, k: (b * nr + r, 0, 0)))
        if out_dtype == jnp.float32:
            io_aliases = {3: 0}          # write the result over the residual buffer

    kernel = functools.partial(
        _conv_bn_kernel, KH=KH, KW=KW, stride=stride, TH=TH, Wo=Wo,
        apply_relu=apply_relu, has_res=residual is not None)

    out = pl.pallas_call(
        kernel,
        out_shape=jax.ShapeDtypeStruct((B * nr, TH * Wo, Cout), out_dtype),
        grid=(B, nr, nk),
        in_specs=in_specs,
        out_specs=pl.BlockSpec((1, TH * Wo, Cout), lambda b, r, k: (b * nr + r, 0, 0)),
        scratch_shapes=[pltpu.VMEM((TH * Wo, Cout), jnp.float32)],
        compiler_params=pltpu.CompilerParams(
            dimension_semantics=("parallel", "parallel", "arbitrary"),
            vmem_limit_bytes=32 * 1024 * 1024),
        input_output_aliases=io_aliases,
    )(*args)
    return out.reshape(B, Ho, Wo, Cout)


# ----------------------------------------------------------------------------
# One-time parameter prep (layout transform + inference-mode BN folding)
# ----------------------------------------------------------------------------
def _fold_bn_into_conv(w, bn):
    """w: (Cout, Cin, KH, KW) torch layout -> ((KH*KW, Cin, Cout) bf16, (1, Cout) f32)."""
    gamma, beta, mean, var = bn
    scale = gamma / jnp.sqrt(var + BN_EPS)
    bias = beta - mean * scale
    cout, cin, kh, kw = w.shape
    wt = jnp.transpose(w, (2, 3, 1, 0)).reshape(kh * kw, cin, cout)
    wt = (wt * scale[None, None, :]).astype(jnp.bfloat16)
    return wt, bias.reshape(1, cout).astype(jnp.float32)


def prepare_basic_block_params(raw):
    p = {"conv1": _fold_bn_into_conv(raw["conv1_w"], raw["bn1"]),
         "conv2": _fold_bn_into_conv(raw["conv2_w"], raw["bn2"])}
    if "down_w" in raw:
        p["down"] = _fold_bn_into_conv(raw["down_w"], raw["down_bn"])
    return p


# ----------------------------------------------------------------------------
# BasicBlock forward (NCHW in, NCHW out, like the PyTorch module)
# ----------------------------------------------------------------------------
@functools.partial(jax.jit, static_argnames=("stride",))
def basic_block_forward(x_nchw, params, stride=1):
    x = jnp.transpose(x_nchw, (0, 2, 3, 1)).astype(jnp.float32)      # NCHW -> NHWC
    w1, b1 = params["conv1"]
    out = conv_bn(x, w1, b1, kernel_size=3, stride=stride, pad=1,
                  apply_relu=True, out_dtype=jnp.bfloat16)           # bf16 intermediate
    if "down" in params:
        wd, bd = params["down"]
        identity = conv_bn(x, wd, bd, kernel_size=1, stride=stride, pad=0,
                           apply_relu=False, out_dtype=jnp.float32)
    else:
        identity = x
    w2, b2 = params["conv2"]
    out = conv_bn(out, w2, b2, kernel_size=3, stride=1, pad=1,
                  residual=identity, apply_relu=True, out_dtype=jnp.float32)
    return jnp.transpose(out, (0, 3, 1, 2))                          # NHWC -> NCHW


# ----------------------------------------------------------------------------
# Deterministic params + pure-JAX reference + demo
# ----------------------------------------------------------------------------
def init_basic_block_params(key, inplanes, planes, stride=1):
    def kaiming(k, cout, cin, kh, kw):
        fan_out = cout * kh * kw
        return jax.random.normal(k, (cout, cin, kh, kw), jnp.float32) * (2.0 / fan_out) ** 0.5

    def bn(c):  # gamma, beta, running_mean, running_var (inference constants)
        return (jnp.ones((c,), jnp.float32), jnp.zeros((c,), jnp.float32),
                jnp.zeros((c,), jnp.float32), jnp.ones((c,), jnp.float32))

    k1, k2, k3 = jax.random.split(key, 3)
    raw = {"conv1_w": kaiming(k1, planes, inplanes, 3, 3), "bn1": bn(planes),
           "conv2_w": kaiming(k2, planes, planes, 3, 3), "bn2": bn(planes)}
    if stride != 1 or inplanes != planes:
        raw["down_w"] = kaiming(k3, planes, inplanes, 1, 1)
        raw["down_bn"] = bn(planes)
    return raw


def _ref_conv_bn(x_nhwc, w, bn, stride, pad):
    y = jax.lax.conv_general_dilated(
        x_nhwc, jnp.transpose(w, (2, 3, 1, 0)),
        window_strides=(stride, stride), padding=[(pad, pad), (pad, pad)],
        dimension_numbers=("NHWC", "HWIO", "NHWC"),
        precision=jax.lax.Precision.HIGHEST)
    gamma, beta, mean, var = bn
    scale = gamma / jnp.sqrt(var + BN_EPS)
    return y * scale + (beta - mean * scale)


def basic_block_ref(x_nchw, raw, stride=1):
    x = jnp.transpose(x_nchw, (0, 2, 3, 1))
    out = jax.nn.relu(_ref_conv_bn(x, raw["conv1_w"], raw["bn1"], stride, 1))
    identity = x
    if "down_w" in raw:
        identity = _ref_conv_bn(x, raw["down_w"], raw["down_bn"], stride, 0)
    out = jax.nn.relu(_ref_conv_bn(out, raw["conv2_w"], raw["bn2"], 1, 1) + identity)
    return jnp.transpose(out, (0, 3, 1, 2))


if __name__ == "__main__":
    key = jax.random.PRNGKey(0)
    kp1, kp2, kx1, kx2 = jax.random.split(key, 4)
    B, C, H, W = 2, 128, 16, 16

    # Test 1: stride = 1, no downsample (identity residual).
    raw1 = init_basic_block_params(kp1, inplanes=C, planes=C, stride=1)
    x1 = jax.random.normal(kx1, (B, C, H, W), jnp.float32)
    out1 = jax.block_until_ready(
        basic_block_forward(x1, prepare_basic_block_params(raw1), stride=1))
    assert out1.shape == (B, C, H, W), out1.shape
    assert bool(jnp.all(jnp.isfinite(out1)))
    err1 = float(jnp.max(jnp.abs(out1 - basic_block_ref(x1, raw1, stride=1))))
    assert err1 < 0.1, err1               # bf16-operand / f32-accumulate tolerance

    # Test 2: stride = 2 with conv1x1 + BN downsample.
    raw2 = init_basic_block_params(kp2, inplanes=C, planes=C, stride=2)
    x2 = jax.random.normal(kx2, (B, C, H, W), jnp.float32)
    out2 = jax.block_until_ready(
        basic_block_forward(x2, prepare_basic_block_params(raw2), stride=2))
    assert out2.shape == (B, C, H // 2, W // 2), out2.shape
    assert bool(jnp.all(jnp.isfinite(out2)))
    err2 = float(jnp.max(jnp.abs(out2 - basic_block_ref(x2, raw2, stride=2))))
    assert err2 < 0.1, err2

    print("KERNEL_OK")
</pallas_src>

<mosaic_0001>
module attributes {stable_mosaic.version = 11 : i64} {
  func.func @_conv_bn_kernel(%arg0: i32, %arg1: i32, %arg2: i32, %arg3: memref<1x1x18x18x128xbf16, #tpu.memory_space<vmem>>, %arg4: memref<9x128x128xbf16, #tpu.memory_space<vmem>>, %arg5: memref<1x128xf32, #tpu.memory_space<vmem>>, %arg6: memref<1x256x128xbf16, #tpu.memory_space<vmem>>, %arg7: memref<256x128xf32, #tpu.memory_space<vmem>>) attributes {dimension_semantics = [#tpu.dimension_semantics<parallel>, #tpu.dimension_semantics<parallel>, #tpu.dimension_semantics<arbitrary>], iteration_bounds = array<i64: 2, 1, 1>, scalar_prefetch = 0 : i64, scratch_operands = 1 : i64, tpu.core_type = #tpu.core_type<tc>, window_params = [{transform_indices = @transform_0, window_bounds = array<i64: 1, 1, 18, 18, 128>}, {transform_indices = @transform_1, window_bounds = array<i64: 9, 128, 128>}, {pipeline_mode = #tpu.pipeline_mode<synchronous>, transform_indices = @transform_2, window_bounds = array<i64: 1, 128>}, {transform_indices = @transform_3, window_bounds = array<i64: 1, 256, 128>}]} {
    %c0_i32 = arith.constant 0 : i32
    %0 = arith.cmpi eq, %arg2, %c0_i32 : i32
    %1 = arith.extui %0 : i1 to i32
    %c0_i32_0 = arith.constant 0 : i32
    %2 = arith.cmpi ne, %1, %c0_i32_0 : i32
    scf.if %2 {
      %cst_78 = arith.constant 0.000000e+00 : f32
      %71 = vector.broadcast %cst_78 : f32 to vector<256x128xf32>
      %c0_79 = arith.constant 0 : index
      %c0_80 = arith.constant 0 : index
      %72 = vector.load %arg7[%c0_79, %c0_80] : memref<256x128xf32, #tpu.memory_space<vmem>>, vector<256x128xf32>
      tpu.vector_store %arg7[%c0_79, %c0_80], %71 {strides = array<i32>} : memref<256x128xf32, #tpu.memory_space<vmem>>, vector<256x128xf32>,
    } else {
    }
    %c0 = arith.constant 0 : index
    %c0_1 = arith.constant 0 : index
    %3 = vector.load %arg7[%c0, %c0_1] : memref<256x128xf32, #tpu.memory_space<vmem>>, vector<256x128xf32>
    %c0_2 = arith.constant 0 : index
    %c0_3 = arith.constant 0 : index
    %c0_4 = arith.constant 0 : index
    %c0_5 = arith.constant 0 : index
    %c0_6 = arith.constant 0 : index
    %4 = vector.load %arg3[%c0_2, %c0_3, %c0_4, %c0_5, %c0_6] : memref<1x1x18x18x128xbf16, #tpu.memory_space<vmem>>, vector<1x1x16x16x128xbf16>
    %5 = vector.shape_cast %4 : vector<1x1x16x16x128xbf16> to vector<16x16x128xbf16>
    %6 = vector.shape_cast %5 : vector<16x16x128xbf16> to vector<256x128xbf16>
    %c0_7 = arith.constant 0 : index
    %c0_8 = arith.constant 0 : index
    %c0_9 = arith.constant 0 : index
    %7 = vector.load %arg4[%c0_7, %c0_8, %c0_9] : memref<9x128x128xbf16, #tpu.memory_space<vmem>>, vector<1x128x128xbf16>
    %8 = vector.shape_cast %7 : vector<1x128x128xbf16> to vector<128x128xbf16>
    %cst = arith.constant dense<0.000000e+00> : vector<256x128xf32>
    %9 = tpu.matmul %6, %8, %cst {dimension_numbers = #tpu.dot_dimension_numbers<[1], [0], [0], [1], [0, 0, 1, 1], [], []>} : vector<256x128xbf16>, vector<128x128xbf16>, vector<256x128xf32> -> vector<256x128xf32>
    %10 = arith.addf %3, %9 : vector<256x128xf32>
    %c0_10 = arith.constant 0 : index
    %c0_11 = arith.constant 0 : index
    %c0_12 = arith.constant 0 : index
    %c1 = arith.constant 1 : index
    %c0_13 = arith.constant 0 : index
    %11 = vector.load %arg3[%c0_10, %c0_11, %c0_12, %c1, %c0_13] : memref<1x1x18x18x128xbf16, #tpu.memory_space<vmem>>, vector<1x1x16x16x128xbf16>
    %12 = vector.shape_cast %11 : vector<1x1x16x16x128xbf16> to vector<16x16x128xbf16>
    %13 = vector.shape_cast %12 : vector<16x16x128xbf16> to vector<256x128xbf16>
    %c1_14 = arith.constant 1 : index
    %c0_15 = arith.constant 0 : index
    %c0_16 = arith.constant 0 : index
    %14 = vector.load %arg4[%c1_14, %c0_15, %c0_16] : memref<9x128x128xbf16, #tpu.memory_space<vmem>>, vector<1x128x128xbf16>
    %15 = vector.shape_cast %14 : vector<1x128x128xbf16> to vector<128x128xbf16>
    %cst_17 = arith.constant dense<0.000000e+00> : vector<256x128xf32>
    %16 = tpu.matmul %13, %15, %cst_17 {dimension_numbers = #tpu.dot_dimension_numbers<[1], [0], [0], [1], [0, 0, 1, 1], [], []>} : vector<256x128xbf16>, vector<128x128xbf16>, vector<256x128xf32> -> vector<256x128xf32>
    %17 = arith.addf %10, %16 : vector<256x128xf32>
    %c0_18 = arith.constant 0 : index
    %c0_19 = arith.constant 0 : index
    %c0_20 = arith.constant 0 : index
    %c2 = arith.constant 2 : index
    %c0_21 = arith.constant 0 : index
    %18 = vector.load %arg3[%c0_18, %c0_19, %c0_20, %c2, %c0_21] : memref<1x1x18x18x128xbf16, #tpu.memory_space<vmem>>, vector<1x1x16x16x128xbf16>
    %19 = vector.shape_cast %18 : vector<1x1x16x16x128xbf16> to vector<16x16x128xbf16>
    %20 = vector.shape_cast %19 : vector<16x16x128xbf16> to vector<256x128xbf16>
    %c2_22 = arith.constant 2 : index
    %c0_23 = arith.constant 0 : index
    %c0_24 = arith.constant 0 : index
    %21 = vector.load %arg4[%c2_22, %c0_23, %c0_24] : memref<9x128x128xbf16, #tpu.memory_space<vmem>>, vector<1x128x128xbf16>
    %22 = vector.shape_cast %21 : vector<1x128x128xbf16> to vector<128x128xbf16>
    %cst_25 = arith.constant dense<0.000000e+00> : vector<256x128xf32>
    %23 = tpu.matmul %20, %22, %cst_25 {dimension_numbers = #tpu.dot_dimension_numbers<[1], [0], [0], [1], [0, 0, 1, 1], [], []>} : vector<256x128xbf16>, vector<128x128xbf16>, vector<256x128xf32> -> vector<256x128xf32>
    %24 = arith.addf %17, %23 : vector<256x128xf32>
    %c0_26 = arith.constant 0 : index
    %c0_27 = arith.constant 0 : index
    %c1_28 = arith.constant 1 : index
    %c0_29 = arith.constant 0 : index
    %c0_30 = arith.constant 0 : index
    %25 = vector.load %arg3[%c0_26, %c0_27, %c1_28, %c0_29, %c0_30] : memref<1x1x18x18x128xbf16, #tpu.memory_space<vmem>>, vector<1x1x16x16x128xbf16>
    %26 = vector.shape_cast %25 : vector<1x1x16x16x128xbf16> to vector<16x16x128xbf16>
    %27 = vector.shape_cast %26 : vector<16x16x128xbf16> to vector<256x128xbf16>
    %c3 = arith.constant 3 : index
    %c0_31 = arith.constant 0 : index
    %c0_32 = arith.constant 0 : index
    %28 = vector.load %arg4[%c3, %c0_31, %c0_32] : memref<9x128x128xbf16, #tpu.memory_space<vmem>>, vector<1x128x128xbf16>
    %29 = vector.shape_cast %28 : vector<1x128x128xbf16> to vector<128x128xbf16>
    %cst_33 = arith.constant dense<0.000000e+00> : vector<256x128xf32>
    %30 = tpu.matmul %27, %29, %cst_33 {dimension_numbers = #tpu.dot_dimension_numbers<[1], [0], [0], [1], [0, 0, 1, 1], [], []>} : vector<256x128xbf16>, vector<128x128xbf16>, vector<256x128xf32> -> vector<256x128xf32>
    %31 = arith.addf %24, %30 : vector<256x128xf32>
    %c0_34 = arith.constant 0 : index
    %c0_35 = arith.constant 0 : index
    %c1_36 = arith.constant 1 : index
    %c1_37 = arith.constant 1 : index
    %c0_38 = arith.constant 0 : index
    %32 = vector.load %arg3[%c0_34, %c0_35, %c1_36, %c1_37, %c0_38] : memref<1x1x18x18x128xbf16, #tpu.memory_space<vmem>>, vector<1x1x16x16x128xbf16>
    %33 = vector.shape_cast %32 : vector<1x1x16x16x128xbf16> to vector<16x16x128xbf16>
    %34 = vector.shape_cast %33 : vector<16x16x128xbf16> to vector<256x128xbf16>
    %c4 = arith.constant 4 : index
    %c0_39 = arith.constant 0 : index
    %c0_40 = arith.constant 0 : index
    %35 = vector.load %arg4[%c4, %c0_39, %c0_40] : memref<9x128x128xbf16, #tpu.memory_space<vmem>>, vector<1x128x128xbf16>
    %36 = vector.shape_cast %35 : vector<1x128x128xbf16> to vector<128x128xbf16>
    %cst_41 = arith.constant dense<0.000000e+00> : vector<256x128xf32>
    %37 = tpu.matmul %34, %36, %cst_41 {dimension_numbers = #tpu.dot_dimension_numbers<[1], [0], [0], [1], [0, 0, 1, 1], [], []>} : vector<256x128xbf16>, vector<128x128xbf16>, vector<256x128xf32> -> vector<256x128xf32>
    %38 = arith.addf %31, %37 : vector<256x128xf32>
    %c0_42 = arith.constant 0 : index
    %c0_43 = arith.constant 0 : index
    %c1_44 = arith.constant 1 : index
    %c2_45 = arith.constant 2 : index
    %c0_46 = arith.constant 0 : index
    %39 = vector.load %arg3[%c0_42, %c0_43, %c1_44, %c2_45, %c0_46] : memref<1x1x18x18x128xbf16, #tpu.memory_space<vmem>>, vector<1x1x16x16x128xbf16>
    %40 = vector.shape_cast %39 : vector<1x1x16x16x128xbf16> to vector<16x16x128xbf16>
    %41 = vector.shape_cast %40 : vector<16x16x128xbf16> to vector<256x128xbf16>
    %c5 = arith.constant 5 : index
    %c0_47 = arith.constant 0 : index
    %c0_48 = arith.constant 0 : index
    %42 = vector.load %arg4[%c5, %c0_47, %c0_48] : memref<9x128x128xbf16, #tpu.memory_space<vmem>>, vector<1x128x128xbf16>
    %43 = vector.shape_cast %42 : vector<1x128x128xbf16> to vector<128x128xbf16>
    %cst_49 = arith.constant dense<0.000000e+00> : vector<256x128xf32>
    %44 = tpu.matmul %41, %43, %cst_49 {dimension_numbers = #tpu.dot_dimension_numbers<[1], [0], [0], [1], [0, 0, 1, 1], [], []>} : vector<256x128xbf16>, vector<128x128xbf16>, vector<256x128xf32> -> vector<256x128xf32>
    %45 = arith.addf %38, %44 : vector<256x128xf32>
    %c0_50 = arith.constant 0 : index
    %c0_51 = arith.constant 0 : index
    %c2_52 = arith.constant 2 : index
    %c0_53 = arith.constant 0 : index
    %c0_54 = arith.constant 0 : index
    %46 = vector.load %arg3[%c0_50, %c0_51, %c2_52, %c0_53, %c0_54] : memref<1x1x18x18x128xbf16, #tpu.memory_space<vmem>>, vector<1x1x16x16x128xbf16>
    %47 = vector.shape_cast %46 : vector<1x1x16x16x128xbf16> to vector<16x16x128xbf16>
    %48 = vector.shape_cast %47 : vector<16x16x128xbf16> to vector<256x128xbf16>
    %c6 = arith.constant 6 : index
    %c0_55 = arith.constant 0 : index
    %c0_56 = arith.constant 0 : index
    %49 = vector.load %arg4[%c6, %c0_55, %c0_56] : memref<9x128x128xbf16, #tpu.memory_space<vmem>>, vector<1x128x128xbf16>
    %50 = vector.shape_cast %49 : vector<1x128x128xbf16> to vector<128x128xbf16>
    %cst_57 = arith.constant dense<0.000000e+00> : vector<256x128xf32>
    %51 = tpu.matmul %48, %50, %cst_57 {dimension_numbers = #tpu.dot_dimension_numbers<[1], [0], [0], [1], [0, 0, 1, 1], [], []>} : vector<256x128xbf16>, vector<128x128xbf16>, vector<256x128xf32> -> vector<256x128xf32>
    %52 = arith.addf %45, %51 : vector<256x128xf32>
    %c0_58 = arith.constant 0 : index
    %c0_59 = arith.constant 0 : index
    %c2_60 = arith.constant 2 : index
    %c1_61 = arith.constant 1 : index
    %c0_62 = arith.constant 0 : index
    %53 = vector.load %arg3[%c0_58, %c0_59, %c2_60, %c1_61, %c0_62] : memref<1x1x18x18x128xbf16, #tpu.memory_space<vmem>>, vector<1x1x16x16x128xbf16>
    %54 = vector.shape_cast %53 : vector<1x1x16x16x128xbf16> to vector<16x16x128xbf16>
    %55 = vector.shape_cast %54 : vector<16x16x128xbf16> to vector<256x128xbf16>
    %c7 = arith.constant 7 : index
    %c0_63 = arith.constant 0 : index
    %c0_64 = arith.constant 0 : index
    %56 = vector.load %arg4[%c7, %c0_63, %c0_64] : memref<9x128x128xbf16, #tpu.memory_space<vmem>>, vector<1x128x128xbf16>
    %57 = vector.shape_cast %56 : vector<1x128x128xbf16> to vector<128x128xbf16>
    %cst_65 = arith.constant dense<0.000000e+00> : vector<256x128xf32>
    %58 = tpu.matmul %55, %57, %cst_65 {dimension_numbers = #tpu.dot_dimension_numbers<[1], [0], [0], [1], [0, 0, 1, 1], [], []>} : vector<256x128xbf16>, vector<128x128xbf16>, vector<256x128xf32> -> vector<256x128xf32>
    %59 = arith.addf %52, %58 : vector<256x128xf32>
    %c0_66 = arith.constant 0 : index
    %c0_67 = arith.constant 0 : index
    %c2_68 = arith.constant 2 : index
    %c2_69 = arith.constant 2 : index
    %c0_70 = arith.constant 0 : index
    %60 = vector.load %arg3[%c0_66, %c0_67, %c2_68, %c2_69, %c0_70] : memref<1x1x18x18x128xbf16, #tpu.memory_space<vmem>>, vector<1x1x16x16x128xbf16>
    %61 = vector.shape_cast %60 : vector<1x1x16x16x128xbf16> to vector<16x16x128xbf16>
    %62 = vector.shape_cast %61 : vector<16x16x128xbf16> to vector<256x128xbf16>
    %c8 = arith.constant 8 : index
    %c0_71 = arith.constant 0 : index
    %c0_72 = arith.constant 0 : index
    %63 = vector.load %arg4[%c8, %c0_71, %c0_72] : memref<9x128x128xbf16, #tpu.memory_space<vmem>>, vector<1x128x128xbf16>
    %64 = vector.shape_cast %63 : vector<1x128x128xbf16> to vector<128x128xbf16>
    %cst_73 = arith.constant dense<0.000000e+00> : vector<256x128xf32>
    %65 = tpu.matmul %62, %64, %cst_73 {dimension_numbers = #tpu.dot_dimension_numbers<[1], [0], [0], [1], [0, 0, 1, 1], [], []>} : vector<256x128xbf16>, vector<128x128xbf16>, vector<256x128xf32> -> vector<256x128xf32>
    %66 = arith.addf %59, %65 : vector<256x128xf32>
    %c0_74 = arith.constant 0 : index
    %c0_75 = arith.constant 0 : index
    %67 = vector.load %arg7[%c0_74, %c0_75] : memref<256x128xf32, #tpu.memory_space<vmem>>, vector<256x128xf32>
    tpu.vector_store %arg7[%c0_74, %c0_75], %66 {strides = array<i32>} : memref<256x128xf32, #tpu.memory_space<vmem>>, vector<256x128xf32>,
    %c0_i32_76 = arith.constant 0 : i32
    %68 = arith.cmpi eq, %arg2, %c0_i32_76 : i32
    %69 = arith.extui %68 : i1 to i32
    %c0_i32_77 = arith.constant 0 : i32
    %70 = arith.cmpi ne, %69, %c0_i32_77 : i32
    scf.if %70 {
      %c0_78 = arith.constant 0 : index
      %c0_79 = arith.constant 0 : index
      %71 = vector.load %arg7[%c0_78, %c0_79] : memref<256x128xf32, #tpu.memory_space<vmem>>, vector<256x128xf32>
      %c0_80 = arith.constant 0 : index
      %c0_81 = arith.constant 0 : index
      %72 = vector.load %arg5[%c0_80, %c0_81] : memref<1x128xf32, #tpu.memory_space<vmem>>, vector<1x128xf32>
      %73 = vector.broadcast %72 : vector<1x128xf32> to vector<256x128xf32>
      %74 = arith.addf %71, %73 : vector<256x128xf32>
      %cst_82 = arith.constant 0.000000e+00 : f32
      %75 = vector.broadcast %cst_82 : f32 to vector<256x128xf32>
      %76 = arith.maximumf %74, %75 : vector<256x128xf32>
      %77 = arith.truncf %76 : vector<256x128xf32> to vector<256x128xbf16>
      %c0_83 = arith.constant 0 : index
      %c0_84 = arith.constant 0 : index
      %c0_85 = arith.constant 0 : index
      %78 = vector.load %arg6[%c0_83, %c0_84, %c0_85] : memref<1x256x128xbf16, #tpu.memory_space<vmem>>, vector<1x256x128xbf16>
      %79 = vector.shape_cast %78 : vector<1x256x128xbf16> to vector<256x128xbf16>
      %80 = vector.shape_cast %77 : vector<256x128xbf16> to vector<1x256x128xbf16>
      tpu.vector_store %arg6[%c0_83, %c0_84, %c0_85], %80 {strides = array<i32>} : memref<1x256x128xbf16, #tpu.memory_space<vmem>>, vector<1x256x128xbf16>,
    } else {
    }
    return
  }
  func.func @transform_0(%arg0: i32, %arg1: i32, %arg2: i32) -> (i32, i32, i32, i32, i32) {
    %c1_i32 = arith.constant 1 : i32
    %0 = arith.muli %arg0, %c1_i32 : i32
    %1 = arith.addi %0, %arg1 : i32
    %c0_i32 = arith.constant 0 : i32
    %c0_i32_0 = arith.constant 0 : i32
    %c0_i32_1 = arith.constant 0 : i32
    %c0_i32_2 = arith.constant 0 : i32
    return %1, %c0_i32, %c0_i32_0, %c0_i32_1, %arg2 : i32, i32, i32, i32, i32
  }
  func.func @transform_1(%arg0: i32, %arg1: i32, %arg2: i32) -> (i32, i32, i32) {
    %c0_i32 = arith.constant 0 : i32
    %c0_i32_0 = arith.constant 0 : i32
    %c0_i32_1 = arith.constant 0 : i32
    return %c0_i32, %arg2, %c0_i32_0 : i32, i32, i32
  }
  func.func @transform_2(%arg0: i32, %arg1: i32, %arg2: i32) -> (i32, i32) {
    %c0_i32 = arith.constant 0 : i32
    %c0_i32_0 = arith.constant 0 : i32
    %c0_i32_1 = arith.constant 0 : i32
    return %c0_i32, %c0_i32_0 : i32, i32
  }
  func.func @transform_3(%arg0: i32, %arg1: i32, %arg2: i32) -> (i32, i32, i32) {
    %c1_i32 = arith.constant 1 : i32
    %0 = arith.muli %arg0, %c1_i32 : i32
    %1 = arith.addi %0, %arg1 : i32
    %c0_i32 = arith.constant 0 : i32
    %c0_i32_0 = arith.constant 0 : i32
    %c0_i32_1 = arith.constant 0 : i32
    return %1, %c0_i32, %c0_i32_0 : i32, i32, i32
  }
}

module attributes {stable_mosaic.version = 11 : i64} {
  func.func @_conv_bn_kernel(%arg0: i32, %arg1: i32, %arg2: i32, %arg3: memref<1x1x18x18x128xbf16, #tpu.memory_space<vmem>>, %arg4: memref<9x128x128xbf16, #tpu.memory_space<vmem>>, %arg5: memref<1x128xf32, #tpu.memory_space<vmem>>, %arg6: memref<1x256x128xf32, #tpu.memory_space<vmem>>, %arg7: memref<1x256x128xf32, #tpu.memory_space<vmem>>, %arg8: memref<256x128xf32, #tpu.memory_space<vmem>>) attributes {dimension_semantics = [#tpu.dimension_semantics<parallel>, #tpu.dimension_semantics<parallel>, #tpu.dimension_semantics<arbitrary>], iteration_bounds = array<i64: 2, 1, 1>, scalar_prefetch = 0 : i64, scratch_operands = 1 : i64, tpu.core_type = #tpu.core_type<tc>, window_params = [{transform_indices = @transform_0, window_bounds = array<i64: 1, 1, 18, 18, 128>}, {transform_indices = @transform_1, window_bounds = array<i64: 9, 128, 128>}, {pipeline_mode = #tpu.pipeline_mode<synchronous>, transform_indices = @transform_2, window_bounds = array<i64: 1, 128>}, {transform_indices = @transform_3, window_bounds = array<i64: 1, 256, 128>}, {transform_indices = @transform_4, window_bounds = array<i64: 1, 256, 128>}]} {
    %c0_i32 = arith.constant 0 : i32
    %0 = arith.cmpi eq, %arg2, %c0_i32 : i32
    %1 = arith.extui %0 : i1 to i32
    %c0_i32_0 = arith.constant 0 : i32
    %2 = arith.cmpi ne, %1, %c0_i32_0 : i32
    scf.if %2 {
      %cst_78 = arith.constant 0.000000e+00 : f32
      %71 = vector.broadcast %cst_78 : f32 to vector<256x128xf32>
      %c0_79 = arith.constant 0 : index
      %c0_80 = arith.constant 0 : index
      %72 = vector.load %arg8[%c0_79, %c0_80] : memref<256x128xf32, #tpu.memory_space<vmem>>, vector<256x128xf32>
      tpu.vector_store %arg8[%c0_79, %c0_80], %71 {strides = array<i32>} : memref<256x128xf32, #tpu.memory_space<vmem>>, vector<256x128xf32>,
    } else {
    }
    %c0 = arith.constant 0 : index
    %c0_1 = arith.constant 0 : index
    %3 = vector.load %arg8[%c0, %c0_1] : memref<256x128xf32, #tpu.memory_space<vmem>>, vector<256x128xf32>
    %c0_2 = arith.constant 0 : index
    %c0_3 = arith.constant 0 : index
    %c0_4 = arith.constant 0 : index
    %c0_5 = arith.constant 0 : index
    %c0_6 = arith.constant 0 : index
    %4 = vector.load %arg3[%c0_2, %c0_3, %c0_4, %c0_5, %c0_6] : memref<1x1x18x18x128xbf16, #tpu.memory_space<vmem>>, vector<1x1x16x16x128xbf16>
    %5 = vector.shape_cast %4 : vector<1x1x16x16x128xbf16> to vector<16x16x128xbf16>
    %6 = vector.shape_cast %5 : vector<16x16x128xbf16> to vector<256x128xbf16>
    %c0_7 = arith.constant 0 : index
    %c0_8 = arith.constant 0 : index
    %c0_9 = arith.constant 0 : index
    %7 = vector.load %arg4[%c0_7, %c0_8, %c0_9] : memref<9x128x128xbf16, #tpu.memory_space<vmem>>, vector<1x128x128xbf16>
    %8 = vector.shape_cast %7 : vector<1x128x128xbf16> to vector<128x128xbf16>
    %cst = arith.constant dense<0.000000e+00> : vector<256x128xf32>
    %9 = tpu.matmul %6, %8, %cst {dimension_numbers = #tpu.dot_dimension_numbers<[1], [0], [0], [1], [0, 0, 1, 1], [], []>} : vector<256x128xbf16>, vector<128x128xbf16>, vector<256x128xf32> -> vector<256x128xf32>
    %10 = arith.addf %3, %9 : vector<256x128xf32>
    %c0_10 = arith.constant 0 : index
    %c0_11 = arith.constant 0 : index
    %c0_12 = arith.constant 0 : index
    %c1 = arith.constant 1 : index
    %c0_13 = arith.constant 0 : index
    %11 = vector.load %arg3[%c0_10, %c0_11, %c0_12, %c1, %c0_13] : memref<1x1x18x18x128xbf16, #tpu.memory_space<vmem>>, vector<1x1x16x16x128xbf16>
    %12 = vector.shape_cast %11 : vector<1x1x16x16x128xbf16> to vector<16x16x128xbf16>
    %13 = vector.shape_cast %12 : vector<16x16x128xbf16> to vector<256x128xbf16>
    %c1_14 = arith.constant 1 : index
    %c0_15 = arith.constant 0 : index
    %c0_16 = arith.constant 0 : index
    %14 = vector.load %arg4[%c1_14, %c0_15, %c0_16] : memref<9x128x128xbf16, #tpu.memory_space<vmem>>, vector<1x128x128xbf16>
    %15 = vector.shape_cast %14 : vector<1x128x128xbf16> to vector<128x128xbf16>
    %cst_17 = arith.constant dense<0.000000e+00> : vector<256x128xf32>
    %16 = tpu.matmul %13, %15, %cst_17 {dimension_numbers = #tpu.dot_dimension_numbers<[1], [0], [0], [1], [0, 0, 1, 1], [], []>} : vector<256x128xbf16>, vector<128x128xbf16>, vector<256x128xf32> -> vector<256x128xf32>
    %17 = arith.addf %10, %16 : vector<256x128xf32>
    %c0_18 = arith.constant 0 : index
    %c0_19 = arith.constant 0 : index
    %c0_20 = arith.constant 0 : index
    %c2 = arith.constant 2 : index
    %c0_21 = arith.constant 0 : index
    %18 = vector.load %arg3[%c0_18, %c0_19, %c0_20, %c2, %c0_21] : memref<1x1x18x18x128xbf16, #tpu.memory_space<vmem>>, vector<1x1x16x16x128xbf16>
    %19 = vector.shape_cast %18 : vector<1x1x16x16x128xbf16> to vector<16x16x128xbf16>
    %20 = vector.shape_cast %19 : vector<16x16x128xbf16> to vector<256x128xbf16>
    %c2_22 = arith.constant 2 : index
    %c0_23 = arith.constant 0 : index
    %c0_24 = arith.constant 0 : index
    %21 = vector.load %arg4[%c2_22, %c0_23, %c0_24] : memref<9x128x128xbf16, #tpu.memory_space<vmem>>, vector<1x128x128xbf16>
    %22 = vector.shape_cast %21 : vector<1x128x128xbf16> to vector<128x128xbf16>
    %cst_25 = arith.constant dense<0.000000e+00> : vector<256x128xf32>
    %23 = tpu.matmul %20, %22, %cst_25 {dimension_numbers = #tpu.dot_dimension_numbers<[1], [0], [0], [1], [0, 0, 1, 1], [], []>} : vector<256x128xbf16>, vector<128x128xbf16>, vector<256x128xf32> -> vector<256x128xf32>
    %24 = arith.addf %17, %23 : vector<256x128xf32>
    %c0_26 = arith.constant 0 : index
    %c0_27 = arith.constant 0 : index
    %c1_28 = arith.constant 1 : index
    %c0_29 = arith.constant 0 : index
    %c0_30 = arith.constant 0 : index
    %25 = vector.load %arg3[%c0_26, %c0_27, %c1_28, %c0_29, %c0_30] : memref<1x1x18x18x128xbf16, #tpu.memory_space<vmem>>, vector<1x1x16x16x128xbf16>
    %26 = vector.shape_cast %25 : vector<1x1x16x16x128xbf16> to vector<16x16x128xbf16>
    %27 = vector.shape_cast %26 : vector<16x16x128xbf16> to vector<256x128xbf16>
    %c3 = arith.constant 3 : index
    %c0_31 = arith.constant 0 : index
    %c0_32 = arith.constant 0 : index
    %28 = vector.load %arg4[%c3, %c0_31, %c0_32] : memref<9x128x128xbf16, #tpu.memory_space<vmem>>, vector<1x128x128xbf16>
    %29 = vector.shape_cast %28 : vector<1x128x128xbf16> to vector<128x128xbf16>
    %cst_33 = arith.constant dense<0.000000e+00> : vector<256x128xf32>
    %30 = tpu.matmul %27, %29, %cst_33 {dimension_numbers = #tpu.dot_dimension_numbers<[1], [0], [0], [1], [0, 0, 1, 1], [], []>} : vector<256x128xbf16>, vector<128x128xbf16>, vector<256x128xf32> -> vector<256x128xf32>
    %31 = arith.addf %24, %30 : vector<256x128xf32>
    %c0_34 = arith.constant 0 : index
    %c0_35 = arith.constant 0 : index
    %c1_36 = arith.constant 1 : index
    %c1_37 = arith.constant 1 : index
    %c0_38 = arith.constant 0 : index
    %32 = vector.load %arg3[%c0_34, %c0_35, %c1_36, %c1_37, %c0_38] : memref<1x1x18x18x128xbf16, #tpu.memory_space<vmem>>, vector<1x1x16x16x128xbf16>
    %33 = vector.shape_cast %32 : vector<1x1x16x16x128xbf16> to vector<16x16x128xbf16>
    %34 = vector.shape_cast %33 : vector<16x16x128xbf16> to vector<256x128xbf16>
    %c4 = arith.constant 4 : index
    %c0_39 = arith.constant 0 : index
    %c0_40 = arith.constant 0 : index
    %35 = vector.load %arg4[%c4, %c0_39, %c0_40] : memref<9x128x128xbf16, #tpu.memory_space<vmem>>, vector<1x128x128xbf16>
    %36 = vector.shape_cast %35 : vector<1x128x128xbf16> to vector<128x128xbf16>
    %cst_41 = arith.constant dense<0.000000e+00> : vector<256x128xf32>
    %37 = tpu.matmul %34, %36, %cst_41 {dimension_numbers = #tpu.dot_dimension_numbers<[1], [0], [0], [1], [0, 0, 1, 1], [], []>} : vector<256x128xbf16>, vector<128x128xbf16>, vector<256x128xf32> -> vector<256x128xf32>
    %38 = arith.addf %31, %37 : vector<256x128xf32>
    %c0_42 = arith.constant 0 : index
    %c0_43 = arith.constant 0 : index
    %c1_44 = arith.constant 1 : index
    %c2_45 = arith.constant 2 : index
    %c0_46 = arith.constant 0 : index
    %39 = vector.load %arg3[%c0_42, %c0_43, %c1_44, %c2_45, %c0_46] : memref<1x1x18x18x128xbf16, #tpu.memory_space<vmem>>, vector<1x1x16x16x128xbf16>
    %40 = vector.shape_cast %39 : vector<1x1x16x16x128xbf16> to vector<16x16x128xbf16>
    %41 = vector.shape_cast %40 : vector<16x16x128xbf16> to vector<256x128xbf16>
    %c5 = arith.constant 5 : index
    %c0_47 = arith.constant 0 : index
    %c0_48 = arith.constant 0 : index
    %42 = vector.load %arg4[%c5, %c0_47, %c0_48] : memref<9x128x128xbf16, #tpu.memory_space<vmem>>, vector<1x128x128xbf16>
    %43 = vector.shape_cast %42 : vector<1x128x128xbf16> to vector<128x128xbf16>
    %cst_49 = arith.constant dense<0.000000e+00> : vector<256x128xf32>
    %44 = tpu.matmul %41, %43, %cst_49 {dimension_numbers = #tpu.dot_dimension_numbers<[1], [0], [0], [1], [0, 0, 1, 1], [], []>} : vector<256x128xbf16>, vector<128x128xbf16>, vector<256x128xf32> -> vector<256x128xf32>
    %45 = arith.addf %38, %44 : vector<256x128xf32>
    %c0_50 = arith.constant 0 : index
    %c0_51 = arith.constant 0 : index
    %c2_52 = arith.constant 2 : index
    %c0_53 = arith.constant 0 : index
    %c0_54 = arith.constant 0 : index
    %46 = vector.load %arg3[%c0_50, %c0_51, %c2_52, %c0_53, %c0_54] : memref<1x1x18x18x128xbf16, #tpu.memory_space<vmem>>, vector<1x1x16x16x128xbf16>
    %47 = vector.shape_cast %46 : vector<1x1x16x16x128xbf16> to vector<16x16x128xbf16>
    %48 = vector.shape_cast %47 : vector<16x16x128xbf16> to vector<256x128xbf16>
    %c6 = arith.constant 6 : index
    %c0_55 = arith.constant 0 : index
    %c0_56 = arith.constant 0 : index
    %49 = vector.load %arg4[%c6, %c0_55, %c0_56] : memref<9x128x128xbf16, #tpu.memory_space<vmem>>, vector<1x128x128xbf16>
    %50 = vector.shape_cast %49 : vector<1x128x128xbf16> to vector<128x128xbf16>
    %cst_57 = arith.constant dense<0.000000e+00> : vector<256x128xf32>
    %51 = tpu.matmul %48, %50, %cst_57 {dimension_numbers = #tpu.dot_dimension_numbers<[1], [0], [0], [1], [0, 0, 1, 1], [], []>} : vector<256x128xbf16>, vector<128x128xbf16>, vector<256x128xf32> -> vector<256x128xf32>
    %52 = arith.addf %45, %51 : vector<256x128xf32>
    %c0_58 = arith.constant 0 : index
    %c0_59 = arith.constant 0 : index
    %c2_60 = arith.constant 2 : index
    %c1_61 = arith.constant 1 : index
    %c0_62 = arith.constant 0 : index
    %53 = vector.load %arg3[%c0_58, %c0_59, %c2_60, %c1_61, %c0_62] : memref<1x1x18x18x128xbf16, #tpu.memory_space<vmem>>, vector<1x1x16x16x128xbf16>
    %54 = vector.shape_cast %53 : vector<1x1x16x16x128xbf16> to vector<16x16x128xbf16>
    %55 = vector.shape_cast %54 : vector<16x16x128xbf16> to vector<256x128xbf16>
    %c7 = arith.constant 7 : index
    %c0_63 = arith.constant 0 : index
    %c0_64 = arith.constant 0 : index
    %56 = vector.load %arg4[%c7, %c0_63, %c0_64] : memref<9x128x128xbf16, #tpu.memory_space<vmem>>, vector<1x128x128xbf16>
    %57 = vector.shape_cast %56 : vector<1x128x128xbf16> to vector<128x128xbf16>
    %cst_65 = arith.constant dense<0.000000e+00> : vector<256x128xf32>
    %58 = tpu.matmul %55, %57, %cst_65 {dimension_numbers = #tpu.dot_dimension_numbers<[1], [0], [0], [1], [0, 0, 1, 1], [], []>} : vector<256x128xbf16>, vector<128x128xbf16>, vector<256x128xf32> -> vector<256x128xf32>
    %59 = arith.addf %52, %58 : vector<256x128xf32>
    %c0_66 = arith.constant 0 : index
    %c0_67 = arith.constant 0 : index
    %c2_68 = arith.constant 2 : index
    %c2_69 = arith.constant 2 : index
    %c0_70 = arith.constant 0 : index
    %60 = vector.load %arg3[%c0_66, %c0_67, %c2_68, %c2_69, %c0_70] : memref<1x1x18x18x128xbf16, #tpu.memory_space<vmem>>, vector<1x1x16x16x128xbf16>
    %61 = vector.shape_cast %60 : vector<1x1x16x16x128xbf16> to vector<16x16x128xbf16>
    %62 = vector.shape_cast %61 : vector<16x16x128xbf16> to vector<256x128xbf16>
    %c8 = arith.constant 8 : index
    %c0_71 = arith.constant 0 : index
    %c0_72 = arith.constant 0 : index
    %63 = vector.load %arg4[%c8, %c0_71, %c0_72] : memref<9x128x128xbf16, #tpu.memory_space<vmem>>, vector<1x128x128xbf16>
    %64 = vector.shape_cast %63 : vector<1x128x128xbf16> to vector<128x128xbf16>
    %cst_73 = arith.constant dense<0.000000e+00> : vector<256x128xf32>
    %65 = tpu.matmul %62, %64, %cst_73 {dimension_numbers = #tpu.dot_dimension_numbers<[1], [0], [0], [1], [0, 0, 1, 1], [], []>} : vector<256x128xbf16>, vector<128x128xbf16>, vector<256x128xf32> -> vector<256x128xf32>
    %66 = arith.addf %59, %65 : vector<256x128xf32>
    %c0_74 = arith.constant 0 : index
    %c0_75 = arith.constant 0 : index
    %67 = vector.load %arg8[%c0_74, %c0_75] : memref<256x128xf32, #tpu.memory_space<vmem>>, vector<256x128xf32>
    tpu.vector_store %arg8[%c0_74, %c0_75], %66 {strides = array<i32>} : memref<256x128xf32, #tpu.memory_space<vmem>>, vector<256x128xf32>,
    %c0_i32_76 = arith.constant 0 : i32
    %68 = arith.cmpi eq, %arg2, %c0_i32_76 : i32
    %69 = arith.extui %68 : i1 to i32
    %c0_i32_77 = arith.constant 0 : i32
    %70 = arith.cmpi ne, %69, %c0_i32_77 : i32
    scf.if %70 {
      %c0_78 = arith.constant 0 : index
      %c0_79 = arith.constant 0 : index
      %71 = vector.load %arg8[%c0_78, %c0_79] : memref<256x128xf32, #tpu.memory_space<vmem>>, vector<256x128xf32>
      %c0_80 = arith.constant 0 : index
      %c0_81 = arith.constant 0 : index
      %72 = vector.load %arg5[%c0_80, %c0_81] : memref<1x128xf32, #tpu.memory_space<vmem>>, vector<1x128xf32>
      %73 = vector.broadcast %72 : vector<1x128xf32> to vector<256x128xf32>
      %74 = arith.addf %71, %73 : vector<256x128xf32>
      %c0_82 = arith.constant 0 : index
      %c0_83 = arith.constant 0 : index
      %c0_84 = arith.constant 0 : index
      %75 = vector.load %arg6[%c0_82, %c0_83, %c0_84] : memref<1x256x128xf32, #tpu.memory_space<vmem>>, vector<1x256x128xf32>
      %76 = vector.shape_cast %75 : vector<1x256x128xf32> to vector<256x128xf32>
      %77 = arith.addf %74, %76 : vector<256x128xf32>
      %cst_85 = arith.constant 0.000000e+00 : f32
      %78 = vector.broadcast %cst_85 : f32 to vector<256x128xf32>
      %79 = arith.maximumf %77, %78 : vector<256x128xf32>
      %c0_86 = arith.constant 0 : index
      %c0_87 = arith.constant 0 : index
      %c0_88 = arith.constant 0 : index
      %80 = vector.load %arg7[%c0_86, %c0_87, %c0_88] : memref<1x256x128xf32, #tpu.memory_space<vmem>>, vector<1x256x128xf32>
      %81 = vector.shape_cast %80 : vector<1x256x128xf32> to vector<256x128xf32>
      %82 = vector.shape_cast %79 : vector<256x128xf32> to vector<1x256x128xf32>
      tpu.vector_store %arg7[%c0_86, %c0_87, %c0_88], %82 {strides = array<i32>} : memref<1x256x128xf32, #tpu.memory_space<vmem>>, vector<1x256x128xf32>,
    } else {
    }
    return
  }
  func.func @transform_0(%arg0: i32, %arg1: i32, %arg2: i32) -> (i32, i32, i32, i32, i32) {
    %c1_i32 = arith.constant 1 : i32
    %0 = arith.muli %arg0, %c1_i32 : i32
    %1 = arith.addi %0, %arg1 : i32
    %c0_i32 = arith.constant 0 : i32
    %c0_i32_0 = arith.constant 0 : i32
    %c0_i32_1 = arith.constant 0 : i32
    %c0_i32_2 = arith.constant 0 : i32
    return %1, %c0_i32, %c0_i32_0, %c0_i32_1, %arg2 : i32, i32, i32, i32, i32
  }
  func.func @transform_1(%arg0: i32, %arg1: i32, %arg2: i32) -> (i32, i32, i32) {
    %c0_i32 = arith.constant 0 : i32
    %c0_i32_0 = arith.constant 0 : i32
    %c0_i32_1 = arith.constant 0 : i32
    return %c0_i32, %arg2, %c0_i32_0 : i32, i32, i32
  }
  func.func @transform_2(%arg0: i32, %arg1: i32, %arg2: i32) -> (i32, i32) {
    %c0_i32 = arith.constant 0 : i32
    %c0_i32_0 = arith.constant 0 : i32
    %c0_i32_1 = arith.constant 0 : i32
    return %c0_i32, %c0_i32_0 : i32, i32
  }
  func.func @transform_3(%arg0: i32, %arg1: i32, %arg2: i32) -> (i32, i32, i32) {
    %c1_i32 = arith.constant 1 : i32
    %0 = arith.muli %arg0, %c1_i32 : i32
    %1 = arith.addi %0, %arg1 : i32
    %c0_i32 = arith.constant 0 : i32
    %c0_i32_0 = arith.constant 0 : i32
    %c0_i32_1 = arith.constant 0 : i32
    return %1, %c0_i32, %c0_i32_0 : i32, i32, i32
  }
  func.func @transform_4(%arg0: i32, %arg1: i32, %arg2: i32) -> (i32, i32, i32) {
    %c1_i32 = arith.constant 1 : i32
    %0 = arith.muli %arg0, %c1_i32 : i32
    %1 = arith.addi %0, %arg1 : i32
    %c0_i32 = arith.constant 0 : i32
    %c0_i32_0 = arith.constant 0 : i32
    %c0_i32_1 = arith.constant 0 : i32
    return %1, %c0_i32, %c0_i32_0 : i32, i32, i32
  }
}

</mosaic_0001>

<llo_original>
// kernel: basic_block_forward.2
$region0: #{basic_block_forward.2}
  #allocation0 [shape = 'u32[]', space=smem, size = 0x4, offset = 0x4, fixed_abs, tag = 'smem constant byte address 0x4 - core index']
  #allocation1 [shape = 'u32[72,128]{1,0:T(1,128)}', space=vmem, size = 0x9000, scoped, tag = 'internal scratch']
  #allocation2 [shape = 'f32[256,128]{1,0:T(8,128)}', space=vmem, size = 0x20000, scoped, tag = 'scratch operand']
  %s0 = inlined_call_operand.vmem [shape: bf16[2,1,18,18,128], index: 0, kind: input, shape index: {}]
  %s1 = inlined_call_operand.vmem [shape: bf16[9,128,128], index: 1, kind: input, shape index: {}]
  %s2 = inlined_call_operand.vmem [shape: f32[1,128], index: 2, kind: input, shape index: {}]
  %s3 = inlined_call_operand.vmem [shape: bf16[2,256,128], index: 3, kind: output, shape index: {}]
  %s4 = sld [smem:[#allocation0]]
  $region53: #{basic_block_forward.2} parent=0
    _
  %s6 = ssub.s32 1, %s4
  %s7 = scalar_select 0, %s6, %s4
  loop: start=0, step=1, limit=4
  $region2: #{basic_block_forward.2} parent=0 // loop_pre_header
    _
  $region3: #{basic_block_forward.2} parent=0 // loop_header
    %s9 = sphi 0, %s13
    %p10 = scmp.ge.s32.totalorder %s9, 4
    %s16 = sphi 0, %s35
    %s17 = sphi 0, %s31
    %s18 = sphi 0, %s27
    %s19 = sphi 0, %s16
    %s20 = sphi 0, %s17
    %s21 = sphi 0, %s18
    %s22 = sphi 0, %s19
    %s23 = sphi 0, %s20
    %s24 = sphi 0, %s21
    %s42 = sphi 0, %s44
    %s45 = sphi 0, %s42
    %s46 = sphi 0, %s45
    %s62 = sphi 0, %s46
    %s68 = sphi 0, %s70
    %s71 = sphi 0, %s68
    %s72 = sphi 0, %s71
    %s88 = sphi 0, %s72
    %s92 = sphi 0, %s92
    %s94 = sphi 0, %s92
    %s95 = sphi 0, %s94
    %s109 = sphi 0, %s95
    %s117 = sphi 0, %s119
    %s120 = sphi 0, %s117
    %s121 = sphi 0, %s120
    %s137 = sphi 0, %s121
  $region4: #{basic_block_forward.2} parent=0 // loop_header_branch
    %12 = sbr.rel (%p10) target = $region8
  $region5: #{basic_block_forward.2} parent=0 // loop_body
    %s14 = ssub.s32 %s9, 1
    %s15 = ssub.s32 %s9, 2
    %s25 = sadd.s32 1, %s18
    %p26 = scmp.ge.s32.totalorder %s25, 1
    %s27 = scalar_select %p26, 0, %s25
    %s28 = sadd.s32 1, %s17
    %s29 = scalar_select %p26, %s28, %s17
    %p30 = scmp.ge.s32.totalorder %s29, 1
    %s31 = scalar_select %p30, 0, %s29
    %s32 = sadd.s32 1, %s16
    %s33 = scalar_select %p30, %s32, %s16
    %p34 = scmp.ge.s32.totalorder %s33, 2
    %s35 = scalar_select %p34, 0, %s33
    %s36 = sadd.s32 %s16, %s17
    %s37 = sadd.s32 %s35, %s31
    %s38 = ssub.s32 %s36, %s37
    %s39 = ssub.s32 %s18, %s27
    %s40 = sor.u32 %s38, %s39
    %p41 = scmp.eq.s32.totalorder %s40, 0
    %s43 = sadd.s32 %s42, 1
    %s44 = scalar_select %p41, %s42, %s43
    %p47 = pneg %p41
    %p48 = scmp.eq.s32.totalorder %s9, 1
    %p49 = por %p47, %p48
    %p50 = scmp.ne.s32.totalorder %s42, %s45
    %p51 = scmp.eq.s32.totalorder %s9, 0
    %p52 = por %p50, %p51
    %p53 = scmp.ne.s32.totalorder %s42, %s45
    %p54 = scmp.eq.s32.totalorder %s14, 1
    %p55 = por %p53, %p54
    %p56 = scmp.ne.s32.totalorder %s45, %s46
    %p57 = scmp.eq.s32.totalorder %s14, 0
    %p58 = por %p56, %p57
    %p59 = scmp.ne.s32.totalorder %s45, %s46
    %p60 = scmp.eq.s32.totalorder %s15, 1
    %p61 = por %p59, %p60
    %p63 = scmp.ne.s32.totalorder %s46, %s62
    %p64 = scmp.eq.s32.totalorder %s15, 0
    %p65 = por %p63, %p64
    %s66 = ssub.s32 %s18, %s27
    %p67 = scmp.eq.s32.totalorder %s66, 0
    %s69 = sadd.s32 %s68, 1
    %s70 = scalar_select %p67, %s68, %s69
    %p73 = pneg %p67
    %p74 = scmp.eq.s32.totalorder %s9, 1
    %p75 = por %p73, %p74
    %p76 = scmp.ne.s32.totalorder %s68, %s71
    %p77 = scmp.eq.s32.totalorder %s9, 0
    %p78 = por %p76, %p77
    %p79 = scmp.ne.s32.totalorder %s68, %s71
    %p80 = scmp.eq.s32.totalorder %s14, 1
    %p81 = por %p79, %p80
    %p82 = scmp.ne.s32.totalorder %s71, %s72
    %p83 = scmp.eq.s32.totalorder %s14, 0
    %p84 = por %p82, %p83
    %p85 = scmp.ne.s32.totalorder %s71, %s72
    %p86 = scmp.eq.s32.totalorder %s15, 1
    %p87 = por %p85, %p86
    %p89 = scmp.ne.s32.totalorder %s72, %s88
    %p90 = scmp.eq.s32.totalorder %s15, 0
    %p91 = por %p89, %p90
    %s93 = sadd.s32 %s92, 1
    %p96 = scmp.eq.s32.totalorder %s9, 1
    %p97 = scmp.ne.s32.totalorder %s92, %s94
    %p98 = scmp.eq.s32.totalorder %s9, 0
    %p99 = por %p97, %p98
    %p100 = scmp.ne.s32.totalorder %s92, %s94
    %p101 = scmp.eq.s32.totalorder %s14, 1
    %p102 = por %p100, %p101
    %p103 = scmp.ne.s32.totalorder %s94, %s95
    %p104 = scmp.eq.s32.totalorder %s14, 0
    %p105 = por %p103, %p104
    %p106 = scmp.ne.s32.totalorder %s94, %s95
    %p107 = scmp.eq.s32.totalorder %s15, 1
    %p108 = por %p106, %p107
    %p110 = scmp.ne.s32.totalorder %s95, %s109
    %p111 = scmp.eq.s32.totalorder %s15, 0
    %p112 = por %p110, %p111
    %s113 = sadd.s32 %s16, %s17
    %s114 = sadd.s32 %s35, %s31
    %s115 = ssub.s32 %s113, %s114
    %p116 = scmp.eq.s32.totalorder %s115, 0
    %s118 = sadd.s32 %s117, 1
    %s119 = scalar_select %p116, %s117, %s118
    %p122 = pneg %p116
    %p123 = scmp.eq.s32.totalorder %s9, 1
    %p124 = por %p122, %p123
    %p125 = scmp.ne.s32.totalorder %s117, %s120
    %p126 = scmp.eq.s32.totalorder %s9, 0
    %p127 = por %p125, %p126
    %p128 = scmp.ne.s32.totalorder %s117, %s120
    %p129 = scmp.eq.s32.totalorder %s14, 1
    %p130 = por %p128, %p129
    %p131 = scmp.ne.s32.totalorder %s120, %s121
    %p132 = scmp.eq.s32.totalorder %s14, 0
    %p133 = por %p131, %p132
    %p134 = scmp.ne.s32.totalorder %s120, %s121
    %p135 = scmp.eq.s32.totalorder %s15, 1
    %p136 = por %p134, %p135
    %p138 = scmp.ne.s32.totalorder %s121, %s137
    %p139 = scmp.eq.s32.totalorder %s15, 0
    %p140 = por %p138, %p139
    %p141 = scmp.le.s32.totalorder 1, %s9
    %p142 = scmp.lt.s32.totalorder %s9, 3
    %p143 = pnand %p141, %p142
    %p144 = pneg %p143
    // Predicated region
    $region9: #{basic_block_forward.2} parent=5 // pred_check
      _
    $region10: #{basic_block_forward.2} parent=5 // pred_check_branch
      %146 = sbr.rel (%p143) target = $region12
    $region11: #{basic_block_forward.2} parent=5 // pred_region
      %s147 = ssub.s32 %s9, 1
      // Predicated region
      $region13: #{basic_block_forward.2} parent=11 // pred_check
        %p148 = pneg %p84
      $region14: #{basic_block_forward.2} parent=11 // pred_check_branch
        %150 = sbr.rel (%p148) target = $region16
      $region15: #{basic_block_forward.2} parent=11 // pred_region
        %s151 = smul.u32 16, %s21
        %p152 = scmp.lt.s32.totalorder %s151, 15
        %s153 = scalar_select %p152, %s151, 15
        %s154 = smul.addr %s153, 4
        %s155 = scalar_lea.vmem %s1, %s154
        %s156 = smul.u32 16, %s21
      $region16: #{basic_block_forward.2} parent=11 // pred_fallthru
        _
      // Predicated region
      $region17: #{basic_block_forward.2} parent=11 // pred_check
        %p157 = pneg %p105
      $region18: #{basic_block_forward.2} parent=11 // pred_check_branch
        %159 = sbr.rel (%p157) target = $region20
      $region19: #{basic_block_forward.2} parent=11 // pred_region
        _
      $region20: #{basic_block_forward.2} parent=11 // pred_fallthru
        _
    $region12: #{basic_block_forward.2} parent=5 // pred_fallthru
      _
    %p160 = scmp.lt.s32.totalorder %s9, 2
    // Predicated region
    $region21: #{basic_block_forward.2} parent=5 // pred_check
      %p161 = pneg %p160
    $region22: #{basic_block_forward.2} parent=5 // pred_check_branch
      %163 = sbr.rel (%p161) target = $region24
    $region23: #{basic_block_forward.2} parent=5 // pred_region
      // Predicated region
      $region25: #{basic_block_forward.2} parent=23 // pred_check
        %p164 = pneg %p52
      $region26: #{basic_block_forward.2} parent=23 // pred_check_branch
        %166 = sbr.rel (%p164) target = $region28
      $region27: #{basic_block_forward.2} parent=23 // pred_region
        %s167 = sadd.s32 %s16, %s17
        %p168 = scmp.lt.s32.totalorder %s167, 1
        %s169 = scalar_select %p168, %s167, 1
        %p170 = scmp.lt.s32.totalorder %s18, 0
        %s171 = scalar_select %p170, %s18, 0
        %s172 = smul.addr %s169, 54
        %s173 = sadd.s32 %s171, %s172
        %s174 = smul.addr %s173, 4
        %s175 = scalar_lea.vmem %s0, %s174
        %s176 = sadd.s32 %s16, %s17
      $region28: #{basic_block_forward.2} parent=23 // pred_fallthru
        _
    $region24: #{basic_block_forward.2} parent=5 // pred_fallthru
      _
    %p177 = scmp.le.s32.totalorder 1, %s9
    %p178 = scmp.lt.s32.totalorder %s9, 3
    %p179 = pnand %p177, %p178
    %p180 = pneg %p179
    // Predicated region
    $region29: #{basic_block_forward.2} parent=5 // pred_check
      _
    $region30: #{basic_block_forward.2} parent=5 // pred_check_branch
      %182 = sbr.rel (%p179) target = $region32
    $region31: #{basic_block_forward.2} parent=5 // pred_region
      %s183 = ssub.s32 %s9, 1
      %s184 = sadd.s32 %s19, %s20
      %p185 = scmp.lt.s32.totalorder %s184, 1
      %s186 = scalar_select %p185, %s184, 1
      %p187 = scmp.lt.s32.totalorder %s21, 0
      %s188 = scalar_select %p187, %s21, 0
      %s189 = smul.addr %s186, 54
      %s190 = sadd.s32 %s188, %s189
      %s191 = smul.addr %s190, 4
      %s192 = scalar_lea.vmem %s0, %s191
      %p193 = pneg %p58
      %p194 = pneg %p55
      %s195 = smul.u32 16, %s21
      %p196 = scmp.lt.s32.totalorder %s195, 15
      %s197 = scalar_select %p196, %s195, 15
      %s198 = smul.addr %s197, 4
      %s199 = scalar_lea.vmem %s1, %s198
      %p200 = pneg %p84
      %p201 = pneg %p81
      %p202 = pneg %p105
      %p203 = pneg %p102
      %p204 = pneg %p133
      %p205 = pneg %p130
      %s206 = sadd.s32 %s19, %s20
      %p207 = scmp.lt.s32.totalorder %s206, 1
      %s208 = scalar_select %p207, %s206, 1
      %s209 = smul.addr %s208, 32
      %s210 = smul.addr %s209, 4
      %s211 = scalar_lea.vmem %s3, %s210
      %s212 = sadd.s32 %s19, %s20
      %p213 = scmp.lt.s32.totalorder %s212, 1
      %s214 = scalar_select %p213, %s212, 1
      %p215 = scmp.lt.s32.totalorder %s21, 0
      %s216 = scalar_select %p215, %s21, 0
      %s217 = smul.addr %s214, 54
      %s218 = sadd.s32 %s216, %s217
      %s219 = smul.addr %s218, 4
      %s220 = scalar_lea.vmem %s0, %s219
      %s221 = sadd.s32 %s19, %s20
      %s222 = smul.u32 16, %s21
      %p223 = scmp.lt.s32.totalorder %s222, 15
      %s224 = scalar_select %p223, %s222, 15
      %s225 = smul.addr %s224, 4
      %s226 = scalar_lea.vmem %s1, %s225
      %s227 = smul.u32 16, %s21
      %s228 = sadd.s32 %s19, %s20
      %p229 = scmp.lt.s32.totalorder %s228, 1
      %s230 = scalar_select %p229, %s228, 1
      %s231 = smul.addr %s230, 32
      %s232 = smul.addr %s231, 4
      %s233 = scalar_lea.vmem %s3, %s232
      %s234 = sadd.s32 %s19, %s20
      %p235 = scmp.eq.s32.totalorder %s21, 0
      // Predicated region
      $region33: #{basic_block_forward.2} parent=31 // pred_check
        %p236 = pneg %p235
      $region34: #{basic_block_forward.2} parent=31 // pred_check_branch
        %238 = sbr.rel (%p236) target = $region36
      $region35: #{basic_block_forward.2} parent=31 // pred_region
        %239 = vst [vmem:[#allocation2] sm:$0xff] 0.0
        %240 = vst [vmem:[#allocation2 + $0x8] sm:$0xff] 0.0
        %241 = vst [vmem:[#allocation2 + $0x10] sm:$0xff] 0.0
        %242 = vst [vmem:[#allocation2 + $0x18] sm:$0xff] 0.0
        %243 = vst [vmem:[#allocation2 + $0x20] sm:$0xff] 0.0
        %244 = vst [vmem:[#allocation2 + $0x28] sm:$0xff] 0.0
        %245 = vst [vmem:[#allocation2 + $0x30] sm:$0xff] 0.0
        %246 = vst [vmem:[#allocation2 + $0x38] sm:$0xff] 0.0
        %247 = vst [vmem:[#allocation2 + $0x40] sm:$0xff] 0.0
        %248 = vst [vmem:[#allocation2 + $0x48] sm:$0xff] 0.0
        %249 = vst [vmem:[#allocation2 + $0x50] sm:$0xff] 0.0
        %250 = vst [vmem:[#allocation2 + $0x58] sm:$0xff] 0.0
        %251 = vst [vmem:[#allocation2 + $0x60] sm:$0xff] 0.0
        %252 = vst [vmem:[#allocation2 + $0x68] sm:$0xff] 0.0
        %253 = vst [vmem:[#allocation2 + $0x70] sm:$0xff] 0.0
        %254 = vst [vmem:[#allocation2 + $0x78] sm:$0xff] 0.0
        %255 = vst [vmem:[#allocation2 + $0x80] sm:$0xff] 0.0
        %256 = vst [vmem:[#allocation2 + $0x88] sm:$0xff] 0.0
        %257 = vst [vmem:[#allocation2 + $0x90] sm:$0xff] 0.0
        %258 = vst [vmem:[#allocation2 + $0x98] sm:$0xff] 0.0
        %259 = vst [vmem:[#allocation2 + $0xa0] sm:$0xff] 0.0
        %260 = vst [vmem:[#allocation2 + $0xa8] sm:$0xff] 0.0
        %261 = vst [vmem:[#allocation2 + $0xb0] sm:$0xff] 0.0
        %262 = vst [vmem:[#allocation2 + $0xb8] sm:$0xff] 0.0
        %263 = vst [vmem:[#allocation2 + $0xc0] sm:$0xff] 0.0
        %264 = vst [vmem:[#allocation2 + $0xc8] sm:$0xff] 0.0
        %265 = vst [vmem:[#allocation2 + $0xd0] sm:$0xff] 0.0
        %266 = vst [vmem:[#allocation2 + $0xd8] sm:$0xff] 0.0
        %267 = vst [vmem:[#allocation2 + $0xe0] sm:$0xff] 0.0
        %268 = vst [vmem:[#allocation2 + $0xe8] sm:$0xff] 0.0
        %269 = vst [vmem:[#allocation2 + $0xf0] sm:$0xff] 0.0
        %270 = vst [vmem:[#allocation2 + $0xf8] sm:$0xff] 0.0
      $region36: #{basic_block_forward.2} parent=31 // pred_fallthru
        _
      %v271 = vld [vmem:[#allocation2] sm:$0xff]
      %v272 = vld [vmem:[#allocation2 + $0x8] sm:$0xff]
      %v273 = vld [vmem:[#allocation2 + $0x10] sm:$0xff]
      %v274 = vld [vmem:[#allocation2 + $0x18] sm:$0xff]
      %v275 = vld [vmem:[#allocation2 + $0x20] sm:$0xff]
      %v276 = vld [vmem:[#allocation2 + $0x28] sm:$0xff]
      %v277 = vld [vmem:[#allocation2 + $0x30] sm:$0xff]
      %v278 = vld [vmem:[#allocation2 + $0x38] sm:$0xff]
      %v279 = vld [vmem:[#allocation2 + $0x40] sm:$0xff]
      %v280 = vld [vmem:[#allocation2 + $0x48] sm:$0xff]
      %v281 = vld [vmem:[#allocation2 + $0x50] sm:$0xff]
      %v282 = vld [vmem:[#allocation2 + $0x58] sm:$0xff]
      %v283 = vld [vmem:[#allocation2 + $0x60] sm:$0xff]
      %v284 = vld [vmem:[#allocation2 + $0x68] sm:$0xff]
      %v285 = vld [vmem:[#allocation2 + $0x70] sm:$0xff]
      %v286 = vld [vmem:[#allocation2 + $0x78] sm:$0xff]
      %v287 = vld [vmem:[#allocation2 + $0x80] sm:$0xff]
      %v288 = vld [vmem:[#allocation2 + $0x88] sm:$0xff]
      %v289 = vld [vmem:[#allocation2 + $0x90] sm:$0xff]
      %v290 = vld [vmem:[#allocation2 + $0x98] sm:$0xff]
      %v291 = vld [vmem:[#allocation2 + $0xa0] sm:$0xff]
      %v292 = vld [vmem:[#allocation2 + $0xa8] sm:$0xff]
      %v293 = vld [vmem:[#allocation2 + $0xb0] sm:$0xff]
      %v294 = vld [vmem:[#allocation2 + $0xb8] sm:$0xff]
      %v295 = vld [vmem:[#allocation2 + $0xc0] sm:$0xff]
      %v296 = vld [vmem:[#allocation2 + $0xc8] sm:$0xff]
      %v297 = vld [vmem:[#allocation2 + $0xd0] sm:$0xff]
      %v298 = vld [vmem:[#allocation2 + $0xd8] sm:$0xff]
      %v299 = vld [vmem:[#allocation2 + $0xe0] sm:$0xff]
      %v300 = vld [vmem:[#allocation2 + $0xe8] sm:$0xff]
      %v301 = vld [vmem:[#allocation2 + $0xf0] sm:$0xff]
      %v302 = vld [vmem:[#allocation2 + $0xf8] sm:$0xff]
      %v303 = vld [vmem:[%s220] sm:$0xf]
      %v304 = vld [vmem:[%s220 + $0x4] sm:$0xf]
      %v305 = vld [vmem:[%s220 + $0xc] sm:$0xf]
      %v306 = vld [vmem:[%s220 + $0x10] sm:$0xf]
      %v307 = vld [vmem:[%s220 + $0x18] sm:$0xf]
      %v308 = vld [vmem:[%s220 + $0x1c] sm:$0xf]
      %v309 = vld [vmem:[%s220 + $0x24] sm:$0xf]
      %v310 = vld [vmem:[%s220 + $0x28] sm:$0xf]
      %v311 = vld [vmem:[%s220 + $0x30] sm:$0xf]
      %v312 = vld [vmem:[%s220 + $0x34] sm:$0xf]
      %v313 = vld [vmem:[%s220 + $0x3c] sm:$0xf]
      %v314 = vld [vmem:[%s220 + $0x40] sm:$0xf]
      %v315 = vld [vmem:[%s220 + $0x48] sm:$0xf]
      %v316 = vld [vmem:[%s220 + $0x4c] sm:$0xf]
      %v317 = vld [vmem:[%s220 + $0x54] sm:$0xf]
      %v318 = vld [vmem:[%s220 + $0x58] sm:$0xf]
      %v319 = vld [vmem:[%s220 + $0x60] sm:$0xf]
      %v320 = vld [vmem:[%s220 + $0x64] sm:$0xf]
      %v321 = vld [vmem:[%s220 + $0x6c] sm:$0xf]
      %v322 = vld [vmem:[%s220 + $0x70] sm:$0xf]
      %v323 = vld [vmem:[%s220 + $0x78] sm:$0xf]
      %v324 = vld [vmem:[%s220 + $0x7c] sm:$0xf]
      %v325 = vld [vmem:[%s220 + $0x84] sm:$0xf]
      %v326 = vld [vmem:[%s220 + $0x88] sm:$0xf]
      %v327 = vld [vmem:[%s220 + $0x90] sm:$0xf]
      %v328 = vld [vmem:[%s220 + $0x94] sm:$0xf]
      %v329 = vld [vmem:[%s220 + $0x9c] sm:$0xf]
      %v330 = vld [vmem:[%s220 + $0xa0] sm:$0xf]
      %v331 = vld [vmem:[%s220 + $0xa8] sm:$0xf]
      %v332 = vld [vmem:[%s220 + $0xac] sm:$0xf]
      %v333 = vld [vmem:[%s220 + $0xb4] sm:$0xf]
      %v334 = vld [vmem:[%s220 + $0xb8] sm:$0xf]
      %v335 = vld [vmem:[%s226] sm:$0xf]
      %v336 = vld [vmem:[%s226 + $0x4] sm:$0xf]
      %v337 = vld [vmem:[%s226 + $0x8] sm:$0xf]
      %v338 = vld [vmem:[%s226 + $0xc] sm:$0xf]
      %v339 = vld [vmem:[%s226 + $0x10] sm:$0xf]
      %v340 = vld [vmem:[%s226 + $0x14] sm:$0xf]
      %v341 = vld [vmem:[%s226 + $0x18] sm:$0xf]
      %v342 = vld [vmem:[%s226 + $0x1c] sm:$0xf]
      %v343 = vld [vmem:[%s226 + $0x20] sm:$0xf]
      %v344 = vld [vmem:[%s226 + $0x24] sm:$0xf]
      %v345 = vld [vmem:[%s226 + $0x28] sm:$0xf]
      %v346 = vld [vmem:[%s226 + $0x2c] sm:$0xf]
      %v347 = vld [vmem:[%s226 + $0x30] sm:$0xf]
      %v348 = vld [vmem:[%s226 + $0x34] sm:$0xf]
      %v349 = vld [vmem:[%s226 + $0x38] sm:$0xf]
      %v350 = vld [vmem:[%s226 + $0x3c] sm:$0xf]
      %v383 = vunpack.c.l.b16 %v303
      %v384 = vunpack.c.l.b16 %v304
      %v385 = vunpack.c.l.b16 %v305
      %v386 = vunpack.c.l.b16 %v306
      %v387 = vunpack.c.l.b16 %v307
      %v388 = vunpack.c.l.b16 %v308
      %v389 = vunpack.c.l.b16 %v309
      %v390 = vunpack.c.l.b16 %v310
      %v391 = vunpack.c.l.b16 %v311
      %v392 = vunpack.c.l.b16 %v312
      %v393 = vunpack.c.l.b16 %v313
      %v394 = vunpack.c.l.b16 %v314
      %v395 = vunpack.c.l.b16 %v315
      %v396 = vunpack.c.l.b16 %v316
      %v397 = vunpack.c.l.b16 %v317
      %v398 = vunpack.c.l.b16 %v318
      %v399 = vunpack.c.l.b16 %v319
      %v400 = vunpack.c.l.b16 %v320
      %v401 = vunpack.c.l.b16 %v321
      %v402 = vunpack.c.l.b16 %v322
      %v403 = vunpack.c.l.b16 %v323
      %v404 = vunpack.c.l.b16 %v324
      %v405 = vunpack.c.l.b16 %v325
      %v406 = vunpack.c.l.b16 %v326
      %v407 = vunpack.c.l.b16 %v327
      %v408 = vunpack.c.l.b16 %v328
      %v409 = vunpack.c.l.b16 %v329
      %v410 = vunpack.c.l.b16 %v330
      %v411 = vunpack.c.l.b16 %v331
      %v412 = vunpack.c.l.b16 %v332
      %v413 = vunpack.c.l.b16 %v333
      %v414 = vunpack.c.l.b16 %v334
      %v415 = vpack.c.b16 %v384, %v383
      %v416 = vpack.c.b16 %v386, %v385
      %v417 = vpack.c.b16 %v388, %v387
      %v418 = vpack.c.b16 %v390, %v389
      %v419 = vpack.c.b16 %v392, %v391
      %v420 = vpack.c.b16 %v394, %v393
      %v421 = vpack.c.b16 %v396, %v395
      %v422 = vpack.c.b16 %v398, %v397
      %v423 = vpack.c.b16 %v400, %v399
      %v424 = vpack.c.b16 %v402, %v401
      %v425 = vpack.c.b16 %v404, %v403
      %v426 = vpack.c.b16 %v406, %v405
      %v427 = vpack.c.b16 %v408, %v407
      %v428 = vpack.c.b16 %v410, %v409
      %v429 = vpack.c.b16 %v412, %v411
      %v430 = vpack.c.b16 %v414, %v413
      %v463 = vunpack.c.l.b16 %v335
      %v464 = vunpack.c.l.b16 %v336
      %v465 = vunpack.c.l.b16 %v337
      %v466 = vunpack.c.l.b16 %v338
      %v467 = vunpack.c.l.b16 %v339
      %v468 = vunpack.c.l.b16 %v340
      %v469 = vunpack.c.l.b16 %v341
      %v470 = vunpack.c.l.b16 %v342
      %v471 = vunpack.c.l.b16 %v343
      %v472 = vunpack.c.l.b16 %v344
      %v473 = vunpack.c.l.b16 %v345
      %v474 = vunpack.c.l.b16 %v346
      %v475 = vunpack.c.l.b16 %v347
      %v476 = vunpack.c.l.b16 %v348
      %v477 = vunpack.c.l.b16 %v349
      %v478 = vunpack.c.l.b16 %v350
      %v479 = vpack.c.b16 %v464, %v463
      %v480 = vpack.c.b16 %v466, %v465
      %v481 = vpack.c.b16 %v468, %v467
      %v482 = vpack.c.b16 %v470, %v469
      %v483 = vpack.c.b16 %v472, %v471
      %v484 = vpack.c.b16 %v474, %v473
      %v485 = vpack.c.b16 %v476, %v475
      %v486 = vpack.c.b16 %v478, %v477
      %495 = vmatpush.bf16.msra.mxu0 %v486
      %496 = vmatpush.bf16.msra.mxu0 %v485
      %497 = vmatpush.bf16.msra.mxu0 %v484
      %498 = vmatpush.bf16.msra.mxu0 %v483
      %499 = vmatpush.bf16.msra.mxu0 %v482
      %500 = vmatpush.bf16.msra.mxu0 %v481
      %501 = vmatpush.bf16.msra.mxu0 %v480
      %502 = vmatpush.bf16.msra.mxu0 %v479
      %503 = vmatmul.bf16.gmra.mxu0 %v415
      %v504 = vpop.f32.mrf.mxu0
      %v505 = vadd.f32 0.0, %v504
      %v506 = vpop.f32.mrf.mxu0
      %v507 = vadd.f32 0.0, %v506
      %508 = vmatmul.bf16.gmra.mxu0 %v416
      %v509 = vpop.f32.mrf.mxu0
      %v510 = vadd.f32 0.0, %v509
      %v511 = vpop.f32.mrf.mxu0
      %v512 = vadd.f32 0.0, %v511
      %513 = vmatmul.bf16.gmra.mxu0 %v417
      %v514 = vpop.f32.mrf.mxu0
      %v515 = vadd.f32 0.0, %v514
      %v516 = vpop.f32.mrf.mxu0
      %v517 = vadd.f32 0.0, %v516
      %518 = vmatmul.bf16.gmra.mxu0 %v418
      %v519 = vpop.f32.mrf.mxu0
      %v520 = vadd.f32 0.0, %v519
      %v521 = vpop.f32.mrf.mxu0
      %v522 = vadd.f32 0.0, %v521
      %523 = vmatmul.bf16.gmra.mxu0 %v419
      %v524 = vpop.f32.mrf.mxu0
      %v525 = vadd.f32 0.0, %v524
      %v526 = vpop.f32.mrf.mxu0
      %v527 = vadd.f32 0.0, %v526
      %528 = vmatmul.bf16.gmra.mxu0 %v420
      %v529 = vpop.f32.mrf.mxu0
      %v530 = vadd.f32 0.0, %v529
      %v531 = vpop.f32.mrf.mxu0
      %v532 = vadd.f32 0.0, %v531
      %533 = vmatmul.bf16.gmra.mxu0 %v421
      %v534 = vpop.f32.mrf.mxu0
      %v535 = vadd.f32 0.0, %v534
      %v536 = vpop.f32.mrf.mxu0
      %v537 = vadd.f32 0.0, %v536
      %538 = vmatmul.bf16.gmra.mxu0 %v422
      %v539 = vpop.f32.mrf.mxu0
      %v540 = vadd.f32 0.0, %v539
      %v541 = vpop.f32.mrf.mxu0
      %v542 = vadd.f32 0.0, %v541
      %543 = vmatmul.bf16.gmra.mxu0 %v423
      %v544 = vpop.f32.mrf.mxu0
      %v545 = vadd.f32 0.0, %v544
      %v546 = vpop.f32.mrf.mxu0
      %v547 = vadd.f32 0.0, %v546
      %548 = vmatmul.bf16.gmra.mxu0 %v424
      %v549 = vpop.f32.mrf.mxu0
      %v550 = vadd.f32 0.0, %v549
      %v551 = vpop.f32.mrf.mxu0
      %v552 = vadd.f32 0.0, %v551
      %553 = vmatmul.bf16.gmra.mxu0 %v425
      %v554 = vpop.f32.mrf.mxu0
      %v555 = vadd.f32 0.0, %v554
      %v556 = vpop.f32.mrf.mxu0
      %v557 = vadd.f32 0.0, %v556
      %558 = vmatmul.bf16.gmra.mxu0 %v426
      %v559 = vpop.f32.mrf.mxu0
      %v560 = vadd.f32 0.0, %v559
      %v561 = vpop.f32.mrf.mxu0
      %v562 = vadd.f32 0.0, %v561
      %563 = vmatmul.bf16.gmra.mxu0 %v427
      %v564 = vpop.f32.mrf.mxu0
      %v565 = vadd.f32 0.0, %v564
      %v566 = vpop.f32.mrf.mxu0
      %v567 = vadd.f32 0.0, %v566
      %568 = vmatmul.bf16.gmra.mxu0 %v428
      %v569 = vpop.f32.mrf.mxu0
      %v570 = vadd.f32 0.0, %v569
      %v571 = vpop.f32.mrf.mxu0
      %v572 = vadd.f32 0.0, %v571
      %573 = vmatmul.bf16.gmra.mxu0 %v429
      %v574 = vpop.f32.mrf.mxu0
      %v575 = vadd.f32 0.0, %v574
      %v576 = vpop.f32.mrf.mxu0
      %v577 = vadd.f32 0.0, %v576
      %578 = vmatmul.bf16.gmra.mxu0 %v430
      %v579 = vpop.f32.mrf.mxu0
      %v580 = vadd.f32 0.0, %v579
      %v581 = vpop.f32.mrf.mxu0
      %v582 = vadd.f32 0.0, %v581
      %583 = vdwg.mxu0
      %v584 = vadd.f32 %v271, %v505
      %v585 = vadd.f32 %v272, %v507
      %v586 = vadd.f32 %v273, %v510
      %v587 = vadd.f32 %v274, %v512
      %v588 = vadd.f32 %v275, %v515
      %v589 = vadd.f32 %v276, %v517
      %v590 = vadd.f32 %v277, %v520
      %v591 = vadd.f32 %v278, %v522
      %v592 = vadd.f32 %v279, %v525
      %v593 = vadd.f32 %v280, %v527
      %v594 = vadd.f32 %v281, %v530
      %v595 = vadd.f32 %v282, %v532
      %v596 = vadd.f32 %v283, %v535
      %v597 = vadd.f32 %v284, %v537
      %v598 = vadd.f32 %v285, %v540
      %v599 = vadd.f32 %v286, %v542
      %v600 = vadd.f32 %v287, %v545
      %v601 = vadd.f32 %v288, %v547
      %v602 = vadd.f32 %v289, %v550
      %v603 = vadd.f32 %v290, %v552
      %v604 = vadd.f32 %v291, %v555
      %v605 = vadd.f32 %v292, %v557
      %v606 = vadd.f32 %v293, %v560
      %v607 = vadd.f32 %v294, %v562
      %v608 = vadd.f32 %v295, %v565
      %v609 = vadd.f32 %v296, %v567
      %v610 = vadd.f32 %v297, %v570
      %v611 = vadd.f32 %v298, %v572
      %v612 = vadd.f32 %v299, %v575
      %v613 = vadd.f32 %v300, %v577
      %v614 = vadd.f32 %v301, %v580
      %v615 = vadd.f32 %v302, %v582
      %v616 = vld [vmem:[%s220] sm:$0xf]
      %v617 = vld [vmem:[%s220 + $0x4] sm:$0xf]
      %v618 = vld [vmem:[%s220 + $0x8] sm:$0x1]
      %v619 = vld [vmem:[%s220 + $0xc] sm:$0xf]
      %v620 = vld [vmem:[%s220 + $0x10] sm:$0xf]
      %v621 = vld [vmem:[%s220 + $0x14] sm:$0x1]
      %v622 = vld [vmem:[%s220 + $0x18] sm:$0xf]
      %v623 = vld [vmem:[%s220 + $0x1c] sm:$0xf]
      %v624 = vld [vmem:[%s220 + $0x20] sm:$0x1]
      %v625 = vld [vmem:[%s220 + $0x24] sm:$0xf]
      %v626 = vld [vmem:[%s220 + $0x28] sm:$0xf]
      %v627 = vld [vmem:[%s220 + $0x2c] sm:$0x1]
      %v628 = vld [vmem:[%s220 + $0x30] sm:$0xf]
      %v629 = vld [vmem:[%s220 + $0x34] sm:$0xf]
      %v630 = vld [vmem:[%s220 + $0x38] sm:$0x1]
      %v631 = vld [vmem:[%s220 + $0x3c] sm:$0xf]
      %v632 = vld [vmem:[%s220 + $0x40] sm:$0xf]
      %v633 = vld [vmem:[%s220 + $0x44] sm:$0x1]
      %v634 = vld [vmem:[%s220 + $0x48] sm:$0xf]
      %v635 = vld [vmem:[%s220 + $0x4c] sm:$0xf]
      %v636 = vld [vmem:[%s220 + $0x50] sm:$0x1]
      %v637 = vld [vmem:[%s220 + $0x54] sm:$0xf]
      %v638 = vld [vmem:[%s220 + $0x58] sm:$0xf]
      %v639 = vld [vmem:[%s220 + $0x5c] sm:$0x1]
      %v640 = vld [vmem:[%s220 + $0x60] sm:$0xf]
      %v641 = vld [vmem:[%s220 + $0x64] sm:$0xf]
      %v642 = vld [vmem:[%s220 + $0x68] sm:$0x1]
      %v643 = vld [vmem:[%s220 + $0x6c] sm:$0xf]
      %v644 = vld [vmem:[%s220 + $0x70] sm:$0xf]
      %v645 = vld [vmem:[%s220 + $0x74] sm:$0x1]
      %v646 = vld [vmem:[%s220 + $0x78] sm:$0xf]
      %v647 = vld [vmem:[%s220 + $0x7c] sm:$0xf]
      %v648 = vld [vmem:[%s220 + $0x80] sm:$0x1]
      %v649 = vld [vmem:[%s220 + $0x84] sm:$0xf]
      %v650 = vld [vmem:[%s220 + $0x88] sm:$0xf]
      %v651 = vld [vmem:[%s220 + $0x8c] sm:$0x1]
      %v652 = vld [vmem:[%s220 + $0x90] sm:$0xf]
      %v653 = vld [vmem:[%s220 + $0x94] sm:$0xf]
      %v654 = vld [vmem:[%s220 + $0x98] sm:$0x1]
      %v655 = vld [vmem:[%s220 + $0x9c] sm:$0xf]
      %v656 = vld [vmem:[%s220 + $0xa0] sm:$0xf]
      %v657 = vld [vmem:[%s220 + $0xa4] sm:$0x1]
      %v658 = vld [vmem:[%s220 + $0xa8] sm:$0xf]
      %v659 = vld [vmem:[%s220 + $0xac] sm:$0xf]
      %v660 = vld [vmem:[%s220 + $0xb0] sm:$0x1]
      %v661 = vld [vmem:[%s220 + $0xb4] sm:$0xf]
      %v662 = vld [vmem:[%s220 + $0xb8] sm:$0xf]
      %v663 = vld [vmem:[%s220 + $0xbc] sm:$0x1]
      %vm664 = vsmask.f32 3328
      %vm665 = vsmask.f32 7440
      %vm666 = vmor %vm664, %vm665
      %v668 = vshrl.u32 %v616, 16
      %v670 = vrot.slane %v668, 4
      %v671 = vshll.u32 %v616, 16
      %v673 = vrot.slane %v671, 5
      %v674 = vor.u32 %v670, %v673
      %v675 = vrot.slane %v674, 4
      %v677 = vshll.u32 %v617, 16
      %v679 = vrot.slane %v677, 5
      %v680 = vsel %vm666, %v675, %v679
      %v681 = vshrl.u32 %v617, 16
      %v683 = vrot.slane %v681, 4
      %v684 = vor.u32 %v683, %v679
      %v685 = vrot.slane %v684, 4
      %v687 = vshll.u32 %v618, 16
      %v689 = vrot.slane %v687, 5
      %v690 = vsel %vm666, %v685, %v689
      %v692 = vshrl.u32 %v619, 16
      %v694 = vrot.slane %v692, 4
      %v695 = vshll.u32 %v619, 16
      %v697 = vrot.slane %v695, 5
      %v698 = vor.u32 %v694, %v697
      %v699 = vrot.slane %v698, 4
      %v701 = vshll.u32 %v620, 16
      %v703 = vrot.slane %v701, 5
      %v704 = vsel %vm666, %v699, %v703
      %v705 = vshrl.u32 %v620, 16
      %v707 = vrot.slane %v705, 4
      %v708 = vor.u32 %v707, %v703
      %v709 = vrot.slane %v708, 4
      %v711 = vshll.u32 %v621, 16
      %v713 = vrot.slane %v711, 5
      %v714 = vsel %vm666, %v709, %v713
      %v716 = vshrl.u32 %v622, 16
      %v718 = vrot.slane %v716, 4
      %v719 = vshll.u32 %v622, 16
      %v721 = vrot.slane %v719, 5
      %v722 = vor.u32 %v718, %v721
      %v723 = vrot.slane %v722, 4
      %v725 = vshll.u32 %v623, 16
      %v727 = vrot.slane %v725, 5
      %v728 = vsel %vm666, %v723, %v727
      %v729 = vshrl.u32 %v623, 16
      %v731 = vrot.slane %v729, 4
      %v732 = vor.u32 %v731, %v727
      %v733 = vrot.slane %v732, 4
      %v735 = vshll.u32 %v624, 16
      %v737 = vrot.slane %v735, 5
      %v738 = vsel %vm666, %v733, %v737
      %v740 = vshrl.u32 %v625, 16
      %v742 = vrot.slane %v740, 4
      %v743 = vshll.u32 %v625, 16
      %v745 = vrot.slane %v743, 5
      %v746 = vor.u32 %v742, %v745
      %v747 = vrot.slane %v746, 4
      %v749 = vshll.u32 %v626, 16
      %v751 = vrot.slane %v749, 5
      %v752 = vsel %vm666, %v747, %v751
      %v753 = vshrl.u32 %v626, 16
      %v755 = vrot.slane %v753, 4
      %v756 = vor.u32 %v755, %v751
      %v757 = vrot.slane %v756, 4
      %v759 = vshll.u32 %v627, 16
      %v761 = vrot.slane %v759, 5
      %v762 = vsel %vm666, %v757, %v761
      %v764 = vshrl.u32 %v628, 16
      %v766 = vrot.slane %v764, 4
      %v767 = vshll.u32 %v628, 16
      %v769 = vrot.slane %v767, 5
      %v770 = vor.u32 %v766, %v769
      %v771 = vrot.slane %v770, 4
      %v773 = vshll.u32 %v629, 16
      %v775 = vrot.slane %v773, 5
      %v776 = vsel %vm666, %v771, %v775
      %v777 = vshrl.u32 %v629, 16
      %v779 = vrot.slane %v777, 4
      %v780 = vor.u32 %v779, %v775
      %v781 = vrot.slane %v780, 4
      %v783 = vshll.u32 %v630, 16
      %v785 = vrot.slane %v783, 5
      %v786 = vsel %vm666, %v781, %v785
      %v788 = vshrl.u32 %v631, 16
      %v790 = vrot.slane %v788, 4
      %v791 = vshll.u32 %v631, 16
      %v793 = vrot.slane %v791, 5
      %v794 = vor.u32 %v790, %v793
      %v795 = vrot.slane %v794, 4
      %v797 = vshll.u32 %v632, 16
      %v799 = vrot.slane %v797, 5
      %v800 = vsel %vm666, %v795, %v799
      %v801 = vshrl.u32 %v632, 16
      %v803 = vrot.slane %v801, 4
      %v804 = vor.u32 %v803, %v799
      %v805 = vrot.slane %v804, 4
      %v807 = vshll.u32 %v633, 16
      %v809 = vrot.slane %v807, 5
      %v810 = vsel %vm666, %v805, %v809
      %v812 = vshrl.u32 %v634, 16
      %v814 = vrot.slane %v812, 4
      %v815 = vshll.u32 %v634, 16
      %v817 = vrot.slane %v815, 5
      %v818 = vor.u32 %v814, %v817
      %v819 = vrot.slane %v818, 4
      %v821 = vshll.u32 %v635, 16
      %v823 = vrot.slane %v821, 5
      %v824 = vsel %vm666, %v819, %v823
      %v825 = vshrl.u32 %v635, 16
      %v827 = vrot.slane %v825, 4
      %v828 = vor.u32 %v827, %v823
      %v829 = vrot.slane %v828, 4
      %v831 = vshll.u32 %v636, 16
      %v833 = vrot.slane %v831, 5
      %v834 = vsel %vm666, %v829, %v833
      %v836 = vshrl.u32 %v637, 16
      %v838 = vrot.slane %v836, 4
      %v839 = vshll.u32 %v637, 16
      %v841 = vrot.slane %v839, 5
      %v842 = vor.u32 %v838, %v841
      %v843 = vrot.slane %v842, 4
      %v845 = vshll.u32 %v638, 16
      %v847 = vrot.slane %v845, 5
      %v848 = vsel %vm666, %v843, %v847
      %v849 = vshrl.u32 %v638, 16
      %v851 = vrot.slane %v849, 4
      %v852 = vor.u32 %v851, %v847
      %v853 = vrot.slane %v852, 4
      %v855 = vshll.u32 %v639, 16
      %v857 = vrot.slane %v855, 5
      %v858 = vsel %vm666, %v853, %v857
      %v860 = vshrl.u32 %v640, 16
      %v862 = vrot.slane %v860, 4
      %v863 = vshll.u32 %v640, 16
      %v865 = vrot.slane %v863, 5
      %v866 = vor.u32 %v862, %v865
      %v867 = vrot.slane %v866, 4
      %v869 = vshll.u32 %v641, 16
      %v871 = vrot.slane %v869, 5
      %v872 = vsel %vm666, %v867, %v871
      %v873 = vshrl.u32 %v641, 16
      %v875 = vrot.slane %v873, 4
      %v876 = vor.u32 %v875, %v871
      %v877 = vrot.slane %v876, 4
      %v879 = vshll.u32 %v642, 16
      %v881 = vrot.slane %v879, 5
      %v882 = vsel %vm666, %v877, %v881
      %v884 = vshrl.u32 %v643, 16
      %v886 = vrot.slane %v884, 4
      %v887 = vshll.u32 %v643, 16
      %v889 = vrot.slane %v887, 5
      %v890 = vor.u32 %v886, %v889
      %v891 = vrot.slane %v890, 4
      %v893 = vshll.u32 %v644, 16
      %v895 = vrot.slane %v893, 5
      %v896 = vsel %vm666, %v891, %v895
      %v897 = vshrl.u32 %v644, 16
      %v899 = vrot.slane %v897, 4
      %v900 = vor.u32 %v899, %v895
      %v901 = vrot.slane %v900, 4
      %v903 = vshll.u32 %v645, 16
      %v905 = vrot.slane %v903, 5
      %v906 = vsel %vm666, %v901, %v905
      %v908 = vshrl.u32 %v646, 16
      %v910 = vrot.slane %v908, 4
      %v911 = vshll.u32 %v646, 16
      %v913 = vrot.slane %v911, 5
      %v914 = vor.u32 %v910, %v913
      %v915 = vrot.slane %v914, 4
      %v917 = vshll.u32 %v647, 16
      %v919 = vrot.slane %v917, 5
      %v920 = vsel %vm666, %v915, %v919
      %v921 = vshrl.u32 %v647, 16
      %v923 = vrot.slane %v921, 4
      %v924 = vor.u32 %v923, %v919
      %v925 = vrot.slane %v924, 4
      %v927 = vshll.u32 %v648, 16
      %v929 = vrot.slane %v927, 5
      %v930 = vsel %vm666, %v925, %v929
      %v932 = vshrl.u32 %v649, 16
      %v934 = vrot.slane %v932, 4
      %v935 = vshll.u32 %v649, 16
      %v937 = vrot.slane %v935, 5
      %v938 = vor.u32 %v934, %v937
      %v939 = vrot.slane %v938, 4
      %v941 = vshll.u32 %v650, 16
      %v943 = vrot.slane %v941, 5
      %v944 = vsel %vm666, %v939, %v943
      %v945 = vshrl.u32 %v650, 16
      %v947 = vrot.slane %v945, 4
      %v948 = vor.u32 %v947, %v943
      %v949 = vrot.slane %v948, 4
      %v951 = vshll.u32 %v651, 16
      %v953 = vrot.slane %v951, 5
      %v954 = vsel %vm666, %v949, %v953
      %v956 = vshrl.u32 %v652, 16
      %v958 = vrot.slane %v956, 4
      %v959 = vshll.u32 %v652, 16
      %v961 = vrot.slane %v959, 5
      %v962 = vor.u32 %v958, %v961
      %v963 = vrot.slane %v962, 4
      %v965 = vshll.u32 %v653, 16
      %v967 = vrot.slane %v965, 5
      %v968 = vsel %vm666, %v963, %v967
      %v969 = vshrl.u32 %v653, 16
      %v971 = vrot.slane %v969, 4
      %v972 = vor.u32 %v971, %v967
      %v973 = vrot.slane %v972, 4
      %v975 = vshll.u32 %v654, 16
      %v977 = vrot.slane %v975, 5
      %v978 = vsel %vm666, %v973, %v977
      %v980 = vshrl.u32 %v655, 16
      %v982 = vrot.slane %v980, 4
      %v983 = vshll.u32 %v655, 16
      %v985 = vrot.slane %v983, 5
      %v986 = vor.u32 %v982, %v985
      %v987 = vrot.slane %v986, 4
      %v989 = vshll.u32 %v656, 16
      %v991 = vrot.slane %v989, 5
      %v992 = vsel %vm666, %v987, %v991
      %v993 = vshrl.u32 %v656, 16
      %v995 = vrot.slane %v993, 4
      %v996 = vor.u32 %v995, %v991
      %v997 = vrot.slane %v996, 4
      %v999 = vshll.u32 %v657, 16
      %v1001 = vrot.slane %v999, 5
      %v1002 = vsel %vm666, %v997, %v1001
      %v1004 = vshrl.u32 %v658, 16
      %v1006 = vrot.slane %v1004, 4
      %v1007 = vshll.u32 %v658, 16
      %v1009 = vrot.slane %v1007, 5
      %v1010 = vor.u32 %v1006, %v1009
      %v1011 = vrot.slane %v1010, 4
      %v1013 = vshll.u32 %v659, 16
      %v1015 = vrot.slane %v1013, 5
      %v1016 = vsel %vm666, %v1011, %v1015
      %v1017 = vshrl.u32 %v659, 16
      %v1019 = vrot.slane %v1017, 4
      %v1020 = vor.u32 %v1019, %v1015
      %v1021 = vrot.slane %v1020, 4
      %v1023 = vshll.u32 %v660, 16
      %v1025 = vrot.slane %v1023, 5
      %v1026 = vsel %vm666, %v1021, %v1025
      %v1028 = vshrl.u32 %v661, 16
      %v1030 = vrot.slane %v1028, 4
      %v1031 = vshll.u32 %v661, 16
      %v1033 = vrot.slane %v1031, 5
      %v1034 = vor.u32 %v1030, %v1033
      %v1035 = vrot.slane %v1034, 4
      %v1037 = vshll.u32 %v662, 16
      %v1039 = vrot.slane %v1037, 5
      %v1040 = vsel %vm666, %v1035, %v1039
      %v1041 = vshrl.u32 %v662, 16
      %v1043 = vrot.slane %v1041, 4
      %v1044 = vor.u32 %v1043, %v1039
      %v1045 = vrot.slane %v1044, 4
      %v1047 = vshll.u32 %v663, 16
      %v1049 = vrot.slane %v1047, 5
      %v1050 = vsel %vm666, %v1045, %v1049
      %s1051 = scalar_lea.vmem %s226, 64
      %v1052 = vld [vmem:[%s1051] sm:$0xf]
      %v1053 = vld [vmem:[%s1051 + $0x4] sm:$0xf]
      %v1054 = vld [vmem:[%s1051 + $0x8] sm:$0xf]
      %v1055 = vld [vmem:[%s1051 + $0xc] sm:$0xf]
      %v1056 = vld [vmem:[%s1051 + $0x10] sm:$0xf]
      %v1057 = vld [vmem:[%s1051 + $0x14] sm:$0xf]
      %v1058 = vld [vmem:[%s1051 + $0x18] sm:$0xf]
      %v1059 = vld [vmem:[%s1051 + $0x1c] sm:$0xf]
      %v1060 = vld [vmem:[%s1051 + $0x20] sm:$0xf]
      %v1061 = vld [vmem:[%s1051 + $0x24] sm:$0xf]
      %v1062 = vld [vmem:[%s1051 + $0x28] sm:$0xf]
      %v1063 = vld [vmem:[%s1051 + $0x2c] sm:$0xf]
      %v1064 = vld [vmem:[%s1051 + $0x30] sm:$0xf]
      %v1065 = vld [vmem:[%s1051 + $0x34] sm:$0xf]
      %v1066 = vld [vmem:[%s1051 + $0x38] sm:$0xf]
      %v1067 = vld [vmem:[%s1051 + $0x3c] sm:$0xf]
      %v1068 = vunpack.c.l.b16 %v680
      %v1069 = vunpack.c.l.b16 %v690
      %v1070 = vunpack.c.l.b16 %v704
      %v1071 = vunpack.c.l.b16 %v714
      %v1072 = vunpack.c.l.b16 %v728
      %v1073 = vunpack.c.l.b16 %v738
      %v1074 = vunpack.c.l.b16 %v752
      %v1075 = vunpack.c.l.b16 %v762
      %v1076 = vunpack.c.l.b16 %v776
      %v1077 = vunpack.c.l.b16 %v786
      %v1078 = vunpack.c.l.b16 %v800
      %v1079 = vunpack.c.l.b16 %v810
      %v1080 = vunpack.c.l.b16 %v824
      %v1081 = vunpack.c.l.b16 %v834
      %v1082 = vunpack.c.l.b16 %v848
      %v1083 = vunpack.c.l.b16 %v858
      %v1084 = vunpack.c.l.b16 %v872
      %v1085 = vunpack.c.l.b16 %v882
      %v1086 = vunpack.c.l.b16 %v896
      %v1087 = vunpack.c.l.b16 %v906
      %v1088 = vunpack.c.l.b16 %v920
      %v1089 = vunpack.c.l.b16 %v930
      %v1090 = vunpack.c.l.b16 %v944
      %v1091 = vunpack.c.l.b16 %v954
      %v1092 = vunpack.c.l.b16 %v968
      %v1093 = vunpack.c.l.b16 %v978
      %v1094 = vunpack.c.l.b16 %v992
      %v1095 = vunpack.c.l.b16 %v1002
      %v1096 = vunpack.c.l.b16 %v1016
      %v1097 = vunpack.c.l.b16 %v1026
      %v1098 = vunpack.c.l.b16 %v1040
      %v1099 = vunpack.c.l.b16 %v1050
      %v1100 = vpack.c.b16 %v1069, %v1068
      %v1101 = vpack.c.b16 %v1071, %v1070
      %v1102 = vpack.c.b16 %v1073, %v1072
      %v1103 = vpack.c.b16 %v1075, %v1074
      %v1104 = vpack.c.b16 %v1077, %v1076
      %v1105 = vpack.c.b16 %v1079, %v1078
      %v1106 = vpack.c.b16 %v1081, %v1080
      %v1107 = vpack.c.b16 %v1083, %v1082
      %v1108 = vpack.c.b16 %v1085, %v1084
      %v1109 = vpack.c.b16 %v1087, %v1086
      %v1110 = vpack.c.b16 %v1089, %v1088
      %v1111 = vpack.c.b16 %v1091, %v1090
      %v1112 = vpack.c.b16 %v1093, %v1092
      %v1113 = vpack.c.b16 %v1095, %v1094
      %v1114 = vpack.c.b16 %v1097, %v1096
      %v1115 = vpack.c.b16 %v1099, %v1098
      %v1148 = vunpack.c.l.b16 %v1052
      %v1149 = vunpack.c.l.b16 %v1053
      %v1150 = vunpack.c.l.b16 %v1054
      %v1151 = vunpack.c.l.b16 %v1055
      %v1152 = vunpack.c.l.b16 %v1056
      %v1153 = vunpack.c.l.b16 %v1057
      %v1154 = vunpack.c.l.b16 %v1058
      %v1155 = vunpack.c.l.b16 %v1059
      %v1156 = vunpack.c.l.b16 %v1060
      %v1157 = vunpack.c.l.b16 %v1061
      %v1158 = vunpack.c.l.b16 %v1062
      %v1159 = vunpack.c.l.b16 %v1063
      %v1160 = vunpack.c.l.b16 %v1064
      %v1161 = vunpack.c.l.b16 %v1065
      %v1162 = vunpack.c.l.b16 %v1066
      %v1163 = vunpack.c.l.b16 %v1067
      %v1164 = vpack.c.b16 %v1149, %v1148
      %v1165 = vpack.c.b16 %v1151, %v1150
      %v1166 = vpack.c.b16 %v1153, %v1152
      %v1167 = vpack.c.b16 %v1155, %v1154
      %v1168 = vpack.c.b16 %v1157, %v1156
      %v1169 = vpack.c.b16 %v1159, %v1158
      %v1170 = vpack.c.b16 %v1161, %v1160
      %v1171 = vpack.c.b16 %v1163, %v1162
      %1180 = vmatpush.bf16.msra.mxu0 %v1171
      %1181 = vmatpush.bf16.msra.mxu0 %v1170
      %1182 = vmatpush.bf16.msra.mxu0 %v1169
      %1183 = vmatpush.bf16.msra.mxu0 %v1168
      %1184 = vmatpush.bf16.msra.mxu0 %v1167
      %1185 = vmatpush.bf16.msra.mxu0 %v1166
      %1186 = vmatpush.bf16.msra.mxu0 %v1165
      %1187 = vmatpush.bf16.msra.mxu0 %v1164
      %1188 = vmatmul.bf16.gmra.mxu0 %v1100
      %v1189 = vpop.f32.mrf.mxu0
      %v1190 = vadd.f32 0.0, %v1189
      %v1191 = vpop.f32.mrf.mxu0
      %v1192 = vadd.f32 0.0, %v1191
      %1193 = vmatmul.bf16.gmra.mxu0 %v1101
      %v1194 = vpop.f32.mrf.mxu0
      %v1195 = vadd.f32 0.0, %v1194
      %v1196 = vpop.f32.mrf.mxu0
      %v1197 = vadd.f32 0.0, %v1196
      %1198 = vmatmul.bf16.gmra.mxu0 %v1102
      %v1199 = vpop.f32.mrf.mxu0
      %v1200 = vadd.f32 0.0, %v1199
      %v1201 = vpop.f32.mrf.mxu0
      %v1202 = vadd.f32 0.0, %v1201
      %1203 = vmatmul.bf16.gmra.mxu0 %v1103
      %v1204 = vpop.f32.mrf.mxu0
      %v1205 = vadd.f32 0.0, %v1204
      %v1206 = vpop.f32.mrf.mxu0
      %v1207 = vadd.f32 0.0, %v1206
      %1208 = vmatmul.bf16.gmra.mxu0 %v1104
      %v1209 = vpop.f32.mrf.mxu0
      %v1210 = vadd.f32 0.0, %v1209
      %v1211 = vpop.f32.mrf.mxu0
      %v1212 = vadd.f32 0.0, %v1211
      %1213 = vmatmul.bf16.gmra.mxu0 %v1105
      %v1214 = vpop.f32.mrf.mxu0
      %v1215 = vadd.f32 0.0, %v1214
      %v1216 = vpop.f32.mrf.mxu0
      %v1217 = vadd.f32 0.0, %v1216
      %1218 = vmatmul.bf16.gmra.mxu0 %v1106
      %v1219 = vpop.f32.mrf.mxu0
      %v1220 = vadd.f32 0.0, %v1219
      %v1221 = vpop.f32.mrf.mxu0
      %v1222 = vadd.f32 0.0, %v1221
      %1223 = vmatmul.bf16.gmra.mxu0 %v1107
      %v1224 = vpop.f32.mrf.mxu0
      %v1225 = vadd.f32 0.0, %v1224
      %v1226 = vpop.f32.mrf.mxu0
      %v1227 = vadd.f32 0.0, %v1226
      %1228 = vmatmul.bf16.gmra.mxu0 %v1108
      %v1229 = vpop.f32.mrf.mxu0
      %v1230 = vadd.f32 0.0, %v1229
      %v1231 = vpop.f32.mrf.mxu0
      %v1232 = vadd.f32 0.0, %v1231
      %1233 = vmatmul.bf16.gmra.mxu0 %v1109
      %v1234 = vpop.f32.mrf.mxu0
      %v1235 = vadd.f32 0.0, %v1234
      %v1236 = vpop.f32.mrf.mxu0
      %v1237 = vadd.f32 0.0, %v1236
      %1238 = vmatmul.bf16.gmra.mxu0 %v1110
      %v1239 = vpop.f32.mrf.mxu0
      %v1240 = vadd.f32 0.0, %v1239
      %v1241 = vpop.f32.mrf.mxu0
      %v1242 = vadd.f32 0.0, %v1241
      %1243 = vmatmul.bf16.gmra.mxu0 %v1111
      %v1244 = vpop.f32.mrf.mxu0
      %v1245 = vadd.f32 0.0, %v1244
      %v1246 = vpop.f32.mrf.mxu0
      %v1247 = vadd.f32 0.0, %v1246
      %1248 = vmatmul.bf16.gmra.mxu0 %v1112
      %v1249 = vpop.f32.mrf.mxu0
      %v1250 = vadd.f32 0.0, %v1249
      %v1251 = vpop.f32.mrf.mxu0
      %v1252 = vadd.f32 0.0, %v1251
      %1253 = vmatmul.bf16.gmra.mxu0 %v1113
      %v1254 = vpop.f32.mrf.mxu0
      %v1255 = vadd.f32 0.0, %v1254
      %v1256 = vpop.f32.mrf.mxu0
      %v1257 = vadd.f32 0.0, %v1256
      %1258 = vmatmul.bf16.gmra.mxu0 %v1114
      %v1259 = vpop.f32.mrf.mxu0
      %v1260 = vadd.f32 0.0, %v1259
      %v1261 = vpop.f32.mrf.mxu0
      %v1262 = vadd.f32 0.0, %v1261
      %1263 = vmatmul.bf16.gmra.mxu0 %v1115
      %v1264 = vpop.f32.mrf.mxu0
      %v1265 = vadd.f32 0.0, %v1264
      %v1266 = vpop.f32.mrf.mxu0
      %v1267 = vadd.f32 0.0, %v1266
      %1268 = vdwg.mxu0
      %v1269 = vadd.f32 %v584, %v1190
      %v1270 = vadd.f32 %v585, %v1192
      %v1271 = vadd.f32 %v586, %v1195
      %v1272 = vadd.f32 %v587, %v1197
      %v1273 = vadd.f32 %v588, %v1200
      %v1274 = vadd.f32 %v589, %v1202
      %v1275 = vadd.f32 %v590, %v1205
      %v1276 = vadd.f32 %v591, %v1207
      %v1277 = vadd.f32 %v592, %v1210
      %v1278 = vadd.f32 %v593, %v1212
      %v1279 = vadd.f32 %v594, %v1215
      %v1280 = vadd.f32 %v595, %v1217
      %v1281 = vadd.f32 %v596, %v1220
      %v1282 = vadd.f32 %v597, %v1222
      %v1283 = vadd.f32 %v598, %v1225
      %v1284 = vadd.f32 %v599, %v1227
      %v1285 = vadd.f32 %v600, %v1230
      %v1286 = vadd.f32 %v601, %v1232
      %v1287 = vadd.f32 %v602, %v1235
      %v1288 = vadd.f32 %v603, %v1237
      %v1289 = vadd.f32 %v604, %v1240
      %v1290 = vadd.f32 %v605, %v1242
      %v1291 = vadd.f32 %v606, %v1245
      %v1292 = vadd.f32 %v607, %v1247
      %v1293 = vadd.f32 %v608, %v1250
      %v1294 = vadd.f32 %v609, %v1252
      %v1295 = vadd.f32 %v610, %v1255
      %v1296 = vadd.f32 %v611, %v1257
      %v1297 = vadd.f32 %v612, %v1260
      %v1298 = vadd.f32 %v613, %v1262
      %v1299 = vadd.f32 %v614, %v1265
      %v1300 = vadd.f32 %v615, %v1267
      %v1301 = vld [vmem:[%s220] sm:$0xe]
      %v1302 = vld [vmem:[%s220 + $0xc] sm:$0xe]
      %v1303 = vld [vmem:[%s220 + $0x18] sm:$0xe]
      %v1304 = vld [vmem:[%s220 + $0x24] sm:$0xe]
      %v1305 = vld [vmem:[%s220 + $0x30] sm:$0xe]
      %v1306 = vld [vmem:[%s220 + $0x3c] sm:$0xe]
      %v1307 = vld [vmem:[%s220 + $0x48] sm:$0xe]
      %v1308 = vld [vmem:[%s220 + $0x54] sm:$0xe]
      %v1309 = vld [vmem:[%s220 + $0x60] sm:$0xe]
      %v1310 = vld [vmem:[%s220 + $0x6c] sm:$0xe]
      %v1311 = vld [vmem:[%s220 + $0x78] sm:$0xe]
      %v1312 = vld [vmem:[%s220 + $0x84] sm:$0xe]
      %v1313 = vld [vmem:[%s220 + $0x90] sm:$0xe]
      %v1314 = vld [vmem:[%s220 + $0x9c] sm:$0xe]
      %v1315 = vld [vmem:[%s220 + $0xa8] sm:$0xe]
      %v1316 = vld [vmem:[%s220 + $0xb4] sm:$0xe]
      %vm1365 = vcmask 1042432
      %vm1366 = vcmask 1046532
      %vm1367 = vmor %vm1365, %vm1366
      %v1368 = vrot.slane %v1301, 5
      %v1369 = vrot.slane %v1368, 4
      %v1370 = vrot.slane %v617, 5
      %v1371 = vsel %vm1367, %v1369, %v1370
      %v1372 = vrot.slane %v1370, 4
      %v1373 = vrot.slane %v618, 5
      %v1374 = vsel %vm1367, %v1372, %v1373
      %v1375 = vrot.slane %v1302, 5
      %v1376 = vrot.slane %v1375, 4
      %v1377 = vrot.slane %v620, 5
      %v1378 = vsel %vm1367, %v1376, %v1377
      %v1379 = vrot.slane %v1377, 4
      %v1380 = vrot.slane %v621, 5
      %v1381 = vsel %vm1367, %v1379, %v1380
      %v1382 = vrot.slane %v1303, 5
      %v1383 = vrot.slane %v1382, 4
      %v1384 = vrot.slane %v623, 5
      %v1385 = vsel %vm1367, %v1383, %v1384
      %v1386 = vrot.slane %v1384, 4
      %v1387 = vrot.slane %v624, 5
      %v1388 = vsel %vm1367, %v1386, %v1387
      %v1389 = vrot.slane %v1304, 5
      %v1390 = vrot.slane %v1389, 4
      %v1391 = vrot.slane %v626, 5
      %v1392 = vsel %vm1367, %v1390, %v1391
      %v1393 = vrot.slane %v1391, 4
      %v1394 = vrot.slane %v627, 5
      %v1395 = vsel %vm1367, %v1393, %v1394
      %v1396 = vrot.slane %v1305, 5
      %v1397 = vrot.slane %v1396, 4
      %v1398 = vrot.slane %v629, 5
      %v1399 = vsel %vm1367, %v1397, %v1398
      %v1400 = vrot.slane %v1398, 4
      %v1401 = vrot.slane %v630, 5
      %v1402 = vsel %vm1367, %v1400, %v1401
      %v1403 = vrot.slane %v1306, 5
      %v1404 = vrot.slane %v1403, 4
      %v1405 = vrot.slane %v632, 5
      %v1406 = vsel %vm1367, %v1404, %v1405
      %v1407 = vrot.slane %v1405, 4
      %v1408 = vrot.slane %v633, 5
      %v1409 = vsel %vm1367, %v1407, %v1408
      %v1410 = vrot.slane %v1307, 5
      %v1411 = vrot.slane %v1410, 4
      %v1412 = vrot.slane %v635, 5
      %v1413 = vsel %vm1367, %v1411, %v1412
      %v1414 = vrot.slane %v1412, 4
      %v1415 = vrot.slane %v636, 5
      %v1416 = vsel %vm1367, %v1414, %v1415
      %v1417 = vrot.slane %v1308, 5
      %v1418 = vrot.slane %v1417, 4
      %v1419 = vrot.slane %v638, 5
      %v1420 = vsel %vm1367, %v1418, %v1419
      %v1421 = vrot.slane %v1419, 4
      %v1422 = vrot.slane %v639, 5
      %v1423 = vsel %vm1367, %v1421, %v1422
      %v1424 = vrot.slane %v1309, 5
      %v1425 = vrot.slane %v1424, 4
      %v1426 = vrot.slane %v641, 5
      %v1427 = vsel %vm1367, %v1425, %v1426
      %v1428 = vrot.slane %v1426, 4
      %v1429 = vrot.slane %v642, 5
      %v1430 = vsel %vm1367, %v1428, %v1429
      %v1431 = vrot.slane %v1310, 5
      %v1432 = vrot.slane %v1431, 4
      %v1433 = vrot.slane %v644, 5
      %v1434 = vsel %vm1367, %v1432, %v1433
      %v1435 = vrot.slane %v1433, 4
      %v1436 = vrot.slane %v645, 5
      %v1437 = vsel %vm1367, %v1435, %v1436
      %v1438 = vrot.slane %v1311, 5
      %v1439 = vrot.slane %v1438, 4
      %v1440 = vrot.slane %v647, 5
      %v1441 = vsel %vm1367, %v1439, %v1440
      %v1442 = vrot.slane %v1440, 4
      %v1443 = vrot.slane %v648, 5
      %v1444 = vsel %vm1367, %v1442, %v1443
      %v1445 = vrot.slane %v1312, 5
      %v1446 = vrot.slane %v1445, 4
      %v1447 = vrot.slane %v650, 5
      %v1448 = vsel %vm1367, %v1446, %v1447
      %v1449 = vrot.slane %v1447, 4
      %v1450 = vrot.slane %v651, 5
      %v1451 = vsel %vm1367, %v1449, %v1450
      %v1452 = vrot.slane %v1313, 5
      %v1453 = vrot.slane %v1452, 4
      %v1454 = vrot.slane %v653, 5
      %v1455 = vsel %vm1367, %v1453, %v1454
      %v1456 = vrot.slane %v1454, 4
      %v1457 = vrot.slane %v654, 5
      %v1458 = vsel %vm1367, %v1456, %v1457
      %v1459 = vrot.slane %v1314, 5
      %v1460 = vrot.slane %v1459, 4
      %v1461 = vrot.slane %v656, 5
      %v1462 = vsel %vm1367, %v1460, %v1461
      %v1463 = vrot.slane %v1461, 4
      %v1464 = vrot.slane %v657, 5
      %v1465 = vsel %vm1367, %v1463, %v1464
      %v1466 = vrot.slane %v1315, 5
      %v1467 = vrot.slane %v1466, 4
      %v1468 = vrot.slane %v659, 5
      %v1469 = vsel %vm1367, %v1467, %v1468
      %v1470 = vrot.slane %v1468, 4
      %v1471 = vrot.slane %v660, 5
      %v1472 = vsel %vm1367, %v1470, %v1471
      %v1473 = vrot.slane %v1316, 5
      %v1474 = vrot.slane %v1473, 4
      %v1475 = vrot.slane %v662, 5
      %v1476 = vsel %vm1367, %v1474, %v1475
      %v1477 = vrot.slane %v1475, 4
      %v1478 = vrot.slane %v663, 5
      %v1479 = vsel %vm1367, %v1477, %v1478
      %s1480 = scalar_lea.vmem %s226, 128
      %v1481 = vld [vmem:[%s1480] sm:$0xf]
      %v1482 = vld [vmem:[%s1480 + $0x4] sm:$0xf]
      %v1483 = vld [vmem:[%s1480 + $0x8] sm:$0xf]
      %v1484 = vld [vmem:[%s1480 + $0xc] sm:$0xf]
      %v1485 = vld [vmem:[%s1480 + $0x10] sm:$0xf]
      %v1486 = vld [vmem:[%s1480 + $0x14] sm:$0xf]
      %v1487 = vld [vmem:[%s1480 + $0x18] sm:$0xf]
      %v1488 = vld [vmem:[%s1480 + $0x1c] sm:$0xf]
      %v1489 = vld [vmem:[%s1480 + $0x20] sm:$0xf]
      %v1490 = vld [vmem:[%s1480 + $0x24] sm:$0xf]
      %v1491 = vld [vmem:[%s1480 + $0x28] sm:$0xf]
      %v1492 = vld [vmem:[%s1480 + $0x2c] sm:$0xf]
      %v1493 = vld [vmem:[%s1480 + $0x30] sm:$0xf]
      %v1494 = vld [vmem:[%s1480 + $0x34] sm:$0xf]
      %v1495 = vld [vmem:[%s1480 + $0x38] sm:$0xf]
      %v1496 = vld [vmem:[%s1480 + $0x3c] sm:$0xf]
      %v1497 = vunpack.c.l.b16 %v1371
      %v1498 = vunpack.c.l.b16 %v1374
      %v1499 = vunpack.c.l.b16 %v1378
      %v1500 = vunpack.c.l.b16 %v1381
      %v1501 = vunpack.c.l.b16 %v1385
      %v1502 = vunpack.c.l.b16 %v1388
      %v1503 = vunpack.c.l.b16 %v1392
      %v1504 = vunpack.c.l.b16 %v1395
      %v1505 = vunpack.c.l.b16 %v1399
      %v1506 = vunpack.c.l.b16 %v1402
      %v1507 = vunpack.c.l.b16 %v1406
      %v1508 = vunpack.c.l.b16 %v1409
      %v1509 = vunpack.c.l.b16 %v1413
      %v1510 = vunpack.c.l.b16 %v1416
      %v1511 = vunpack.c.l.b16 %v1420
      %v1512 = vunpack.c.l.b16 %v1423
      %v1513 = vunpack.c.l.b16 %v1427
      %v1514 = vunpack.c.l.b16 %v1430
      %v1515 = vunpack.c.l.b16 %v1434
      %v1516 = vunpack.c.l.b16 %v1437
      %v1517 = vunpack.c.l.b16 %v1441
      %v1518 = vunpack.c.l.b16 %v1444
      %v1519 = vunpack.c.l.b16 %v1448
      %v1520 = vunpack.c.l.b16 %v1451
      %v1521 = vunpack.c.l.b16 %v1455
      %v1522 = vunpack.c.l.b16 %v1458
      %v1523 = vunpack.c.l.b16 %v1462
      %v1524 = vunpack.c.l.b16 %v1465
      %v1525 = vunpack.c.l.b16 %v1469
      %v1526 = vunpack.c.l.b16 %v1472
      %v1527 = vunpack.c.l.b16 %v1476
      %v1528 = vunpack.c.l.b16 %v1479
      %v1529 = vpack.c.b16 %v1498, %v1497
      %v1530 = vpack.c.b16 %v1500, %v1499
      %v1531 = vpack.c.b16 %v1502, %v1501
      %v1532 = vpack.c.b16 %v1504, %v1503
      %v1533 = vpack.c.b16 %v1506, %v1505
      %v1534 = vpack.c.b16 %v1508, %v1507
      %v1535 = vpack.c.b16 %v1510, %v1509
      %v1536 = vpack.c.b16 %v1512, %v1511
      %v1537 = vpack.c.b16 %v1514, %v1513
      %v1538 = vpack.c.b16 %v1516, %v1515
      %v1539 = vpack.c.b16 %v1518, %v1517
      %v1540 = vpack.c.b16 %v1520, %v1519
      %v1541 = vpack.c.b16 %v1522, %v1521
      %v1542 = vpack.c.b16 %v1524, %v1523
      %v1543 = vpack.c.b16 %v1526, %v1525
      %v1544 = vpack.c.b16 %v1528, %v1527
      %v1577 = vunpack.c.l.b16 %v1481
      %v1578 = vunpack.c.l.b16 %v1482
      %v1579 = vunpack.c.l.b16 %v1483
      %v1580 = vunpack.c.l.b16 %v1484
      %v1581 = vunpack.c.l.b16 %v1485
      %v1582 = vunpack.c.l.b16 %v1486
      %v1583 = vunpack.c.l.b16 %v1487
      %v1584 = vunpack.c.l.b16 %v1488
      %v1585 = vunpack.c.l.b16 %v1489
      %v1586 = vunpack.c.l.b16 %v1490
      %v1587 = vunpack.c.l.b16 %v1491
      %v1588 = vunpack.c.l.b16 %v1492
      %v1589 = vunpack.c.l.b16 %v1493
      %v1590 = vunpack.c.l.b16 %v1494
      %v1591 = vunpack.c.l.b16 %v1495
      %v1592 = vunpack.c.l.b16 %v1496
      %v1593 = vpack.c.b16 %v1578, %v1577
      %v1594 = vpack.c.b16 %v1580, %v1579
      %v1595 = vpack.c.b16 %v1582, %v1581
      %v1596 = vpack.c.b16 %v1584, %v1583
      %v1597 = vpack.c.b16 %v1586, %v1585
      %v1598 = vpack.c.b16 %v1588, %v1587
      %v1599 = vpack.c.b16 %v1590, %v1589
      %v1600 = vpack.c.b16 %v1592, %v1591
      %1609 = vmatpush.bf16.msra.mxu0 %v1600
      %1610 = vmatpush.bf16.msra.mxu0 %v1599
      %1611 = vmatpush.bf16.msra.mxu0 %v1598
      %1612 = vmatpush.bf16.msra.mxu0 %v1597
      %1613 = vmatpush.bf16.msra.mxu0 %v1596
      %1614 = vmatpush.bf16.msra.mxu0 %v1595
      %1615 = vmatpush.bf16.msra.mxu0 %v1594
      %1616 = vmatpush.bf16.msra.mxu0 %v1593
      %1617 = vmatmul.bf16.gmra.mxu0 %v1529
      %v1618 = vpop.f32.mrf.mxu0
      %v1619 = vadd.f32 0.0, %v1618
      %v1620 = vpop.f32.mrf.mxu0
      %v1621 = vadd.f32 0.0, %v1620
      %1622 = vmatmul.bf16.gmra.mxu0 %v1530
      %v1623 = vpop.f32.mrf.mxu0
      %v1624 = vadd.f32 0.0, %v1623
      %v1625 = vpop.f32.mrf.mxu0
      %v1626 = vadd.f32 0.0, %v1625
      %1627 = vmatmul.bf16.gmra.mxu0 %v1531
      %v1628 = vpop.f32.mrf.mxu0
      %v1629 = vadd.f32 0.0, %v1628
      %v1630 = vpop.f32.mrf.mxu0
      %v1631 = vadd.f32 0.0, %v1630
      %1632 = vmatmul.bf16.gmra.mxu0 %v1532
      %v1633 = vpop.f32.mrf.mxu0
      %v1634 = vadd.f32 0.0, %v1633
      %v1635 = vpop.f32.mrf.mxu0
      %v1636 = vadd.f32 0.0, %v1635
      %1637 = vmatmul.bf16.gmra.mxu0 %v1533
      %v1638 = vpop.f32.mrf.mxu0
      %v1639 = vadd.f32 0.0, %v1638
      %v1640 = vpop.f32.mrf.mxu0
      %v1641 = vadd.f32 0.0, %v1640
      %1642 = vmatmul.bf16.gmra.mxu0 %v1534
      %v1643 = vpop.f32.mrf.mxu0
      %v1644 = vadd.f32 0.0, %v1643
      %v1645 = vpop.f32.mrf.mxu0
      %v1646 = vadd.f32 0.0, %v1645
      %1647 = vmatmul.bf16.gmra.mxu0 %v1535
      %v1648 = vpop.f32.mrf.mxu0
      %v1649 = vadd.f32 0.0, %v1648
      %v1650 = vpop.f32.mrf.mxu0
      %v1651 = vadd.f32 0.0, %v1650
      %1652 = vmatmul.bf16.gmra.mxu0 %v1536
      %v1653 = vpop.f32.mrf.mxu0
      %v1654 = vadd.f32 0.0, %v1653
      %v1655 = vpop.f32.mrf.mxu0
      %v1656 = vadd.f32 0.0, %v1655
      %1657 = vmatmul.bf16.gmra.mxu0 %v1537
      %v1658 = vpop.f32.mrf.mxu0
      %v1659 = vadd.f32 0.0, %v1658
      %v1660 = vpop.f32.mrf.mxu0
      %v1661 = vadd.f32 0.0, %v1660
      %1662 = vmatmul.bf16.gmra.mxu0 %v1538
      %v1663 = vpop.f32.mrf.mxu0
      %v1664 = vadd.f32 0.0, %v1663
      %v1665 = vpop.f32.mrf.mxu0
      %v1666 = vadd.f32 0.0, %v1665
      %1667 = vmatmul.bf16.gmra.mxu0 %v1539
      %v1668 = vpop.f32.mrf.mxu0
      %v1669 = vadd.f32 0.0, %v1668
      %v1670 = vpop.f32.mrf.mxu0
      %v1671 = vadd.f32 0.0, %v1670
      %1672 = vmatmul.bf16.gmra.mxu0 %v1540
      %v1673 = vpop.f32.mrf.mxu0
      %v1674 = vadd.f32 0.0, %v1673
      %v1675 = vpop.f32.mrf.mxu0
      %v1676 = vadd.f32 0.0, %v1675
      %1677 = vmatmul.bf16.gmra.mxu0 %v1541
      %v1678 = vpop.f32.mrf.mxu0
      %v1679 = vadd.f32 0.0, %v1678
      %v1680 = vpop.f32.mrf.mxu0
      %v1681 = vadd.f32 0.0, %v1680
      %1682 = vmatmul.bf16.gmra.mxu0 %v1542
      %v1683 = vpop.f32.mrf.mxu0
      %v1684 = vadd.f32 0.0, %v1683
      %v1685 = vpop.f32.mrf.mxu0
      %v1686 = vadd.f32 0.0, %v1685
      %1687 = vmatmul.bf16.gmra.mxu0 %v1543
      %v1688 = vpop.f32.mrf.mxu0
      %v1689 = vadd.f32 0.0, %v1688
      %v1690 = vpop.f32.mrf.mxu0
      %v1691 = vadd.f32 0.0, %v1690
      %1692 = vmatmul.bf16.gmra.mxu0 %v1544
      %v1693 = vpop.f32.mrf.mxu0
      %v1694 = vadd.f32 0.0, %v1693
      %v1695 = vpop.f32.mrf.mxu0
      %v1696 = vadd.f32 0.0, %v1695
      %1697 = vdwg.mxu0
      %v1698 = vadd.f32 %v1269, %v1619
      %v1699 = vadd.f32 %v1270, %v1621
      %v1700 = vadd.f32 %v1271, %v1624
      %v1701 = vadd.f32 %v1272, %v1626
      %v1702 = vadd.f32 %v1273, %v1629
      %v1703 = vadd.f32 %v1274, %v1631
      %v1704 = vadd.f32 %v1275, %v1634
      %v1705 = vadd.f32 %v1276, %v1636
      %v1706 = vadd.f32 %v1277, %v1639
      %v1707 = vadd.f32 %v1278, %v1641
      %v1708 = vadd.f32 %v1279, %v1644
      %v1709 = vadd.f32 %v1280, %v1646
      %v1710 = vadd.f32 %v1281, %v1649
      %v1711 = vadd.f32 %v1282, %v1651
      %v1712 = vadd.f32 %v1283, %v1654
      %v1713 = vadd.f32 %v1284, %v1656
      %v1714 = vadd.f32 %v1285, %v1659
      %v1715 = vadd.f32 %v1286, %v1661
      %v1716 = vadd.f32 %v1287, %v1664
      %v1717 = vadd.f32 %v1288, %v1666
      %v1718 = vadd.f32 %v1289, %v1669
      %v1719 = vadd.f32 %v1290, %v1671
      %v1720 = vadd.f32 %v1291, %v1674
      %v1721 = vadd.f32 %v1292, %v1676
      %v1722 = vadd.f32 %v1293, %v1679
      %v1723 = vadd.f32 %v1294, %v1681
      %v1724 = vadd.f32 %v1295, %v1684
      %v1725 = vadd.f32 %v1296, %v1686
      %v1726 = vadd.f32 %v1297, %v1689
      %v1727 = vadd.f32 %v1298, %v1691
      %v1728 = vadd.f32 %v1299, %v1694
      %v1729 = vadd.f32 %v1300, %v1696
      %s1730 = scalar_lea.vmem %s220, 12
      %v1731 = vld [vmem:[%s1730] sm:$0xf]
      %v1732 = vld [vmem:[%s1730 + $0x4] sm:$0xf]
      %v1733 = vld [vmem:[%s1730 + $0xc] sm:$0xf]
      %v1734 = vld [vmem:[%s1730 + $0x10] sm:$0xf]
      %v1735 = vld [vmem:[%s1730 + $0x18] sm:$0xf]
      %v1736 = vld [vmem:[%s1730 + $0x1c] sm:$0xf]
      %v1737 = vld [vmem:[%s1730 + $0x24] sm:$0xf]
      %v1738 = vld [vmem:[%s1730 + $0x28] sm:$0xf]
      %v1739 = vld [vmem:[%s1730 + $0x30] sm:$0xf]
      %v1740 = vld [vmem:[%s1730 + $0x34] sm:$0xf]
      %v1741 = vld [vmem:[%s1730 + $0x3c] sm:$0xf]
      %v1742 = vld [vmem:[%s1730 + $0x40] sm:$0xf]
      %v1743 = vld [vmem:[%s1730 + $0x48] sm:$0xf]
      %v1744 = vld [vmem:[%s1730 + $0x4c] sm:$0xf]
      %v1745 = vld [vmem:[%s1730 + $0x54] sm:$0xf]
      %v1746 = vld [vmem:[%s1730 + $0x58] sm:$0xf]
      %v1747 = vld [vmem:[%s1730 + $0x60] sm:$0xf]
      %v1748 = vld [vmem:[%s1730 + $0x64] sm:$0xf]
      %v1749 = vld [vmem:[%s1730 + $0x6c] sm:$0xf]
      %v1750 = vld [vmem:[%s1730 + $0x70] sm:$0xf]
      %v1751 = vld [vmem:[%s1730 + $0x78] sm:$0xf]
      %v1752 = vld [vmem:[%s1730 + $0x7c] sm:$0xf]
      %v1753 = vld [vmem:[%s1730 + $0x84] sm:$0xf]
      %v1754 = vld [vmem:[%s1730 + $0x88] sm:$0xf]
      %v1755 = vld [vmem:[%s1730 + $0x90] sm:$0xf]
      %v1756 = vld [vmem:[%s1730 + $0x94] sm:$0xf]
      %v1757 = vld [vmem:[%s1730 + $0x9c] sm:$0xf]
      %v1758 = vld [vmem:[%s1730 + $0xa0] sm:$0xf]
      %v1759 = vld [vmem:[%s1730 + $0xa8] sm:$0xf]
      %v1760 = vld [vmem:[%s1730 + $0xac] sm:$0xf]
      %v1761 = vld [vmem:[%s1730 + $0xb4] sm:$0xf]
      %v1762 = vld [vmem:[%s1730 + $0xb8] sm:$0xf]
      %s1763 = scalar_lea.vmem %s226, 192
      %v1764 = vld [vmem:[%s1763] sm:$0xf]
      %v1765 = vld [vmem:[%s1763 + $0x4] sm:$0xf]
      %v1766 = vld [vmem:[%s1763 + $0x8] sm:$0xf]
      %v1767 = vld [vmem:[%s1763 + $0xc] sm:$0xf]
      %v1768 = vld [vmem:[%s1763 + $0x10] sm:$0xf]
      %v1769 = vld [vmem:[%s1763 + $0x14] sm:$0xf]
      %v1770 = vld [vmem:[%s1763 + $0x18] sm:$0xf]
      %v1771 = vld [vmem:[%s1763 + $0x1c] sm:$0xf]
      %v1772 = vld [vmem:[%s1763 + $0x20] sm:$0xf]
      %v1773 = vld [vmem:[%s1763 + $0x24] sm:$0xf]
      %v1774 = vld [vmem:[%s1763 + $0x28] sm:$0xf]
      %v1775 = vld [vmem:[%s1763 + $0x2c] sm:$0xf]
      %v1776 = vld [vmem:[%s1763 + $0x30] sm:$0xf]
      %v1777 = vld [vmem:[%s1763 + $0x34] sm:$0xf]
      %v1778 = vld [vmem:[%s1763 + $0x38] sm:$0xf]
      %v1779 = vld [vmem:[%s1763 + $0x3c] sm:$0xf]
      %v1812 = vunpack.c.l.b16 %v1731
      %v1813 = vunpack.c.l.b16 %v1732
      %v1814 = vunpack.c.l.b16 %v1733
      %v1815 = vunpack.c.l.b16 %v1734
      %v1816 = vunpack.c.l.b16 %v1735
      %v1817 = vunpack.c.l.b16 %v1736
      %v1818 = vunpack.c.l.b16 %v1737
      %v1819 = vunpack.c.l.b16 %v1738
      %v1820 = vunpack.c.l.b16 %v1739
      %v1821 = vunpack.c.l.b16 %v1740
      %v1822 = vunpack.c.l.b16 %v1741
      %v1823 = vunpack.c.l.b16 %v1742
      %v1824 = vunpack.c.l.b16 %v1743
      %v1825 = vunpack.c.l.b16 %v1744
      %v1826 = vunpack.c.l.b16 %v1745
      %v1827 = vunpack.c.l.b16 %v1746
      %v1828 = vunpack.c.l.b16 %v1747
      %v1829 = vunpack.c.l.b16 %v1748
      %v1830 = vunpack.c.l.b16 %v1749
      %v1831 = vunpack.c.l.b16 %v1750
      %v1832 = vunpack.c.l.b16 %v1751
      %v1833 = vunpack.c.l.b16 %v1752
      %v1834 = vunpack.c.l.b16 %v1753
      %v1835 = vunpack.c.l.b16 %v1754
      %v1836 = vunpack.c.l.b16 %v1755
      %v1837 = vunpack.c.l.b16 %v1756
      %v1838 = vunpack.c.l.b16 %v1757
      %v1839 = vunpack.c.l.b16 %v1758
      %v1840 = vunpack.c.l.b16 %v1759
      %v1841 = vunpack.c.l.b16 %v1760
      %v1842 = vunpack.c.l.b16 %v1761
      %v1843 = vunpack.c.l.b16 %v1762
      %v1844 = vpack.c.b16 %v1813, %v1812
      %v1845 = vpack.c.b16 %v1815, %v1814
      %v1846 = vpack.c.b16 %v1817, %v1816
      %v1847 = vpack.c.b16 %v1819, %v1818
      %v1848 = vpack.c.b16 %v1821, %v1820
      %v1849 = vpack.c.b16 %v1823, %v1822
      %v1850 = vpack.c.b16 %v1825, %v1824
      %v1851 = vpack.c.b16 %v1827, %v1826
      %v1852 = vpack.c.b16 %v1829, %v1828
      %v1853 = vpack.c.b16 %v1831, %v1830
      %v1854 = vpack.c.b16 %v1833, %v1832
      %v1855 = vpack.c.b16 %v1835, %v1834
      %v1856 = vpack.c.b16 %v1837, %v1836
      %v1857 = vpack.c.b16 %v1839, %v1838
      %v1858 = vpack.c.b16 %v1841, %v1840
      %v1859 = vpack.c.b16 %v1843, %v1842
      %v1892 = vunpack.c.l.b16 %v1764
      %v1893 = vunpack.c.l.b16 %v1765
      %v1894 = vunpack.c.l.b16 %v1766
      %v1895 = vunpack.c.l.b16 %v1767
      %v1896 = vunpack.c.l.b16 %v1768
      %v1897 = vunpack.c.l.b16 %v1769
      %v1898 = vunpack.c.l.b16 %v1770
      %v1899 = vunpack.c.l.b16 %v1771
      %v1900 = vunpack.c.l.b16 %v1772
      %v1901 = vunpack.c.l.b16 %v1773
      %v1902 = vunpack.c.l.b16 %v1774
      %v1903 = vunpack.c.l.b16 %v1775
      %v1904 = vunpack.c.l.b16 %v1776
      %v1905 = vunpack.c.l.b16 %v1777
      %v1906 = vunpack.c.l.b16 %v1778
      %v1907 = vunpack.c.l.b16 %v1779
      %v1908 = vpack.c.b16 %v1893, %v1892
      %v1909 = vpack.c.b16 %v1895, %v1894
      %v1910 = vpack.c.b16 %v1897, %v1896
      %v1911 = vpack.c.b16 %v1899, %v1898
      %v1912 = vpack.c.b16 %v1901, %v1900
      %v1913 = vpack.c.b16 %v1903, %v1902
      %v1914 = vpack.c.b16 %v1905, %v1904
      %v1915 = vpack.c.b16 %v1907, %v1906
      %1924 = vmatpush.bf16.msra.mxu0 %v1915
      %1925 = vmatpush.bf16.msra.mxu0 %v1914
      %1926 = vmatpush.bf16.msra.mxu0 %v1913
      %1927 = vmatpush.bf16.msra.mxu0 %v1912
      %1928 = vmatpush.bf16.msra.mxu0 %v1911
      %1929 = vmatpush.bf16.msra.mxu0 %v1910
      %1930 = vmatpush.bf16.msra.mxu0 %v1909
      %1931 = vmatpush.bf16.msra.mxu0 %v1908
      %1932 = vmatmul.bf16.gmra.mxu0 %v1844
      %v1933 = vpop.f32.mrf.mxu0
      %v1934 = vadd.f32 0.0, %v1933
      %v1935 = vpop.f32.mrf.mxu0
      %v1936 = vadd.f32 0.0, %v1935
      %1937 = vmatmul.bf16.gmra.mxu0 %v1845
      %v1938 = vpop.f32.mrf.mxu0
      %v1939 = vadd.f32 0.0, %v1938
      %v1940 = vpop.f32.mrf.mxu0
      %v1941 = vadd.f32 0.0, %v1940
      %1942 = vmatmul.bf16.gmra.mxu0 %v1846
      %v1943 = vpop.f32.mrf.mxu0
      %v1944 = vadd.f32 0.0, %v1943
      %v1945 = vpop.f32.mrf.mxu0
      %v1946 = vadd.f32 0.0, %v1945
      %1947 = vmatmul.bf16.gmra.mxu0 %v1847
      %v1948 = vpop.f32.mrf.mxu0
      %v1949 = vadd.f32 0.0, %v1948
      %v1950 = vpop.f32.mrf.mxu0
      %v1951 = vadd.f32 0.0, %v1950
      %1952 = vmatmul.bf16.gmra.mxu0 %v1848
      %v1953 = vpop.f32.mrf.mxu0
      %v1954 = vadd.f32 0.0, %v1953
      %v1955 = vpop.f32.mrf.mxu0
      %v1956 = vadd.f32 0.0, %v1955
      %1957 = vmatmul.bf16.gmra.mxu0 %v1849
      %v1958 = vpop.f32.mrf.mxu0
      %v1959 = vadd.f32 0.0, %v1958
      %v1960 = vpop.f32.mrf.mxu0
      %v1961 = vadd.f32 0.0, %v1960
      %1962 = vmatmul.bf16.gmra.mxu0 %v1850
      %v1963 = vpop.f32.mrf.mxu0
      %v1964 = vadd.f32 0.0, %v1963
      %v1965 = vpop.f32.mrf.mxu0
      %v1966 = vadd.f32 0.0, %v1965
      %1967 = vmatmul.bf16.gmra.mxu0 %v1851
      %v1968 = vpop.f32.mrf.mxu0
      %v1969 = vadd.f32 0.0, %v1968
      %v1970 = vpop.f32.mrf.mxu0
      %v1971 = vadd.f32 0.0, %v1970
      %1972 = vmatmul.bf16.gmra.mxu0 %v1852
      %v1973 = vpop.f32.mrf.mxu0
      %v1974 = vadd.f32 0.0, %v1973
      %v1975 = vpop.f32.mrf.mxu0
      %v1976 = vadd.f32 0.0, %v1975
      %1977 = vmatmul.bf16.gmra.mxu0 %v1853
      %v1978 = vpop.f32.mrf.mxu0
      %v1979 = vadd.f32 0.0, %v1978
      %v1980 = vpop.f32.mrf.mxu0
      %v1981 = vadd.f32 0.0, %v1980
      %1982 = vmatmul.bf16.gmra.mxu0 %v1854
      %v1983 = vpop.f32.mrf.mxu0
      %v1984 = vadd.f32 0.0, %v1983
      %v1985 = vpop.f32.mrf.mxu0
      %v1986 = vadd.f32 0.0, %v1985
      %1987 = vmatmul.bf16.gmra.mxu0 %v1855
      %v1988 = vpop.f32.mrf.mxu0
      %v1989 = vadd.f32 0.0, %v1988
      %v1990 = vpop.f32.mrf.mxu0
      %v1991 = vadd.f32 0.0, %v1990
      %1992 = vmatmul.bf16.gmra.mxu0 %v1856
      %v1993 = vpop.f32.mrf.mxu0
      %v1994 = vadd.f32 0.0, %v1993
      %v1995 = vpop.f32.mrf.mxu0
      %v1996 = vadd.f32 0.0, %v1995
      %1997 = vmatmul.bf16.gmra.mxu0 %v1857
      %v1998 = vpop.f32.mrf.mxu0
      %v1999 = vadd.f32 0.0, %v1998
      %v2000 = vpop.f32.mrf.mxu0
      %v2001 = vadd.f32 0.0, %v2000
      %2002 = vmatmul.bf16.gmra.mxu0 %v1858
      %v2003 = vpop.f32.mrf.mxu0
      %v2004 = vadd.f32 0.0, %v2003
      %v2005 = vpop.f32.mrf.mxu0
      %v2006 = vadd.f32 0.0, %v2005
      %2007 = vmatmul.bf16.gmra.mxu0 %v1859
      %v2008 = vpop.f32.mrf.mxu0
      %v2009 = vadd.f32 0.0, %v2008
      %v2010 = vpop.f32.mrf.mxu0
      %v2011 = vadd.f32 0.0, %v2010
      %2012 = vdwg.mxu0
      %v2013 = vadd.f32 %v1698, %v1934
      %v2014 = vadd.f32 %v1699, %v1936
      %v2015 = vadd.f32 %v1700, %v1939
      %v2016 = vadd.f32 %v1701, %v1941
      %v2017 = vadd.f32 %v1702, %v1944
      %v2018 = vadd.f32 %v1703, %v1946
      %v2019 = vadd.f32 %v1704, %v1949
      %v2020 = vadd.f32 %v1705, %v1951
      %v2021 = vadd.f32 %v1706, %v1954
      %v2022 = vadd.f32 %v1707, %v1956
      %v2023 = vadd.f32 %v1708, %v1959
      %v2024 = vadd.f32 %v1709, %v1961
      %v2025 = vadd.f32 %v1710, %v1964
      %v2026 = vadd.f32 %v1711, %v1966
      %v2027 = vadd.f32 %v1712, %v1969
      %v2028 = vadd.f32 %v1713, %v1971
      %v2029 = vadd.f32 %v1714, %v1974
      %v2030 = vadd.f32 %v1715, %v1976
      %v2031 = vadd.f32 %v1716, %v1979
      %v2032 = vadd.f32 %v1717, %v1981
      %v2033 = vadd.f32 %v1718, %v1984
      %v2034 = vadd.f32 %v1719, %v1986
      %v2035 = vadd.f32 %v1720, %v1989
      %v2036 = vadd.f32 %v1721, %v1991
      %v2037 = vadd.f32 %v1722, %v1994
      %v2038 = vadd.f32 %v1723, %v1996
      %v2039 = vadd.f32 %v1724, %v1999
      %v2040 = vadd.f32 %v1725, %v2001
      %v2041 = vadd.f32 %v1726, %v2004
      %v2042 = vadd.f32 %v1727, %v2006
      %v2043 = vadd.f32 %v1728, %v2009
      %v2044 = vadd.f32 %v1729, %v2011
      %v2045 = vld [vmem:[%s1730] sm:$0xf]
      %v2046 = vld [vmem:[%s1730 + $0x4] sm:$0xf]
      %v2047 = vld [vmem:[%s1730 + $0x8] sm:$0x1]
      %v2048 = vld [vmem:[%s1730 + $0xc] sm:$0xf]
      %v2049 = vld [vmem:[%s1730 + $0x10] sm:$0xf]
      %v2050 = vld [vmem:[%s1730 + $0x14] sm:$0x1]
      %v2051 = vld [vmem:[%s1730 + $0x18] sm:$0xf]
      %v2052 = vld [vmem:[%s1730 + $0x1c] sm:$0xf]
      %v2053 = vld [vmem:[%s1730 + $0x20] sm:$0x1]
      %v2054 = vld [vmem:[%s1730 + $0x24] sm:$0xf]
      %v2055 = vld [vmem:[%s1730 + $0x28] sm:$0xf]
      %v2056 = vld [vmem:[%s1730 + $0x2c] sm:$0x1]
      %v2057 = vld [vmem:[%s1730 + $0x30] sm:$0xf]
      %v2058 = vld [vmem:[%s1730 + $0x34] sm:$0xf]
      %v2059 = vld [vmem:[%s1730 + $0x38] sm:$0x1]
      %v2060 = vld [vmem:[%s1730 + $0x3c] sm:$0xf]
      %v2061 = vld [vmem:[%s1730 + $0x40] sm:$0xf]
      %v2062 = vld [vmem:[%s1730 + $0x44] sm:$0x1]
      %v2063 = vld [vmem:[%s1730 + $0x48] sm:$0xf]
      %v2064 = vld [vmem:[%s1730 + $0x4c] sm:$0xf]
      %v2065 = vld [vmem:[%s1730 + $0x50] sm:$0x1]
      %v2066 = vld [vmem:[%s1730 + $0x54] sm:$0xf]
      %v2067 = vld [vmem:[%s1730 + $0x58] sm:$0xf]
      %v2068 = vld [vmem:[%s1730 + $0x5c] sm:$0x1]
      %v2069 = vld [vmem:[%s1730 + $0x60] sm:$0xf]
      %v2070 = vld [vmem:[%s1730 + $0x64] sm:$0xf]
      %v2071 = vld [vmem:[%s1730 + $0x68] sm:$0x1]
      %v2072 = vld [vmem:[%s1730 + $0x6c] sm:$0xf]
      %v2073 = vld [vmem:[%s1730 + $0x70] sm:$0xf]
      %v2074 = vld [vmem:[%s1730 + $0x74] sm:$0x1]
      %v2075 = vld [vmem:[%s1730 + $0x78] sm:$0xf]
      %v2076 = vld [vmem:[%s1730 + $0x7c] sm:$0xf]
      %v2077 = vld [vmem:[%s1730 + $0x80] sm:$0x1]
      %v2078 = vld [vmem:[%s1730 + $0x84] sm:$0xf]
      %v2079 = vld [vmem:[%s1730 + $0x88] sm:$0xf]
      %v2080 = vld [vmem:[%s1730 + $0x8c] sm:$0x1]
      %v2081 = vld [vmem:[%s1730 + $0x90] sm:$0xf]
      %v2082 = vld [vmem:[%s1730 + $0x94] sm:$0xf]
      %v2083 = vld [vmem:[%s1730 + $0x98] sm:$0x1]
      %v2084 = vld [vmem:[%s1730 + $0x9c] sm:$0xf]
      %v2085 = vld [vmem:[%s1730 + $0xa0] sm:$0xf]
      %v2086 = vld [vmem:[%s1730 + $0xa4] sm:$0x1]
      %v2087 = vld [vmem:[%s1730 + $0xa8] sm:$0xf]
      %v2088 = vld [vmem:[%s1730 + $0xac] sm:$0xf]
      %v2089 = vld [vmem:[%s1730 + $0xb0] sm:$0x1]
      %v2090 = vld [vmem:[%s1730 + $0xb4] sm:$0xf]
      %v2091 = vld [vmem:[%s1730 + $0xb8] sm:$0xf]
      %v2092 = vld [vmem:[%s1730 + $0xbc] sm:$0x1]
      %v2094 = vshrl.u32 %v2045, 16
      %v2096 = vrot.slane %v2094, 4
      %v2097 = vshll.u32 %v2045, 16
      %v2099 = vrot.slane %v2097, 5
      %v2100 = vor.u32 %v2096, %v2099
      %v2101 = vrot.slane %v2100, 4
      %v2103 = vshll.u32 %v2046, 16
      %v2105 = vrot.slane %v2103, 5
      %v2106 = vsel %vm666, %v2101, %v2105
      %v2107 = vshrl.u32 %v2046, 16
      %v2109 = vrot.slane %v2107, 4
      %v2110 = vor.u32 %v2109, %v2105
      %v2111 = vrot.slane %v2110, 4
      %v2113 = vshll.u32 %v2047, 16
      %v2115 = vrot.slane %v2113, 5
      %v2116 = vsel %vm666, %v2111, %v2115
      %v2118 = vshrl.u32 %v2048, 16
      %v2120 = vrot.slane %v2118, 4
      %v2121 = vshll.u32 %v2048, 16
      %v2123 = vrot.slane %v2121, 5
      %v2124 = vor.u32 %v2120, %v2123
      %v2125 = vrot.slane %v2124, 4
      %v2127 = vshll.u32 %v2049, 16
      %v2129 = vrot.slane %v2127, 5
      %v2130 = vsel %vm666, %v2125, %v2129
      %v2131 = vshrl.u32 %v2049, 16
      %v2133 = vrot.slane %v2131, 4
      %v2134 = vor.u32 %v2133, %v2129
      %v2135 = vrot.slane %v2134, 4
      %v2137 = vshll.u32 %v2050, 16
      %v2139 = vrot.slane %v2137, 5
      %v2140 = vsel %vm666, %v2135, %v2139
      %v2142 = vshrl.u32 %v2051, 16
      %v2144 = vrot.slane %v2142, 4
      %v2145 = vshll.u32 %v2051, 16
      %v2147 = vrot.slane %v2145, 5
      %v2148 = vor.u32 %v2144, %v2147
      %v2149 = vrot.slane %v2148, 4
      %v2151 = vshll.u32 %v2052, 16
      %v2153 = vrot.slane %v2151, 5
      %v2154 = vsel %vm666, %v2149, %v2153
      %v2155 = vshrl.u32 %v2052, 16
      %v2157 = vrot.slane %v2155, 4
      %v2158 = vor.u32 %v2157, %v2153
      %v2159 = vrot.slane %v2158, 4
      %v2161 = vshll.u32 %v2053, 16
      %v2163 = vrot.slane %v2161, 5
      %v2164 = vsel %vm666, %v2159, %v2163
      %v2166 = vshrl.u32 %v2054, 16
      %v2168 = vrot.slane %v2166, 4
      %v2169 = vshll.u32 %v2054, 16
      %v2171 = vrot.slane %v2169, 5
      %v2172 = vor.u32 %v2168, %v2171
      %v2173 = vrot.slane %v2172, 4
      %v2175 = vshll.u32 %v2055, 16
      %v2177 = vrot.slane %v2175, 5
      %v2178 = vsel %vm666, %v2173, %v2177
      %v2179 = vshrl.u32 %v2055, 16
      %v2181 = vrot.slane %v2179, 4
      %v2182 = vor.u32 %v2181, %v2177
      %v2183 = vrot.slane %v2182, 4
      %v2185 = vshll.u32 %v2056, 16
      %v2187 = vrot.slane %v2185, 5
      %v2188 = vsel %vm666, %v2183, %v2187
      %v2190 = vshrl.u32 %v2057, 16
      %v2192 = vrot.slane %v2190, 4
      %v2193 = vshll.u32 %v2057, 16
      %v2195 = vrot.slane %v2193, 5
      %v2196 = vor.u32 %v2192, %v2195
      %v2197 = vrot.slane %v2196, 4
      %v2199 = vshll.u32 %v2058, 16
      %v2201 = vrot.slane %v2199, 5
      %v2202 = vsel %vm666, %v2197, %v2201
      %v2203 = vshrl.u32 %v2058, 16
      %v2205 = vrot.slane %v2203, 4
      %v2206 = vor.u32 %v2205, %v2201
      %v2207 = vrot.slane %v2206, 4
      %v2209 = vshll.u32 %v2059, 16
      %v2211 = vrot.slane %v2209, 5
      %v2212 = vsel %vm666, %v2207, %v2211
      %v2214 = vshrl.u32 %v2060, 16
      %v2216 = vrot.slane %v2214, 4
      %v2217 = vshll.u32 %v2060, 16
      %v2219 = vrot.slane %v2217, 5
      %v2220 = vor.u32 %v2216, %v2219
      %v2221 = vrot.slane %v2220, 4
      %v2223 = vshll.u32 %v2061, 16
      %v2225 = vrot.slane %v2223, 5
      %v2226 = vsel %vm666, %v2221, %v2225
      %v2227 = vshrl.u32 %v2061, 16
      %v2229 = vrot.slane %v2227, 4
      %v2230 = vor.u32 %v2229, %v2225
      %v2231 = vrot.slane %v2230, 4
      %v2233 = vshll.u32 %v2062, 16
      %v2235 = vrot.slane %v2233, 5
      %v2236 = vsel %vm666, %v2231, %v2235
      %v2238 = vshrl.u32 %v2063, 16
      %v2240 = vrot.slane %v2238, 4
      %v2241 = vshll.u32 %v2063, 16
      %v2243 = vrot.slane %v2241, 5
      %v2244 = vor.u32 %v2240, %v2243
      %v2245 = vrot.slane %v2244, 4
      %v2247 = vshll.u32 %v2064, 16
      %v2249 = vrot.slane %v2247, 5
      %v2250 = vsel %vm666, %v2245, %v2249
      %v2251 = vshrl.u32 %v2064, 16
      %v2253 = vrot.slane %v2251, 4
      %v2254 = vor.u32 %v2253, %v2249
      %v2255 = vrot.slane %v2254, 4
      %v2257 = vshll.u32 %v2065, 16
      %v2259 = vrot.slane %v2257, 5
      %v2260 = vsel %vm666, %v2255, %v2259
      %v2262 = vshrl.u32 %v2066, 16
      %v2264 = vrot.slane %v2262, 4
      %v2265 = vshll.u32 %v2066, 16
      %v2267 = vrot.slane %v2265, 5
      %v2268 = vor.u32 %v2264, %v2267
      %v2269 = vrot.slane %v2268, 4
      %v2271 = vshll.u32 %v2067, 16
      %v2273 = vrot.slane %v2271, 5
      %v2274 = vsel %vm666, %v2269, %v2273
      %v2275 = vshrl.u32 %v2067, 16
      %v2277 = vrot.slane %v2275, 4
      %v2278 = vor.u32 %v2277, %v2273
      %v2279 = vrot.slane %v2278, 4
      %v2281 = vshll.u32 %v2068, 16
      %v2283 = vrot.slane %v2281, 5
      %v2284 = vsel %vm666, %v2279, %v2283
      %v2286 = vshrl.u32 %v2069, 16
      %v2288 = vrot.slane %v2286, 4
      %v2289 = vshll.u32 %v2069, 16
      %v2291 = vrot.slane %v2289, 5
      %v2292 = vor.u32 %v2288, %v2291
      %v2293 = vrot.slane %v2292, 4
      %v2295 = vshll.u32 %v2070, 16
      %v2297 = vrot.slane %v2295, 5
      %v2298 = vsel %vm666, %v2293, %v2297
      %v2299 = vshrl.u32 %v2070, 16
      %v2301 = vrot.slane %v2299, 4
      %v2302 = vor.u32 %v2301, %v2297
      %v2303 = vrot.slane %v2302, 4
      %v2305 = vshll.u32 %v2071, 16
      %v2307 = vrot.slane %v2305, 5
      %v2308 = vsel %vm666, %v2303, %v2307
      %v2310 = vshrl.u32 %v2072, 16
      %v2312 = vrot.slane %v2310, 4
      %v2313 = vshll.u32 %v2072, 16
      %v2315 = vrot.slane %v2313, 5
      %v2316 = vor.u32 %v2312, %v2315
      %v2317 = vrot.slane %v2316, 4
      %v2319 = vshll.u32 %v2073, 16
      %v2321 = vrot.slane %v2319, 5
      %v2322 = vsel %vm666, %v2317, %v2321
      %v2323 = vshrl.u32 %v2073, 16
      %v2325 = vrot.slane %v2323, 4
      %v2326 = vor.u32 %v2325, %v2321
      %v2327 = vrot.slane %v2326, 4
      %v2329 = vshll.u32 %v2074, 16
      %v2331 = vrot.slane %v2329, 5
      %v2332 = vsel %vm666, %v2327, %v2331
      %v2334 = vshrl.u32 %v2075, 16
      %v2336 = vrot.slane %v2334, 4
      %v2337 = vshll.u32 %v2075, 16
      %v2339 = vrot.slane %v2337, 5
      %v2340 = vor.u32 %v2336, %v2339
      %v2341 = vrot.slane %v2340, 4
      %v2343 = vshll.u32 %v2076, 16
      %v2345 = vrot.slane %v2343, 5
      %v2346 = vsel %vm666, %v2341, %v2345
      %v2347 = vshrl.u32 %v2076, 16
      %v2349 = vrot.slane %v2347, 4
      %v2350 = vor.u32 %v2349, %v2345
      %v2351 = vrot.slane %v2350, 4
      %v2353 = vshll.u32 %v2077, 16
      %v2355 = vrot.slane %v2353, 5
      %v2356 = vsel %vm666, %v2351, %v2355
      %v2358 = vshrl.u32 %v2078, 16
      %v2360 = vrot.slane %v2358, 4
      %v2361 = vshll.u32 %v2078, 16
      %v2363 = vrot.slane %v2361, 5
      %v2364 = vor.u32 %v2360, %v2363
      %v2365 = vrot.slane %v2364, 4
      %v2367 = vshll.u32 %v2079, 16
      %v2369 = vrot.slane %v2367, 5
      %v2370 = vsel %vm666, %v2365, %v2369
      %v2371 = vshrl.u32 %v2079, 16
      %v2373 = vrot.slane %v2371, 4
      %v2374 = vor.u32 %v2373, %v2369
      %v2375 = vrot.slane %v2374, 4
      %v2377 = vshll.u32 %v2080, 16
      %v2379 = vrot.slane %v2377, 5
      %v2380 = vsel %vm666, %v2375, %v2379
      %v2382 = vshrl.u32 %v2081, 16
      %v2384 = vrot.slane %v2382, 4
      %v2385 = vshll.u32 %v2081, 16
      %v2387 = vrot.slane %v2385, 5
      %v2388 = vor.u32 %v2384, %v2387
      %v2389 = vrot.slane %v2388, 4
      %v2391 = vshll.u32 %v2082, 16
      %v2393 = vrot.slane %v2391, 5
      %v2394 = vsel %vm666, %v2389, %v2393
      %v2395 = vshrl.u32 %v2082, 16
      %v2397 = vrot.slane %v2395, 4
      %v2398 = vor.u32 %v2397, %v2393
      %v2399 = vrot.slane %v2398, 4
      %v2401 = vshll.u32 %v2083, 16
      %v2403 = vrot.slane %v2401, 5
      %v2404 = vsel %vm666, %v2399, %v2403
      %v2406 = vshrl.u32 %v2084, 16
      %v2408 = vrot.slane %v2406, 4
      %v2409 = vshll.u32 %v2084, 16
      %v2411 = vrot.slane %v2409, 5
      %v2412 = vor.u32 %v2408, %v2411
      %v2413 = vrot.slane %v2412, 4
      %v2415 = vshll.u32 %v2085, 16
      %v2417 = vrot.slane %v2415, 5
      %v2418 = vsel %vm666, %v2413, %v2417
      %v2419 = vshrl.u32 %v2085, 16
      %v2421 = vrot.slane %v2419, 4
      %v2422 = vor.u32 %v2421, %v2417
      %v2423 = vrot.slane %v2422, 4
      %v2425 = vshll.u32 %v2086, 16
      %v2427 = vrot.slane %v2425, 5
      %v2428 = vsel %vm666, %v2423, %v2427
      %v2430 = vshrl.u32 %v2087, 16
      %v2432 = vrot.slane %v2430, 4
      %v2433 = vshll.u32 %v2087, 16
      %v2435 = vrot.slane %v2433, 5
      %v2436 = vor.u32 %v2432, %v2435
      %v2437 = vrot.slane %v2436, 4
      %v2439 = vshll.u32 %v2088, 16
      %v2441 = vrot.slane %v2439, 5
      %v2442 = vsel %vm666, %v2437, %v2441
      %v2443 = vshrl.u32 %v2088, 16
      %v2445 = vrot.slane %v2443, 4
      %v2446 = vor.u32 %v2445, %v2441
      %v2447 = vrot.slane %v2446, 4
      %v2449 = vshll.u32 %v2089, 16
      %v2451 = vrot.slane %v2449, 5
      %v2452 = vsel %vm666, %v2447, %v2451
      %v2454 = vshrl.u32 %v2090, 16
      %v2456 = vrot.slane %v2454, 4
      %v2457 = vshll.u32 %v2090, 16
      %v2459 = vrot.slane %v2457, 5
      %v2460 = vor.u32 %v2456, %v2459
      %v2461 = vrot.slane %v2460, 4
      %v2463 = vshll.u32 %v2091, 16
      %v2465 = vrot.slane %v2463, 5
      %v2466 = vsel %vm666, %v2461, %v2465
      %v2467 = vshrl.u32 %v2091, 16
      %v2469 = vrot.slane %v2467, 4
      %v2470 = vor.u32 %v2469, %v2465
      %v2471 = vrot.slane %v2470, 4
      %v2473 = vshll.u32 %v2092, 16
      %v2475 = vrot.slane %v2473, 5
      %v2476 = vsel %vm666, %v2471, %v2475
      %s2477 = scalar_lea.vmem %s226, 256
      %v2478 = vld [vmem:[%s2477] sm:$0xf]
      %v2479 = vld [vmem:[%s2477 + $0x4] sm:$0xf]
      %v2480 = vld [vmem:[%s2477 + $0x8] sm:$0xf]
      %v2481 = vld [vmem:[%s2477 + $0xc] sm:$0xf]
      %v2482 = vld [vmem:[%s2477 + $0x10] sm:$0xf]
      %v2483 = vld [vmem:[%s2477 + $0x14] sm:$0xf]
      %v2484 = vld [vmem:[%s2477 + $0x18] sm:$0xf]
      %v2485 = vld [vmem:[%s2477 + $0x1c] sm:$0xf]
      %v2486 = vld [vmem:[%s2477 + $0x20] sm:$0xf]
      %v2487 = vld [vmem:[%s2477 + $0x24] sm:$0xf]
      %v2488 = vld [vmem:[%s2477 + $0x28] sm:$0xf]
      %v2489 = vld [vmem:[%s2477 + $0x2c] sm:$0xf]
      %v2490 = vld [vmem:[%s2477 + $0x30] sm:$0xf]
      %v2491 = vld [vmem:[%s2477 + $0x34] sm:$0xf]
      %v2492 = vld [vmem:[%s2477 + $0x38] sm:$0xf]
      %v2493 = vld [vmem:[%s2477 + $0x3c] sm:$0xf]
      %v2494 = vunpack.c.l.b16 %v2106
      %v2495 = vunpack.c.l.b16 %v2116
      %v2496 = vunpack.c.l.b16 %v2130
      %v2497 = vunpack.c.l.b16 %v2140
      %v2498 = vunpack.c.l.b16 %v2154
      %v2499 = vunpack.c.l.b16 %v2164
      %v2500 = vunpack.c.l.b16 %v2178
      %v2501 = vunpack.c.l.b16 %v2188
      %v2502 = vunpack.c.l.b16 %v2202
      %v2503 = vunpack.c.l.b16 %v2212
      %v2504 = vunpack.c.l.b16 %v2226
      %v2505 = vunpack.c.l.b16 %v2236
      %v2506 = vunpack.c.l.b16 %v2250
      %v2507 = vunpack.c.l.b16 %v2260
      %v2508 = vunpack.c.l.b16 %v2274
      %v2509 = vunpack.c.l.b16 %v2284
      %v2510 = vunpack.c.l.b16 %v2298
      %v2511 = vunpack.c.l.b16 %v2308
      %v2512 = vunpack.c.l.b16 %v2322
      %v2513 = vunpack.c.l.b16 %v2332
      %v2514 = vunpack.c.l.b16 %v2346
      %v2515 = vunpack.c.l.b16 %v2356
      %v2516 = vunpack.c.l.b16 %v2370
      %v2517 = vunpack.c.l.b16 %v2380
      %v2518 = vunpack.c.l.b16 %v2394
      %v2519 = vunpack.c.l.b16 %v2404
      %v2520 = vunpack.c.l.b16 %v2418
      %v2521 = vunpack.c.l.b16 %v2428
      %v2522 = vunpack.c.l.b16 %v2442
      %v2523 = vunpack.c.l.b16 %v2452
      %v2524 = vunpack.c.l.b16 %v2466
      %v2525 = vunpack.c.l.b16 %v2476
      %v2526 = vpack.c.b16 %v2495, %v2494
      %v2527 = vpack.c.b16 %v2497, %v2496
      %v2528 = vpack.c.b16 %v2499, %v2498
      %v2529 = vpack.c.b16 %v2501, %v2500
      %v2530 = vpack.c.b16 %v2503, %v2502
      %v2531 = vpack.c.b16 %v2505, %v2504
      %v2532 = vpack.c.b16 %v2507, %v2506
      %v2533 = vpack.c.b16 %v2509, %v2508
      %v2534 = vpack.c.b16 %v2511, %v2510
      %v2535 = vpack.c.b16 %v2513, %v2512
      %v2536 = vpack.c.b16 %v2515, %v2514
      %v2537 = vpack.c.b16 %v2517, %v2516
      %v2538 = vpack.c.b16 %v2519, %v2518
      %v2539 = vpack.c.b16 %v2521, %v2520
      %v2540 = vpack.c.b16 %v2523, %v2522
      %v2541 = vpack.c.b16 %v2525, %v2524
      %v2574 = vunpack.c.l.b16 %v2478
      %v2575 = vunpack.c.l.b16 %v2479
      %v2576 = vunpack.c.l.b16 %v2480
      %v2577 = vunpack.c.l.b16 %v2481
      %v2578 = vunpack.c.l.b16 %v2482
      %v2579 = vunpack.c.l.b16 %v2483
      %v2580 = vunpack.c.l.b16 %v2484
      %v2581 = vunpack.c.l.b16 %v2485
      %v2582 = vunpack.c.l.b16 %v2486
      %v2583 = vunpack.c.l.b16 %v2487
      %v2584 = vunpack.c.l.b16 %v2488
      %v2585 = vunpack.c.l.b16 %v2489
      %v2586 = vunpack.c.l.b16 %v2490
      %v2587 = vunpack.c.l.b16 %v2491
      %v2588 = vunpack.c.l.b16 %v2492
      %v2589 = vunpack.c.l.b16 %v2493
      %v2590 = vpack.c.b16 %v2575, %v2574
      %v2591 = vpack.c.b16 %v2577, %v2576
      %v2592 = vpack.c.b16 %v2579, %v2578
      %v2593 = vpack.c.b16 %v2581, %v2580
      %v2594 = vpack.c.b16 %v2583, %v2582
      %v2595 = vpack.c.b16 %v2585, %v2584
      %v2596 = vpack.c.b16 %v2587, %v2586
      %v2597 = vpack.c.b16 %v2589, %v2588
      %2606 = vmatpush.bf16.msra.mxu0 %v2597
      %2607 = vmatpush.bf16.msra.mxu0 %v2596
      %2608 = vmatpush.bf16.msra.mxu0 %v2595
      %2609 = vmatpush.bf16.msra.mxu0 %v2594
      %2610 = vmatpush.bf16.msra.mxu0 %v2593
      %2611 = vmatpush.bf16.msra.mxu0 %v2592
      %2612 = vmatpush.bf16.msra.mxu0 %v2591
      %2613 = vmatpush.bf16.msra.mxu0 %v2590
      %2614 = vmatmul.bf16.gmra.mxu0 %v2526
      %v2615 = vpop.f32.mrf.mxu0
      %v2616 = vadd.f32 0.0, %v2615
      %v2617 = vpop.f32.mrf.mxu0
      %v2618 = vadd.f32 0.0, %v2617
      %2619 = vmatmul.bf16.gmra.mxu0 %v2527
      %v2620 = vpop.f32.mrf.mxu0
      %v2621 = vadd.f32 0.0, %v2620
      %v2622 = vpop.f32.mrf.mxu0
      %v2623 = vadd.f32 0.0, %v2622
      %2624 = vmatmul.bf16.gmra.mxu0 %v2528
      %v2625 = vpop.f32.mrf.mxu0
      %v2626 = vadd.f32 0.0, %v2625
      %v2627 = vpop.f32.mrf.mxu0
      %v2628 = vadd.f32 0.0, %v2627
      %2629 = vmatmul.bf16.gmra.mxu0 %v2529
      %v2630 = vpop.f32.mrf.mxu0
      %v2631 = vadd.f32 0.0, %v2630
      %v2632 = vpop.f32.mrf.mxu0
      %v2633 = vadd.f32 0.0, %v2632
      %2634 = vmatmul.bf16.gmra.mxu0 %v2530
      %v2635 = vpop.f32.mrf.mxu0
      %v2636 = vadd.f32 0.0, %v2635
      %v2637 = vpop.f32.mrf.mxu0
      %v2638 = vadd.f32 0.0, %v2637
      %2639 = vmatmul.bf16.gmra.mxu0 %v2531
      %v2640 = vpop.f32.mrf.mxu0
      %v2641 = vadd.f32 0.0, %v2640
      %v2642 = vpop.f32.mrf.mxu0
      %v2643 = vadd.f32 0.0, %v2642
      %2644 = vmatmul.bf16.gmra.mxu0 %v2532
      %v2645 = vpop.f32.mrf.mxu0
      %v2646 = vadd.f32 0.0, %v2645
      %v2647 = vpop.f32.mrf.mxu0
      %v2648 = vadd.f32 0.0, %v2647
      %2649 = vmatmul.bf16.gmra.mxu0 %v2533
      %v2650 = vpop.f32.mrf.mxu0
      %v2651 = vadd.f32 0.0, %v2650
      %v2652 = vpop.f32.mrf.mxu0
      %v2653 = vadd.f32 0.0, %v2652
      %2654 = vmatmul.bf16.gmra.mxu0 %v2534
      %v2655 = vpop.f32.mrf.mxu0
      %v2656 = vadd.f32 0.0, %v2655
      %v2657 = vpop.f32.mrf.mxu0
      %v2658 = vadd.f32 0.0, %v2657
      %2659 = vmatmul.bf16.gmra.mxu0 %v2535
      %v2660 = vpop.f32.mrf.mxu0
      %v2661 = vadd.f32 0.0, %v2660
      %v2662 = vpop.f32.mrf.mxu0
      %v2663 = vadd.f32 0.0, %v2662
      %2664 = vmatmul.bf16.gmra.mxu0 %v2536
      %v2665 = vpop.f32.mrf.mxu0
      %v2666 = vadd.f32 0.0, %v2665
      %v2667 = vpop.f32.mrf.mxu0
      %v2668 = vadd.f32 0.0, %v2667
      %2669 = vmatmul.bf16.gmra.mxu0 %v2537
      %v2670 = vpop.f32.mrf.mxu0
      %v2671 = vadd.f32 0.0, %v2670
      %v2672 = vpop.f32.mrf.mxu0
      %v2673 = vadd.f32 0.0, %v2672
      %2674 = vmatmul.bf16.gmra.mxu0 %v2538
      %v2675 = vpop.f32.mrf.mxu0
      %v2676 = vadd.f32 0.0, %v2675
      %v2677 = vpop.f32.mrf.mxu0
      %v2678 = vadd.f32 0.0, %v2677
      %2679 = vmatmul.bf16.gmra.mxu0 %v2539
      %v2680 = vpop.f32.mrf.mxu0
      %v2681 = vadd.f32 0.0, %v2680
      %v2682 = vpop.f32.mrf.mxu0
      %v2683 = vadd.f32 0.0, %v2682
      %2684 = vmatmul.bf16.gmra.mxu0 %v2540
      %v2685 = vpop.f32.mrf.mxu0
      %v2686 = vadd.f32 0.0, %v2685
      %v2687 = vpop.f32.mrf.mxu0
      %v2688 = vadd.f32 0.0, %v2687
      %2689 = vmatmul.bf16.gmra.mxu0 %v2541
      %v2690 = vpop.f32.mrf.mxu0
      %v2691 = vadd.f32 0.0, %v2690
      %v2692 = vpop.f32.mrf.mxu0
      %v2693 = vadd.f32 0.0, %v2692
      %2694 = vdwg.mxu0
      %v2695 = vadd.f32 %v2013, %v2616
      %v2696 = vadd.f32 %v2014, %v2618
      %v2697 = vadd.f32 %v2015, %v2621
      %v2698 = vadd.f32 %v2016, %v2623
      %v2699 = vadd.f32 %v2017, %v2626
      %v2700 = vadd.f32 %v2018, %v2628
      %v2701 = vadd.f32 %v2019, %v2631
      %v2702 = vadd.f32 %v2020, %v2633
      %v2703 = vadd.f32 %v2021, %v2636
      %v2704 = vadd.f32 %v2022, %v2638
      %v2705 = vadd.f32 %v2023, %v2641
      %v2706 = vadd.f32 %v2024, %v2643
      %v2707 = vadd.f32 %v2025, %v2646
      %v2708 = vadd.f32 %v2026, %v2648
      %v2709 = vadd.f32 %v2027, %v2651
      %v2710 = vadd.f32 %v2028, %v2653
      %v2711 = vadd.f32 %v2029, %v2656
      %v2712 = vadd.f32 %v2030, %v2658
      %v2713 = vadd.f32 %v2031, %v2661
      %v2714 = vadd.f32 %v2032, %v2663
      %v2715 = vadd.f32 %v2033, %v2666
      %v2716 = vadd.f32 %v2034, %v2668
      %v2717 = vadd.f32 %v2035, %v2671
      %v2718 = vadd.f32 %v2036, %v2673
      %v2719 = vadd.f32 %v2037, %v2676
      %v2720 = vadd.f32 %v2038, %v2678
      %v2721 = vadd.f32 %v2039, %v2681
      %v2722 = vadd.f32 %v2040, %v2683
      %v2723 = vadd.f32 %v2041, %v2686
      %v2724 = vadd.f32 %v2042, %v2688
      %v2725 = vadd.f32 %v2043, %v2691
      %v2726 = vadd.f32 %v2044, %v2693
      %v2727 = vld [vmem:[%s1730] sm:$0xe]
      %v2728 = vld [vmem:[%s1730 + $0xc] sm:$0xe]
      %v2729 = vld [vmem:[%s1730 + $0x18] sm:$0xe]
      %v2730 = vld [vmem:[%s1730 + $0x24] sm:$0xe]
      %v2731 = vld [vmem:[%s1730 + $0x30] sm:$0xe]
      %v2732 = vld [vmem:[%s1730 + $0x3c] sm:$0xe]
      %v2733 = vld [vmem:[%s1730 + $0x48] sm:$0xe]
      %v2734 = vld [vmem:[%s1730 + $0x54] sm:$0xe]
      %v2735 = vld [vmem:[%s1730 + $0x60] sm:$0xe]
      %v2736 = vld [vmem:[%s1730 + $0x6c] sm:$0xe]
      %v2737 = vld [vmem:[%s1730 + $0x78] sm:$0xe]
      %v2738 = vld [vmem:[%s1730 + $0x84] sm:$0xe]
      %v2739 = vld [vmem:[%s1730 + $0x90] sm:$0xe]
      %v2740 = vld [vmem:[%s1730 + $0x9c] sm:$0xe]
      %v2741 = vld [vmem:[%s1730 + $0xa8] sm:$0xe]
      %v2742 = vld [vmem:[%s1730 + $0xb4] sm:$0xe]
      %v2791 = vrot.slane %v2727, 5
      %v2792 = vrot.slane %v2791, 4
      %v2793 = vrot.slane %v2046, 5
      %v2794 = vsel %vm1367, %v2792, %v2793
      %v2795 = vrot.slane %v2793, 4
      %v2796 = vrot.slane %v2047, 5
      %v2797 = vsel %vm1367, %v2795, %v2796
      %v2798 = vrot.slane %v2728, 5
      %v2799 = vrot.slane %v2798, 4
      %v2800 = vrot.slane %v2049, 5
      %v2801 = vsel %vm1367, %v2799, %v2800
      %v2802 = vrot.slane %v2800, 4
      %v2803 = vrot.slane %v2050, 5
      %v2804 = vsel %vm1367, %v2802, %v2803
      %v2805 = vrot.slane %v2729, 5
      %v2806 = vrot.slane %v2805, 4
      %v2807 = vrot.slane %v2052, 5
      %v2808 = vsel %vm1367, %v2806, %v2807
      %v2809 = vrot.slane %v2807, 4
      %v2810 = vrot.slane %v2053, 5
      %v2811 = vsel %vm1367, %v2809, %v2810
      %v2812 = vrot.slane %v2730, 5
      %v2813 = vrot.slane %v2812, 4
      %v2814 = vrot.slane %v2055, 5
      %v2815 = vsel %vm1367, %v2813, %v2814
      %v2816 = vrot.slane %v2814, 4
      %v2817 = vrot.slane %v2056, 5
      %v2818 = vsel %vm1367, %v2816, %v2817
      %v2819 = vrot.slane %v2731, 5
      %v2820 = vrot.slane %v2819, 4
      %v2821 = vrot.slane %v2058, 5
      %v2822 = vsel %vm1367, %v2820, %v2821
      %v2823 = vrot.slane %v2821, 4
      %v2824 = vrot.slane %v2059, 5
      %v2825 = vsel %vm1367, %v2823, %v2824
      %v2826 = vrot.slane %v2732, 5
      %v2827 = vrot.slane %v2826, 4
      %v2828 = vrot.slane %v2061, 5
      %v2829 = vsel %vm1367, %v2827, %v2828
      %v2830 = vrot.slane %v2828, 4
      %v2831 = vrot.slane %v2062, 5
      %v2832 = vsel %vm1367, %v2830, %v2831
      %v2833 = vrot.slane %v2733, 5
      %v2834 = vrot.slane %v2833, 4
      %v2835 = vrot.slane %v2064, 5
      %v2836 = vsel %vm1367, %v2834, %v2835
      %v2837 = vrot.slane %v2835, 4
      %v2838 = vrot.slane %v2065, 5
      %v2839 = vsel %vm1367, %v2837, %v2838
      %v2840 = vrot.slane %v2734, 5
      %v2841 = vrot.slane %v2840, 4
      %v2842 = vrot.slane %v2067, 5
      %v2843 = vsel %vm1367, %v2841, %v2842
      %v2844 = vrot.slane %v2842, 4
      %v2845 = vrot.slane %v2068, 5
      %v2846 = vsel %vm1367, %v2844, %v2845
      %v2847 = vrot.slane %v2735, 5
      %v2848 = vrot.slane %v2847, 4
      %v2849 = vrot.slane %v2070, 5
      %v2850 = vsel %vm1367, %v2848, %v2849
      %v2851 = vrot.slane %v2849, 4
      %v2852 = vrot.slane %v2071, 5
      %v2853 = vsel %vm1367, %v2851, %v2852
      %v2854 = vrot.slane %v2736, 5
      %v2855 = vrot.slane %v2854, 4
      %v2856 = vrot.slane %v2073, 5
      %v2857 = vsel %vm1367, %v2855, %v2856
      %v2858 = vrot.slane %v2856, 4
      %v2859 = vrot.slane %v2074, 5
      %v2860 = vsel %vm1367, %v2858, %v2859
      %v2861 = vrot.slane %v2737, 5
      %v2862 = vrot.slane %v2861, 4
      %v2863 = vrot.slane %v2076, 5
      %v2864 = vsel %vm1367, %v2862, %v2863
      %v2865 = vrot.slane %v2863, 4
      %v2866 = vrot.slane %v2077, 5
      %v2867 = vsel %vm1367, %v2865, %v2866
      %v2868 = vrot.slane %v2738, 5
      %v2869 = vrot.slane %v2868, 4
      %v2870 = vrot.slane %v2079, 5
      %v2871 = vsel %vm1367, %v2869, %v2870
      %v2872 = vrot.slane %v2870, 4
      %v2873 = vrot.slane %v2080, 5
      %v2874 = vsel %vm1367, %v2872, %v2873
      %v2875 = vrot.slane %v2739, 5
      %v2876 = vrot.slane %v2875, 4
      %v2877 = vrot.slane %v2082, 5
      %v2878 = vsel %vm1367, %v2876, %v2877
      %v2879 = vrot.slane %v2877, 4
      %v2880 = vrot.slane %v2083, 5
      %v2881 = vsel %vm1367, %v2879, %v2880
      %v2882 = vrot.slane %v2740, 5
      %v2883 = vrot.slane %v2882, 4
      %v2884 = vrot.slane %v2085, 5
      %v2885 = vsel %vm1367, %v2883, %v2884
      %v2886 = vrot.slane %v2884, 4
      %v2887 = vrot.slane %v2086, 5
      %v2888 = vsel %vm1367, %v2886, %v2887
      %v2889 = vrot.slane %v2741, 5
      %v2890 = vrot.slane %v2889, 4
      %v2891 = vrot.slane %v2088, 5
      %v2892 = vsel %vm1367, %v2890, %v2891
      %v2893 = vrot.slane %v2891, 4
      %v2894 = vrot.slane %v2089, 5
      %v2895 = vsel %vm1367, %v2893, %v2894
      %v2896 = vrot.slane %v2742, 5
      %v2897 = vrot.slane %v2896, 4
      %v2898 = vrot.slane %v2091, 5
      %v2899 = vsel %vm1367, %v2897, %v2898
      %v2900 = vrot.slane %v2898, 4
      %v2901 = vrot.slane %v2092, 5
      %v2902 = vsel %vm1367, %v2900, %v2901
      %s2903 = scalar_lea.vmem %s226, 320
      %v2904 = vld [vmem:[%s2903] sm:$0xf]
      %v2905 = vld [vmem:[%s2903 + $0x4] sm:$0xf]
      %v2906 = vld [vmem:[%s2903 + $0x8] sm:$0xf]
      %v2907 = vld [vmem:[%s2903 + $0xc] sm:$0xf]
      %v2908 = vld [vmem:[%s2903 + $0x10] sm:$0xf]
      %v2909 = vld [vmem:[%s2903 + $0x14] sm:$0xf]
      %v2910 = vld [vmem:[%s2903 + $0x18] sm:$0xf]
      %v2911 = vld [vmem:[%s2903 + $0x1c] sm:$0xf]
      %v2912 = vld [vmem:[%s2903 + $0x20] sm:$0xf]
      %v2913 = vld [vmem:[%s2903 + $0x24] sm:$0xf]
      %v2914 = vld [vmem:[%s2903 + $0x28] sm:$0xf]
      %v2915 = vld [vmem:[%s2903 + $0x2c] sm:$0xf]
      %v2916 = vld [vmem:[%s2903 + $0x30] sm:$0xf]
      %v2917 = vld [vmem:[%s2903 + $0x34] sm:$0xf]
      %v2918 = vld [vmem:[%s2903 + $0x38] sm:$0xf]
      %v2919 = vld [vmem:[%s2903 + $0x3c] sm:$0xf]
      %v2920 = vunpack.c.l.b16 %v2794
      %v2921 = vunpack.c.l.b16 %v2797
      %v2922 = vunpack.c.l.b16 %v2801
      %v2923 = vunpack.c.l.b16 %v2804
      %v2924 = vunpack.c.l.b16 %v2808
      %v2925 = vunpack.c.l.b16 %v2811
      %v2926 = vunpack.c.l.b16 %v2815
      %v2927 = vunpack.c.l.b16 %v2818
      %v2928 = vunpack.c.l.b16 %v2822
      %v2929 = vunpack.c.l.b16 %v2825
      %v2930 = vunpack.c.l.b16 %v2829
      %v2931 = vunpack.c.l.b16 %v2832
      %v2932 = vunpack.c.l.b16 %v2836
      %v2933 = vunpack.c.l.b16 %v2839
      %v2934 = vunpack.c.l.b16 %v2843
      %v2935 = vunpack.c.l.b16 %v2846
      %v2936 = vunpack.c.l.b16 %v2850
      %v2937 = vunpack.c.l.b16 %v2853
      %v2938 = vunpack.c.l.b16 %v2857
      %v2939 = vunpack.c.l.b16 %v2860
      %v2940 = vunpack.c.l.b16 %v2864
      %v2941 = vunpack.c.l.b16 %v2867
      %v2942 = vunpack.c.l.b16 %v2871
      %v2943 = vunpack.c.l.b16 %v2874
      %v2944 = vunpack.c.l.b16 %v2878
      %v2945 = vunpack.c.l.b16 %v2881
      %v2946 = vunpack.c.l.b16 %v2885
      %v2947 = vunpack.c.l.b16 %v2888
      %v2948 = vunpack.c.l.b16 %v2892
      %v2949 = vunpack.c.l.b16 %v2895
      %v2950 = vunpack.c.l.b16 %v2899
      %v2951 = vunpack.c.l.b16 %v2902
      %v2952 = vpack.c.b16 %v2921, %v2920
      %v2953 = vpack.c.b16 %v2923, %v2922
      %v2954 = vpack.c.b16 %v2925, %v2924
      %v2955 = vpack.c.b16 %v2927, %v2926
      %v2956 = vpack.c.b16 %v2929, %v2928
      %v2957 = vpack.c.b16 %v2931, %v2930
      %v2958 = vpack.c.b16 %v2933, %v2932
      %v2959 = vpack.c.b16 %v2935, %v2934
      %v2960 = vpack.c.b16 %v2937, %v2936
      %v2961 = vpack.c.b16 %v2939, %v2938
      %v2962 = vpack.c.b16 %v2941, %v2940
      %v2963 = vpack.c.b16 %v2943, %v2942
      %v2964 = vpack.c.b16 %v2945, %v2944
      %v2965 = vpack.c.b16 %v2947, %v2946
      %v2966 = vpack.c.b16 %v2949, %v2948
      %v2967 = vpack.c.b16 %v2951, %v2950
      %v3000 = vunpack.c.l.b16 %v2904
      %v3001 = vunpack.c.l.b16 %v2905
      %v3002 = vunpack.c.l.b16 %v2906
      %v3003 = vunpack.c.l.b16 %v2907
      %v3004 = vunpack.c.l.b16 %v2908
      %v3005 = vunpack.c.l.b16 %v2909
      %v3006 = vunpack.c.l.b16 %v2910
      %v3007 = vunpack.c.l.b16 %v2911
      %v3008 = vunpack.c.l.b16 %v2912
      %v3009 = vunpack.c.l.b16 %v2913
      %v3010 = vunpack.c.l.b16 %v2914
      %v3011 = vunpack.c.l.b16 %v2915
      %v3012 = vunpack.c.l.b16 %v2916
      %v3013 = vunpack.c.l.b16 %v2917
      %v3014 = vunpack.c.l.b16 %v2918
      %v3015 = vunpack.c.l.b16 %v2919
      %v3016 = vpack.c.b16 %v3001, %v3000
      %v3017 = vpack.c.b16 %v3003, %v3002
      %v3018 = vpack.c.b16 %v3005, %v3004
      %v3019 = vpack.c.b16 %v3007, %v3006
      %v3020 = vpack.c.b16 %v3009, %v3008
      %v3021 = vpack.c.b16 %v3011, %v3010
      %v3022 = vpack.c.b16 %v3013, %v3012
      %v3023 = vpack.c.b16 %v3015, %v3014
      %3032 = vmatpush.bf16.msra.mxu0 %v3023
      %3033 = vmatpush.bf16.msra.mxu0 %v3022
      %3034 = vmatpush.bf16.msra.mxu0 %v3021
      %3035 = vmatpush.bf16.msra.mxu0 %v3020
      %3036 = vmatpush.bf16.msra.mxu0 %v3019
      %3037 = vmatpush.bf16.msra.mxu0 %v3018
      %3038 = vmatpush.bf16.msra.mxu0 %v3017
      %3039 = vmatpush.bf16.msra.mxu0 %v3016
      %3040 = vmatmul.bf16.gmra.mxu0 %v2952
      %v3041 = vpop.f32.mrf.mxu0
      %v3042 = vadd.f32 0.0, %v3041
      %v3043 = vpop.f32.mrf.mxu0
      %v3044 = vadd.f32 0.0, %v3043
      %3045 = vmatmul.bf16.gmra.mxu0 %v2953
      %v3046 = vpop.f32.mrf.mxu0
      %v3047 = vadd.f32 0.0, %v3046
      %v3048 = vpop.f32.mrf.mxu0
      %v3049 = vadd.f32 0.0, %v3048
      %3050 = vmatmul.bf16.gmra.mxu0 %v2954
      %v3051 = vpop.f32.mrf.mxu0
      %v3052 = vadd.f32 0.0, %v3051
      %v3053 = vpop.f32.mrf.mxu0
      %v3054 = vadd.f32 0.0, %v3053
      %3055 = vmatmul.bf16.gmra.mxu0 %v2955
      %v3056 = vpop.f32.mrf.mxu0
      %v3057 = vadd.f32 0.0, %v3056
      %v3058 = vpop.f32.mrf.mxu0
      %v3059 = vadd.f32 0.0, %v3058
      %3060 = vmatmul.bf16.gmra.mxu0 %v2956
      %v3061 = vpop.f32.mrf.mxu0
      %v3062 = vadd.f32 0.0, %v3061
      %v3063 = vpop.f32.mrf.mxu0
      %v3064 = vadd.f32 0.0, %v3063
      %3065 = vmatmul.bf16.gmra.mxu0 %v2957
      %v3066 = vpop.f32.mrf.mxu0
      %v3067 = vadd.f32 0.0, %v3066
      %v3068 = vpop.f32.mrf.mxu0
      %v3069 = vadd.f32 0.0, %v3068
      %3070 = vmatmul.bf16.gmra.mxu0 %v2958
      %v3071 = vpop.f32.mrf.mxu0
      %v3072 = vadd.f32 0.0, %v3071
      %v3073 = vpop.f32.mrf.mxu0
      %v3074 = vadd.f32 0.0, %v3073
      %3075 = vmatmul.bf16.gmra.mxu0 %v2959
      %v3076 = vpop.f32.mrf.mxu0
      %v3077 = vadd.f32 0.0, %v3076
      %v3078 = vpop.f32.mrf.mxu0
      %v3079 = vadd.f32 0.0, %v3078
      %3080 = vmatmul.bf16.gmra.mxu0 %v2960
      %v3081 = vpop.f32.mrf.mxu0
      %v3082 = vadd.f32 0.0, %v3081
      %v3083 = vpop.f32.mrf.mxu0
      %v3084 = vadd.f32 0.0, %v3083
      %3085 = vmatmul.bf16.gmra.mxu0 %v2961
      %v3086 = vpop.f32.mrf.mxu0
      %v3087 = vadd.f32 0.0, %v3086
      %v3088 = vpop.f32.mrf.mxu0
      %v3089 = vadd.f32 0.0, %v3088
      %3090 = vmatmul.bf16.gmra.mxu0 %v2962
      %v3091 = vpop.f32.mrf.mxu0
      %v3092 = vadd.f32 0.0, %v3091
      %v3093 = vpop.f32.mrf.mxu0
      %v3094 = vadd.f32 0.0, %v3093
      %3095 = vmatmul.bf16.gmra.mxu0 %v2963
      %v3096 = vpop.f32.mrf.mxu0
      %v3097 = vadd.f32 0.0, %v3096
      %v3098 = vpop.f32.mrf.mxu0
      %v3099 = vadd.f32 0.0, %v3098
      %3100 = vmatmul.bf16.gmra.mxu0 %v2964
      %v3101 = vpop.f32.mrf.mxu0
      %v3102 = vadd.f32 0.0, %v3101
      %v3103 = vpop.f32.mrf.mxu0
      %v3104 = vadd.f32 0.0, %v3103
      %3105 = vmatmul.bf16.gmra.mxu0 %v2965
      %v3106 = vpop.f32.mrf.mxu0
      %v3107 = vadd.f32 0.0, %v3106
      %v3108 = vpop.f32.mrf.mxu0
      %v3109 = vadd.f32 0.0, %v3108
      %3110 = vmatmul.bf16.gmra.mxu0 %v2966
      %v3111 = vpop.f32.mrf.mxu0
      %v3112 = vadd.f32 0.0, %v3111
      %v3113 = vpop.f32.mrf.mxu0
      %v3114 = vadd.f32 0.0, %v3113
      %3115 = vmatmul.bf16.gmra.mxu0 %v2967
      %v3116 = vpop.f32.mrf.mxu0
      %v3117 = vadd.f32 0.0, %v3116
      %v3118 = vpop.f32.mrf.mxu0
      %v3119 = vadd.f32 0.0, %v3118
      %3120 = vdwg.mxu0
      %v3121 = vadd.f32 %v2695, %v3042
      %v3122 = vadd.f32 %v2696, %v3044
      %v3123 = vadd.f32 %v2697, %v3047
      %v3124 = vadd.f32 %v2698, %v3049
      %v3125 = vadd.f32 %v2699, %v3052
      %v3126 = vadd.f32 %v2700, %v3054
      %v3127 = vadd.f32 %v2701, %v3057
      %v3128 = vadd.f32 %v2702, %v3059
      %v3129 = vadd.f32 %v2703, %v3062
      %v3130 = vadd.f32 %v2704, %v3064
      %v3131 = vadd.f32 %v2705, %v3067
      %v3132 = vadd.f32 %v2706, %v3069
      %v3133 = vadd.f32 %v2707, %v3072
      %v3134 = vadd.f32 %v2708, %v3074
      %v3135 = vadd.f32 %v2709, %v3077
      %v3136 = vadd.f32 %v2710, %v3079
      %v3137 = vadd.f32 %v2711, %v3082
      %v3138 = vadd.f32 %v2712, %v3084
      %v3139 = vadd.f32 %v2713, %v3087
      %v3140 = vadd.f32 %v2714, %v3089
      %v3141 = vadd.f32 %v2715, %v3092
      %v3142 = vadd.f32 %v2716, %v3094
      %v3143 = vadd.f32 %v2717, %v3097
      %v3144 = vadd.f32 %v2718, %v3099
      %v3145 = vadd.f32 %v2719, %v3102
      %v3146 = vadd.f32 %v2720, %v3104
      %v3147 = vadd.f32 %v2721, %v3107
      %v3148 = vadd.f32 %v2722, %v3109
      %v3149 = vadd.f32 %v2723, %v3112
      %v3150 = vadd.f32 %v2724, %v3114
      %v3151 = vadd.f32 %v2725, %v3117
      %v3152 = vadd.f32 %v2726, %v3119
      %s3153 = scalar_lea.vmem %s220, 24
      %v3154 = vld [vmem:[%s3153] sm:$0xf]
      %v3155 = vld [vmem:[%s3153 + $0x4] sm:$0xf]
      %v3156 = vld [vmem:[%s3153 + $0xc] sm:$0xf]
      %v3157 = vld [vmem:[%s3153 + $0x10] sm:$0xf]
      %v3158 = vld [vmem:[%s3153 + $0x18] sm:$0xf]
      %v3159 = vld [vmem:[%s3153 + $0x1c] sm:$0xf]
      %v3160 = vld [vmem:[%s3153 + $0x24] sm:$0xf]
      %v3161 = vld [vmem:[%s3153 + $0x28] sm:$0xf]
      %v3162 = vld [vmem:[%s3153 + $0x30] sm:$0xf]
      %v3163 = vld [vmem:[%s3153 + $0x34] sm:$0xf]
      %v3164 = vld [vmem:[%s3153 + $0x3c] sm:$0xf]
      %v3165 = vld [vmem:[%s3153 + $0x40] sm:$0xf]
      %v3166 = vld [vmem:[%s3153 + $0x48] sm:$0xf]
      %v3167 = vld [vmem:[%s3153 + $0x4c] sm:$0xf]
      %v3168 = vld [vmem:[%s3153 + $0x54] sm:$0xf]
      %v3169 = vld [vmem:[%s3153 + $0x58] sm:$0xf]
      %v3170 = vld [vmem:[%s3153 + $0x60] sm:$0xf]
      %v3171 = vld [vmem:[%s3153 + $0x64] sm:$0xf]
      %v3172 = vld [vmem:[%s3153 + $0x6c] sm:$0xf]
      %v3173 = vld [vmem:[%s3153 + $0x70] sm:$0xf]
      %v3174 = vld [vmem:[%s3153 + $0x78] sm:$0xf]
      %v3175 = vld [vmem:[%s3153 + $0x7c] sm:$0xf]
      %v3176 = vld [vmem:[%s3153 + $0x84] sm:$0xf]
      %v3177 = vld [vmem:[%s3153 + $0x88] sm:$0xf]
      %v3178 = vld [vmem:[%s3153 + $0x90] sm:$0xf]
      %v3179 = vld [vmem:[%s3153 + $0x94] sm:$0xf]
      %v3180 = vld [vmem:[%s3153 + $0x9c] sm:$0xf]
      %v3181 = vld [vmem:[%s3153 + $0xa0] sm:$0xf]
      %v3182 = vld [vmem:[%s3153 + $0xa8] sm:$0xf]
      %v3183 = vld [vmem:[%s3153 + $0xac] sm:$0xf]
      %v3184 = vld [vmem:[%s3153 + $0xb4] sm:$0xf]
      %v3185 = vld [vmem:[%s3153 + $0xb8] sm:$0xf]
      %s3186 = scalar_lea.vmem %s226, 384
      %v3187 = vld [vmem:[%s3186] sm:$0xf]
      %v3188 = vld [vmem:[%s3186 + $0x4] sm:$0xf]
      %v3189 = vld [vmem:[%s3186 + $0x8] sm:$0xf]
      %v3190 = vld [vmem:[%s3186 + $0xc] sm:$0xf]
      %v3191 = vld [vmem:[%s3186 + $0x10] sm:$0xf]
      %v3192 = vld [vmem:[%s3186 + $0x14] sm:$0xf]
      %v3193 = vld [vmem:[%s3186 + $0x18] sm:$0xf]
      %v3194 = vld [vmem:[%s3186 + $0x1c] sm:$0xf]
      %v3195 = vld [vmem:[%s3186 + $0x20] sm:$0xf]
      %v3196 = vld [vmem:[%s3186 + $0x24] sm:$0xf]
      %v3197 = vld [vmem:[%s3186 + $0x28] sm:$0xf]
      %v3198 = vld [vmem:[%s3186 + $0x2c] sm:$0xf]
      %v3199 = vld [vmem:[%s3186 + $0x30] sm:$0xf]
      %v3200 = vld [vmem:[%s3186 + $0x34] sm:$0xf]
      %v3201 = vld [vmem:[%s3186 + $0x38] sm:$0xf]
      %v3202 = vld [vmem:[%s3186 + $0x3c] sm:$0xf]
      %v3235 = vunpack.c.l.b16 %v3154
      %v3236 = vunpack.c.l.b16 %v3155
      %v3237 = vunpack.c.l.b16 %v3156
      %v3238 = vunpack.c.l.b16 %v3157
      %v3239 = vunpack.c.l.b16 %v3158
      %v3240 = vunpack.c.l.b16 %v3159
      %v3241 = vunpack.c.l.b16 %v3160
      %v3242 = vunpack.c.l.b16 %v3161
      %v3243 = vunpack.c.l.b16 %v3162
      %v3244 = vunpack.c.l.b16 %v3163
      %v3245 = vunpack.c.l.b16 %v3164
      %v3246 = vunpack.c.l.b16 %v3165
      %v3247 = vunpack.c.l.b16 %v3166
      %v3248 = vunpack.c.l.b16 %v3167
      %v3249 = vunpack.c.l.b16 %v3168
      %v3250 = vunpack.c.l.b16 %v3169
      %v3251 = vunpack.c.l.b16 %v3170
      %v3252 = vunpack.c.l.b16 %v3171
      %v3253 = vunpack.c.l.b16 %v3172
      %v3254 = vunpack.c.l.b16 %v3173
      %v3255 = vunpack.c.l.b16 %v3174
      %v3256 = vunpack.c.l.b16 %v3175
      %v3257 = vunpack.c.l.b16 %v3176
      %v3258 = vunpack.c.l.b16 %v3177
      %v3259 = vunpack.c.l.b16 %v3178
      %v3260 = vunpack.c.l.b16 %v3179
      %v3261 = vunpack.c.l.b16 %v3180
      %v3262 = vunpack.c.l.b16 %v3181
      %v3263 = vunpack.c.l.b16 %v3182
      %v3264 = vunpack.c.l.b16 %v3183
      %v3265 = vunpack.c.l.b16 %v3184
      %v3266 = vunpack.c.l.b16 %v3185
      %v3267 = vpack.c.b16 %v3236, %v3235
      %v3268 = vpack.c.b16 %v3238, %v3237
      %v3269 = vpack.c.b16 %v3240, %v3239
      %v3270 = vpack.c.b16 %v3242, %v3241
      %v3271 = vpack.c.b16 %v3244, %v3243
      %v3272 = vpack.c.b16 %v3246, %v3245
      %v3273 = vpack.c.b16 %v3248, %v3247
      %v3274 = vpack.c.b16 %v3250, %v3249
      %v3275 = vpack.c.b16 %v3252, %v3251
      %v3276 = vpack.c.b16 %v3254, %v3253
      %v3277 = vpack.c.b16 %v3256, %v3255
      %v3278 = vpack.c.b16 %v3258, %v3257
      %v3279 = vpack.c.b16 %v3260, %v3259
      %v3280 = vpack.c.b16 %v3262, %v3261
      %v3281 = vpack.c.b16 %v3264, %v3263
      %v3282 = vpack.c.b16 %v3266, %v3265
      %v3315 = vunpack.c.l.b16 %v3187
      %v3316 = vunpack.c.l.b16 %v3188
      %v3317 = vunpack.c.l.b16 %v3189
      %v3318 = vunpack.c.l.b16 %v3190
      %v3319 = vunpack.c.l.b16 %v3191
      %v3320 = vunpack.c.l.b16 %v3192
      %v3321 = vunpack.c.l.b16 %v3193
      %v3322 = vunpack.c.l.b16 %v3194
      %v3323 = vunpack.c.l.b16 %v3195
      %v3324 = vunpack.c.l.b16 %v3196
      %v3325 = vunpack.c.l.b16 %v3197
      %v3326 = vunpack.c.l.b16 %v3198
      %v3327 = vunpack.c.l.b16 %v3199
      %v3328 = vunpack.c.l.b16 %v3200
      %v3329 = vunpack.c.l.b16 %v3201
      %v3330 = vunpack.c.l.b16 %v3202
      %v3331 = vpack.c.b16 %v3316, %v3315
      %v3332 = vpack.c.b16 %v3318, %v3317
      %v3333 = vpack.c.b16 %v3320, %v3319
      %v3334 = vpack.c.b16 %v3322, %v3321
      %v3335 = vpack.c.b16 %v3324, %v3323
      %v3336 = vpack.c.b16 %v3326, %v3325
      %v3337 = vpack.c.b16 %v3328, %v3327
      %v3338 = vpack.c.b16 %v3330, %v3329
      %3347 = vmatpush.bf16.msra.mxu0 %v3338
      %3348 = vmatpush.bf16.msra.mxu0 %v3337
      %3349 = vmatpush.bf16.msra.mxu0 %v3336
      %3350 = vmatpush.bf16.msra.mxu0 %v3335
      %3351 = vmatpush.bf16.msra.mxu0 %v3334
      %3352 = vmatpush.bf16.msra.mxu0 %v3333
      %3353 = vmatpush.bf16.msra.mxu0 %v3332
      %3354 = vmatpush.bf16.msra.mxu0 %v3331
      %3355 = vmatmul.bf16.gmra.mxu0 %v3267
      %v3356 = vpop.f32.mrf.mxu0
      %v3357 = vadd.f32 0.0, %v3356
      %v3358 = vpop.f32.mrf.mxu0
      %v3359 = vadd.f32 0.0, %v3358
      %3360 = vmatmul.bf16.gmra.mxu0 %v3268
      %v3361 = vpop.f32.mrf.mxu0
      %v3362 = vadd.f32 0.0, %v3361
      %v3363 = vpop.f32.mrf.mxu0
      %v3364 = vadd.f32 0.0, %v3363
      %3365 = vmatmul.bf16.gmra.mxu0 %v3269
      %v3366 = vpop.f32.mrf.mxu0
      %v3367 = vadd.f32 0.0, %v3366
      %v3368 = vpop.f32.mrf.mxu0
      %v3369 = vadd.f32 0.0, %v3368
      %3370 = vmatmul.bf16.gmra.mxu0 %v3270
      %v3371 = vpop.f32.mrf.mxu0
      %v3372 = vadd.f32 0.0, %v3371
      %v3373 = vpop.f32.mrf.mxu0
      %v3374 = vadd.f32 0.0, %v3373
      %3375 = vmatmul.bf16.gmra.mxu0 %v3271
      %v3376 = vpop.f32.mrf.mxu0
      %v3377 = vadd.f32 0.0, %v3376
      %v3378 = vpop.f32.mrf.mxu0
      %v3379 = vadd.f32 0.0, %v3378
      %3380 = vmatmul.bf16.gmra.mxu0 %v3272
      %v3381 = vpop.f32.mrf.mxu0
      %v3382 = vadd.f32 0.0, %v3381
      %v3383 = vpop.f32.mrf.mxu0
      %v3384 = vadd.f32 0.0, %v3383
      %3385 = vmatmul.bf16.gmra.mxu0 %v3273
      %v3386 = vpop.f32.mrf.mxu0
      %v3387 = vadd.f32 0.0, %v3386
      %v3388 = vpop.f32.mrf.mxu0
      %v3389 = vadd.f32 0.0, %v3388
      %3390 = vmatmul.bf16.gmra.mxu0 %v3274
      %v3391 = vpop.f32.mrf.mxu0
      %v3392 = vadd.f32 0.0, %v3391
      %v3393 = vpop.f32.mrf.mxu0
      %v3394 = vadd.f32 0.0, %v3393
      %3395 = vmatmul.bf16.gmra.mxu0 %v3275
      %v3396 = vpop.f32.mrf.mxu0
      %v3397 = vadd.f32 0.0, %v3396
      %v3398 = vpop.f32.mrf.mxu0
      %v3399 = vadd.f32 0.0, %v3398
      %3400 = vmatmul.bf16.gmra.mxu0 %v3276
      %v3401 = vpop.f32.mrf.mxu0
      %v3402 = vadd.f32 0.0, %v3401
      %v3403 = vpop.f32.mrf.mxu0
      %v3404 = vadd.f32 0.0, %v3403
      %3405 = vmatmul.bf16.gmra.mxu0 %v3277
      %v3406 = vpop.f32.mrf.mxu0
      %v3407 = vadd.f32 0.0, %v3406
      %v3408 = vpop.f32.mrf.mxu0
      %v3409 = vadd.f32 0.0, %v3408
      %3410 = vmatmul.bf16.gmra.mxu0 %v3278
      %v3411 = vpop.f32.mrf.mxu0
      %v3412 = vadd.f32 0.0, %v3411
      %v3413 = vpop.f32.mrf.mxu0
      %v3414 = vadd.f32 0.0, %v3413
      %3415 = vmatmul.bf16.gmra.mxu0 %v3279
      %v3416 = vpop.f32.mrf.mxu0
      %v3417 = vadd.f32 0.0, %v3416
      %v3418 = vpop.f32.mrf.mxu0
      %v3419 = vadd.f32 0.0, %v3418
      %3420 = vmatmul.bf16.gmra.mxu0 %v3280
      %v3421 = vpop.f32.mrf.mxu0
      %v3422 = vadd.f32 0.0, %v3421
      %v3423 = vpop.f32.mrf.mxu0
      %v3424 = vadd.f32 0.0, %v3423
      %3425 = vmatmul.bf16.gmra.mxu0 %v3281
      %v3426 = vpop.f32.mrf.mxu0
      %v3427 = vadd.f32 0.0, %v3426
      %v3428 = vpop.f32.mrf.mxu0
      %v3429 = vadd.f32 0.0, %v3428
      %3430 = vmatmul.bf16.gmra.mxu0 %v3282
      %v3431 = vpop.f32.mrf.mxu0
      %v3432 = vadd.f32 0.0, %v3431
      %v3433 = vpop.f32.mrf.mxu0
      %v3434 = vadd.f32 0.0, %v3433
      %3435 = vdwg.mxu0
      %v3436 = vadd.f32 %v3121, %v3357
      %v3437 = vadd.f32 %v3122, %v3359
      %v3438 = vadd.f32 %v3123, %v3362
      %v3439 = vadd.f32 %v3124, %v3364
      %v3440 = vadd.f32 %v3125, %v3367
      %v3441 = vadd.f32 %v3126, %v3369
      %v3442 = vadd.f32 %v3127, %v3372
      %v3443 = vadd.f32 %v3128, %v3374
      %v3444 = vadd.f32 %v3129, %v3377
      %v3445 = vadd.f32 %v3130, %v3379
      %v3446 = vadd.f32 %v3131, %v3382
      %v3447 = vadd.f32 %v3132, %v3384
      %v3448 = vadd.f32 %v3133, %v3387
      %v3449 = vadd.f32 %v3134, %v3389
      %v3450 = vadd.f32 %v3135, %v3392
      %v3451 = vadd.f32 %v3136, %v3394
      %v3452 = vadd.f32 %v3137, %v3397
      %v3453 = vadd.f32 %v3138, %v3399
      %v3454 = vadd.f32 %v3139, %v3402
      %v3455 = vadd.f32 %v3140, %v3404
      %v3456 = vadd.f32 %v3141, %v3407
      %v3457 = vadd.f32 %v3142, %v3409
      %v3458 = vadd.f32 %v3143, %v3412
      %v3459 = vadd.f32 %v3144, %v3414
      %v3460 = vadd.f32 %v3145, %v3417
      %v3461 = vadd.f32 %v3146, %v3419
      %v3462 = vadd.f32 %v3147, %v3422
      %v3463 = vadd.f32 %v3148, %v3424
      %v3464 = vadd.f32 %v3149, %v3427
      %v3465 = vadd.f32 %v3150, %v3429
      %v3466 = vadd.f32 %v3151, %v3432
      %v3467 = vadd.f32 %v3152, %v3434
      %v3468 = vld [vmem:[%s3153] sm:$0xf]
      %v3469 = vld [vmem:[%s3153 + $0x4] sm:$0xf]
      %v3470 = vld [vmem:[%s3153 + $0x8] sm:$0x1]
      %v3471 = vld [vmem:[%s3153 + $0xc] sm:$0xf]
      %v3472 = vld [vmem:[%s3153 + $0x10] sm:$0xf]
      %v3473 = vld [vmem:[%s3153 + $0x14] sm:$0x1]
      %v3474 = vld [vmem:[%s3153 + $0x18] sm:$0xf]
      %v3475 = vld [vmem:[%s3153 + $0x1c] sm:$0xf]
      %v3476 = vld [vmem:[%s3153 + $0x20] sm:$0x1]
      %v3477 = vld [vmem:[%s3153 + $0x24] sm:$0xf]
      %v3478 = vld [vmem:[%s3153 + $0x28] sm:$0xf]
      %v3479 = vld [vmem:[%s3153 + $0x2c] sm:$0x1]
      %v3480 = vld [vmem:[%s3153 + $0x30] sm:$0xf]
      %v3481 = vld [vmem:[%s3153 + $0x34] sm:$0xf]
      %v3482 = vld [vmem:[%s3153 + $0x38] sm:$0x1]
      %v3483 = vld [vmem:[%s3153 + $0x3c] sm:$0xf]
      %v3484 = vld [vmem:[%s3153 + $0x40] sm:$0xf]
      %v3485 = vld [vmem:[%s3153 + $0x44] sm:$0x1]
      %v3486 = vld [vmem:[%s3153 + $0x48] sm:$0xf]
      %v3487 = vld [vmem:[%s3153 + $0x4c] sm:$0xf]
      %v3488 = vld [vmem:[%s3153 + $0x50] sm:$0x1]
      %v3489 = vld [vmem:[%s3153 + $0x54] sm:$0xf]
      %v3490 = vld [vmem:[%s3153 + $0x58] sm:$0xf]
      %v3491 = vld [vmem:[%s3153 + $0x5c] sm:$0x1]
      %v3492 = vld [vmem:[%s3153 + $0x60] sm:$0xf]
      %v3493 = vld [vmem:[%s3153 + $0x64] sm:$0xf]
      %v3494 = vld [vmem:[%s3153 + $0x68] sm:$0x1]
      %v3495 = vld [vmem:[%s3153 + $0x6c] sm:$0xf]
      %v3496 = vld [vmem:[%s3153 + $0x70] sm:$0xf]
      %v3497 = vld [vmem:[%s3153 + $0x74] sm:$0x1]
      %v3498 = vld [vmem:[%s3153 + $0x78] sm:$0xf]
      %v3499 = vld [vmem:[%s3153 + $0x7c] sm:$0xf]
      %v3500 = vld [vmem:[%s3153 + $0x80] sm:$0x1]
      %v3501 = vld [vmem:[%s3153 + $0x84] sm:$0xf]
      %v3502 = vld [vmem:[%s3153 + $0x88] sm:$0xf]
      %v3503 = vld [vmem:[%s3153 + $0x8c] sm:$0x1]
      %v3504 = vld [vmem:[%s3153 + $0x90] sm:$0xf]
      %v3505 = vld [vmem:[%s3153 + $0x94] sm:$0xf]
      %v3506 = vld [vmem:[%s3153 + $0x98] sm:$0x1]
      %v3507 = vld [vmem:[%s3153 + $0x9c] sm:$0xf]
      %v3508 = vld [vmem:[%s3153 + $0xa0] sm:$0xf]
      %v3509 = vld [vmem:[%s3153 + $0xa4] sm:$0x1]
      %v3510 = vld [vmem:[%s3153 + $0xa8] sm:$0xf]
      %v3511 = vld [vmem:[%s3153 + $0xac] sm:$0xf]
      %v3512 = vld [vmem:[%s3153 + $0xb0] sm:$0x1]
      %v3513 = vld [vmem:[%s3153 + $0xb4] sm:$0xf]
      %v3514 = vld [vmem:[%s3153 + $0xb8] sm:$0xf]
      %v3515 = vld [vmem:[%s3153 + $0xbc] sm:$0x1]
      %v3517 = vshrl.u32 %v3468, 16
      %v3519 = vrot.slane %v3517, 4
      %v3520 = vshll.u32 %v3468, 16
      %v3522 = vrot.slane %v3520, 5
      %v3523 = vor.u32 %v3519, %v3522
      %v3524 = vrot.slane %v3523, 4
      %v3526 = vshll.u32 %v3469, 16
      %v3528 = vrot.slane %v3526, 5
      %v3529 = vsel %vm666, %v3524, %v3528
      %v3530 = vshrl.u32 %v3469, 16
      %v3532 = vrot.slane %v3530, 4
      %v3533 = vor.u32 %v3532, %v3528
      %v3534 = vrot.slane %v3533, 4
      %v3536 = vshll.u32 %v3470, 16
      %v3538 = vrot.slane %v3536, 5
      %v3539 = vsel %vm666, %v3534, %v3538
      %v3541 = vshrl.u32 %v3471, 16
      %v3543 = vrot.slane %v3541, 4
      %v3544 = vshll.u32 %v3471, 16
      %v3546 = vrot.slane %v3544, 5
      %v3547 = vor.u32 %v3543, %v3546
      %v3548 = vrot.slane %v3547, 4
      %v3550 = vshll.u32 %v3472, 16
      %v3552 = vrot.slane %v3550, 5
      %v3553 = vsel %vm666, %v3548, %v3552
      %v3554 = vshrl.u32 %v3472, 16
      %v3556 = vrot.slane %v3554, 4
      %v3557 = vor.u32 %v3556, %v3552
      %v3558 = vrot.slane %v3557, 4
      %v3560 = vshll.u32 %v3473, 16
      %v3562 = vrot.slane %v3560, 5
      %v3563 = vsel %vm666, %v3558, %v3562
      %v3565 = vshrl.u32 %v3474, 16
      %v3567 = vrot.slane %v3565, 4
      %v3568 = vshll.u32 %v3474, 16
      %v3570 = vrot.slane %v3568, 5
      %v3571 = vor.u32 %v3567, %v3570
      %v3572 = vrot.slane %v3571, 4
      %v3574 = vshll.u32 %v3475, 16
      %v3576 = vrot.slane %v3574, 5
      %v3577 = vsel %vm666, %v3572, %v3576
      %v3578 = vshrl.u32 %v3475, 16
      %v3580 = vrot.slane %v3578, 4
      %v3581 = vor.u32 %v3580, %v3576
      %v3582 = vrot.slane %v3581, 4
      %v3584 = vshll.u32 %v3476, 16
      %v3586 = vrot.slane %v3584, 5
      %v3587 = vsel %vm666, %v3582, %v3586
      %v3589 = vshrl.u32 %v3477, 16
      %v3591 = vrot.slane %v3589, 4
      %v3592 = vshll.u32 %v3477, 16
      %v3594 = vrot.slane %v3592, 5
      %v3595 = vor.u32 %v3591, %v3594
      %v3596 = vrot.slane %v3595, 4
      %v3598 = vshll.u32 %v3478, 16
      %v3600 = vrot.slane %v3598, 5
      %v3601 = vsel %vm666, %v3596, %v3600
      %v3602 = vshrl.u32 %v3478, 16
      %v3604 = vrot.slane %v3602, 4
      %v3605 = vor.u32 %v3604, %v3600
      %v3606 = vrot.slane %v3605, 4
      %v3608 = vshll.u32 %v3479, 16
      %v3610 = vrot.slane %v3608, 5
      %v3611 = vsel %vm666, %v3606, %v3610
      %v3613 = vshrl.u32 %v3480, 16
      %v3615 = vrot.slane %v3613, 4
      %v3616 = vshll.u32 %v3480, 16
      %v3618 = vrot.slane %v3616, 5
      %v3619 = vor.u32 %v3615, %v3618
      %v3620 = vrot.slane %v3619, 4
      %v3622 = vshll.u32 %v3481, 16
      %v3624 = vrot.slane %v3622, 5
      %v3625 = vsel %vm666, %v3620, %v3624
      %v3626 = vshrl.u32 %v3481, 16
      %v3628 = vrot.slane %v3626, 4
      %v3629 = vor.u32 %v3628, %v3624
      %v3630 = vrot.slane %v3629, 4
      %v3632 = vshll.u32 %v3482, 16
      %v3634 = vrot.slane %v3632, 5
      %v3635 = vsel %vm666, %v3630, %v3634
      %v3637 = vshrl.u32 %v3483, 16
      %v3639 = vrot.slane %v3637, 4
      %v3640 = vshll.u32 %v3483, 16
      %v3642 = vrot.slane %v3640, 5
      %v3643 = vor.u32 %v3639, %v3642
      %v3644 = vrot.slane %v3643, 4
      %v3646 = vshll.u32 %v3484, 16
      %v3648 = vrot.slane %v3646, 5
      %v3649 = vsel %vm666, %v3644, %v3648
      %v3650 = vshrl.u32 %v3484, 16
      %v3652 = vrot.slane %v3650, 4
      %v3653 = vor.u32 %v3652, %v3648
      %v3654 = vrot.slane %v3653, 4
      %v3656 = vshll.u32 %v3485, 16
      %v3658 = vrot.slane %v3656, 5
      %v3659 = vsel %vm666, %v3654, %v3658
      %v3661 = vshrl.u32 %v3486, 16
      %v3663 = vrot.slane %v3661, 4
      %v3664 = vshll.u32 %v3486, 16
      %v3666 = vrot.slane %v3664, 5
      %v3667 = vor.u32 %v3663, %v3666
      %v3668 = vrot.slane %v3667, 4
      %v3670 = vshll.u32 %v3487, 16
      %v3672 = vrot.slane %v3670, 5
      %v3673 = vsel %vm666, %v3668, %v3672
      %v3674 = vshrl.u32 %v3487, 16
      %v3676 = vrot.slane %v3674, 4
      %v3677 = vor.u32 %v3676, %v3672
      %v3678 = vrot.slane %v3677, 4
      %v3680 = vshll.u32 %v3488, 16
      %v3682 = vrot.slane %v3680, 5
      %v3683 = vsel %vm666, %v3678, %v3682
      %v3685 = vshrl.u32 %v3489, 16
      %v3687 = vrot.slane %v3685, 4
      %v3688 = vshll.u32 %v3489, 16
      %v3690 = vrot.slane %v3688, 5
      %v3691 = vor.u32 %v3687, %v3690
      %v3692 = vrot.slane %v3691, 4
      %v3694 = vshll.u32 %v3490, 16
      %v3696 = vrot.slane %v3694, 5
      %v3697 = vsel %vm666, %v3692, %v3696
      %v3698 = vshrl.u32 %v3490, 16
      %v3700 = vrot.slane %v3698, 4
      %v3701 = vor.u32 %v3700, %v3696
      %v3702 = vrot.slane %v3701, 4
      %v3704 = vshll.u32 %v3491, 16
      %v3706 = vrot.slane %v3704, 5
      %v3707 = vsel %vm666, %v3702, %v3706
      %v3709 = vshrl.u32 %v3492, 16
      %v3711 = vrot.slane %v3709, 4
      %v3712 = vshll.u32 %v3492, 16
      %v3714 = vrot.slane %v3712, 5
      %v3715 = vor.u32 %v3711, %v3714
      %v3716 = vrot.slane %v3715, 4
      %v3718 = vshll.u32 %v3493, 16
      %v3720 = vrot.slane %v3718, 5
      %v3721 = vsel %vm666, %v3716, %v3720
      %v3722 = vshrl.u32 %v3493, 16
      %v3724 = vrot.slane %v3722, 4
      %v3725 = vor.u32 %v3724, %v3720
      %v3726 = vrot.slane %v3725, 4
      %v3728 = vshll.u32 %v3494, 16
      %v3730 = vrot.slane %v3728, 5
      %v3731 = vsel %vm666, %v3726, %v3730
      %v3733 = vshrl.u32 %v3495, 16
      %v3735 = vrot.slane %v3733, 4
      %v3736 = vshll.u32 %v3495, 16
      %v3738 = vrot.slane %v3736, 5
      %v3739 = vor.u32 %v3735, %v3738
      %v3740 = vrot.slane %v3739, 4
      %v3742 = vshll.u32 %v3496, 16
      %v3744 = vrot.slane %v3742, 5
      %v3745 = vsel %vm666, %v3740, %v3744
      %v3746 = vshrl.u32 %v3496, 16
      %v3748 = vrot.slane %v3746, 4
      %v3749 = vor.u32 %v3748, %v3744
      %v3750 = vrot.slane %v3749, 4
      %v3752 = vshll.u32 %v3497, 16
      %v3754 = vrot.slane %v3752, 5
      %v3755 = vsel %vm666, %v3750, %v3754
      %v3757 = vshrl.u32 %v3498, 16
      %v3759 = vrot.slane %v3757, 4
      %v3760 = vshll.u32 %v3498, 16
      %v3762 = vrot.slane %v3760, 5
      %v3763 = vor.u32 %v3759, %v3762
      %v3764 = vrot.slane %v3763, 4
      %v3766 = vshll.u32 %v3499, 16
      %v3768 = vrot.slane %v3766, 5
      %v3769 = vsel %vm666, %v3764, %v3768
      %v3770 = vshrl.u32 %v3499, 16
      %v3772 = vrot.slane %v3770, 4
      %v3773 = vor.u32 %v3772, %v3768
      %v3774 = vrot.slane %v3773, 4
      %v3776 = vshll.u32 %v3500, 16
      %v3778 = vrot.slane %v3776, 5
      %v3779 = vsel %vm666, %v3774, %v3778
      %v3781 = vshrl.u32 %v3501, 16
      %v3783 = vrot.slane %v3781, 4
      %v3784 = vshll.u32 %v3501, 16
      %v3786 = vrot.slane %v3784, 5
      %v3787 = vor.u32 %v3783, %v3786
      %v3788 = vrot.slane %v3787, 4
      %v3790 = vshll.u32 %v3502, 16
      %v3792 = vrot.slane %v3790, 5
      %v3793 = vsel %vm666, %v3788, %v3792
      %v3794 = vshrl.u32 %v3502, 16
      %v3796 = vrot.slane %v3794, 4
      %v3797 = vor.u32 %v3796, %v3792
      %v3798 = vrot.slane %v3797, 4
      %v3800 = vshll.u32 %v3503, 16
      %v3802 = vrot.slane %v3800, 5
      %v3803 = vsel %vm666, %v3798, %v3802
      %v3805 = vshrl.u32 %v3504, 16
      %v3807 = vrot.slane %v3805, 4
      %v3808 = vshll.u32 %v3504, 16
      %v3810 = vrot.slane %v3808, 5
      %v3811 = vor.u32 %v3807, %v3810
      %v3812 = vrot.slane %v3811, 4
      %v3814 = vshll.u32 %v3505, 16
      %v3816 = vrot.slane %v3814, 5
      %v3817 = vsel %vm666, %v3812, %v3816
      %v3818 = vshrl.u32 %v3505, 16
      %v3820 = vrot.slane %v3818, 4
      %v3821 = vor.u32 %v3820, %v3816
      %v3822 = vrot.slane %v3821, 4
      %v3824 = vshll.u32 %v3506, 16
      %v3826 = vrot.slane %v3824, 5
      %v3827 = vsel %vm666, %v3822, %v3826
      %v3829 = vshrl.u32 %v3507, 16
      %v3831 = vrot.slane %v3829, 4
      %v3832 = vshll.u32 %v3507, 16
      %v3834 = vrot.slane %v3832, 5
      %v3835 = vor.u32 %v3831, %v3834
      %v3836 = vrot.slane %v3835, 4
      %v3838 = vshll.u32 %v3508, 16
      %v3840 = vrot.slane %v3838, 5
      %v3841 = vsel %vm666, %v3836, %v3840
      %v3842 = vshrl.u32 %v3508, 16
      %v3844 = vrot.slane %v3842, 4
      %v3845 = vor.u32 %v3844, %v3840
      %v3846 = vrot.slane %v3845, 4
      %v3848 = vshll.u32 %v3509, 16
      %v3850 = vrot.slane %v3848, 5
      %v3851 = vsel %vm666, %v3846, %v3850
      %v3853 = vshrl.u32 %v3510, 16
      %v3855 = vrot.slane %v3853, 4
      %v3856 = vshll.u32 %v3510, 16
      %v3858 = vrot.slane %v3856, 5
      %v3859 = vor.u32 %v3855, %v3858
      %v3860 = vrot.slane %v3859, 4
      %v3862 = vshll.u32 %v3511, 16
      %v3864 = vrot.slane %v3862, 5
      %v3865 = vsel %vm666, %v3860, %v3864
      %v3866 = vshrl.u32 %v3511, 16
      %v3868 = vrot.slane %v3866, 4
      %v3869 = vor.u32 %v3868, %v3864
      %v3870 = vrot.slane %v3869, 4
      %v3872 = vshll.u32 %v3512, 16
      %v3874 = vrot.slane %v3872, 5
      %v3875 = vsel %vm666, %v3870, %v3874
      %v3877 = vshrl.u32 %v3513, 16
      %v3879 = vrot.slane %v3877, 4
      %v3880 = vshll.u32 %v3513, 16
      %v3882 = vrot.slane %v3880, 5
      %v3883 = vor.u32 %v3879, %v3882
      %v3884 = vrot.slane %v3883, 4
      %v3886 = vshll.u32 %v3514, 16
      %v3888 = vrot.slane %v3886, 5
      %v3889 = vsel %vm666, %v3884, %v3888
      %v3890 = vshrl.u32 %v3514, 16
      %v3892 = vrot.slane %v3890, 4
      %v3893 = vor.u32 %v3892, %v3888
      %v3894 = vrot.slane %v3893, 4
      %v3896 = vshll.u32 %v3515, 16
      %v3898 = vrot.slane %v3896, 5
      %v3899 = vsel %vm666, %v3894, %v3898
      %s3900 = scalar_lea.vmem %s226, 448
      %v3901 = vld [vmem:[%s3900] sm:$0xf]
      %v3902 = vld [vmem:[%s3900 + $0x4] sm:$0xf]
      %v3903 = vld [vmem:[%s3900 + $0x8] sm:$0xf]
      %v3904 = vld [vmem:[%s3900 + $0xc] sm:$0xf]
      %v3905 = vld [vmem:[%s3900 + $0x10] sm:$0xf]
      %v3906 = vld [vmem:[%s3900 + $0x14] sm:$0xf]
      %v3907 = vld [vmem:[%s3900 + $0x18] sm:$0xf]
      %v3908 = vld [vmem:[%s3900 + $0x1c] sm:$0xf]
      %v3909 = vld [vmem:[%s3900 + $0x20] sm:$0xf]
      %v3910 = vld [vmem:[%s3900 + $0x24] sm:$0xf]
      %v3911 = vld [vmem:[%s3900 + $0x28] sm:$0xf]
      %v3912 = vld [vmem:[%s3900 + $0x2c] sm:$0xf]
      %v3913 = vld [vmem:[%s3900 + $0x30] sm:$0xf]
      %v3914 = vld [vmem:[%s3900 + $0x34] sm:$0xf]
      %v3915 = vld [vmem:[%s3900 + $0x38] sm:$0xf]
      %v3916 = vld [vmem:[%s3900 + $0x3c] sm:$0xf]
      %v3917 = vunpack.c.l.b16 %v3529
      %v3918 = vunpack.c.l.b16 %v3539
      %v3919 = vunpack.c.l.b16 %v3553
      %v3920 = vunpack.c.l.b16 %v3563
      %v3921 = vunpack.c.l.b16 %v3577
      %v3922 = vunpack.c.l.b16 %v3587
      %v3923 = vunpack.c.l.b16 %v3601
      %v3924 = vunpack.c.l.b16 %v3611
      %v3925 = vunpack.c.l.b16 %v3625
      %v3926 = vunpack.c.l.b16 %v3635
      %v3927 = vunpack.c.l.b16 %v3649
      %v3928 = vunpack.c.l.b16 %v3659
      %v3929 = vunpack.c.l.b16 %v3673
      %v3930 = vunpack.c.l.b16 %v3683
      %v3931 = vunpack.c.l.b16 %v3697
      %v3932 = vunpack.c.l.b16 %v3707
      %v3933 = vunpack.c.l.b16 %v3721
      %v3934 = vunpack.c.l.b16 %v3731
      %v3935 = vunpack.c.l.b16 %v3745
      %v3936 = vunpack.c.l.b16 %v3755
      %v3937 = vunpack.c.l.b16 %v3769
      %v3938 = vunpack.c.l.b16 %v3779
      %v3939 = vunpack.c.l.b16 %v3793
      %v3940 = vunpack.c.l.b16 %v3803
      %v3941 = vunpack.c.l.b16 %v3817
      %v3942 = vunpack.c.l.b16 %v3827
      %v3943 = vunpack.c.l.b16 %v3841
      %v3944 = vunpack.c.l.b16 %v3851
      %v3945 = vunpack.c.l.b16 %v3865
      %v3946 = vunpack.c.l.b16 %v3875
      %v3947 = vunpack.c.l.b16 %v3889
      %v3948 = vunpack.c.l.b16 %v3899
      %v3949 = vpack.c.b16 %v3918, %v3917
      %v3950 = vpack.c.b16 %v3920, %v3919
      %v3951 = vpack.c.b16 %v3922, %v3921
      %v3952 = vpack.c.b16 %v3924, %v3923
      %v3953 = vpack.c.b16 %v3926, %v3925
      %v3954 = vpack.c.b16 %v3928, %v3927
      %v3955 = vpack.c.b16 %v3930, %v3929
      %v3956 = vpack.c.b16 %v3932, %v3931
      %v3957 = vpack.c.b16 %v3934, %v3933
      %v3958 = vpack.c.b16 %v3936, %v3935
      %v3959 = vpack.c.b16 %v3938, %v3937
      %v3960 = vpack.c.b16 %v3940, %v3939
      %v3961 = vpack.c.b16 %v3942, %v3941
      %v3962 = vpack.c.b16 %v3944, %v3943
      %v3963 = vpack.c.b16 %v3946, %v3945
      %v3964 = vpack.c.b16 %v3948, %v3947
      %v3997 = vunpack.c.l.b16 %v3901
      %v3998 = vunpack.c.l.b16 %v3902
      %v3999 = vunpack.c.l.b16 %v3903
      %v4000 = vunpack.c.l.b16 %v3904
      %v4001 = vunpack.c.l.b16 %v3905
      %v4002 = vunpack.c.l.b16 %v3906
      %v4003 = vunpack.c.l.b16 %v3907
      %v4004 = vunpack.c.l.b16 %v3908
      %v4005 = vunpack.c.l.b16 %v3909
      %v4006 = vunpack.c.l.b16 %v3910
      %v4007 = vunpack.c.l.b16 %v3911
      %v4008 = vunpack.c.l.b16 %v3912
      %v4009 = vunpack.c.l.b16 %v3913
      %v4010 = vunpack.c.l.b16 %v3914
      %v4011 = vunpack.c.l.b16 %v3915
      %v4012 = vunpack.c.l.b16 %v3916
      %v4013 = vpack.c.b16 %v3998, %v3997
      %v4014 = vpack.c.b16 %v4000, %v3999
      %v4015 = vpack.c.b16 %v4002, %v4001
      %v4016 = vpack.c.b16 %v4004, %v4003
      %v4017 = vpack.c.b16 %v4006, %v4005
      %v4018 = vpack.c.b16 %v4008, %v4007
      %v4019 = vpack.c.b16 %v4010, %v4009
      %v4020 = vpack.c.b16 %v4012, %v4011
      %4029 = vmatpush.bf16.msra.mxu0 %v4020
      %4030 = vmatpush.bf16.msra.mxu0 %v4019
      %4031 = vmatpush.bf16.msra.mxu0 %v4018
      %4032 = vmatpush.bf16.msra.mxu0 %v4017
      %4033 = vmatpush.bf16.msra.mxu0 %v4016
      %4034 = vmatpush.bf16.msra.mxu0 %v4015
      %4035 = vmatpush.bf16.msra.mxu0 %v4014
      %4036 = vmatpush.bf16.msra.mxu0 %v4013
      %4037 = vmatmul.bf16.gmra.mxu0 %v3949
      %v4038 = vpop.f32.mrf.mxu0
      %v4039 = vadd.f32 0.0, %v4038
      %v4040 = vpop.f32.mrf.mxu0
      %v4041 = vadd.f32 0.0, %v4040
      %4042 = vmatmul.bf16.gmra.mxu0 %v3950
      %v4043 = vpop.f32.mrf.mxu0
      %v4044 = vadd.f32 0.0, %v4043
      %v4045 = vpop.f32.mrf.mxu0
      %v4046 = vadd.f32 0.0, %v4045
      %4047 = vmatmul.bf16.gmra.mxu0 %v3951
      %v4048 = vpop.f32.mrf.mxu0
      %v4049 = vadd.f32 0.0, %v4048
      %v4050 = vpop.f32.mrf.mxu0
      %v4051 = vadd.f32 0.0, %v4050
      %4052 = vmatmul.bf16.gmra.mxu0 %v3952
      %v4053 = vpop.f32.mrf.mxu0
      %v4054 = vadd.f32 0.0, %v4053
      %v4055 = vpop.f32.mrf.mxu0
      %v4056 = vadd.f32 0.0, %v4055
      %4057 = vmatmul.bf16.gmra.mxu0 %v3953
      %v4058 = vpop.f32.mrf.mxu0
      %v4059 = vadd.f32 0.0, %v4058
      %v4060 = vpop.f32.mrf.mxu0
      %v4061 = vadd.f32 0.0, %v4060
      %4062 = vmatmul.bf16.gmra.mxu0 %v3954
      %v4063 = vpop.f32.mrf.mxu0
      %v4064 = vadd.f32 0.0, %v4063
      %v4065 = vpop.f32.mrf.mxu0
      %v4066 = vadd.f32 0.0, %v4065
      %4067 = vmatmul.bf16.gmra.mxu0 %v3955
      %v4068 = vpop.f32.mrf.mxu0
      %v4069 = vadd.f32 0.0, %v4068
      %v4070 = vpop.f32.mrf.mxu0
      %v4071 = vadd.f32 0.0, %v4070
      %4072 = vmatmul.bf16.gmra.mxu0 %v3956
      %v4073 = vpop.f32.mrf.mxu0
      %v4074 = vadd.f32 0.0, %v4073
      %v4075 = vpop.f32.mrf.mxu0
      %v4076 = vadd.f32 0.0, %v4075
      %4077 = vmatmul.bf16.gmra.mxu0 %v3957
      %v4078 = vpop.f32.mrf.mxu0
      %v4079 = vadd.f32 0.0, %v4078
      %v4080 = vpop.f32.mrf.mxu0
      %v4081 = vadd.f32 0.0, %v4080
      %4082 = vmatmul.bf16.gmra.mxu0 %v3958
      %v4083 = vpop.f32.mrf.mxu0
      %v4084 = vadd.f32 0.0, %v4083
      %v4085 = vpop.f32.mrf.mxu0
      %v4086 = vadd.f32 0.0, %v4085
      %4087 = vmatmul.bf16.gmra.mxu0 %v3959
      %v4088 = vpop.f32.mrf.mxu0
      %v4089 = vadd.f32 0.0, %v4088
      %v4090 = vpop.f32.mrf.mxu0
      %v4091 = vadd.f32 0.0, %v4090
      %4092 = vmatmul.bf16.gmra.mxu0 %v3960
      %v4093 = vpop.f32.mrf.mxu0
      %v4094 = vadd.f32 0.0, %v4093
      %v4095 = vpop.f32.mrf.mxu0
      %v4096 = vadd.f32 0.0, %v4095
      %4097 = vmatmul.bf16.gmra.mxu0 %v3961
      %v4098 = vpop.f32.mrf.mxu0
      %v4099 = vadd.f32 0.0, %v4098
      %v4100 = vpop.f32.mrf.mxu0
      %v4101 = vadd.f32 0.0, %v4100
      %4102 = vmatmul.bf16.gmra.mxu0 %v3962
      %v4103 = vpop.f32.mrf.mxu0
      %v4104 = vadd.f32 0.0, %v4103
      %v4105 = vpop.f32.mrf.mxu0
      %v4106 = vadd.f32 0.0, %v4105
      %4107 = vmatmul.bf16.gmra.mxu0 %v3963
      %v4108 = vpop.f32.mrf.mxu0
      %v4109 = vadd.f32 0.0, %v4108
      %v4110 = vpop.f32.mrf.mxu0
      %v4111 = vadd.f32 0.0, %v4110
      %4112 = vmatmul.bf16.gmra.mxu0 %v3964
      %v4113 = vpop.f32.mrf.mxu0
      %v4114 = vadd.f32 0.0, %v4113
      %v4115 = vpop.f32.mrf.mxu0
      %v4116 = vadd.f32 0.0, %v4115
      %4117 = vdwg.mxu0
      %v4118 = vadd.f32 %v3436, %v4039
      %v4119 = vadd.f32 %v3437, %v4041
      %v4120 = vadd.f32 %v3438, %v4044
      %v4121 = vadd.f32 %v3439, %v4046
      %v4122 = vadd.f32 %v3440, %v4049
      %v4123 = vadd.f32 %v3441, %v4051
      %v4124 = vadd.f32 %v3442, %v4054
      %v4125 = vadd.f32 %v3443, %v4056
      %v4126 = vadd.f32 %v3444, %v4059
      %v4127 = vadd.f32 %v3445, %v4061
      %v4128 = vadd.f32 %v3446, %v4064
      %v4129 = vadd.f32 %v3447, %v4066
      %v4130 = vadd.f32 %v3448, %v4069
      %v4131 = vadd.f32 %v3449, %v4071
      %v4132 = vadd.f32 %v3450, %v4074
      %v4133 = vadd.f32 %v3451, %v4076
      %v4134 = vadd.f32 %v3452, %v4079
      %v4135 = vadd.f32 %v3453, %v4081
      %v4136 = vadd.f32 %v3454, %v4084
      %v4137 = vadd.f32 %v3455, %v4086
      %v4138 = vadd.f32 %v3456, %v4089
      %v4139 = vadd.f32 %v3457, %v4091
      %v4140 = vadd.f32 %v3458, %v4094
      %v4141 = vadd.f32 %v3459, %v4096
      %v4142 = vadd.f32 %v3460, %v4099
      %v4143 = vadd.f32 %v3461, %v4101
      %v4144 = vadd.f32 %v3462, %v4104
      %v4145 = vadd.f32 %v3463, %v4106
      %v4146 = vadd.f32 %v3464, %v4109
      %v4147 = vadd.f32 %v3465, %v4111
      %v4148 = vadd.f32 %v3466, %v4114
      %v4149 = vadd.f32 %v3467, %v4116
      %v4150 = vld [vmem:[%s3153] sm:$0xe]
      %v4151 = vld [vmem:[%s3153 + $0xc] sm:$0xe]
      %v4152 = vld [vmem:[%s3153 + $0x18] sm:$0xe]
      %v4153 = vld [vmem:[%s3153 + $0x24] sm:$0xe]
      %v4154 = vld [vmem:[%s3153 + $0x30] sm:$0xe]
      %v4155 = vld [vmem:[%s3153 + $0x3c] sm:$0xe]
      %v4156 = vld [vmem:[%s3153 + $0x48] sm:$0xe]
      %v4157 = vld [vmem:[%s3153 + $0x54] sm:$0xe]
      %v4158 = vld [vmem:[%s3153 + $0x60] sm:$0xe]
      %v4159 = vld [vmem:[%s3153 + $0x6c] sm:$0xe]
      %v4160 = vld [vmem:[%s3153 + $0x78] sm:$0xe]
      %v4161 = vld [vmem:[%s3153 + $0x84] sm:$0xe]
      %v4162 = vld [vmem:[%s3153 + $0x90] sm:$0xe]
      %v4163 = vld [vmem:[%s3153 + $0x9c] sm:$0xe]
      %v4164 = vld [vmem:[%s3153 + $0xa8] sm:$0xe]
      %v4165 = vld [vmem:[%s3153 + $0xb4] sm:$0xe]
      %v4214 = vrot.slane %v4150, 5
      %v4215 = vrot.slane %v4214, 4
      %v4216 = vrot.slane %v3469, 5
      %v4217 = vsel %vm1367, %v4215, %v4216
      %v4218 = vrot.slane %v4216, 4
      %v4219 = vrot.slane %v3470, 5
      %v4220 = vsel %vm1367, %v4218, %v4219
      %v4221 = vrot.slane %v4151, 5
      %v4222 = vrot.slane %v4221, 4
      %v4223 = vrot.slane %v3472, 5
      %v4224 = vsel %vm1367, %v4222, %v4223
      %v4225 = vrot.slane %v4223, 4
      %v4226 = vrot.slane %v3473, 5
      %v4227 = vsel %vm1367, %v4225, %v4226
      %v4228 = vrot.slane %v4152, 5
      %v4229 = vrot.slane %v4228, 4
      %v4230 = vrot.slane %v3475, 5
      %v4231 = vsel %vm1367, %v4229, %v4230
      %v4232 = vrot.slane %v4230, 4
      %v4233 = vrot.slane %v3476, 5
      %v4234 = vsel %vm1367, %v4232, %v4233
      %v4235 = vrot.slane %v4153, 5
      %v4236 = vrot.slane %v4235, 4
      %v4237 = vrot.slane %v3478, 5
      %v4238 = vsel %vm1367, %v4236, %v4237
      %v4239 = vrot.slane %v4237, 4
      %v4240 = vrot.slane %v3479, 5
      %v4241 = vsel %vm1367, %v4239, %v4240
      %v4242 = vrot.slane %v4154, 5
      %v4243 = vrot.slane %v4242, 4
      %v4244 = vrot.slane %v3481, 5
      %v4245 = vsel %vm1367, %v4243, %v4244
      %v4246 = vrot.slane %v4244, 4
      %v4247 = vrot.slane %v3482, 5
      %v4248 = vsel %vm1367, %v4246, %v4247
      %v4249 = vrot.slane %v4155, 5
      %v4250 = vrot.slane %v4249, 4
      %v4251 = vrot.slane %v3484, 5
      %v4252 = vsel %vm1367, %v4250, %v4251
      %v4253 = vrot.slane %v4251, 4
      %v4254 = vrot.slane %v3485, 5
      %v4255 = vsel %vm1367, %v4253, %v4254
      %v4256 = vrot.slane %v4156, 5
      %v4257 = vrot.slane %v4256, 4
      %v4258 = vrot.slane %v3487, 5
      %v4259 = vsel %vm1367, %v4257, %v4258
      %v4260 = vrot.slane %v4258, 4
      %v4261 = vrot.slane %v3488, 5
      %v4262 = vsel %vm1367, %v4260, %v4261
      %v4263 = vrot.slane %v4157, 5
      %v4264 = vrot.slane %v4263, 4
      %v4265 = vrot.slane %v3490, 5
      %v4266 = vsel %vm1367, %v4264, %v4265
      %v4267 = vrot.slane %v4265, 4
      %v4268 = vrot.slane %v3491, 5
      %v4269 = vsel %vm1367, %v4267, %v4268
      %v4270 = vrot.slane %v4158, 5
      %v4271 = vrot.slane %v4270, 4
      %v4272 = vrot.slane %v3493, 5
      %v4273 = vsel %vm1367, %v4271, %v4272
      %v4274 = vrot.slane %v4272, 4
      %v4275 = vrot.slane %v3494, 5
      %v4276 = vsel %vm1367, %v4274, %v4275
      %v4277 = vrot.slane %v4159, 5
      %v4278 = vrot.slane %v4277, 4
      %v4279 = vrot.slane %v3496, 5
      %v4280 = vsel %vm1367, %v4278, %v4279
      %v4281 = vrot.slane %v4279, 4
      %v4282 = vrot.slane %v3497, 5
      %v4283 = vsel %vm1367, %v4281, %v4282
      %v4284 = vrot.slane %v4160, 5
      %v4285 = vrot.slane %v4284, 4
      %v4286 = vrot.slane %v3499, 5
      %v4287 = vsel %vm1367, %v4285, %v4286
      %v4288 = vrot.slane %v4286, 4
      %v4289 = vrot.slane %v3500, 5
      %v4290 = vsel %vm1367, %v4288, %v4289
      %v4291 = vrot.slane %v4161, 5
      %v4292 = vrot.slane %v4291, 4
      %v4293 = vrot.slane %v3502, 5
      %v4294 = vsel %vm1367, %v4292, %v4293
      %v4295 = vrot.slane %v4293, 4
      %v4296 = vrot.slane %v3503, 5
      %v4297 = vsel %vm1367, %v4295, %v4296
      %v4298 = vrot.slane %v4162, 5
      %v4299 = vrot.slane %v4298, 4
      %v4300 = vrot.slane %v3505, 5
      %v4301 = vsel %vm1367, %v4299, %v4300
      %v4302 = vrot.slane %v4300, 4
      %v4303 = vrot.slane %v3506, 5
      %v4304 = vsel %vm1367, %v4302, %v4303
      %v4305 = vrot.slane %v4163, 5
      %v4306 = vrot.slane %v4305, 4
      %v4307 = vrot.slane %v3508, 5
      %v4308 = vsel %vm1367, %v4306, %v4307
      %v4309 = vrot.slane %v4307, 4
      %v4310 = vrot.slane %v3509, 5
      %v4311 = vsel %vm1367, %v4309, %v4310
      %v4312 = vrot.slane %v4164, 5
      %v4313 = vrot.slane %v4312, 4
      %v4314 = vrot.slane %v3511, 5
      %v4315 = vsel %vm1367, %v4313, %v4314
      %v4316 = vrot.slane %v4314, 4
      %v4317 = vrot.slane %v3512, 5
      %v4318 = vsel %vm1367, %v4316, %v4317
      %v4319 = vrot.slane %v4165, 5
      %v4320 = vrot.slane %v4319, 4
      %v4321 = vrot.slane %v3514, 5
      %v4322 = vsel %vm1367, %v4320, %v4321
      %v4323 = vrot.slane %v4321, 4
      %v4324 = vrot.slane %v3515, 5
      %v4325 = vsel %vm1367, %v4323, %v4324
      %s4326 = scalar_lea.vmem %s226, 512
      %v4327 = vld [vmem:[%s4326] sm:$0xf]
      %v4328 = vld [vmem:[%s4326 + $0x4] sm:$0xf]
      %v4329 = vld [vmem:[%s4326 + $0x8] sm:$0xf]
      %v4330 = vld [vmem:[%s4326 + $0xc] sm:$0xf]
      %v4331 = vld [vmem:[%s4326 + $0x10] sm:$0xf]
      %v4332 = vld [vmem:[%s4326 + $0x14] sm:$0xf]
      %v4333 = vld [vmem:[%s4326 + $0x18] sm:$0xf]
      %v4334 = vld [vmem:[%s4326 + $0x1c] sm:$0xf]
      %v4335 = vld [vmem:[%s4326 + $0x20] sm:$0xf]
      %v4336 = vld [vmem:[%s4326 + $0x24] sm:$0xf]
      %v4337 = vld [vmem:[%s4326 + $0x28] sm:$0xf]
      %v4338 = vld [vmem:[%s4326 + $0x2c] sm:$0xf]
      %v4339 = vld [vmem:[%s4326 + $0x30] sm:$0xf]
      %v4340 = vld [vmem:[%s4326 + $0x34] sm:$0xf]
      %v4341 = vld [vmem:[%s4326 + $0x38] sm:$0xf]
      %v4342 = vld [vmem:[%s4326 + $0x3c] sm:$0xf]
      %v4343 = vunpack.c.l.b16 %v4217
      %v4344 = vunpack.c.l.b16 %v4220
      %v4345 = vunpack.c.l.b16 %v4224
      %v4346 = vunpack.c.l.b16 %v4227
      %v4347 = vunpack.c.l.b16 %v4231
      %v4348 = vunpack.c.l.b16 %v4234
      %v4349 = vunpack.c.l.b16 %v4238
      %v4350 = vunpack.c.l.b16 %v4241
      %v4351 = vunpack.c.l.b16 %v4245
      %v4352 = vunpack.c.l.b16 %v4248
      %v4353 = vunpack.c.l.b16 %v4252
      %v4354 = vunpack.c.l.b16 %v4255
      %v4355 = vunpack.c.l.b16 %v4259
      %v4356 = vunpack.c.l.b16 %v4262
      %v4357 = vunpack.c.l.b16 %v4266
      %v4358 = vunpack.c.l.b16 %v4269
      %v4359 = vunpack.c.l.b16 %v4273
      %v4360 = vunpack.c.l.b16 %v4276
      %v4361 = vunpack.c.l.b16 %v4280
      %v4362 = vunpack.c.l.b16 %v4283
      %v4363 = vunpack.c.l.b16 %v4287
      %v4364 = vunpack.c.l.b16 %v4290
      %v4365 = vunpack.c.l.b16 %v4294
      %v4366 = vunpack.c.l.b16 %v4297
      %v4367 = vunpack.c.l.b16 %v4301
      %v4368 = vunpack.c.l.b16 %v4304
      %v4369 = vunpack.c.l.b16 %v4308
      %v4370 = vunpack.c.l.b16 %v4311
      %v4371 = vunpack.c.l.b16 %v4315
      %v4372 = vunpack.c.l.b16 %v4318
      %v4373 = vunpack.c.l.b16 %v4322
      %v4374 = vunpack.c.l.b16 %v4325
      %v4375 = vpack.c.b16 %v4344, %v4343
      %v4376 = vpack.c.b16 %v4346, %v4345
      %v4377 = vpack.c.b16 %v4348, %v4347
      %v4378 = vpack.c.b16 %v4350, %v4349
      %v4379 = vpack.c.b16 %v4352, %v4351
      %v4380 = vpack.c.b16 %v4354, %v4353
      %v4381 = vpack.c.b16 %v4356, %v4355
      %v4382 = vpack.c.b16 %v4358, %v4357
      %v4383 = vpack.c.b16 %v4360, %v4359
      %v4384 = vpack.c.b16 %v4362, %v4361
      %v4385 = vpack.c.b16 %v4364, %v4363
      %v4386 = vpack.c.b16 %v4366, %v4365
      %v4387 = vpack.c.b16 %v4368, %v4367
      %v4388 = vpack.c.b16 %v4370, %v4369
      %v4389 = vpack.c.b16 %v4372, %v4371
      %v4390 = vpack.c.b16 %v4374, %v4373
      %v4423 = vunpack.c.l.b16 %v4327
      %v4424 = vunpack.c.l.b16 %v4328
      %v4425 = vunpack.c.l.b16 %v4329
      %v4426 = vunpack.c.l.b16 %v4330
      %v4427 = vunpack.c.l.b16 %v4331
      %v4428 = vunpack.c.l.b16 %v4332
      %v4429 = vunpack.c.l.b16 %v4333
      %v4430 = vunpack.c.l.b16 %v4334
      %v4431 = vunpack.c.l.b16 %v4335
      %v4432 = vunpack.c.l.b16 %v4336
      %v4433 = vunpack.c.l.b16 %v4337
      %v4434 = vunpack.c.l.b16 %v4338
      %v4435 = vunpack.c.l.b16 %v4339
      %v4436 = vunpack.c.l.b16 %v4340
      %v4437 = vunpack.c.l.b16 %v4341
      %v4438 = vunpack.c.l.b16 %v4342
      %v4439 = vpack.c.b16 %v4424, %v4423
      %v4440 = vpack.c.b16 %v4426, %v4425
      %v4441 = vpack.c.b16 %v4428, %v4427
      %v4442 = vpack.c.b16 %v4430, %v4429
      %v4443 = vpack.c.b16 %v4432, %v4431
      %v4444 = vpack.c.b16 %v4434, %v4433
      %v4445 = vpack.c.b16 %v4436, %v4435
      %v4446 = vpack.c.b16 %v4438, %v4437
      %4455 = vmatpush.bf16.msra.mxu0 %v4446
      %4456 = vmatpush.bf16.msra.mxu0 %v4445
      %4457 = vmatpush.bf16.msra.mxu0 %v4444
      %4458 = vmatpush.bf16.msra.mxu0 %v4443
      %4459 = vmatpush.bf16.msra.mxu0 %v4442
      %4460 = vmatpush.bf16.msra.mxu0 %v4441
      %4461 = vmatpush.bf16.msra.mxu0 %v4440
      %4462 = vmatpush.bf16.msra.mxu0 %v4439
      %4463 = vmatmul.bf16.gmra.mxu0 %v4375
      %v4464 = vpop.f32.mrf.mxu0
      %v4465 = vadd.f32 0.0, %v4464
      %v4466 = vpop.f32.mrf.mxu0
      %v4467 = vadd.f32 0.0, %v4466
      %4468 = vmatmul.bf16.gmra.mxu0 %v4376
      %v4469 = vpop.f32.mrf.mxu0
      %v4470 = vadd.f32 0.0, %v4469
      %v4471 = vpop.f32.mrf.mxu0
      %v4472 = vadd.f32 0.0, %v4471
      %4473 = vmatmul.bf16.gmra.mxu0 %v4377
      %v4474 = vpop.f32.mrf.mxu0
      %v4475 = vadd.f32 0.0, %v4474
      %v4476 = vpop.f32.mrf.mxu0
      %v4477 = vadd.f32 0.0, %v4476
      %4478 = vmatmul.bf16.gmra.mxu0 %v4378
      %v4479 = vpop.f32.mrf.mxu0
      %v4480 = vadd.f32 0.0, %v4479
      %v4481 = vpop.f32.mrf.mxu0
      %v4482 = vadd.f32 0.0, %v4481
      %4483 = vmatmul.bf16.gmra.mxu0 %v4379
      %v4484 = vpop.f32.mrf.mxu0
      %v4485 = vadd.f32 0.0, %v4484
      %v4486 = vpop.f32.mrf.mxu0
      %v4487 = vadd.f32 0.0, %v4486
      %4488 = vmatmul.bf16.gmra.mxu0 %v4380
      %v4489 = vpop.f32.mrf.mxu0
      %v4490 = vadd.f32 0.0, %v4489
      %v4491 = vpop.f32.mrf.mxu0
      %v4492 = vadd.f32 0.0, %v4491
      %4493 = vmatmul.bf16.gmra.mxu0 %v4381
      %v4494 = vpop.f32.mrf.mxu0
      %v4495 = vadd.f32 0.0, %v4494
      %v4496 = vpop.f32.mrf.mxu0
      %v4497 = vadd.f32 0.0, %v4496
      %4498 = vmatmul.bf16.gmra.mxu0 %v4382
      %v4499 = vpop.f32.mrf.mxu0
      %v4500 = vadd.f32 0.0, %v4499
      %v4501 = vpop.f32.mrf.mxu0
      %v4502 = vadd.f32 0.0, %v4501
      %4503 = vmatmul.bf16.gmra.mxu0 %v4383
      %v4504 = vpop.f32.mrf.mxu0
      %v4505 = vadd.f32 0.0, %v4504
      %v4506 = vpop.f32.mrf.mxu0
      %v4507 = vadd.f32 0.0, %v4506
      %4508 = vmatmul.bf16.gmra.mxu0 %v4384
      %v4509 = vpop.f32.mrf.mxu0
      %v4510 = vadd.f32 0.0, %v4509
      %v4511 = vpop.f32.mrf.mxu0
      %v4512 = vadd.f32 0.0, %v4511
      %4513 = vmatmul.bf16.gmra.mxu0 %v4385
      %v4514 = vpop.f32.mrf.mxu0
      %v4515 = vadd.f32 0.0, %v4514
      %v4516 = vpop.f32.mrf.mxu0
      %v4517 = vadd.f32 0.0, %v4516
      %4518 = vmatmul.bf16.gmra.mxu0 %v4386
      %v4519 = vpop.f32.mrf.mxu0
      %v4520 = vadd.f32 0.0, %v4519
      %v4521 = vpop.f32.mrf.mxu0
      %v4522 = vadd.f32 0.0, %v4521
      %4523 = vmatmul.bf16.gmra.mxu0 %v4387
      %v4524 = vpop.f32.mrf.mxu0
      %v4525 = vadd.f32 0.0, %v4524
      %v4526 = vpop.f32.mrf.mxu0
      %v4527 = vadd.f32 0.0, %v4526
      %4528 = vmatmul.bf16.gmra.mxu0 %v4388
      %v4529 = vpop.f32.mrf.mxu0
      %v4530 = vadd.f32 0.0, %v4529
      %v4531 = vpop.f32.mrf.mxu0
      %v4532 = vadd.f32 0.0, %v4531
      %4533 = vmatmul.bf16.gmra.mxu0 %v4389
      %v4534 = vpop.f32.mrf.mxu0
      %v4535 = vadd.f32 0.0, %v4534
      %v4536 = vpop.f32.mrf.mxu0
      %v4537 = vadd.f32 0.0, %v4536
      %4538 = vmatmul.bf16.gmra.mxu0 %v4390
      %v4539 = vpop.f32.mrf.mxu0
      %v4540 = vadd.f32 0.0, %v4539
      %v4541 = vpop.f32.mrf.mxu0
      %v4542 = vadd.f32 0.0, %v4541
      %4543 = vdwg.mxu0
      %v4544 = vadd.f32 %v4118, %v4465
      %v4545 = vadd.f32 %v4119, %v4467
      %v4546 = vadd.f32 %v4120, %v4470
      %v4547 = vadd.f32 %v4121, %v4472
      %v4548 = vadd.f32 %v4122, %v4475
      %v4549 = vadd.f32 %v4123, %v4477
      %v4550 = vadd.f32 %v4124, %v4480
      %v4551 = vadd.f32 %v4125, %v4482
      %v4552 = vadd.f32 %v4126, %v4485
      %v4553 = vadd.f32 %v4127, %v4487
      %v4554 = vadd.f32 %v4128, %v4490
      %v4555 = vadd.f32 %v4129, %v4492
      %v4556 = vadd.f32 %v4130, %v4495
      %v4557 = vadd.f32 %v4131, %v4497
      %v4558 = vadd.f32 %v4132, %v4500
      %v4559 = vadd.f32 %v4133, %v4502
      %v4560 = vadd.f32 %v4134, %v4505
      %v4561 = vadd.f32 %v4135, %v4507
      %v4562 = vadd.f32 %v4136, %v4510
      %v4563 = vadd.f32 %v4137, %v4512
      %v4564 = vadd.f32 %v4138, %v4515
      %v4565 = vadd.f32 %v4139, %v4517
      %v4566 = vadd.f32 %v4140, %v4520
      %v4567 = vadd.f32 %v4141, %v4522
      %v4568 = vadd.f32 %v4142, %v4525
      %v4569 = vadd.f32 %v4143, %v4527
      %v4570 = vadd.f32 %v4144, %v4530
      %v4571 = vadd.f32 %v4145, %v4532
      %v4572 = vadd.f32 %v4146, %v4535
      %v4573 = vadd.f32 %v4147, %v4537
      %v4574 = vadd.f32 %v4148, %v4540
      %v4575 = vadd.f32 %v4149, %v4542
      %4576 = vst [vmem:[#allocation2] sm:$0xff] %v4544
      %4577 = vst [vmem:[#allocation2 + $0x8] sm:$0xff] %v4545
      %4578 = vst [vmem:[#allocation2 + $0x10] sm:$0xff] %v4546
      %4579 = vst [vmem:[#allocation2 + $0x18] sm:$0xff] %v4547
      %4580 = vst [vmem:[#allocation2 + $0x20] sm:$0xff] %v4548
      %4581 = vst [vmem:[#allocation2 + $0x28] sm:$0xff] %v4549
      %4582 = vst [vmem:[#allocation2 + $0x30] sm:$0xff] %v4550
      %4583 = vst [vmem:[#allocation2 + $0x38] sm:$0xff] %v4551
      %4584 = vst [vmem:[#allocation2 + $0x40] sm:$0xff] %v4552
      %4585 = vst [vmem:[#allocation2 + $0x48] sm:$0xff] %v4553
      %4586 = vst [vmem:[#allocation2 + $0x50] sm:$0xff] %v4554
      %4587 = vst [vmem:[#allocation2 + $0x58] sm:$0xff] %v4555
      %4588 = vst [vmem:[#allocation2 + $0x60] sm:$0xff] %v4556
      %4589 = vst [vmem:[#allocation2 + $0x68] sm:$0xff] %v4557
      %4590 = vst [vmem:[#allocation2 + $0x70] sm:$0xff] %v4558
      %4591 = vst [vmem:[#allocation2 + $0x78] sm:$0xff] %v4559
      %4592 = vst [vmem:[#allocation2 + $0x80] sm:$0xff] %v4560
      %4593 = vst [vmem:[#allocation2 + $0x88] sm:$0xff] %v4561
      %4594 = vst [vmem:[#allocation2 + $0x90] sm:$0xff] %v4562
      %4595 = vst [vmem:[#allocation2 + $0x98] sm:$0xff] %v4563
      %4596 = vst [vmem:[#allocation2 + $0xa0] sm:$0xff] %v4564
      %4597 = vst [vmem:[#allocation2 + $0xa8] sm:$0xff] %v4565
      %4598 = vst [vmem:[#allocation2 + $0xb0] sm:$0xff] %v4566
      %4599 = vst [vmem:[#allocation2 + $0xb8] sm:$0xff] %v4567
      %4600 = vst [vmem:[#allocation2 + $0xc0] sm:$0xff] %v4568
      %4601 = vst [vmem:[#allocation2 + $0xc8] sm:$0xff] %v4569
      %4602 = vst [vmem:[#allocation2 + $0xd0] sm:$0xff] %v4570
      %4603 = vst [vmem:[#allocation2 + $0xd8] sm:$0xff] %v4571
      %4604 = vst [vmem:[#allocation2 + $0xe0] sm:$0xff] %v4572
      %4605 = vst [vmem:[#allocation2 + $0xe8] sm:$0xff] %v4573
      %4606 = vst [vmem:[#allocation2 + $0xf0] sm:$0xff] %v4574
      %4607 = vst [vmem:[#allocation2 + $0xf8] sm:$0xff] %v4575
      // Predicated region
      $region37: #{basic_block_forward.2} parent=31 // pred_check
        %p4608 = pneg %p235
      $region38: #{basic_block_forward.2} parent=31 // pred_check_branch
        %4610 = sbr.rel (%p4608) target = $region40
      $region39: #{basic_block_forward.2} parent=31 // pred_region
        %v4611 = vld [vmem:[#allocation2] sm:$0xff]
        %v4612 = vld [vmem:[#allocation2 + $0x8] sm:$0xff]
        %v4613 = vld [vmem:[#allocation2 + $0x10] sm:$0xff]
        %v4614 = vld [vmem:[#allocation2 + $0x18] sm:$0xff]
        %v4615 = vld [vmem:[#allocation2 + $0x20] sm:$0xff]
        %v4616 = vld [vmem:[#allocation2 + $0x28] sm:$0xff]
        %v4617 = vld [vmem:[#allocation2 + $0x30] sm:$0xff]
        %v4618 = vld [vmem:[#allocation2 + $0x38] sm:$0xff]
        %v4619 = vld [vmem:[#allocation2 + $0x40] sm:$0xff]
        %v4620 = vld [vmem:[#allocation2 + $0x48] sm:$0xff]
        %v4621 = vld [vmem:[#allocation2 + $0x50] sm:$0xff]
        %v4622 = vld [vmem:[#allocation2 + $0x58] sm:$0xff]
        %v4623 = vld [vmem:[#allocation2 + $0x60] sm:$0xff]
        %v4624 = vld [vmem:[#allocation2 + $0x68] sm:$0xff]
        %v4625 = vld [vmem:[#allocation2 + $0x70] sm:$0xff]
        %v4626 = vld [vmem:[#allocation2 + $0x78] sm:$0xff]
        %v4627 = vld [vmem:[#allocation2 + $0x80] sm:$0xff]
        %v4628 = vld [vmem:[#allocation2 + $0x88] sm:$0xff]
        %v4629 = vld [vmem:[#allocation2 + $0x90] sm:$0xff]
        %v4630 = vld [vmem:[#allocation2 + $0x98] sm:$0xff]
        %v4631 = vld [vmem:[#allocation2 + $0xa0] sm:$0xff]
        %v4632 = vld [vmem:[#allocation2 + $0xa8] sm:$0xff]
        %v4633 = vld [vmem:[#allocation2 + $0xb0] sm:$0xff]
        %v4634 = vld [vmem:[#allocation2 + $0xb8] sm:$0xff]
        %v4635 = vld [vmem:[#allocation2 + $0xc0] sm:$0xff]
        %v4636 = vld [vmem:[#allocation2 + $0xc8] sm:$0xff]
        %v4637 = vld [vmem:[#allocation2 + $0xd0] sm:$0xff]
        %v4638 = vld [vmem:[#allocation2 + $0xd8] sm:$0xff]
        %v4639 = vld [vmem:[#allocation2 + $0xe0] sm:$0xff]
        %v4640 = vld [vmem:[#allocation2 + $0xe8] sm:$0xff]
        %v4641 = vld [vmem:[#allocation2 + $0xf0] sm:$0xff]
        %v4642 = vld [vmem:[#allocation2 + $0xf8] sm:$0xff]
        %v4643 = vld [vmem:[%s2] sm:$0x1]
        %v4645 = vperm.slane %v4643, 0
        %v4647 = vadd.f32 %v4611, %v4645
        %v4648 = vadd.f32 %v4612, %v4645
        %v4649 = vadd.f32 %v4613, %v4645
        %v4650 = vadd.f32 %v4614, %v4645
        %v4651 = vadd.f32 %v4615, %v4645
        %v4652 = vadd.f32 %v4616, %v4645
        %v4653 = vadd.f32 %v4617, %v4645
        %v4654 = vadd.f32 %v4618, %v4645
        %v4655 = vadd.f32 %v4619, %v4645
        %v4656 = vadd.f32 %v4620, %v4645
        %v4657 = vadd.f32 %v4621, %v4645
        %v4658 = vadd.f32 %v4622, %v4645
        %v4659 = vadd.f32 %v4623, %v4645
        %v4660 = vadd.f32 %v4624, %v4645
        %v4661 = vadd.f32 %v4625, %v4645
        %v4662 = vadd.f32 %v4626, %v4645
        %v4663 = vadd.f32 %v4627, %v4645
        %v4664 = vadd.f32 %v4628, %v4645
        %v4665 = vadd.f32 %v4629, %v4645
        %v4666 = vadd.f32 %v4630, %v4645
        %v4667 = vadd.f32 %v4631, %v4645
        %v4668 = vadd.f32 %v4632, %v4645
        %v4669 = vadd.f32 %v4633, %v4645
        %v4670 = vadd.f32 %v4634, %v4645
        %v4671 = vadd.f32 %v4635, %v4645
        %v4672 = vadd.f32 %v4636, %v4645
        %v4673 = vadd.f32 %v4637, %v4645
        %v4674 = vadd.f32 %v4638, %v4645
        %v4675 = vadd.f32 %v4639, %v4645
        %v4676 = vadd.f32 %v4640, %v4645
        %v4677 = vadd.f32 %v4641, %v4645
        %v4678 = vadd.f32 %v4642, %v4645
        %v4679 = vmax.f32 %v4647, 0.0
        %v4680 = vmax.f32 %v4648, 0.0
        %v4681 = vmax.f32 %v4649, 0.0
        %v4682 = vmax.f32 %v4650, 0.0
        %v4683 = vmax.f32 %v4651, 0.0
        %v4684 = vmax.f32 %v4652, 0.0
        %v4685 = vmax.f32 %v4653, 0.0
        %v4686 = vmax.f32 %v4654, 0.0
        %v4687 = vmax.f32 %v4655, 0.0
        %v4688 = vmax.f32 %v4656, 0.0
        %v4689 = vmax.f32 %v4657, 0.0
        %v4690 = vmax.f32 %v4658, 0.0
        %v4691 = vmax.f32 %v4659, 0.0
        %v4692 = vmax.f32 %v4660, 0.0
        %v4693 = vmax.f32 %v4661, 0.0
        %v4694 = vmax.f32 %v4662, 0.0
        %v4695 = vmax.f32 %v4663, 0.0
        %v4696 = vmax.f32 %v4664, 0.0
        %v4697 = vmax.f32 %v4665, 0.0
        %v4698 = vmax.f32 %v4666, 0.0
        %v4699 = vmax.f32 %v4667, 0.0
        %v4700 = vmax.f32 %v4668, 0.0
        %v4701 = vmax.f32 %v4669, 0.0
        %v4702 = vmax.f32 %v4670, 0.0
        %v4703 = vmax.f32 %v4671, 0.0
        %v4704 = vmax.f32 %v4672, 0.0
        %v4705 = vmax.f32 %v4673, 0.0
        %v4706 = vmax.f32 %v4674, 0.0
        %v4707 = vmax.f32 %v4675, 0.0
        %v4708 = vmax.f32 %v4676, 0.0
        %v4709 = vmax.f32 %v4677, 0.0
        %v4710 = vmax.f32 %v4678, 0.0
        %v4711 = vpack.c.bf16 %v4679, %v4679
        %v4712 = vpack.c.bf16 %v4680, %v4680
        %v4713 = vpack.c.bf16 %v4681, %v4681
        %v4714 = vpack.c.bf16 %v4682, %v4682
        %v4715 = vpack.c.bf16 %v4683, %v4683
        %v4716 = vpack.c.bf16 %v4684, %v4684
        %v4717 = vpack.c.bf16 %v4685, %v4685
        %v4718 = vpack.c.bf16 %v4686, %v4686
        %v4719 = vpack.c.bf16 %v4687, %v4687
        %v4720 = vpack.c.bf16 %v4688, %v4688
        %v4721 = vpack.c.bf16 %v4689, %v4689
        %v4722 = vpack.c.bf16 %v4690, %v4690
        %v4723 = vpack.c.bf16 %v4691, %v4691
        %v4724 = vpack.c.bf16 %v4692, %v4692
        %v4725 = vpack.c.bf16 %v4693, %v4693
        %v4726 = vpack.c.bf16 %v4694, %v4694
        %v4727 = vpack.c.bf16 %v4695, %v4695
        %v4728 = vpack.c.bf16 %v4696, %v4696
        %v4729 = vpack.c.bf16 %v4697, %v4697
        %v4730 = vpack.c.bf16 %v4698, %v4698
        %v4731 = vpack.c.bf16 %v4699, %v4699
        %v4732 = vpack.c.bf16 %v4700, %v4700
        %v4733 = vpack.c.bf16 %v4701, %v4701
        %v4734 = vpack.c.bf16 %v4702, %v4702
        %v4735 = vpack.c.bf16 %v4703, %v4703
        %v4736 = vpack.c.bf16 %v4704, %v4704
        %v4737 = vpack.c.bf16 %v4705, %v4705
        %v4738 = vpack.c.bf16 %v4706, %v4706
        %v4739 = vpack.c.bf16 %v4707, %v4707
        %v4740 = vpack.c.bf16 %v4708, %v4708
        %v4741 = vpack.c.bf16 %v4709, %v4709
        %v4742 = vpack.c.bf16 %v4710, %v4710
        %4743 = vst [vmem:[%s233] sm:$0xf] %v4711
        %4744 = vst [vmem:[%s233 + $0x4] sm:$0xf] %v4712
        %4745 = vst [vmem:[%s233 + $0x8] sm:$0xf] %v4713
        %4746 = vst [vmem:[%s233 + $0xc] sm:$0xf] %v4714
        %4747 = vst [vmem:[%s233 + $0x10] sm:$0xf] %v4715
        %4748 = vst [vmem:[%s233 + $0x14] sm:$0xf] %v4716
        %4749 = vst [vmem:[%s233 + $0x18] sm:$0xf] %v4717
        %4750 = vst [vmem:[%s233 + $0x1c] sm:$0xf] %v4718
        %4751 = vst [vmem:[%s233 + $0x20] sm:$0xf] %v4719
        %4752 = vst [vmem:[%s233 + $0x24] sm:$0xf] %v4720
        %4753 = vst [vmem:[%s233 + $0x28] sm:$0xf] %v4721
        %4754 = vst [vmem:[%s233 + $0x2c] sm:$0xf] %v4722
        %4755 = vst [vmem:[%s233 + $0x30] sm:$0xf] %v4723
        %4756 = vst [vmem:[%s233 + $0x34] sm:$0xf] %v4724
        %4757 = vst [vmem:[%s233 + $0x38] sm:$0xf] %v4725
        %4758 = vst [vmem:[%s233 + $0x3c] sm:$0xf] %v4726
        %4759 = vst [vmem:[%s233 + $0x40] sm:$0xf] %v4727
        %4760 = vst [vmem:[%s233 + $0x44] sm:$0xf] %v4728
        %4761 = vst [vmem:[%s233 + $0x48] sm:$0xf] %v4729
        %4762 = vst [vmem:[%s233 + $0x4c] sm:$0xf] %v4730
        %4763 = vst [vmem:[%s233 + $0x50] sm:$0xf] %v4731
        %4764 = vst [vmem:[%s233 + $0x54] sm:$0xf] %v4732
        %4765 = vst [vmem:[%s233 + $0x58] sm:$0xf] %v4733
        %4766 = vst [vmem:[%s233 + $0x5c] sm:$0xf] %v4734
        %4767 = vst [vmem:[%s233 + $0x60] sm:$0xf] %v4735
        %4768 = vst [vmem:[%s233 + $0x64] sm:$0xf] %v4736
        %4769 = vst [vmem:[%s233 + $0x68] sm:$0xf] %v4737
        %4770 = vst [vmem:[%s233 + $0x6c] sm:$0xf] %v4738
        %4771 = vst [vmem:[%s233 + $0x70] sm:$0xf] %v4739
        %4772 = vst [vmem:[%s233 + $0x74] sm:$0xf] %v4740
        %4773 = vst [vmem:[%s233 + $0x78] sm:$0xf] %v4741
        %4774 = vst [vmem:[%s233 + $0x7c] sm:$0xf] %v4742
      $region40: #{basic_block_forward.2} parent=31 // pred_fallthru
        _
      %s4775 = sadd.s32 %s19, %s20
      %p4776 = scmp.lt.s32.totalorder %s4775, 1
      %s4777 = scalar_select %p4776, %s4775, 1
      %s4778 = smul.addr %s4777, 32
      %s4779 = smul.addr %s4778, 4
      %s4780 = scalar_lea.vmem %s3, %s4779
      // Predicated region
      $region41: #{basic_block_forward.2} parent=31 // pred_check
        %p4781 = pneg %p130
      $region42: #{basic_block_forward.2} parent=31 // pred_check_branch
        %4783 = sbr.rel (%p4781) target = $region44
      $region43: #{basic_block_forward.2} parent=31 // pred_region
        %s4784 = sadd.s32 %s19, %s20
      $region44: #{basic_block_forward.2} parent=31 // pred_fallthru
        _
    $region32: #{basic_block_forward.2} parent=5 // pred_fallthru
      _
    %p4785 = scmp.le.s32.totalorder 2, %s9
    // Predicated region
    $region45: #{basic_block_forward.2} parent=5 // pred_check
      %p4786 = pneg %p4785
    $region46: #{basic_block_forward.2} parent=5 // pred_check_branch
      %4788 = sbr.rel (%p4786) target = $region48
    $region47: #{basic_block_forward.2} parent=5 // pred_region
      %s4789 = ssub.s32 %s9, 2
      // Predicated region
      $region49: #{basic_block_forward.2} parent=47 // pred_check
        %p4790 = pneg %p136
      $region50: #{basic_block_forward.2} parent=47 // pred_check_branch
        %4792 = sbr.rel (%p4790) target = $region52
      $region51: #{basic_block_forward.2} parent=47 // pred_region
        %s4793 = sadd.s32 %s22, %s23
        %p4794 = scmp.lt.s32.totalorder %s4793, 1
        %s4795 = scalar_select %p4794, %s4793, 1
        %s4796 = smul.addr %s4795, 32
        %s4797 = smul.addr %s4796, 4
        %s4798 = scalar_lea.vmem %s3, %s4797
      $region52: #{basic_block_forward.2} parent=47 // pred_fallthru
        _
    $region48: #{basic_block_forward.2} parent=5 // pred_fallthru
      _
  $region6: #{basic_block_forward.2} parent=0 // loop_footer
    %s13 = sadd.s32 1, %s9
  $region7: #{basic_block_forward.2} parent=0 // loop_footer_branch
    %8 = sbr.rel target = $region3
  $region8: #{basic_block_forward.2} parent=0 // loop_exit
    _

// kernel: basic_block_forward.3
$region0: #{basic_block_forward.3}
  #allocation0 [shape = 'u32[]', space=smem, size = 0x4, offset = 0x4, fixed_abs, tag = 'smem constant byte address 0x4 - core index']
  #allocation1 [shape = 'u32[72,128]{1,0:T(1,128)}', space=vmem, size = 0x9000, scoped, tag = 'internal scratch']
  #allocation2 [shape = 'f32[256,128]{1,0:T(8,128)}', space=vmem, size = 0x20000, scoped, tag = 'scratch operand']
  %s0 = inlined_call_operand.vmem [shape: bf16[2,1,18,18,128], index: 0, kind: input, shape index: {}]
  %s1 = inlined_call_operand.vmem [shape: bf16[9,128,128], index: 1, kind: input, shape index: {}]
  %s2 = inlined_call_operand.vmem [shape: f32[1,128], index: 2, kind: input, shape index: {}]
  %s3 = inlined_call_operand.vmem [shape: f32[2,256,128], index: 3, kind: input, shape index: {}, may-alias: {3,4}]
  %s4 = inlined_call_operand.vmem [shape: f32[2,256,128], index: 4, kind: output, shape index: {}, may-alias: {3,4}]
  %s5 = sld [smem:[#allocation0]]
  $region57: #{basic_block_forward.3} parent=0
    _
  %s7 = ssub.s32 1, %s5
  %s8 = scalar_select 0, %s7, %s5
  loop: start=0, step=1, limit=4
  $region2: #{basic_block_forward.3} parent=0 // loop_pre_header
    _
  $region3: #{basic_block_forward.3} parent=0 // loop_header
    %s10 = sphi 0, %s14
    %p11 = scmp.ge.s32.totalorder %s10, 4
    %s17 = sphi 0, %s36
    %s18 = sphi 0, %s32
    %s19 = sphi 0, %s28
    %s20 = sphi 0, %s17
    %s21 = sphi 0, %s18
    %s22 = sphi 0, %s19
    %s23 = sphi 0, %s20
    %s24 = sphi 0, %s21
    %s25 = sphi 0, %s22
    %s43 = sphi 0, %s45
    %s46 = sphi 0, %s43
    %s47 = sphi 0, %s46
    %s63 = sphi 0, %s47
    %s69 = sphi 0, %s71
    %s72 = sphi 0, %s69
    %s73 = sphi 0, %s72
    %s89 = sphi 0, %s73
    %s93 = sphi 0, %s93
    %s95 = sphi 0, %s93
    %s96 = sphi 0, %s95
    %s110 = sphi 0, %s96
    %s118 = sphi 0, %s120
    %s121 = sphi 0, %s118
    %s122 = sphi 0, %s121
    %s138 = sphi 0, %s122
    %s146 = sphi 0, %s148
    %s149 = sphi 0, %s146
    %s150 = sphi 0, %s149
    %s166 = sphi 0, %s150
  $region4: #{basic_block_forward.3} parent=0 // loop_header_branch
    %13 = sbr.rel (%p11) target = $region8
  $region5: #{basic_block_forward.3} parent=0 // loop_body
    %s15 = ssub.s32 %s10, 1
    %s16 = ssub.s32 %s10, 2
    %s26 = sadd.s32 1, %s19
    %p27 = scmp.ge.s32.totalorder %s26, 1
    %s28 = scalar_select %p27, 0, %s26
    %s29 = sadd.s32 1, %s18
    %s30 = scalar_select %p27, %s29, %s18
    %p31 = scmp.ge.s32.totalorder %s30, 1
    %s32 = scalar_select %p31, 0, %s30
    %s33 = sadd.s32 1, %s17
    %s34 = scalar_select %p31, %s33, %s17
    %p35 = scmp.ge.s32.totalorder %s34, 2
    %s36 = scalar_select %p35, 0, %s34
    %s37 = sadd.s32 %s17, %s18
    %s38 = sadd.s32 %s36, %s32
    %s39 = ssub.s32 %s37, %s38
    %s40 = ssub.s32 %s19, %s28
    %s41 = sor.u32 %s39, %s40
    %p42 = scmp.eq.s32.totalorder %s41, 0
    %s44 = sadd.s32 %s43, 1
    %s45 = scalar_select %p42, %s43, %s44
    %p48 = pneg %p42
    %p49 = scmp.eq.s32.totalorder %s10, 1
    %p50 = por %p48, %p49
    %p51 = scmp.ne.s32.totalorder %s43, %s46
    %p52 = scmp.eq.s32.totalorder %s10, 0
    %p53 = por %p51, %p52
    %p54 = scmp.ne.s32.totalorder %s43, %s46
    %p55 = scmp.eq.s32.totalorder %s15, 1
    %p56 = por %p54, %p55
    %p57 = scmp.ne.s32.totalorder %s46, %s47
    %p58 = scmp.eq.s32.totalorder %s15, 0
    %p59 = por %p57, %p58
    %p60 = scmp.ne.s32.totalorder %s46, %s47
    %p61 = scmp.eq.s32.totalorder %s16, 1
    %p62 = por %p60, %p61
    %p64 = scmp.ne.s32.totalorder %s47, %s63
    %p65 = scmp.eq.s32.totalorder %s16, 0
    %p66 = por %p64, %p65
    %s67 = ssub.s32 %s19, %s28
    %p68 = scmp.eq.s32.totalorder %s67, 0
    %s70 = sadd.s32 %s69, 1
    %s71 = scalar_select %p68, %s69, %s70
    %p74 = pneg %p68
    %p75 = scmp.eq.s32.totalorder %s10, 1
    %p76 = por %p74, %p75
    %p77 = scmp.ne.s32.totalorder %s69, %s72
    %p78 = scmp.eq.s32.totalorder %s10, 0
    %p79 = por %p77, %p78
    %p80 = scmp.ne.s32.totalorder %s69, %s72
    %p81 = scmp.eq.s32.totalorder %s15, 1
    %p82 = por %p80, %p81
    %p83 = scmp.ne.s32.totalorder %s72, %s73
    %p84 = scmp.eq.s32.totalorder %s15, 0
    %p85 = por %p83, %p84
    %p86 = scmp.ne.s32.totalorder %s72, %s73
    %p87 = scmp.eq.s32.totalorder %s16, 1
    %p88 = por %p86, %p87
    %p90 = scmp.ne.s32.totalorder %s73, %s89
    %p91 = scmp.eq.s32.totalorder %s16, 0
    %p92 = por %p90, %p91
    %s94 = sadd.s32 %s93, 1
    %p97 = scmp.eq.s32.totalorder %s10, 1
    %p98 = scmp.ne.s32.totalorder %s93, %s95
    %p99 = scmp.eq.s32.totalorder %s10, 0
    %p100 = por %p98, %p99
    %p101 = scmp.ne.s32.totalorder %s93, %s95
    %p102 = scmp.eq.s32.totalorder %s15, 1
    %p103 = por %p101, %p102
    %p104 = scmp.ne.s32.totalorder %s95, %s96
    %p105 = scmp.eq.s32.totalorder %s15, 0
    %p106 = por %p104, %p105
    %p107 = scmp.ne.s32.totalorder %s95, %s96
    %p108 = scmp.eq.s32.totalorder %s16, 1
    %p109 = por %p107, %p108
    %p111 = scmp.ne.s32.totalorder %s96, %s110
    %p112 = scmp.eq.s32.totalorder %s16, 0
    %p113 = por %p111, %p112
    %s114 = sadd.s32 %s17, %s18
    %s115 = sadd.s32 %s36, %s32
    %s116 = ssub.s32 %s114, %s115
    %p117 = scmp.eq.s32.totalorder %s116, 0
    %s119 = sadd.s32 %s118, 1
    %s120 = scalar_select %p117, %s118, %s119
    %p123 = pneg %p117
    %p124 = scmp.eq.s32.totalorder %s10, 1
    %p125 = por %p123, %p124
    %p126 = scmp.ne.s32.totalorder %s118, %s121
    %p127 = scmp.eq.s32.totalorder %s10, 0
    %p128 = por %p126, %p127
    %p129 = scmp.ne.s32.totalorder %s118, %s121
    %p130 = scmp.eq.s32.totalorder %s15, 1
    %p131 = por %p129, %p130
    %p132 = scmp.ne.s32.totalorder %s121, %s122
    %p133 = scmp.eq.s32.totalorder %s15, 0
    %p134 = por %p132, %p133
    %p135 = scmp.ne.s32.totalorder %s121, %s122
    %p136 = scmp.eq.s32.totalorder %s16, 1
    %p137 = por %p135, %p136
    %p139 = scmp.ne.s32.totalorder %s122, %s138
    %p140 = scmp.eq.s32.totalorder %s16, 0
    %p141 = por %p139, %p140
    %s142 = sadd.s32 %s17, %s18
    %s143 = sadd.s32 %s36, %s32
    %s144 = ssub.s32 %s142, %s143
    %p145 = scmp.eq.s32.totalorder %s144, 0
    %s147 = sadd.s32 %s146, 1
    %s148 = scalar_select %p145, %s146, %s147
    %p151 = pneg %p145
    %p152 = scmp.eq.s32.totalorder %s10, 1
    %p153 = por %p151, %p152
    %p154 = scmp.ne.s32.totalorder %s146, %s149
    %p155 = scmp.eq.s32.totalorder %s10, 0
    %p156 = por %p154, %p155
    %p157 = scmp.ne.s32.totalorder %s146, %s149
    %p158 = scmp.eq.s32.totalorder %s15, 1
    %p159 = por %p157, %p158
    %p160 = scmp.ne.s32.totalorder %s149, %s150
    %p161 = scmp.eq.s32.totalorder %s15, 0
    %p162 = por %p160, %p161
    %p163 = scmp.ne.s32.totalorder %s149, %s150
    %p164 = scmp.eq.s32.totalorder %s16, 1
    %p165 = por %p163, %p164
    %p167 = scmp.ne.s32.totalorder %s150, %s166
    %p168 = scmp.eq.s32.totalorder %s16, 0
    %p169 = por %p167, %p168
    %p170 = scmp.le.s32.totalorder 1, %s10
    %p171 = scmp.lt.s32.totalorder %s10, 3
    %p172 = pnand %p170, %p171
    %p173 = pneg %p172
    // Predicated region
    $region9: #{basic_block_forward.3} parent=5 // pred_check
      _
    $region10: #{basic_block_forward.3} parent=5 // pred_check_branch
      %175 = sbr.rel (%p172) target = $region12
    $region11: #{basic_block_forward.3} parent=5 // pred_region
      %s176 = ssub.s32 %s10, 1
      // Predicated region
      $region13: #{basic_block_forward.3} parent=11 // pred_check
        %p177 = pneg %p85
      $region14: #{basic_block_forward.3} parent=11 // pred_check_branch
        %179 = sbr.rel (%p177) target = $region16
      $region15: #{basic_block_forward.3} parent=11 // pred_region
        %s180 = smul.u32 16, %s22
        %p181 = scmp.lt.s32.totalorder %s180, 15
        %s182 = scalar_select %p181, %s180, 15
        %s183 = smul.addr %s182, 4
        %s184 = scalar_lea.vmem %s1, %s183
        %s185 = smul.u32 16, %s22
      $region16: #{basic_block_forward.3} parent=11 // pred_fallthru
        _
      // Predicated region
      $region17: #{basic_block_forward.3} parent=11 // pred_check
        %p186 = pneg %p106
      $region18: #{basic_block_forward.3} parent=11 // pred_check_branch
        %188 = sbr.rel (%p186) target = $region20
      $region19: #{basic_block_forward.3} parent=11 // pred_region
        _
      $region20: #{basic_block_forward.3} parent=11 // pred_fallthru
        _
    $region12: #{basic_block_forward.3} parent=5 // pred_fallthru
      _
    %p189 = scmp.lt.s32.totalorder %s10, 2
    // Predicated region
    $region21: #{basic_block_forward.3} parent=5 // pred_check
      %p190 = pneg %p189
    $region22: #{basic_block_forward.3} parent=5 // pred_check_branch
      %192 = sbr.rel (%p190) target = $region24
    $region23: #{basic_block_forward.3} parent=5 // pred_region
      // Predicated region
      $region25: #{basic_block_forward.3} parent=23 // pred_check
        %p193 = pneg %p53
      $region26: #{basic_block_forward.3} parent=23 // pred_check_branch
        %195 = sbr.rel (%p193) target = $region28
      $region27: #{basic_block_forward.3} parent=23 // pred_region
        %s196 = sadd.s32 %s17, %s18
        %p197 = scmp.lt.s32.totalorder %s196, 1
        %s198 = scalar_select %p197, %s196, 1
        %p199 = scmp.lt.s32.totalorder %s19, 0
        %s200 = scalar_select %p199, %s19, 0
        %s201 = smul.addr %s198, 54
        %s202 = sadd.s32 %s200, %s201
        %s203 = smul.addr %s202, 4
        %s204 = scalar_lea.vmem %s0, %s203
        %s205 = sadd.s32 %s17, %s18
      $region28: #{basic_block_forward.3} parent=23 // pred_fallthru
        _
      // Predicated region
      $region29: #{basic_block_forward.3} parent=23 // pred_check
        %p206 = pneg %p128
      $region30: #{basic_block_forward.3} parent=23 // pred_check_branch
        %208 = sbr.rel (%p206) target = $region32
      $region31: #{basic_block_forward.3} parent=23 // pred_region
        %s209 = sadd.s32 %s17, %s18
        %p210 = scmp.lt.s32.totalorder %s209, 1
        %s211 = scalar_select %p210, %s209, 1
        %s212 = smul.addr %s211, 32
        %s213 = smul.addr %s212, 8
        %s214 = scalar_lea.vmem %s3, %s213
        %s215 = sadd.s32 %s17, %s18
      $region32: #{basic_block_forward.3} parent=23 // pred_fallthru
        _
    $region24: #{basic_block_forward.3} parent=5 // pred_fallthru
      _
    %p216 = scmp.le.s32.totalorder 1, %s10
    %p217 = scmp.lt.s32.totalorder %s10, 3
    %p218 = pnand %p216, %p217
    %p219 = pneg %p218
    // Predicated region
    $region33: #{basic_block_forward.3} parent=5 // pred_check
      _
    $region34: #{basic_block_forward.3} parent=5 // pred_check_branch
      %221 = sbr.rel (%p218) target = $region36
    $region35: #{basic_block_forward.3} parent=5 // pred_region
      %s222 = ssub.s32 %s10, 1
      %s223 = sadd.s32 %s20, %s21
      %p224 = scmp.lt.s32.totalorder %s223, 1
      %s225 = scalar_select %p224, %s223, 1
      %p226 = scmp.lt.s32.totalorder %s22, 0
      %s227 = scalar_select %p226, %s22, 0
      %s228 = smul.addr %s225, 54
      %s229 = sadd.s32 %s227, %s228
      %s230 = smul.addr %s229, 4
      %s231 = scalar_lea.vmem %s0, %s230
      %p232 = pneg %p59
      %p233 = pneg %p56
      %s234 = smul.u32 16, %s22
      %p235 = scmp.lt.s32.totalorder %s234, 15
      %s236 = scalar_select %p235, %s234, 15
      %s237 = smul.addr %s236, 4
      %s238 = scalar_lea.vmem %s1, %s237
      %p239 = pneg %p85
      %p240 = pneg %p82
      %p241 = pneg %p106
      %p242 = pneg %p103
      %s243 = sadd.s32 %s20, %s21
      %p244 = scmp.lt.s32.totalorder %s243, 1
      %s245 = scalar_select %p244, %s243, 1
      %s246 = smul.addr %s245, 32
      %s247 = smul.addr %s246, 8
      %s248 = scalar_lea.vmem %s3, %s247
      %p249 = pneg %p134
      %p250 = pneg %p131
      %p251 = pneg %p162
      %p252 = pneg %p159
      %s253 = sadd.s32 %s20, %s21
      %p254 = scmp.lt.s32.totalorder %s253, 1
      %s255 = scalar_select %p254, %s253, 1
      %s256 = smul.addr %s255, 32
      %s257 = smul.addr %s256, 8
      %s258 = scalar_lea.vmem %s4, %s257
      %s259 = sadd.s32 %s20, %s21
      %p260 = scmp.lt.s32.totalorder %s259, 1
      %s261 = scalar_select %p260, %s259, 1
      %p262 = scmp.lt.s32.totalorder %s22, 0
      %s263 = scalar_select %p262, %s22, 0
      %s264 = smul.addr %s261, 54
      %s265 = sadd.s32 %s263, %s264
      %s266 = smul.addr %s265, 4
      %s267 = scalar_lea.vmem %s0, %s266
      %s268 = sadd.s32 %s20, %s21
      %s269 = smul.u32 16, %s22
      %p270 = scmp.lt.s32.totalorder %s269, 15
      %s271 = scalar_select %p270, %s269, 15
      %s272 = smul.addr %s271, 4
      %s273 = scalar_lea.vmem %s1, %s272
      %s274 = smul.u32 16, %s22
      %s275 = sadd.s32 %s20, %s21
      %p276 = scmp.lt.s32.totalorder %s275, 1
      %s277 = scalar_select %p276, %s275, 1
      %s278 = smul.addr %s277, 32
      %s279 = smul.addr %s278, 8
      %s280 = scalar_lea.vmem %s3, %s279
      %s281 = sadd.s32 %s20, %s21
      %s282 = sadd.s32 %s20, %s21
      %p283 = scmp.lt.s32.totalorder %s282, 1
      %s284 = scalar_select %p283, %s282, 1
      %s285 = smul.addr %s284, 32
      %s286 = smul.addr %s285, 8
      %s287 = scalar_lea.vmem %s4, %s286
      %s288 = sadd.s32 %s20, %s21
      %p289 = scmp.eq.s32.totalorder %s22, 0
      // Predicated region
      $region37: #{basic_block_forward.3} parent=35 // pred_check
        %p290 = pneg %p289
      $region38: #{basic_block_forward.3} parent=35 // pred_check_branch
        %292 = sbr.rel (%p290) target = $region40
      $region39: #{basic_block_forward.3} parent=35 // pred_region
        %293 = vst [vmem:[#allocation2] sm:$0xff] 0.0
        %294 = vst [vmem:[#allocation2 + $0x8] sm:$0xff] 0.0
        %295 = vst [vmem:[#allocation2 + $0x10] sm:$0xff] 0.0
        %296 = vst [vmem:[#allocation2 + $0x18] sm:$0xff] 0.0
        %297 = vst [vmem:[#allocation2 + $0x20] sm:$0xff] 0.0
        %298 = vst [vmem:[#allocation2 + $0x28] sm:$0xff] 0.0
        %299 = vst [vmem:[#allocation2 + $0x30] sm:$0xff] 0.0
        %300 = vst [vmem:[#allocation2 + $0x38] sm:$0xff] 0.0
        %301 = vst [vmem:[#allocation2 + $0x40] sm:$0xff] 0.0
        %302 = vst [vmem:[#allocation2 + $0x48] sm:$0xff] 0.0
        %303 = vst [vmem:[#allocation2 + $0x50] sm:$0xff] 0.0
        %304 = vst [vmem:[#allocation2 + $0x58] sm:$0xff] 0.0
        %305 = vst [vmem:[#allocation2 + $0x60] sm:$0xff] 0.0
        %306 = vst [vmem:[#allocation2 + $0x68] sm:$0xff] 0.0
        %307 = vst [vmem:[#allocation2 + $0x70] sm:$0xff] 0.0
        %308 = vst [vmem:[#allocation2 + $0x78] sm:$0xff] 0.0
        %309 = vst [vmem:[#allocation2 + $0x80] sm:$0xff] 0.0
        %310 = vst [vmem:[#allocation2 + $0x88] sm:$0xff] 0.0
        %311 = vst [vmem:[#allocation2 + $0x90] sm:$0xff] 0.0
        %312 = vst [vmem:[#allocation2 + $0x98] sm:$0xff] 0.0
        %313 = vst [vmem:[#allocation2 + $0xa0] sm:$0xff] 0.0
        %314 = vst [vmem:[#allocation2 + $0xa8] sm:$0xff] 0.0
        %315 = vst [vmem:[#allocation2 + $0xb0] sm:$0xff] 0.0
        %316 = vst [vmem:[#allocation2 + $0xb8] sm:$0xff] 0.0
        %317 = vst [vmem:[#allocation2 + $0xc0] sm:$0xff] 0.0
        %318 = vst [vmem:[#allocation2 + $0xc8] sm:$0xff] 0.0
        %319 = vst [vmem:[#allocation2 + $0xd0] sm:$0xff] 0.0
        %320 = vst [vmem:[#allocation2 + $0xd8] sm:$0xff] 0.0
        %321 = vst [vmem:[#allocation2 + $0xe0] sm:$0xff] 0.0
        %322 = vst [vmem:[#allocation2 + $0xe8] sm:$0xff] 0.0
        %323 = vst [vmem:[#allocation2 + $0xf0] sm:$0xff] 0.0
        %324 = vst [vmem:[#allocation2 + $0xf8] sm:$0xff] 0.0
      $region40: #{basic_block_forward.3} parent=35 // pred_fallthru
        _
      %v325 = vld [vmem:[#allocation2] sm:$0xff]
      %v326 = vld [vmem:[#allocation2 + $0x8] sm:$0xff]
      %v327 = vld [vmem:[#allocation2 + $0x10] sm:$0xff]
      %v328 = vld [vmem:[#allocation2 + $0x18] sm:$0xff]
      %v329 = vld [vmem:[#allocation2 + $0x20] sm:$0xff]
      %v330 = vld [vmem:[#allocation2 + $0x28] sm:$0xff]
      %v331 = vld [vmem:[#allocation2 + $0x30] sm:$0xff]
      %v332 = vld [vmem:[#allocation2 + $0x38] sm:$0xff]
      %v333 = vld [vmem:[#allocation2 + $0x40] sm:$0xff]
      %v334 = vld [vmem:[#allocation2 + $0x48] sm:$0xff]
      %v335 = vld [vmem:[#allocation2 + $0x50] sm:$0xff]
      %v336 = vld [vmem:[#allocation2 + $0x58] sm:$0xff]
      %v337 = vld [vmem:[#allocation2 + $0x60] sm:$0xff]
      %v338 = vld [vmem:[#allocation2 + $0x68] sm:$0xff]
      %v339 = vld [vmem:[#allocation2 + $0x70] sm:$0xff]
      %v340 = vld [vmem:[#allocation2 + $0x78] sm:$0xff]
      %v341 = vld [vmem:[#allocation2 + $0x80] sm:$0xff]
      %v342 = vld [vmem:[#allocation2 + $0x88] sm:$0xff]
      %v343 = vld [vmem:[#allocation2 + $0x90] sm:$0xff]
      %v344 = vld [vmem:[#allocation2 + $0x98] sm:$0xff]
      %v345 = vld [vmem:[#allocation2 + $0xa0] sm:$0xff]
      %v346 = vld [vmem:[#allocation2 + $0xa8] sm:$0xff]
      %v347 = vld [vmem:[#allocation2 + $0xb0] sm:$0xff]
      %v348 = vld [vmem:[#allocation2 + $0xb8] sm:$0xff]
      %v349 = vld [vmem:[#allocation2 + $0xc0] sm:$0xff]
      %v350 = vld [vmem:[#allocation2 + $0xc8] sm:$0xff]
      %v351 = vld [vmem:[#allocation2 + $0xd0] sm:$0xff]
      %v352 = vld [vmem:[#allocation2 + $0xd8] sm:$0xff]
      %v353 = vld [vmem:[#allocation2 + $0xe0] sm:$0xff]
      %v354 = vld [vmem:[#allocation2 + $0xe8] sm:$0xff]
      %v355 = vld [vmem:[#allocation2 + $0xf0] sm:$0xff]
      %v356 = vld [vmem:[#allocation2 + $0xf8] sm:$0xff]
      %v357 = vld [vmem:[%s267] sm:$0xf]
      %v358 = vld [vmem:[%s267 + $0x4] sm:$0xf]
      %v359 = vld [vmem:[%s267 + $0xc] sm:$0xf]
      %v360 = vld [vmem:[%s267 + $0x10] sm:$0xf]
      %v361 = vld [vmem:[%s267 + $0x18] sm:$0xf]
      %v362 = vld [vmem:[%s267 + $0x1c] sm:$0xf]
      %v363 = vld [vmem:[%s267 + $0x24] sm:$0xf]
      %v364 = vld [vmem:[%s267 + $0x28] sm:$0xf]
      %v365 = vld [vmem:[%s267 + $0x30] sm:$0xf]
      %v366 = vld [vmem:[%s267 + $0x34] sm:$0xf]
      %v367 = vld [vmem:[%s267 + $0x3c] sm:$0xf]
      %v368 = vld [vmem:[%s267 + $0x40] sm:$0xf]
      %v369 = vld [vmem:[%s267 + $0x48] sm:$0xf]
      %v370 = vld [vmem:[%s267 + $0x4c] sm:$0xf]
      %v371 = vld [vmem:[%s267 + $0x54] sm:$0xf]
      %v372 = vld [vmem:[%s267 + $0x58] sm:$0xf]
      %v373 = vld [vmem:[%s267 + $0x60] sm:$0xf]
      %v374 = vld [vmem:[%s267 + $0x64] sm:$0xf]
      %v375 = vld [vmem:[%s267 + $0x6c] sm:$0xf]
      %v376 = vld [vmem:[%s267 + $0x70] sm:$0xf]
      %v377 = vld [vmem:[%s267 + $0x78] sm:$0xf]
      %v378 = vld [vmem:[%s267 + $0x7c] sm:$0xf]
      %v379 = vld [vmem:[%s267 + $0x84] sm:$0xf]
      %v380 = vld [vmem:[%s267 + $0x88] sm:$0xf]
      %v381 = vld [vmem:[%s267 + $0x90] sm:$0xf]
      %v382 = vld [vmem:[%s267 + $0x94] sm:$0xf]
      %v383 = vld [vmem:[%s267 + $0x9c] sm:$0xf]
      %v384 = vld [vmem:[%s267 + $0xa0] sm:$0xf]
      %v385 = vld [vmem:[%s267 + $0xa8] sm:$0xf]
      %v386 = vld [vmem:[%s267 + $0xac] sm:$0xf]
      %v387 = vld [vmem:[%s267 + $0xb4] sm:$0xf]
      %v388 = vld [vmem:[%s267 + $0xb8] sm:$0xf]
      %v389 = vld [vmem:[%s273] sm:$0xf]
      %v390 = vld [vmem:[%s273 + $0x4] sm:$0xf]
      %v391 = vld [vmem:[%s273 + $0x8] sm:$0xf]
      %v392 = vld [vmem:[%s273 + $0xc] sm:$0xf]
      %v393 = vld [vmem:[%s273 + $0x10] sm:$0xf]
      %v394 = vld [vmem:[%s273 + $0x14] sm:$0xf]
      %v395 = vld [vmem:[%s273 + $0x18] sm:$0xf]
      %v396 = vld [vmem:[%s273 + $0x1c] sm:$0xf]
      %v397 = vld [vmem:[%s273 + $0x20] sm:$0xf]
      %v398 = vld [vmem:[%s273 + $0x24] sm:$0xf]
      %v399 = vld [vmem:[%s273 + $0x28] sm:$0xf]
      %v400 = vld [vmem:[%s273 + $0x2c] sm:$0xf]
      %v401 = vld [vmem:[%s273 + $0x30] sm:$0xf]
      %v402 = vld [vmem:[%s273 + $0x34] sm:$0xf]
      %v403 = vld [vmem:[%s273 + $0x38] sm:$0xf]
      %v404 = vld [vmem:[%s273 + $0x3c] sm:$0xf]
      %v437 = vunpack.c.l.b16 %v357
      %v438 = vunpack.c.l.b16 %v358
      %v439 = vunpack.c.l.b16 %v359
      %v440 = vunpack.c.l.b16 %v360
      %v441 = vunpack.c.l.b16 %v361
      %v442 = vunpack.c.l.b16 %v362
      %v443 = vunpack.c.l.b16 %v363
      %v444 = vunpack.c.l.b16 %v364
      %v445 = vunpack.c.l.b16 %v365
      %v446 = vunpack.c.l.b16 %v366
      %v447 = vunpack.c.l.b16 %v367
      %v448 = vunpack.c.l.b16 %v368
      %v449 = vunpack.c.l.b16 %v369
      %v450 = vunpack.c.l.b16 %v370
      %v451 = vunpack.c.l.b16 %v371
      %v452 = vunpack.c.l.b16 %v372
      %v453 = vunpack.c.l.b16 %v373
      %v454 = vunpack.c.l.b16 %v374
      %v455 = vunpack.c.l.b16 %v375
      %v456 = vunpack.c.l.b16 %v376
      %v457 = vunpack.c.l.b16 %v377
      %v458 = vunpack.c.l.b16 %v378
      %v459 = vunpack.c.l.b16 %v379
      %v460 = vunpack.c.l.b16 %v380
      %v461 = vunpack.c.l.b16 %v381
      %v462 = vunpack.c.l.b16 %v382
      %v463 = vunpack.c.l.b16 %v383
      %v464 = vunpack.c.l.b16 %v384
      %v465 = vunpack.c.l.b16 %v385
      %v466 = vunpack.c.l.b16 %v386
      %v467 = vunpack.c.l.b16 %v387
      %v468 = vunpack.c.l.b16 %v388
      %v469 = vpack.c.b16 %v438, %v437
      %v470 = vpack.c.b16 %v440, %v439
      %v471 = vpack.c.b16 %v442, %v441
      %v472 = vpack.c.b16 %v444, %v443
      %v473 = vpack.c.b16 %v446, %v445
      %v474 = vpack.c.b16 %v448, %v447
      %v475 = vpack.c.b16 %v450, %v449
      %v476 = vpack.c.b16 %v452, %v451
      %v477 = vpack.c.b16 %v454, %v453
      %v478 = vpack.c.b16 %v456, %v455
      %v479 = vpack.c.b16 %v458, %v457
      %v480 = vpack.c.b16 %v460, %v459
      %v481 = vpack.c.b16 %v462, %v461
      %v482 = vpack.c.b16 %v464, %v463
      %v483 = vpack.c.b16 %v466, %v465
      %v484 = vpack.c.b16 %v468, %v467
      %v517 = vunpack.c.l.b16 %v389
      %v518 = vunpack.c.l.b16 %v390
      %v519 = vunpack.c.l.b16 %v391
      %v520 = vunpack.c.l.b16 %v392
      %v521 = vunpack.c.l.b16 %v393
      %v522 = vunpack.c.l.b16 %v394
      %v523 = vunpack.c.l.b16 %v395
      %v524 = vunpack.c.l.b16 %v396
      %v525 = vunpack.c.l.b16 %v397
      %v526 = vunpack.c.l.b16 %v398
      %v527 = vunpack.c.l.b16 %v399
      %v528 = vunpack.c.l.b16 %v400
      %v529 = vunpack.c.l.b16 %v401
      %v530 = vunpack.c.l.b16 %v402
      %v531 = vunpack.c.l.b16 %v403
      %v532 = vunpack.c.l.b16 %v404
      %v533 = vpack.c.b16 %v518, %v517
      %v534 = vpack.c.b16 %v520, %v519
      %v535 = vpack.c.b16 %v522, %v521
      %v536 = vpack.c.b16 %v524, %v523
      %v537 = vpack.c.b16 %v526, %v525
      %v538 = vpack.c.b16 %v528, %v527
      %v539 = vpack.c.b16 %v530, %v529
      %v540 = vpack.c.b16 %v532, %v531
      %549 = vmatpush.bf16.msra.mxu0 %v540
      %550 = vmatpush.bf16.msra.mxu0 %v539
      %551 = vmatpush.bf16.msra.mxu0 %v538
      %552 = vmatpush.bf16.msra.mxu0 %v537
      %553 = vmatpush.bf16.msra.mxu0 %v536
      %554 = vmatpush.bf16.msra.mxu0 %v535
      %555 = vmatpush.bf16.msra.mxu0 %v534
      %556 = vmatpush.bf16.msra.mxu0 %v533
      %557 = vmatmul.bf16.gmra.mxu0 %v469
      %v558 = vpop.f32.mrf.mxu0
      %v559 = vadd.f32 0.0, %v558
      %v560 = vpop.f32.mrf.mxu0
      %v561 = vadd.f32 0.0, %v560
      %562 = vmatmul.bf16.gmra.mxu0 %v470
      %v563 = vpop.f32.mrf.mxu0
      %v564 = vadd.f32 0.0, %v563
      %v565 = vpop.f32.mrf.mxu0
      %v566 = vadd.f32 0.0, %v565
      %567 = vmatmul.bf16.gmra.mxu0 %v471
      %v568 = vpop.f32.mrf.mxu0
      %v569 = vadd.f32 0.0, %v568
      %v570 = vpop.f32.mrf.mxu0
      %v571 = vadd.f32 0.0, %v570
      %572 = vmatmul.bf16.gmra.mxu0 %v472
      %v573 = vpop.f32.mrf.mxu0
      %v574 = vadd.f32 0.0, %v573
      %v575 = vpop.f32.mrf.mxu0
      %v576 = vadd.f32 0.0, %v575
      %577 = vmatmul.bf16.gmra.mxu0 %v473
      %v578 = vpop.f32.mrf.mxu0
      %v579 = vadd.f32 0.0, %v578
      %v580 = vpop.f32.mrf.mxu0
      %v581 = vadd.f32 0.0, %v580
      %582 = vmatmul.bf16.gmra.mxu0 %v474
      %v583 = vpop.f32.mrf.mxu0
      %v584 = vadd.f32 0.0, %v583
      %v585 = vpop.f32.mrf.mxu0
      %v586 = vadd.f32 0.0, %v585
      %587 = vmatmul.bf16.gmra.mxu0 %v475
      %v588 = vpop.f32.mrf.mxu0
      %v589 = vadd.f32 0.0, %v588
      %v590 = vpop.f32.mrf.mxu0
      %v591 = vadd.f32 0.0, %v590
      %592 = vmatmul.bf16.gmra.mxu0 %v476
      %v593 = vpop.f32.mrf.mxu0
      %v594 = vadd.f32 0.0, %v593
      %v595 = vpop.f32.mrf.mxu0
      %v596 = vadd.f32 0.0, %v595
      %597 = vmatmul.bf16.gmra.mxu0 %v477
      %v598 = vpop.f32.mrf.mxu0
      %v599 = vadd.f32 0.0, %v598
      %v600 = vpop.f32.mrf.mxu0
      %v601 = vadd.f32 0.0, %v600
      %602 = vmatmul.bf16.gmra.mxu0 %v478
      %v603 = vpop.f32.mrf.mxu0
      %v604 = vadd.f32 0.0, %v603
      %v605 = vpop.f32.mrf.mxu0
      %v606 = vadd.f32 0.0, %v605
      %607 = vmatmul.bf16.gmra.mxu0 %v479
      %v608 = vpop.f32.mrf.mxu0
      %v609 = vadd.f32 0.0, %v608
      %v610 = vpop.f32.mrf.mxu0
      %v611 = vadd.f32 0.0, %v610
      %612 = vmatmul.bf16.gmra.mxu0 %v480
      %v613 = vpop.f32.mrf.mxu0
      %v614 = vadd.f32 0.0, %v613
      %v615 = vpop.f32.mrf.mxu0
      %v616 = vadd.f32 0.0, %v615
      %617 = vmatmul.bf16.gmra.mxu0 %v481
      %v618 = vpop.f32.mrf.mxu0
      %v619 = vadd.f32 0.0, %v618
      %v620 = vpop.f32.mrf.mxu0
      %v621 = vadd.f32 0.0, %v620
      %622 = vmatmul.bf16.gmra.mxu0 %v482
      %v623 = vpop.f32.mrf.mxu0
      %v624 = vadd.f32 0.0, %v623
      %v625 = vpop.f32.mrf.mxu0
      %v626 = vadd.f32 0.0, %v625
      %627 = vmatmul.bf16.gmra.mxu0 %v483
      %v628 = vpop.f32.mrf.mxu0
      %v629 = vadd.f32 0.0, %v628
      %v630 = vpop.f32.mrf.mxu0
      %v631 = vadd.f32 0.0, %v630
      %632 = vmatmul.bf16.gmra.mxu0 %v484
      %v633 = vpop.f32.mrf.mxu0
      %v634 = vadd.f32 0.0, %v633
      %v635 = vpop.f32.mrf.mxu0
      %v636 = vadd.f32 0.0, %v635
      %637 = vdwg.mxu0
      %v638 = vadd.f32 %v325, %v559
      %v639 = vadd.f32 %v326, %v561
      %v640 = vadd.f32 %v327, %v564
      %v641 = vadd.f32 %v328, %v566
      %v642 = vadd.f32 %v329, %v569
      %v643 = vadd.f32 %v330, %v571
      %v644 = vadd.f32 %v331, %v574
      %v645 = vadd.f32 %v332, %v576
      %v646 = vadd.f32 %v333, %v579
      %v647 = vadd.f32 %v334, %v581
      %v648 = vadd.f32 %v335, %v584
      %v649 = vadd.f32 %v336, %v586
      %v650 = vadd.f32 %v337, %v589
      %v651 = vadd.f32 %v338, %v591
      %v652 = vadd.f32 %v339, %v594
      %v653 = vadd.f32 %v340, %v596
      %v654 = vadd.f32 %v341, %v599
      %v655 = vadd.f32 %v342, %v601
      %v656 = vadd.f32 %v343, %v604
      %v657 = vadd.f32 %v344, %v606
      %v658 = vadd.f32 %v345, %v609
      %v659 = vadd.f32 %v346, %v611
      %v660 = vadd.f32 %v347, %v614
      %v661 = vadd.f32 %v348, %v616
      %v662 = vadd.f32 %v349, %v619
      %v663 = vadd.f32 %v350, %v621
      %v664 = vadd.f32 %v351, %v624
      %v665 = vadd.f32 %v352, %v626
      %v666 = vadd.f32 %v353, %v629
      %v667 = vadd.f32 %v354, %v631
      %v668 = vadd.f32 %v355, %v634
      %v669 = vadd.f32 %v356, %v636
      %v670 = vld [vmem:[%s267] sm:$0xf]
      %v671 = vld [vmem:[%s267 + $0x4] sm:$0xf]
      %v672 = vld [vmem:[%s267 + $0x8] sm:$0x1]
      %v673 = vld [vmem:[%s267 + $0xc] sm:$0xf]
      %v674 = vld [vmem:[%s267 + $0x10] sm:$0xf]
      %v675 = vld [vmem:[%s267 + $0x14] sm:$0x1]
      %v676 = vld [vmem:[%s267 + $0x18] sm:$0xf]
      %v677 = vld [vmem:[%s267 + $0x1c] sm:$0xf]
      %v678 = vld [vmem:[%s267 + $0x20] sm:$0x1]
      %v679 = vld [vmem:[%s267 + $0x24] sm:$0xf]
      %v680 = vld [vmem:[%s267 + $0x28] sm:$0xf]
      %v681 = vld [vmem:[%s267 + $0x2c] sm:$0x1]
      %v682 = vld [vmem:[%s267 + $0x30] sm:$0xf]
      %v683 = vld [vmem:[%s267 + $0x34] sm:$0xf]
      %v684 = vld [vmem:[%s267 + $0x38] sm:$0x1]
      %v685 = vld [vmem:[%s267 + $0x3c] sm:$0xf]
      %v686 = vld [vmem:[%s267 + $0x40] sm:$0xf]
      %v687 = vld [vmem:[%s267 + $0x44] sm:$0x1]
      %v688 = vld [vmem:[%s267 + $0x48] sm:$0xf]
      %v689 = vld [vmem:[%s267 + $0x4c] sm:$0xf]
      %v690 = vld [vmem:[%s267 + $0x50] sm:$0x1]
      %v691 = vld [vmem:[%s267 + $0x54] sm:$0xf]
      %v692 = vld [vmem:[%s267 + $0x58] sm:$0xf]
      %v693 = vld [vmem:[%s267 + $0x5c] sm:$0x1]
      %v694 = vld [vmem:[%s267 + $0x60] sm:$0xf]
      %v695 = vld [vmem:[%s267 + $0x64] sm:$0xf]
      %v696 = vld [vmem:[%s267 + $0x68] sm:$0x1]
      %v697 = vld [vmem:[%s267 + $0x6c] sm:$0xf]
      %v698 = vld [vmem:[%s267 + $0x70] sm:$0xf]
      %v699 = vld [vmem:[%s267 + $0x74] sm:$0x1]
      %v700 = vld [vmem:[%s267 + $0x78] sm:$0xf]
      %v701 = vld [vmem:[%s267 + $0x7c] sm:$0xf]
      %v702 = vld [vmem:[%s267 + $0x80] sm:$0x1]
      %v703 = vld [vmem:[%s267 + $0x84] sm:$0xf]
      %v704 = vld [vmem:[%s267 + $0x88] sm:$0xf]
      %v705 = vld [vmem:[%s267 + $0x8c] sm:$0x1]
      %v706 = vld [vmem:[%s267 + $0x90] sm:$0xf]
      %v707 = vld [vmem:[%s267 + $0x94] sm:$0xf]
      %v708 = vld [vmem:[%s267 + $0x98] sm:$0x1]
      %v709 = vld [vmem:[%s267 + $0x9c] sm:$0xf]
      %v710 = vld [vmem:[%s267 + $0xa0] sm:$0xf]
      %v711 = vld [vmem:[%s267 + $0xa4] sm:$0x1]
      %v712 = vld [vmem:[%s267 + $0xa8] sm:$0xf]
      %v713 = vld [vmem:[%s267 + $0xac] sm:$0xf]
      %v714 = vld [vmem:[%s267 + $0xb0] sm:$0x1]
      %v715 = vld [vmem:[%s267 + $0xb4] sm:$0xf]
      %v716 = vld [vmem:[%s267 + $0xb8] sm:$0xf]
      %v717 = vld [vmem:[%s267 + $0xbc] sm:$0x1]
      %vm718 = vsmask.f32 3328
      %vm719 = vsmask.f32 7440
      %vm720 = vmor %vm718, %vm719
      %v722 = vshrl.u32 %v670, 16
      %v724 = vrot.slane %v722, 4
      %v725 = vshll.u32 %v670, 16
      %v727 = vrot.slane %v725, 5
      %v728 = vor.u32 %v724, %v727
      %v729 = vrot.slane %v728, 4
      %v731 = vshll.u32 %v671, 16
      %v733 = vrot.slane %v731, 5
      %v734 = vsel %vm720, %v729, %v733
      %v735 = vshrl.u32 %v671, 16
      %v737 = vrot.slane %v735, 4
      %v738 = vor.u32 %v737, %v733
      %v739 = vrot.slane %v738, 4
      %v741 = vshll.u32 %v672, 16
      %v743 = vrot.slane %v741, 5
      %v744 = vsel %vm720, %v739, %v743
      %v746 = vshrl.u32 %v673, 16
      %v748 = vrot.slane %v746, 4
      %v749 = vshll.u32 %v673, 16
      %v751 = vrot.slane %v749, 5
      %v752 = vor.u32 %v748, %v751
      %v753 = vrot.slane %v752, 4
      %v755 = vshll.u32 %v674, 16
      %v757 = vrot.slane %v755, 5
      %v758 = vsel %vm720, %v753, %v757
      %v759 = vshrl.u32 %v674, 16
      %v761 = vrot.slane %v759, 4
      %v762 = vor.u32 %v761, %v757
      %v763 = vrot.slane %v762, 4
      %v765 = vshll.u32 %v675, 16
      %v767 = vrot.slane %v765, 5
      %v768 = vsel %vm720, %v763, %v767
      %v770 = vshrl.u32 %v676, 16
      %v772 = vrot.slane %v770, 4
      %v773 = vshll.u32 %v676, 16
      %v775 = vrot.slane %v773, 5
      %v776 = vor.u32 %v772, %v775
      %v777 = vrot.slane %v776, 4
      %v779 = vshll.u32 %v677, 16
      %v781 = vrot.slane %v779, 5
      %v782 = vsel %vm720, %v777, %v781
      %v783 = vshrl.u32 %v677, 16
      %v785 = vrot.slane %v783, 4
      %v786 = vor.u32 %v785, %v781
      %v787 = vrot.slane %v786, 4
      %v789 = vshll.u32 %v678, 16
      %v791 = vrot.slane %v789, 5
      %v792 = vsel %vm720, %v787, %v791
      %v794 = vshrl.u32 %v679, 16
      %v796 = vrot.slane %v794, 4
      %v797 = vshll.u32 %v679, 16
      %v799 = vrot.slane %v797, 5
      %v800 = vor.u32 %v796, %v799
      %v801 = vrot.slane %v800, 4
      %v803 = vshll.u32 %v680, 16
      %v805 = vrot.slane %v803, 5
      %v806 = vsel %vm720, %v801, %v805
      %v807 = vshrl.u32 %v680, 16
      %v809 = vrot.slane %v807, 4
      %v810 = vor.u32 %v809, %v805
      %v811 = vrot.slane %v810, 4
      %v813 = vshll.u32 %v681, 16
      %v815 = vrot.slane %v813, 5
      %v816 = vsel %vm720, %v811, %v815
      %v818 = vshrl.u32 %v682, 16
      %v820 = vrot.slane %v818, 4
      %v821 = vshll.u32 %v682, 16
      %v823 = vrot.slane %v821, 5
      %v824 = vor.u32 %v820, %v823
      %v825 = vrot.slane %v824, 4
      %v827 = vshll.u32 %v683, 16
      %v829 = vrot.slane %v827, 5
      %v830 = vsel %vm720, %v825, %v829
      %v831 = vshrl.u32 %v683, 16
      %v833 = vrot.slane %v831, 4
      %v834 = vor.u32 %v833, %v829
      %v835 = vrot.slane %v834, 4
      %v837 = vshll.u32 %v684, 16
      %v839 = vrot.slane %v837, 5
      %v840 = vsel %vm720, %v835, %v839
      %v842 = vshrl.u32 %v685, 16
      %v844 = vrot.slane %v842, 4
      %v845 = vshll.u32 %v685, 16
      %v847 = vrot.slane %v845, 5
      %v848 = vor.u32 %v844, %v847
      %v849 = vrot.slane %v848, 4
      %v851 = vshll.u32 %v686, 16
      %v853 = vrot.slane %v851, 5
      %v854 = vsel %vm720, %v849, %v853
      %v855 = vshrl.u32 %v686, 16
      %v857 = vrot.slane %v855, 4
      %v858 = vor.u32 %v857, %v853
      %v859 = vrot.slane %v858, 4
      %v861 = vshll.u32 %v687, 16
      %v863 = vrot.slane %v861, 5
      %v864 = vsel %vm720, %v859, %v863
      %v866 = vshrl.u32 %v688, 16
      %v868 = vrot.slane %v866, 4
      %v869 = vshll.u32 %v688, 16
      %v871 = vrot.slane %v869, 5
      %v872 = vor.u32 %v868, %v871
      %v873 = vrot.slane %v872, 4
      %v875 = vshll.u32 %v689, 16
      %v877 = vrot.slane %v875, 5
      %v878 = vsel %vm720, %v873, %v877
      %v879 = vshrl.u32 %v689, 16
      %v881 = vrot.slane %v879, 4
      %v882 = vor.u32 %v881, %v877
      %v883 = vrot.slane %v882, 4
      %v885 = vshll.u32 %v690, 16
      %v887 = vrot.slane %v885, 5
      %v888 = vsel %vm720, %v883, %v887
      %v890 = vshrl.u32 %v691, 16
      %v892 = vrot.slane %v890, 4
      %v893 = vshll.u32 %v691, 16
      %v895 = vrot.slane %v893, 5
      %v896 = vor.u32 %v892, %v895
      %v897 = vrot.slane %v896, 4
      %v899 = vshll.u32 %v692, 16
      %v901 = vrot.slane %v899, 5
      %v902 = vsel %vm720, %v897, %v901
      %v903 = vshrl.u32 %v692, 16
      %v905 = vrot.slane %v903, 4
      %v906 = vor.u32 %v905, %v901
      %v907 = vrot.slane %v906, 4
      %v909 = vshll.u32 %v693, 16
      %v911 = vrot.slane %v909, 5
      %v912 = vsel %vm720, %v907, %v911
      %v914 = vshrl.u32 %v694, 16
      %v916 = vrot.slane %v914, 4
      %v917 = vshll.u32 %v694, 16
      %v919 = vrot.slane %v917, 5
      %v920 = vor.u32 %v916, %v919
      %v921 = vrot.slane %v920, 4
      %v923 = vshll.u32 %v695, 16
      %v925 = vrot.slane %v923, 5
      %v926 = vsel %vm720, %v921, %v925
      %v927 = vshrl.u32 %v695, 16
      %v929 = vrot.slane %v927, 4
      %v930 = vor.u32 %v929, %v925
      %v931 = vrot.slane %v930, 4
      %v933 = vshll.u32 %v696, 16
      %v935 = vrot.slane %v933, 5
      %v936 = vsel %vm720, %v931, %v935
      %v938 = vshrl.u32 %v697, 16
      %v940 = vrot.slane %v938, 4
      %v941 = vshll.u32 %v697, 16
      %v943 = vrot.slane %v941, 5
      %v944 = vor.u32 %v940, %v943
      %v945 = vrot.slane %v944, 4
      %v947 = vshll.u32 %v698, 16
      %v949 = vrot.slane %v947, 5
      %v950 = vsel %vm720, %v945, %v949
      %v951 = vshrl.u32 %v698, 16
      %v953 = vrot.slane %v951, 4
      %v954 = vor.u32 %v953, %v949
      %v955 = vrot.slane %v954, 4
      %v957 = vshll.u32 %v699, 16
      %v959 = vrot.slane %v957, 5
      %v960 = vsel %vm720, %v955, %v959
      %v962 = vshrl.u32 %v700, 16
      %v964 = vrot.slane %v962, 4
      %v965 = vshll.u32 %v700, 16
      %v967 = vrot.slane %v965, 5
      %v968 = vor.u32 %v964, %v967
      %v969 = vrot.slane %v968, 4
      %v971 = vshll.u32 %v701, 16
      %v973 = vrot.slane %v971, 5
      %v974 = vsel %vm720, %v969, %v973
      %v975 = vshrl.u32 %v701, 16
      %v977 = vrot.slane %v975, 4
      %v978 = vor.u32 %v977, %v973
      %v979 = vrot.slane %v978, 4
      %v981 = vshll.u32 %v702, 16
      %v983 = vrot.slane %v981, 5
      %v984 = vsel %vm720, %v979, %v983
      %v986 = vshrl.u32 %v703, 16
      %v988 = vrot.slane %v986, 4
      %v989 = vshll.u32 %v703, 16
      %v991 = vrot.slane %v989, 5
      %v992 = vor.u32 %v988, %v991
      %v993 = vrot.slane %v992, 4
      %v995 = vshll.u32 %v704, 16
      %v997 = vrot.slane %v995, 5
      %v998 = vsel %vm720, %v993, %v997
      %v999 = vshrl.u32 %v704, 16
      %v1001 = vrot.slane %v999, 4
      %v1002 = vor.u32 %v1001, %v997
      %v1003 = vrot.slane %v1002, 4
      %v1005 = vshll.u32 %v705, 16
      %v1007 = vrot.slane %v1005, 5
      %v1008 = vsel %vm720, %v1003, %v1007
      %v1010 = vshrl.u32 %v706, 16
      %v1012 = vrot.slane %v1010, 4
      %v1013 = vshll.u32 %v706, 16
      %v1015 = vrot.slane %v1013, 5
      %v1016 = vor.u32 %v1012, %v1015
      %v1017 = vrot.slane %v1016, 4
      %v1019 = vshll.u32 %v707, 16
      %v1021 = vrot.slane %v1019, 5
      %v1022 = vsel %vm720, %v1017, %v1021
      %v1023 = vshrl.u32 %v707, 16
      %v1025 = vrot.slane %v1023, 4
      %v1026 = vor.u32 %v1025, %v1021
      %v1027 = vrot.slane %v1026, 4
      %v1029 = vshll.u32 %v708, 16
      %v1031 = vrot.slane %v1029, 5
      %v1032 = vsel %vm720, %v1027, %v1031
      %v1034 = vshrl.u32 %v709, 16
      %v1036 = vrot.slane %v1034, 4
      %v1037 = vshll.u32 %v709, 16
      %v1039 = vrot.slane %v1037, 5
      %v1040 = vor.u32 %v1036, %v1039
      %v1041 = vrot.slane %v1040, 4
      %v1043 = vshll.u32 %v710, 16
      %v1045 = vrot.slane %v1043, 5
      %v1046 = vsel %vm720, %v1041, %v1045
      %v1047 = vshrl.u32 %v710, 16
      %v1049 = vrot.slane %v1047, 4
      %v1050 = vor.u32 %v1049, %v1045
      %v1051 = vrot.slane %v1050, 4
      %v1053 = vshll.u32 %v711, 16
      %v1055 = vrot.slane %v1053, 5
      %v1056 = vsel %vm720, %v1051, %v1055
      %v1058 = vshrl.u32 %v712, 16
      %v1060 = vrot.slane %v1058, 4
      %v1061 = vshll.u32 %v712, 16
      %v1063 = vrot.slane %v1061, 5
      %v1064 = vor.u32 %v1060, %v1063
      %v1065 = vrot.slane %v1064, 4
      %v1067 = vshll.u32 %v713, 16
      %v1069 = vrot.slane %v1067, 5
      %v1070 = vsel %vm720, %v1065, %v1069
      %v1071 = vshrl.u32 %v713, 16
      %v1073 = vrot.slane %v1071, 4
      %v1074 = vor.u32 %v1073, %v1069
      %v1075 = vrot.slane %v1074, 4
      %v1077 = vshll.u32 %v714, 16
      %v1079 = vrot.slane %v1077, 5
      %v1080 = vsel %vm720, %v1075, %v1079
      %v1082 = vshrl.u32 %v715, 16
      %v1084 = vrot.slane %v1082, 4
      %v1085 = vshll.u32 %v715, 16
      %v1087 = vrot.slane %v1085, 5
      %v1088 = vor.u32 %v1084, %v1087
      %v1089 = vrot.slane %v1088, 4
      %v1091 = vshll.u32 %v716, 16
      %v1093 = vrot.slane %v1091, 5
      %v1094 = vsel %vm720, %v1089, %v1093
      %v1095 = vshrl.u32 %v716, 16
      %v1097 = vrot.slane %v1095, 4
      %v1098 = vor.u32 %v1097, %v1093
      %v1099 = vrot.slane %v1098, 4
      %v1101 = vshll.u32 %v717, 16
      %v1103 = vrot.slane %v1101, 5
      %v1104 = vsel %vm720, %v1099, %v1103
      %s1105 = scalar_lea.vmem %s273, 64
      %v1106 = vld [vmem:[%s1105] sm:$0xf]
      %v1107 = vld [vmem:[%s1105 + $0x4] sm:$0xf]
      %v1108 = vld [vmem:[%s1105 + $0x8] sm:$0xf]
      %v1109 = vld [vmem:[%s1105 + $0xc] sm:$0xf]
      %v1110 = vld [vmem:[%s1105 + $0x10] sm:$0xf]
      %v1111 = vld [vmem:[%s1105 + $0x14] sm:$0xf]
      %v1112 = vld [vmem:[%s1105 + $0x18] sm:$0xf]
      %v1113 = vld [vmem:[%s1105 + $0x1c] sm:$0xf]
      %v1114 = vld [vmem:[%s1105 + $0x20] sm:$0xf]
      %v1115 = vld [vmem:[%s1105 + $0x24] sm:$0xf]
      %v1116 = vld [vmem:[%s1105 + $0x28] sm:$0xf]
      %v1117 = vld [vmem:[%s1105 + $0x2c] sm:$0xf]
      %v1118 = vld [vmem:[%s1105 + $0x30] sm:$0xf]
      %v1119 = vld [vmem:[%s1105 + $0x34] sm:$0xf]
      %v1120 = vld [vmem:[%s1105 + $0x38] sm:$0xf]
      %v1121 = vld [vmem:[%s1105 + $0x3c] sm:$0xf]
      %v1122 = vunpack.c.l.b16 %v734
      %v1123 = vunpack.c.l.b16 %v744
      %v1124 = vunpack.c.l.b16 %v758
      %v1125 = vunpack.c.l.b16 %v768
      %v1126 = vunpack.c.l.b16 %v782
      %v1127 = vunpack.c.l.b16 %v792
      %v1128 = vunpack.c.l.b16 %v806
      %v1129 = vunpack.c.l.b16 %v816
      %v1130 = vunpack.c.l.b16 %v830
      %v1131 = vunpack.c.l.b16 %v840
      %v1132 = vunpack.c.l.b16 %v854
      %v1133 = vunpack.c.l.b16 %v864
      %v1134 = vunpack.c.l.b16 %v878
      %v1135 = vunpack.c.l.b16 %v888
      %v1136 = vunpack.c.l.b16 %v902
      %v1137 = vunpack.c.l.b16 %v912
      %v1138 = vunpack.c.l.b16 %v926
      %v1139 = vunpack.c.l.b16 %v936
      %v1140 = vunpack.c.l.b16 %v950
      %v1141 = vunpack.c.l.b16 %v960
      %v1142 = vunpack.c.l.b16 %v974
      %v1143 = vunpack.c.l.b16 %v984
      %v1144 = vunpack.c.l.b16 %v998
      %v1145 = vunpack.c.l.b16 %v1008
      %v1146 = vunpack.c.l.b16 %v1022
      %v1147 = vunpack.c.l.b16 %v1032
      %v1148 = vunpack.c.l.b16 %v1046
      %v1149 = vunpack.c.l.b16 %v1056
      %v1150 = vunpack.c.l.b16 %v1070
      %v1151 = vunpack.c.l.b16 %v1080
      %v1152 = vunpack.c.l.b16 %v1094
      %v1153 = vunpack.c.l.b16 %v1104
      %v1154 = vpack.c.b16 %v1123, %v1122
      %v1155 = vpack.c.b16 %v1125, %v1124
      %v1156 = vpack.c.b16 %v1127, %v1126
      %v1157 = vpack.c.b16 %v1129, %v1128
      %v1158 = vpack.c.b16 %v1131, %v1130
      %v1159 = vpack.c.b16 %v1133, %v1132
      %v1160 = vpack.c.b16 %v1135, %v1134
      %v1161 = vpack.c.b16 %v1137, %v1136
      %v1162 = vpack.c.b16 %v1139, %v1138
      %v1163 = vpack.c.b16 %v1141, %v1140
      %v1164 = vpack.c.b16 %v1143, %v1142
      %v1165 = vpack.c.b16 %v1145, %v1144
      %v1166 = vpack.c.b16 %v1147, %v1146
      %v1167 = vpack.c.b16 %v1149, %v1148
      %v1168 = vpack.c.b16 %v1151, %v1150
      %v1169 = vpack.c.b16 %v1153, %v1152
      %v1202 = vunpack.c.l.b16 %v1106
      %v1203 = vunpack.c.l.b16 %v1107
      %v1204 = vunpack.c.l.b16 %v1108
      %v1205 = vunpack.c.l.b16 %v1109
      %v1206 = vunpack.c.l.b16 %v1110
      %v1207 = vunpack.c.l.b16 %v1111
      %v1208 = vunpack.c.l.b16 %v1112
      %v1209 = vunpack.c.l.b16 %v1113
      %v1210 = vunpack.c.l.b16 %v1114
      %v1211 = vunpack.c.l.b16 %v1115
      %v1212 = vunpack.c.l.b16 %v1116
      %v1213 = vunpack.c.l.b16 %v1117
      %v1214 = vunpack.c.l.b16 %v1118
      %v1215 = vunpack.c.l.b16 %v1119
      %v1216 = vunpack.c.l.b16 %v1120
      %v1217 = vunpack.c.l.b16 %v1121
      %v1218 = vpack.c.b16 %v1203, %v1202
      %v1219 = vpack.c.b16 %v1205, %v1204
      %v1220 = vpack.c.b16 %v1207, %v1206
      %v1221 = vpack.c.b16 %v1209, %v1208
      %v1222 = vpack.c.b16 %v1211, %v1210
      %v1223 = vpack.c.b16 %v1213, %v1212
      %v1224 = vpack.c.b16 %v1215, %v1214
      %v1225 = vpack.c.b16 %v1217, %v1216
      %1234 = vmatpush.bf16.msra.mxu0 %v1225
      %1235 = vmatpush.bf16.msra.mxu0 %v1224
      %1236 = vmatpush.bf16.msra.mxu0 %v1223
      %1237 = vmatpush.bf16.msra.mxu0 %v1222
      %1238 = vmatpush.bf16.msra.mxu0 %v1221
      %1239 = vmatpush.bf16.msra.mxu0 %v1220
      %1240 = vmatpush.bf16.msra.mxu0 %v1219
      %1241 = vmatpush.bf16.msra.mxu0 %v1218
      %1242 = vmatmul.bf16.gmra.mxu0 %v1154
      %v1243 = vpop.f32.mrf.mxu0
      %v1244 = vadd.f32 0.0, %v1243
      %v1245 = vpop.f32.mrf.mxu0
      %v1246 = vadd.f32 0.0, %v1245
      %1247 = vmatmul.bf16.gmra.mxu0 %v1155
      %v1248 = vpop.f32.mrf.mxu0
      %v1249 = vadd.f32 0.0, %v1248
      %v1250 = vpop.f32.mrf.mxu0
      %v1251 = vadd.f32 0.0, %v1250
      %1252 = vmatmul.bf16.gmra.mxu0 %v1156
      %v1253 = vpop.f32.mrf.mxu0
      %v1254 = vadd.f32 0.0, %v1253
      %v1255 = vpop.f32.mrf.mxu0
      %v1256 = vadd.f32 0.0, %v1255
      %1257 = vmatmul.bf16.gmra.mxu0 %v1157
      %v1258 = vpop.f32.mrf.mxu0
      %v1259 = vadd.f32 0.0, %v1258
      %v1260 = vpop.f32.mrf.mxu0
      %v1261 = vadd.f32 0.0, %v1260
      %1262 = vmatmul.bf16.gmra.mxu0 %v1158
      %v1263 = vpop.f32.mrf.mxu0
      %v1264 = vadd.f32 0.0, %v1263
      %v1265 = vpop.f32.mrf.mxu0
      %v1266 = vadd.f32 0.0, %v1265
      %1267 = vmatmul.bf16.gmra.mxu0 %v1159
      %v1268 = vpop.f32.mrf.mxu0
      %v1269 = vadd.f32 0.0, %v1268
      %v1270 = vpop.f32.mrf.mxu0
      %v1271 = vadd.f32 0.0, %v1270
      %1272 = vmatmul.bf16.gmra.mxu0 %v1160
      %v1273 = vpop.f32.mrf.mxu0
      %v1274 = vadd.f32 0.0, %v1273
      %v1275 = vpop.f32.mrf.mxu0
      %v1276 = vadd.f32 0.0, %v1275
      %1277 = vmatmul.bf16.gmra.mxu0 %v1161
      %v1278 = vpop.f32.mrf.mxu0
      %v1279 = vadd.f32 0.0, %v1278
      %v1280 = vpop.f32.mrf.mxu0
      %v1281 = vadd.f32 0.0, %v1280
      %1282 = vmatmul.bf16.gmra.mxu0 %v1162
      %v1283 = vpop.f32.mrf.mxu0
      %v1284 = vadd.f32 0.0, %v1283
      %v1285 = vpop.f32.mrf.mxu0
      %v1286 = vadd.f32 0.0, %v1285
      %1287 = vmatmul.bf16.gmra.mxu0 %v1163
      %v1288 = vpop.f32.mrf.mxu0
      %v1289 = vadd.f32 0.0, %v1288
      %v1290 = vpop.f32.mrf.mxu0
      %v1291 = vadd.f32 0.0, %v1290
      %1292 = vmatmul.bf16.gmra.mxu0 %v1164
      %v1293 = vpop.f32.mrf.mxu0
      %v1294 = vadd.f32 0.0, %v1293
      %v1295 = vpop.f32.mrf.mxu0
      %v1296 = vadd.f32 0.0, %v1295
      %1297 = vmatmul.bf16.gmra.mxu0 %v1165
      %v1298 = vpop.f32.mrf.mxu0
      %v1299 = vadd.f32 0.0, %v1298
      %v1300 = vpop.f32.mrf.mxu0
      %v1301 = vadd.f32 0.0, %v1300
      %1302 = vmatmul.bf16.gmra.mxu0 %v1166
      %v1303 = vpop.f32.mrf.mxu0
      %v1304 = vadd.f32 0.0, %v1303
      %v1305 = vpop.f32.mrf.mxu0
      %v1306 = vadd.f32 0.0, %v1305
      %1307 = vmatmul.bf16.gmra.mxu0 %v1167
      %v1308 = vpop.f32.mrf.mxu0
      %v1309 = vadd.f32 0.0, %v1308
      %v1310 = vpop.f32.mrf.mxu0
      %v1311 = vadd.f32 0.0, %v1310
      %1312 = vmatmul.bf16.gmra.mxu0 %v1168
      %v1313 = vpop.f32.mrf.mxu0
      %v1314 = vadd.f32 0.0, %v1313
      %v1315 = vpop.f32.mrf.mxu0
      %v1316 = vadd.f32 0.0, %v1315
      %1317 = vmatmul.bf16.gmra.mxu0 %v1169
      %v1318 = vpop.f32.mrf.mxu0
      %v1319 = vadd.f32 0.0, %v1318
      %v1320 = vpop.f32.mrf.mxu0
      %v1321 = vadd.f32 0.0, %v1320
      %1322 = vdwg.mxu0
      %v1323 = vadd.f32 %v638, %v1244
      %v1324 = vadd.f32 %v639, %v1246
      %v1325 = vadd.f32 %v640, %v1249
      %v1326 = vadd.f32 %v641, %v1251
      %v1327 = vadd.f32 %v642, %v1254
      %v1328 = vadd.f32 %v643, %v1256
      %v1329 = vadd.f32 %v644, %v1259
      %v1330 = vadd.f32 %v645, %v1261
      %v1331 = vadd.f32 %v646, %v1264
      %v1332 = vadd.f32 %v647, %v1266
      %v1333 = vadd.f32 %v648, %v1269
      %v1334 = vadd.f32 %v649, %v1271
      %v1335 = vadd.f32 %v650, %v1274
      %v1336 = vadd.f32 %v651, %v1276
      %v1337 = vadd.f32 %v652, %v1279
      %v1338 = vadd.f32 %v653, %v1281
      %v1339 = vadd.f32 %v654, %v1284
      %v1340 = vadd.f32 %v655, %v1286
      %v1341 = vadd.f32 %v656, %v1289
      %v1342 = vadd.f32 %v657, %v1291
      %v1343 = vadd.f32 %v658, %v1294
      %v1344 = vadd.f32 %v659, %v1296
      %v1345 = vadd.f32 %v660, %v1299
      %v1346 = vadd.f32 %v661, %v1301
      %v1347 = vadd.f32 %v662, %v1304
      %v1348 = vadd.f32 %v663, %v1306
      %v1349 = vadd.f32 %v664, %v1309
      %v1350 = vadd.f32 %v665, %v1311
      %v1351 = vadd.f32 %v666, %v1314
      %v1352 = vadd.f32 %v667, %v1316
      %v1353 = vadd.f32 %v668, %v1319
      %v1354 = vadd.f32 %v669, %v1321
      %v1355 = vld [vmem:[%s267] sm:$0xe]
      %v1356 = vld [vmem:[%s267 + $0xc] sm:$0xe]
      %v1357 = vld [vmem:[%s267 + $0x18] sm:$0xe]
      %v1358 = vld [vmem:[%s267 + $0x24] sm:$0xe]
      %v1359 = vld [vmem:[%s267 + $0x30] sm:$0xe]
      %v1360 = vld [vmem:[%s267 + $0x3c] sm:$0xe]
      %v1361 = vld [vmem:[%s267 + $0x48] sm:$0xe]
      %v1362 = vld [vmem:[%s267 + $0x54] sm:$0xe]
      %v1363 = vld [vmem:[%s267 + $0x60] sm:$0xe]
      %v1364 = vld [vmem:[%s267 + $0x6c] sm:$0xe]
      %v1365 = vld [vmem:[%s267 + $0x78] sm:$0xe]
      %v1366 = vld [vmem:[%s267 + $0x84] sm:$0xe]
      %v1367 = vld [vmem:[%s267 + $0x90] sm:$0xe]
      %v1368 = vld [vmem:[%s267 + $0x9c] sm:$0xe]
      %v1369 = vld [vmem:[%s267 + $0xa8] sm:$0xe]
      %v1370 = vld [vmem:[%s267 + $0xb4] sm:$0xe]
      %vm1419 = vcmask 1042432
      %vm1420 = vcmask 1046532
      %vm1421 = vmor %vm1419, %vm1420
      %v1422 = vrot.slane %v1355, 5
      %v1423 = vrot.slane %v1422, 4
      %v1424 = vrot.slane %v671, 5
      %v1425 = vsel %vm1421, %v1423, %v1424
      %v1426 = vrot.slane %v1424, 4
      %v1427 = vrot.slane %v672, 5
      %v1428 = vsel %vm1421, %v1426, %v1427
      %v1429 = vrot.slane %v1356, 5
      %v1430 = vrot.slane %v1429, 4
      %v1431 = vrot.slane %v674, 5
      %v1432 = vsel %vm1421, %v1430, %v1431
      %v1433 = vrot.slane %v1431, 4
      %v1434 = vrot.slane %v675, 5
      %v1435 = vsel %vm1421, %v1433, %v1434
      %v1436 = vrot.slane %v1357, 5
      %v1437 = vrot.slane %v1436, 4
      %v1438 = vrot.slane %v677, 5
      %v1439 = vsel %vm1421, %v1437, %v1438
      %v1440 = vrot.slane %v1438, 4
      %v1441 = vrot.slane %v678, 5
      %v1442 = vsel %vm1421, %v1440, %v1441
      %v1443 = vrot.slane %v1358, 5
      %v1444 = vrot.slane %v1443, 4
      %v1445 = vrot.slane %v680, 5
      %v1446 = vsel %vm1421, %v1444, %v1445
      %v1447 = vrot.slane %v1445, 4
      %v1448 = vrot.slane %v681, 5
      %v1449 = vsel %vm1421, %v1447, %v1448
      %v1450 = vrot.slane %v1359, 5
      %v1451 = vrot.slane %v1450, 4
      %v1452 = vrot.slane %v683, 5
      %v1453 = vsel %vm1421, %v1451, %v1452
      %v1454 = vrot.slane %v1452, 4
      %v1455 = vrot.slane %v684, 5
      %v1456 = vsel %vm1421, %v1454, %v1455
      %v1457 = vrot.slane %v1360, 5
      %v1458 = vrot.slane %v1457, 4
      %v1459 = vrot.slane %v686, 5
      %v1460 = vsel %vm1421, %v1458, %v1459
      %v1461 = vrot.slane %v1459, 4
      %v1462 = vrot.slane %v687, 5
      %v1463 = vsel %vm1421, %v1461, %v1462
      %v1464 = vrot.slane %v1361, 5
      %v1465 = vrot.slane %v1464, 4
      %v1466 = vrot.slane %v689, 5
      %v1467 = vsel %vm1421, %v1465, %v1466
      %v1468 = vrot.slane %v1466, 4
      %v1469 = vrot.slane %v690, 5
      %v1470 = vsel %vm1421, %v1468, %v1469
      %v1471 = vrot.slane %v1362, 5
      %v1472 = vrot.slane %v1471, 4
      %v1473 = vrot.slane %v692, 5
      %v1474 = vsel %vm1421, %v1472, %v1473
      %v1475 = vrot.slane %v1473, 4
      %v1476 = vrot.slane %v693, 5
      %v1477 = vsel %vm1421, %v1475, %v1476
      %v1478 = vrot.slane %v1363, 5
      %v1479 = vrot.slane %v1478, 4
      %v1480 = vrot.slane %v695, 5
      %v1481 = vsel %vm1421, %v1479, %v1480
      %v1482 = vrot.slane %v1480, 4
      %v1483 = vrot.slane %v696, 5
      %v1484 = vsel %vm1421, %v1482, %v1483
      %v1485 = vrot.slane %v1364, 5
      %v1486 = vrot.slane %v1485, 4
      %v1487 = vrot.slane %v698, 5
      %v1488 = vsel %vm1421, %v1486, %v1487
      %v1489 = vrot.slane %v1487, 4
      %v1490 = vrot.slane %v699, 5
      %v1491 = vsel %vm1421, %v1489, %v1490
      %v1492 = vrot.slane %v1365, 5
      %v1493 = vrot.slane %v1492, 4
      %v1494 = vrot.slane %v701, 5
      %v1495 = vsel %vm1421, %v1493, %v1494
      %v1496 = vrot.slane %v1494, 4
      %v1497 = vrot.slane %v702, 5
      %v1498 = vsel %vm1421, %v1496, %v1497
      %v1499 = vrot.slane %v1366, 5
      %v1500 = vrot.slane %v1499, 4
      %v1501 = vrot.slane %v704, 5
      %v1502 = vsel %vm1421, %v1500, %v1501
      %v1503 = vrot.slane %v1501, 4
      %v1504 = vrot.slane %v705, 5
      %v1505 = vsel %vm1421, %v1503, %v1504
      %v1506 = vrot.slane %v1367, 5
      %v1507 = vrot.slane %v1506, 4
      %v1508 = vrot.slane %v707, 5
      %v1509 = vsel %vm1421, %v1507, %v1508
      %v1510 = vrot.slane %v1508, 4
      %v1511 = vrot.slane %v708, 5
      %v1512 = vsel %vm1421, %v1510, %v1511
      %v1513 = vrot.slane %v1368, 5
      %v1514 = vrot.slane %v1513, 4
      %v1515 = vrot.slane %v710, 5
      %v1516 = vsel %vm1421, %v1514, %v1515
      %v1517 = vrot.slane %v1515, 4
      %v1518 = vrot.slane %v711, 5
      %v1519 = vsel %vm1421, %v1517, %v1518
      %v1520 = vrot.slane %v1369, 5
      %v1521 = vrot.slane %v1520, 4
      %v1522 = vrot.slane %v713, 5
      %v1523 = vsel %vm1421, %v1521, %v1522
      %v1524 = vrot.slane %v1522, 4
      %v1525 = vrot.slane %v714, 5
      %v1526 = vsel %vm1421, %v1524, %v1525
      %v1527 = vrot.slane %v1370, 5
      %v1528 = vrot.slane %v1527, 4
      %v1529 = vrot.slane %v716, 5
      %v1530 = vsel %vm1421, %v1528, %v1529
      %v1531 = vrot.slane %v1529, 4
      %v1532 = vrot.slane %v717, 5
      %v1533 = vsel %vm1421, %v1531, %v1532
      %s1534 = scalar_lea.vmem %s273, 128
      %v1535 = vld [vmem:[%s1534] sm:$0xf]
      %v1536 = vld [vmem:[%s1534 + $0x4] sm:$0xf]
      %v1537 = vld [vmem:[%s1534 + $0x8] sm:$0xf]
      %v1538 = vld [vmem:[%s1534 + $0xc] sm:$0xf]
      %v1539 = vld [vmem:[%s1534 + $0x10] sm:$0xf]
      %v1540 = vld [vmem:[%s1534 + $0x14] sm:$0xf]
      %v1541 = vld [vmem:[%s1534 + $0x18] sm:$0xf]
      %v1542 = vld [vmem:[%s1534 + $0x1c] sm:$0xf]
      %v1543 = vld [vmem:[%s1534 + $0x20] sm:$0xf]
      %v1544 = vld [vmem:[%s1534 + $0x24] sm:$0xf]
      %v1545 = vld [vmem:[%s1534 + $0x28] sm:$0xf]
      %v1546 = vld [vmem:[%s1534 + $0x2c] sm:$0xf]
      %v1547 = vld [vmem:[%s1534 + $0x30] sm:$0xf]
      %v1548 = vld [vmem:[%s1534 + $0x34] sm:$0xf]
      %v1549 = vld [vmem:[%s1534 + $0x38] sm:$0xf]
      %v1550 = vld [vmem:[%s1534 + $0x3c] sm:$0xf]
      %v1551 = vunpack.c.l.b16 %v1425
      %v1552 = vunpack.c.l.b16 %v1428
      %v1553 = vunpack.c.l.b16 %v1432
      %v1554 = vunpack.c.l.b16 %v1435
      %v1555 = vunpack.c.l.b16 %v1439
      %v1556 = vunpack.c.l.b16 %v1442
      %v1557 = vunpack.c.l.b16 %v1446
      %v1558 = vunpack.c.l.b16 %v1449
      %v1559 = vunpack.c.l.b16 %v1453
      %v1560 = vunpack.c.l.b16 %v1456
      %v1561 = vunpack.c.l.b16 %v1460
      %v1562 = vunpack.c.l.b16 %v1463
      %v1563 = vunpack.c.l.b16 %v1467
      %v1564 = vunpack.c.l.b16 %v1470
      %v1565 = vunpack.c.l.b16 %v1474
      %v1566 = vunpack.c.l.b16 %v1477
      %v1567 = vunpack.c.l.b16 %v1481
      %v1568 = vunpack.c.l.b16 %v1484
      %v1569 = vunpack.c.l.b16 %v1488
      %v1570 = vunpack.c.l.b16 %v1491
      %v1571 = vunpack.c.l.b16 %v1495
      %v1572 = vunpack.c.l.b16 %v1498
      %v1573 = vunpack.c.l.b16 %v1502
      %v1574 = vunpack.c.l.b16 %v1505
      %v1575 = vunpack.c.l.b16 %v1509
      %v1576 = vunpack.c.l.b16 %v1512
      %v1577 = vunpack.c.l.b16 %v1516
      %v1578 = vunpack.c.l.b16 %v1519
      %v1579 = vunpack.c.l.b16 %v1523
      %v1580 = vunpack.c.l.b16 %v1526
      %v1581 = vunpack.c.l.b16 %v1530
      %v1582 = vunpack.c.l.b16 %v1533
      %v1583 = vpack.c.b16 %v1552, %v1551
      %v1584 = vpack.c.b16 %v1554, %v1553
      %v1585 = vpack.c.b16 %v1556, %v1555
      %v1586 = vpack.c.b16 %v1558, %v1557
      %v1587 = vpack.c.b16 %v1560, %v1559
      %v1588 = vpack.c.b16 %v1562, %v1561
      %v1589 = vpack.c.b16 %v1564, %v1563
      %v1590 = vpack.c.b16 %v1566, %v1565
      %v1591 = vpack.c.b16 %v1568, %v1567
      %v1592 = vpack.c.b16 %v1570, %v1569
      %v1593 = vpack.c.b16 %v1572, %v1571
      %v1594 = vpack.c.b16 %v1574, %v1573
      %v1595 = vpack.c.b16 %v1576, %v1575
      %v1596 = vpack.c.b16 %v1578, %v1577
      %v1597 = vpack.c.b16 %v1580, %v1579
      %v1598 = vpack.c.b16 %v1582, %v1581
      %v1631 = vunpack.c.l.b16 %v1535
      %v1632 = vunpack.c.l.b16 %v1536
      %v1633 = vunpack.c.l.b16 %v1537
      %v1634 = vunpack.c.l.b16 %v1538
      %v1635 = vunpack.c.l.b16 %v1539
      %v1636 = vunpack.c.l.b16 %v1540
      %v1637 = vunpack.c.l.b16 %v1541
      %v1638 = vunpack.c.l.b16 %v1542
      %v1639 = vunpack.c.l.b16 %v1543
      %v1640 = vunpack.c.l.b16 %v1544
      %v1641 = vunpack.c.l.b16 %v1545
      %v1642 = vunpack.c.l.b16 %v1546
      %v1643 = vunpack.c.l.b16 %v1547
      %v1644 = vunpack.c.l.b16 %v1548
      %v1645 = vunpack.c.l.b16 %v1549
      %v1646 = vunpack.c.l.b16 %v1550
      %v1647 = vpack.c.b16 %v1632, %v1631
      %v1648 = vpack.c.b16 %v1634, %v1633
      %v1649 = vpack.c.b16 %v1636, %v1635
      %v1650 = vpack.c.b16 %v1638, %v1637
      %v1651 = vpack.c.b16 %v1640, %v1639
      %v1652 = vpack.c.b16 %v1642, %v1641
      %v1653 = vpack.c.b16 %v1644, %v1643
      %v1654 = vpack.c.b16 %v1646, %v1645
      %1663 = vmatpush.bf16.msra.mxu0 %v1654
      %1664 = vmatpush.bf16.msra.mxu0 %v1653
      %1665 = vmatpush.bf16.msra.mxu0 %v1652
      %1666 = vmatpush.bf16.msra.mxu0 %v1651
      %1667 = vmatpush.bf16.msra.mxu0 %v1650
      %1668 = vmatpush.bf16.msra.mxu0 %v1649
      %1669 = vmatpush.bf16.msra.mxu0 %v1648
      %1670 = vmatpush.bf16.msra.mxu0 %v1647
      %1671 = vmatmul.bf16.gmra.mxu0 %v1583
      %v1672 = vpop.f32.mrf.mxu0
      %v1673 = vadd.f32 0.0, %v1672
      %v1674 = vpop.f32.mrf.mxu0
      %v1675 = vadd.f32 0.0, %v1674
      %1676 = vmatmul.bf16.gmra.mxu0 %v1584
      %v1677 = vpop.f32.mrf.mxu0
      %v1678 = vadd.f32 0.0, %v1677
      %v1679 = vpop.f32.mrf.mxu0
      %v1680 = vadd.f32 0.0, %v1679
      %1681 = vmatmul.bf16.gmra.mxu0 %v1585
      %v1682 = vpop.f32.mrf.mxu0
      %v1683 = vadd.f32 0.0, %v1682
      %v1684 = vpop.f32.mrf.mxu0
      %v1685 = vadd.f32 0.0, %v1684
      %1686 = vmatmul.bf16.gmra.mxu0 %v1586
      %v1687 = vpop.f32.mrf.mxu0
      %v1688 = vadd.f32 0.0, %v1687
      %v1689 = vpop.f32.mrf.mxu0
      %v1690 = vadd.f32 0.0, %v1689
      %1691 = vmatmul.bf16.gmra.mxu0 %v1587
      %v1692 = vpop.f32.mrf.mxu0
      %v1693 = vadd.f32 0.0, %v1692
      %v1694 = vpop.f32.mrf.mxu0
      %v1695 = vadd.f32 0.0, %v1694
      %1696 = vmatmul.bf16.gmra.mxu0 %v1588
      %v1697 = vpop.f32.mrf.mxu0
      %v1698 = vadd.f32 0.0, %v1697
      %v1699 = vpop.f32.mrf.mxu0
      %v1700 = vadd.f32 0.0, %v1699
      %1701 = vmatmul.bf16.gmra.mxu0 %v1589
      %v1702 = vpop.f32.mrf.mxu0
      %v1703 = vadd.f32 0.0, %v1702
      %v1704 = vpop.f32.mrf.mxu0
      %v1705 = vadd.f32 0.0, %v1704
      %1706 = vmatmul.bf16.gmra.mxu0 %v1590
      %v1707 = vpop.f32.mrf.mxu0
      %v1708 = vadd.f32 0.0, %v1707
      %v1709 = vpop.f32.mrf.mxu0
      %v1710 = vadd.f32 0.0, %v1709
      %1711 = vmatmul.bf16.gmra.mxu0 %v1591
      %v1712 = vpop.f32.mrf.mxu0
      %v1713 = vadd.f32 0.0, %v1712
      %v1714 = vpop.f32.mrf.mxu0
      %v1715 = vadd.f32 0.0, %v1714
      %1716 = vmatmul.bf16.gmra.mxu0 %v1592
      %v1717 = vpop.f32.mrf.mxu0
      %v1718 = vadd.f32 0.0, %v1717
      %v1719 = vpop.f32.mrf.mxu0
      %v1720 = vadd.f32 0.0, %v1719
      %1721 = vmatmul.bf16.gmra.mxu0 %v1593
      %v1722 = vpop.f32.mrf.mxu0
      %v1723 = vadd.f32 0.0, %v1722
      %v1724 = vpop.f32.mrf.mxu0
      %v1725 = vadd.f32 0.0, %v1724
      %1726 = vmatmul.bf16.gmra.mxu0 %v1594
      %v1727 = vpop.f32.mrf.mxu0
      %v1728 = vadd.f32 0.0, %v1727
      %v1729 = vpop.f32.mrf.mxu0
      %v1730 = vadd.f32 0.0, %v1729
      %1731 = vmatmul.bf16.gmra.mxu0 %v1595
      %v1732 = vpop.f32.mrf.mxu0
      %v1733 = vadd.f32 0.0, %v1732
      %v1734 = vpop.f32.mrf.mxu0
      %v1735 = vadd.f32 0.0, %v1734
      %1736 = vmatmul.bf16.gmra.mxu0 %v1596
      %v1737 = vpop.f32.mrf.mxu0
      %v1738 = vadd.f32 0.0, %v1737
      %v1739 = vpop.f32.mrf.mxu0
      %v1740 = vadd.f32 0.0, %v1739
      %1741 = vmatmul.bf16.gmra.mxu0 %v1597
      %v1742 = vpop.f32.mrf.mxu0
      %v1743 = vadd.f32 0.0, %v1742
      %v1744 = vpop.f32.mrf.mxu0
      %v1745 = vadd.f32 0.0, %v1744
      %1746 = vmatmul.bf16.gmra.mxu0 %v1598
      %v1747 = vpop.f32.mrf.mxu0
      %v1748 = vadd.f32 0.0, %v1747
      %v1749 = vpop.f32.mrf.mxu0
      %v1750 = vadd.f32 0.0, %v1749
      %1751 = vdwg.mxu0
      %v1752 = vadd.f32 %v1323, %v1673
      %v1753 = vadd.f32 %v1324, %v1675
      %v1754 = vadd.f32 %v1325, %v1678
      %v1755 = vadd.f32 %v1326, %v1680
      %v1756 = vadd.f32 %v1327, %v1683
      %v1757 = vadd.f32 %v1328, %v1685
      %v1758 = vadd.f32 %v1329, %v1688
      %v1759 = vadd.f32 %v1330, %v1690
      %v1760 = vadd.f32 %v1331, %v1693
      %v1761 = vadd.f32 %v1332, %v1695
      %v1762 = vadd.f32 %v1333, %v1698
      %v1763 = vadd.f32 %v1334, %v1700
      %v1764 = vadd.f32 %v1335, %v1703
      %v1765 = vadd.f32 %v1336, %v1705
      %v1766 = vadd.f32 %v1337, %v1708
      %v1767 = vadd.f32 %v1338, %v1710
      %v1768 = vadd.f32 %v1339, %v1713
      %v1769 = vadd.f32 %v1340, %v1715
      %v1770 = vadd.f32 %v1341, %v1718
      %v1771 = vadd.f32 %v1342, %v1720
      %v1772 = vadd.f32 %v1343, %v1723
      %v1773 = vadd.f32 %v1344, %v1725
      %v1774 = vadd.f32 %v1345, %v1728
      %v1775 = vadd.f32 %v1346, %v1730
      %v1776 = vadd.f32 %v1347, %v1733
      %v1777 = vadd.f32 %v1348, %v1735
      %v1778 = vadd.f32 %v1349, %v1738
      %v1779 = vadd.f32 %v1350, %v1740
      %v1780 = vadd.f32 %v1351, %v1743
      %v1781 = vadd.f32 %v1352, %v1745
      %v1782 = vadd.f32 %v1353, %v1748
      %v1783 = vadd.f32 %v1354, %v1750
      %s1784 = scalar_lea.vmem %s267, 12
      %v1785 = vld [vmem:[%s1784] sm:$0xf]
      %v1786 = vld [vmem:[%s1784 + $0x4] sm:$0xf]
      %v1787 = vld [vmem:[%s1784 + $0xc] sm:$0xf]
      %v1788 = vld [vmem:[%s1784 + $0x10] sm:$0xf]
      %v1789 = vld [vmem:[%s1784 + $0x18] sm:$0xf]
      %v1790 = vld [vmem:[%s1784 + $0x1c] sm:$0xf]
      %v1791 = vld [vmem:[%s1784 + $0x24] sm:$0xf]
      %v1792 = vld [vmem:[%s1784 + $0x28] sm:$0xf]
      %v1793 = vld [vmem:[%s1784 + $0x30] sm:$0xf]
      %v1794 = vld [vmem:[%s1784 + $0x34] sm:$0xf]
      %v1795 = vld [vmem:[%s1784 + $0x3c] sm:$0xf]
      %v1796 = vld [vmem:[%s1784 + $0x40] sm:$0xf]
      %v1797 = vld [vmem:[%s1784 + $0x48] sm:$0xf]
      %v1798 = vld [vmem:[%s1784 + $0x4c] sm:$0xf]
      %v1799 = vld [vmem:[%s1784 + $0x54] sm:$0xf]
      %v1800 = vld [vmem:[%s1784 + $0x58] sm:$0xf]
      %v1801 = vld [vmem:[%s1784 + $0x60] sm:$0xf]
      %v1802 = vld [vmem:[%s1784 + $0x64] sm:$0xf]
      %v1803 = vld [vmem:[%s1784 + $0x6c] sm:$0xf]
      %v1804 = vld [vmem:[%s1784 + $0x70] sm:$0xf]
      %v1805 = vld [vmem:[%s1784 + $0x78] sm:$0xf]
      %v1806 = vld [vmem:[%s1784 + $0x7c] sm:$0xf]
      %v1807 = vld [vmem:[%s1784 + $0x84] sm:$0xf]
      %v1808 = vld [vmem:[%s1784 + $0x88] sm:$0xf]
      %v1809 = vld [vmem:[%s1784 + $0x90] sm:$0xf]
      %v1810 = vld [vmem:[%s1784 + $0x94] sm:$0xf]
      %v1811 = vld [vmem:[%s1784 + $0x9c] sm:$0xf]
      %v1812 = vld [vmem:[%s1784 + $0xa0] sm:$0xf]
      %v1813 = vld [vmem:[%s1784 + $0xa8] sm:$0xf]
      %v1814 = vld [vmem:[%s1784 + $0xac] sm:$0xf]
      %v1815 = vld [vmem:[%s1784 + $0xb4] sm:$0xf]
      %v1816 = vld [vmem:[%s1784 + $0xb8] sm:$0xf]
      %s1817 = scalar_lea.vmem %s273, 192
      %v1818 = vld [vmem:[%s1817] sm:$0xf]
      %v1819 = vld [vmem:[%s1817 + $0x4] sm:$0xf]
      %v1820 = vld [vmem:[%s1817 + $0x8] sm:$0xf]
      %v1821 = vld [vmem:[%s1817 + $0xc] sm:$0xf]
      %v1822 = vld [vmem:[%s1817 + $0x10] sm:$0xf]
      %v1823 = vld [vmem:[%s1817 + $0x14] sm:$0xf]
      %v1824 = vld [vmem:[%s1817 + $0x18] sm:$0xf]
      %v1825 = vld [vmem:[%s1817 + $0x1c] sm:$0xf]
      %v1826 = vld [vmem:[%s1817 + $0x20] sm:$0xf]
      %v1827 = vld [vmem:[%s1817 + $0x24] sm:$0xf]
      %v1828 = vld [vmem:[%s1817 + $0x28] sm:$0xf]
      %v1829 = vld [vmem:[%s1817 + $0x2c] sm:$0xf]
      %v1830 = vld [vmem:[%s1817 + $0x30] sm:$0xf]
      %v1831 = vld [vmem:[%s1817 + $0x34] sm:$0xf]
      %v1832 = vld [vmem:[%s1817 + $0x38] sm:$0xf]
      %v1833 = vld [vmem:[%s1817 + $0x3c] sm:$0xf]
      %v1866 = vunpack.c.l.b16 %v1785
      %v1867 = vunpack.c.l.b16 %v1786
      %v1868 = vunpack.c.l.b16 %v1787
      %v1869 = vunpack.c.l.b16 %v1788
      %v1870 = vunpack.c.l.b16 %v1789
      %v1871 = vunpack.c.l.b16 %v1790
      %v1872 = vunpack.c.l.b16 %v1791
      %v1873 = vunpack.c.l.b16 %v1792
      %v1874 = vunpack.c.l.b16 %v1793
      %v1875 = vunpack.c.l.b16 %v1794
      %v1876 = vunpack.c.l.b16 %v1795
      %v1877 = vunpack.c.l.b16 %v1796
      %v1878 = vunpack.c.l.b16 %v1797
      %v1879 = vunpack.c.l.b16 %v1798
      %v1880 = vunpack.c.l.b16 %v1799
      %v1881 = vunpack.c.l.b16 %v1800
      %v1882 = vunpack.c.l.b16 %v1801
      %v1883 = vunpack.c.l.b16 %v1802
      %v1884 = vunpack.c.l.b16 %v1803
      %v1885 = vunpack.c.l.b16 %v1804
      %v1886 = vunpack.c.l.b16 %v1805
      %v1887 = vunpack.c.l.b16 %v1806
      %v1888 = vunpack.c.l.b16 %v1807
      %v1889 = vunpack.c.l.b16 %v1808
      %v1890 = vunpack.c.l.b16 %v1809
      %v1891 = vunpack.c.l.b16 %v1810
      %v1892 = vunpack.c.l.b16 %v1811
      %v1893 = vunpack.c.l.b16 %v1812
      %v1894 = vunpack.c.l.b16 %v1813
      %v1895 = vunpack.c.l.b16 %v1814
      %v1896 = vunpack.c.l.b16 %v1815
      %v1897 = vunpack.c.l.b16 %v1816
      %v1898 = vpack.c.b16 %v1867, %v1866
      %v1899 = vpack.c.b16 %v1869, %v1868
      %v1900 = vpack.c.b16 %v1871, %v1870
      %v1901 = vpack.c.b16 %v1873, %v1872
      %v1902 = vpack.c.b16 %v1875, %v1874
      %v1903 = vpack.c.b16 %v1877, %v1876
      %v1904 = vpack.c.b16 %v1879, %v1878
      %v1905 = vpack.c.b16 %v1881, %v1880
      %v1906 = vpack.c.b16 %v1883, %v1882
      %v1907 = vpack.c.b16 %v1885, %v1884
      %v1908 = vpack.c.b16 %v1887, %v1886
      %v1909 = vpack.c.b16 %v1889, %v1888
      %v1910 = vpack.c.b16 %v1891, %v1890
      %v1911 = vpack.c.b16 %v1893, %v1892
      %v1912 = vpack.c.b16 %v1895, %v1894
      %v1913 = vpack.c.b16 %v1897, %v1896
      %v1946 = vunpack.c.l.b16 %v1818
      %v1947 = vunpack.c.l.b16 %v1819
      %v1948 = vunpack.c.l.b16 %v1820
      %v1949 = vunpack.c.l.b16 %v1821
      %v1950 = vunpack.c.l.b16 %v1822
      %v1951 = vunpack.c.l.b16 %v1823
      %v1952 = vunpack.c.l.b16 %v1824
      %v1953 = vunpack.c.l.b16 %v1825
      %v1954 = vunpack.c.l.b16 %v1826
      %v1955 = vunpack.c.l.b16 %v1827
      %v1956 = vunpack.c.l.b16 %v1828
      %v1957 = vunpack.c.l.b16 %v1829
      %v1958 = vunpack.c.l.b16 %v1830
      %v1959 = vunpack.c.l.b16 %v1831
      %v1960 = vunpack.c.l.b16 %v1832
      %v1961 = vunpack.c.l.b16 %v1833
      %v1962 = vpack.c.b16 %v1947, %v1946
      %v1963 = vpack.c.b16 %v1949, %v1948
      %v1964 = vpack.c.b16 %v1951, %v1950
      %v1965 = vpack.c.b16 %v1953, %v1952
      %v1966 = vpack.c.b16 %v1955, %v1954
      %v1967 = vpack.c.b16 %v1957, %v1956
      %v1968 = vpack.c.b16 %v1959, %v1958
      %v1969 = vpack.c.b16 %v1961, %v1960
      %1978 = vmatpush.bf16.msra.mxu0 %v1969
      %1979 = vmatpush.bf16.msra.mxu0 %v1968
      %1980 = vmatpush.bf16.msra.mxu0 %v1967
      %1981 = vmatpush.bf16.msra.mxu0 %v1966
      %1982 = vmatpush.bf16.msra.mxu0 %v1965
      %1983 = vmatpush.bf16.msra.mxu0 %v1964
      %1984 = vmatpush.bf16.msra.mxu0 %v1963
      %1985 = vmatpush.bf16.msra.mxu0 %v1962
      %1986 = vmatmul.bf16.gmra.mxu0 %v1898
      %v1987 = vpop.f32.mrf.mxu0
      %v1988 = vadd.f32 0.0, %v1987
      %v1989 = vpop.f32.mrf.mxu0
      %v1990 = vadd.f32 0.0, %v1989
      %1991 = vmatmul.bf16.gmra.mxu0 %v1899
      %v1992 = vpop.f32.mrf.mxu0
      %v1993 = vadd.f32 0.0, %v1992
      %v1994 = vpop.f32.mrf.mxu0
      %v1995 = vadd.f32 0.0, %v1994
      %1996 = vmatmul.bf16.gmra.mxu0 %v1900
      %v1997 = vpop.f32.mrf.mxu0
      %v1998 = vadd.f32 0.0, %v1997
      %v1999 = vpop.f32.mrf.mxu0
      %v2000 = vadd.f32 0.0, %v1999
      %2001 = vmatmul.bf16.gmra.mxu0 %v1901
      %v2002 = vpop.f32.mrf.mxu0
      %v2003 = vadd.f32 0.0, %v2002
      %v2004 = vpop.f32.mrf.mxu0
      %v2005 = vadd.f32 0.0, %v2004
      %2006 = vmatmul.bf16.gmra.mxu0 %v1902
      %v2007 = vpop.f32.mrf.mxu0
      %v2008 = vadd.f32 0.0, %v2007
      %v2009 = vpop.f32.mrf.mxu0
      %v2010 = vadd.f32 0.0, %v2009
      %2011 = vmatmul.bf16.gmra.mxu0 %v1903
      %v2012 = vpop.f32.mrf.mxu0
      %v2013 = vadd.f32 0.0, %v2012
      %v2014 = vpop.f32.mrf.mxu0
      %v2015 = vadd.f32 0.0, %v2014
      %2016 = vmatmul.bf16.gmra.mxu0 %v1904
      %v2017 = vpop.f32.mrf.mxu0
      %v2018 = vadd.f32 0.0, %v2017
      %v2019 = vpop.f32.mrf.mxu0
      %v2020 = vadd.f32 0.0, %v2019
      %2021 = vmatmul.bf16.gmra.mxu0 %v1905
      %v2022 = vpop.f32.mrf.mxu0
      %v2023 = vadd.f32 0.0, %v2022
      %v2024 = vpop.f32.mrf.mxu0
      %v2025 = vadd.f32 0.0, %v2024
      %2026 = vmatmul.bf16.gmra.mxu0 %v1906
      %v2027 = vpop.f32.mrf.mxu0
      %v2028 = vadd.f32 0.0, %v2027
      %v2029 = vpop.f32.mrf.mxu0
      %v2030 = vadd.f32 0.0, %v2029
      %2031 = vmatmul.bf16.gmra.mxu0 %v1907
      %v2032 = vpop.f32.mrf.mxu0
      %v2033 = vadd.f32 0.0, %v2032
      %v2034 = vpop.f32.mrf.mxu0
      %v2035 = vadd.f32 0.0, %v2034
      %2036 = vmatmul.bf16.gmra.mxu0 %v1908
      %v2037 = vpop.f32.mrf.mxu0
      %v2038 = vadd.f32 0.0, %v2037
      %v2039 = vpop.f32.mrf.mxu0
      %v2040 = vadd.f32 0.0, %v2039
      %2041 = vmatmul.bf16.gmra.mxu0 %v1909
      %v2042 = vpop.f32.mrf.mxu0
      %v2043 = vadd.f32 0.0, %v2042
      %v2044 = vpop.f32.mrf.mxu0
      %v2045 = vadd.f32 0.0, %v2044
      %2046 = vmatmul.bf16.gmra.mxu0 %v1910
      %v2047 = vpop.f32.mrf.mxu0
      %v2048 = vadd.f32 0.0, %v2047
      %v2049 = vpop.f32.mrf.mxu0
      %v2050 = vadd.f32 0.0, %v2049
      %2051 = vmatmul.bf16.gmra.mxu0 %v1911
      %v2052 = vpop.f32.mrf.mxu0
      %v2053 = vadd.f32 0.0, %v2052
      %v2054 = vpop.f32.mrf.mxu0
      %v2055 = vadd.f32 0.0, %v2054
      %2056 = vmatmul.bf16.gmra.mxu0 %v1912
      %v2057 = vpop.f32.mrf.mxu0
      %v2058 = vadd.f32 0.0, %v2057
      %v2059 = vpop.f32.mrf.mxu0
      %v2060 = vadd.f32 0.0, %v2059
      %2061 = vmatmul.bf16.gmra.mxu0 %v1913
      %v2062 = vpop.f32.mrf.mxu0
      %v2063 = vadd.f32 0.0, %v2062
      %v2064 = vpop.f32.mrf.mxu0
      %v2065 = vadd.f32 0.0, %v2064
      %2066 = vdwg.mxu0
      %v2067 = vadd.f32 %v1752, %v1988
      %v2068 = vadd.f32 %v1753, %v1990
      %v2069 = vadd.f32 %v1754, %v1993
      %v2070 = vadd.f32 %v1755, %v1995
      %v2071 = vadd.f32 %v1756, %v1998
      %v2072 = vadd.f32 %v1757, %v2000
      %v2073 = vadd.f32 %v1758, %v2003
      %v2074 = vadd.f32 %v1759, %v2005
      %v2075 = vadd.f32 %v1760, %v2008
      %v2076 = vadd.f32 %v1761, %v2010
      %v2077 = vadd.f32 %v1762, %v2013
      %v2078 = vadd.f32 %v1763, %v2015
      %v2079 = vadd.f32 %v1764, %v2018
      %v2080 = vadd.f32 %v1765, %v2020
      %v2081 = vadd.f32 %v1766, %v2023
      %v2082 = vadd.f32 %v1767, %v2025
      %v2083 = vadd.f32 %v1768, %v2028
      %v2084 = vadd.f32 %v1769, %v2030
      %v2085 = vadd.f32 %v1770, %v2033
      %v2086 = vadd.f32 %v1771, %v2035
      %v2087 = vadd.f32 %v1772, %v2038
      %v2088 = vadd.f32 %v1773, %v2040
      %v2089 = vadd.f32 %v1774, %v2043
      %v2090 = vadd.f32 %v1775, %v2045
      %v2091 = vadd.f32 %v1776, %v2048
      %v2092 = vadd.f32 %v1777, %v2050
      %v2093 = vadd.f32 %v1778, %v2053
      %v2094 = vadd.f32 %v1779, %v2055
      %v2095 = vadd.f32 %v1780, %v2058
      %v2096 = vadd.f32 %v1781, %v2060
      %v2097 = vadd.f32 %v1782, %v2063
      %v2098 = vadd.f32 %v1783, %v2065
      %v2099 = vld [vmem:[%s1784] sm:$0xf]
      %v2100 = vld [vmem:[%s1784 + $0x4] sm:$0xf]
      %v2101 = vld [vmem:[%s1784 + $0x8] sm:$0x1]
      %v2102 = vld [vmem:[%s1784 + $0xc] sm:$0xf]
      %v2103 = vld [vmem:[%s1784 + $0x10] sm:$0xf]
      %v2104 = vld [vmem:[%s1784 + $0x14] sm:$0x1]
      %v2105 = vld [vmem:[%s1784 + $0x18] sm:$0xf]
      %v2106 = vld [vmem:[%s1784 + $0x1c] sm:$0xf]
      %v2107 = vld [vmem:[%s1784 + $0x20] sm:$0x1]
      %v2108 = vld [vmem:[%s1784 + $0x24] sm:$0xf]
      %v2109 = vld [vmem:[%s1784 + $0x28] sm:$0xf]
      %v2110 = vld [vmem:[%s1784 + $0x2c] sm:$0x1]
      %v2111 = vld [vmem:[%s1784 + $0x30] sm:$0xf]
      %v2112 = vld [vmem:[%s1784 + $0x34] sm:$0xf]
      %v2113 = vld [vmem:[%s1784 + $0x38] sm:$0x1]
      %v2114 = vld [vmem:[%s1784 + $0x3c] sm:$0xf]
      %v2115 = vld [vmem:[%s1784 + $0x40] sm:$0xf]
      %v2116 = vld [vmem:[%s1784 + $0x44] sm:$0x1]
      %v2117 = vld [vmem:[%s1784 + $0x48] sm:$0xf]
      %v2118 = vld [vmem:[%s1784 + $0x4c] sm:$0xf]
      %v2119 = vld [vmem:[%s1784 + $0x50] sm:$0x1]
      %v2120 = vld [vmem:[%s1784 + $0x54] sm:$0xf]
      %v2121 = vld [vmem:[%s1784 + $0x58] sm:$0xf]
      %v2122 = vld [vmem:[%s1784 + $0x5c] sm:$0x1]
      %v2123 = vld [vmem:[%s1784 + $0x60] sm:$0xf]
      %v2124 = vld [vmem:[%s1784 + $0x64] sm:$0xf]
      %v2125 = vld [vmem:[%s1784 + $0x68] sm:$0x1]
      %v2126 = vld [vmem:[%s1784 + $0x6c] sm:$0xf]
      %v2127 = vld [vmem:[%s1784 + $0x70] sm:$0xf]
      %v2128 = vld [vmem:[%s1784 + $0x74] sm:$0x1]
      %v2129 = vld [vmem:[%s1784 + $0x78] sm:$0xf]
      %v2130 = vld [vmem:[%s1784 + $0x7c] sm:$0xf]
      %v2131 = vld [vmem:[%s1784 + $0x80] sm:$0x1]
      %v2132 = vld [vmem:[%s1784 + $0x84] sm:$0xf]
      %v2133 = vld [vmem:[%s1784 + $0x88] sm:$0xf]
      %v2134 = vld [vmem:[%s1784 + $0x8c] sm:$0x1]
      %v2135 = vld [vmem:[%s1784 + $0x90] sm:$0xf]
      %v2136 = vld [vmem:[%s1784 + $0x94] sm:$0xf]
      %v2137 = vld [vmem:[%s1784 + $0x98] sm:$0x1]
      %v2138 = vld [vmem:[%s1784 + $0x9c] sm:$0xf]
      %v2139 = vld [vmem:[%s1784 + $0xa0] sm:$0xf]
      %v2140 = vld [vmem:[%s1784 + $0xa4] sm:$0x1]
      %v2141 = vld [vmem:[%s1784 + $0xa8] sm:$0xf]
      %v2142 = vld [vmem:[%s1784 + $0xac] sm:$0xf]
      %v2143 = vld [vmem:[%s1784 + $0xb0] sm:$0x1]
      %v2144 = vld [vmem:[%s1784 + $0xb4] sm:$0xf]
      %v2145 = vld [vmem:[%s1784 + $0xb8] sm:$0xf]
      %v2146 = vld [vmem:[%s1784 + $0xbc] sm:$0x1]
      %v2148 = vshrl.u32 %v2099, 16
      %v2150 = vrot.slane %v2148, 4
      %v2151 = vshll.u32 %v2099, 16
      %v2153 = vrot.slane %v2151, 5
      %v2154 = vor.u32 %v2150, %v2153
      %v2155 = vrot.slane %v2154, 4
      %v2157 = vshll.u32 %v2100, 16
      %v2159 = vrot.slane %v2157, 5
      %v2160 = vsel %vm720, %v2155, %v2159
      %v2161 = vshrl.u32 %v2100, 16
      %v2163 = vrot.slane %v2161, 4
      %v2164 = vor.u32 %v2163, %v2159
      %v2165 = vrot.slane %v2164, 4
      %v2167 = vshll.u32 %v2101, 16
      %v2169 = vrot.slane %v2167, 5
      %v2170 = vsel %vm720, %v2165, %v2169
      %v2172 = vshrl.u32 %v2102, 16
      %v2174 = vrot.slane %v2172, 4
      %v2175 = vshll.u32 %v2102, 16
      %v2177 = vrot.slane %v2175, 5
      %v2178 = vor.u32 %v2174, %v2177
      %v2179 = vrot.slane %v2178, 4
      %v2181 = vshll.u32 %v2103, 16
      %v2183 = vrot.slane %v2181, 5
      %v2184 = vsel %vm720, %v2179, %v2183
      %v2185 = vshrl.u32 %v2103, 16
      %v2187 = vrot.slane %v2185, 4
      %v2188 = vor.u32 %v2187, %v2183
      %v2189 = vrot.slane %v2188, 4
      %v2191 = vshll.u32 %v2104, 16
      %v2193 = vrot.slane %v2191, 5
      %v2194 = vsel %vm720, %v2189, %v2193
      %v2196 = vshrl.u32 %v2105, 16
      %v2198 = vrot.slane %v2196, 4
      %v2199 = vshll.u32 %v2105, 16
      %v2201 = vrot.slane %v2199, 5
      %v2202 = vor.u32 %v2198, %v2201
      %v2203 = vrot.slane %v2202, 4
      %v2205 = vshll.u32 %v2106, 16
      %v2207 = vrot.slane %v2205, 5
      %v2208 = vsel %vm720, %v2203, %v2207
      %v2209 = vshrl.u32 %v2106, 16
      %v2211 = vrot.slane %v2209, 4
      %v2212 = vor.u32 %v2211, %v2207
      %v2213 = vrot.slane %v2212, 4
      %v2215 = vshll.u32 %v2107, 16
      %v2217 = vrot.slane %v2215, 5
      %v2218 = vsel %vm720, %v2213, %v2217
      %v2220 = vshrl.u32 %v2108, 16
      %v2222 = vrot.slane %v2220, 4
      %v2223 = vshll.u32 %v2108, 16
      %v2225 = vrot.slane %v2223, 5
      %v2226 = vor.u32 %v2222, %v2225
      %v2227 = vrot.slane %v2226, 4
      %v2229 = vshll.u32 %v2109, 16
      %v2231 = vrot.slane %v2229, 5
      %v2232 = vsel %vm720, %v2227, %v2231
      %v2233 = vshrl.u32 %v2109, 16
      %v2235 = vrot.slane %v2233, 4
      %v2236 = vor.u32 %v2235, %v2231
      %v2237 = vrot.slane %v2236, 4
      %v2239 = vshll.u32 %v2110, 16
      %v2241 = vrot.slane %v2239, 5
      %v2242 = vsel %vm720, %v2237, %v2241
      %v2244 = vshrl.u32 %v2111, 16
      %v2246 = vrot.slane %v2244, 4
      %v2247 = vshll.u32 %v2111, 16
      %v2249 = vrot.slane %v2247, 5
      %v2250 = vor.u32 %v2246, %v2249
      %v2251 = vrot.slane %v2250, 4
      %v2253 = vshll.u32 %v2112, 16
      %v2255 = vrot.slane %v2253, 5
      %v2256 = vsel %vm720, %v2251, %v2255
      %v2257 = vshrl.u32 %v2112, 16
      %v2259 = vrot.slane %v2257, 4
      %v2260 = vor.u32 %v2259, %v2255
      %v2261 = vrot.slane %v2260, 4
      %v2263 = vshll.u32 %v2113, 16
      %v2265 = vrot.slane %v2263, 5
      %v2266 = vsel %vm720, %v2261, %v2265
      %v2268 = vshrl.u32 %v2114, 16
      %v2270 = vrot.slane %v2268, 4
      %v2271 = vshll.u32 %v2114, 16
      %v2273 = vrot.slane %v2271, 5
      %v2274 = vor.u32 %v2270, %v2273
      %v2275 = vrot.slane %v2274, 4
      %v2277 = vshll.u32 %v2115, 16
      %v2279 = vrot.slane %v2277, 5
      %v2280 = vsel %vm720, %v2275, %v2279
      %v2281 = vshrl.u32 %v2115, 16
      %v2283 = vrot.slane %v2281, 4
      %v2284 = vor.u32 %v2283, %v2279
      %v2285 = vrot.slane %v2284, 4
      %v2287 = vshll.u32 %v2116, 16
      %v2289 = vrot.slane %v2287, 5
      %v2290 = vsel %vm720, %v2285, %v2289
      %v2292 = vshrl.u32 %v2117, 16
      %v2294 = vrot.slane %v2292, 4
      %v2295 = vshll.u32 %v2117, 16
      %v2297 = vrot.slane %v2295, 5
      %v2298 = vor.u32 %v2294, %v2297
      %v2299 = vrot.slane %v2298, 4
      %v2301 = vshll.u32 %v2118, 16
      %v2303 = vrot.slane %v2301, 5
      %v2304 = vsel %vm720, %v2299, %v2303
      %v2305 = vshrl.u32 %v2118, 16
      %v2307 = vrot.slane %v2305, 4
      %v2308 = vor.u32 %v2307, %v2303
      %v2309 = vrot.slane %v2308, 4
      %v2311 = vshll.u32 %v2119, 16
      %v2313 = vrot.slane %v2311, 5
      %v2314 = vsel %vm720, %v2309, %v2313
      %v2316 = vshrl.u32 %v2120, 16
      %v2318 = vrot.slane %v2316, 4
      %v2319 = vshll.u32 %v2120, 16
      %v2321 = vrot.slane %v2319, 5
      %v2322 = vor.u32 %v2318, %v2321
      %v2323 = vrot.slane %v2322, 4
      %v2325 = vshll.u32 %v2121, 16
      %v2327 = vrot.slane %v2325, 5
      %v2328 = vsel %vm720, %v2323, %v2327
      %v2329 = vshrl.u32 %v2121, 16
      %v2331 = vrot.slane %v2329, 4
      %v2332 = vor.u32 %v2331, %v2327
      %v2333 = vrot.slane %v2332, 4
      %v2335 = vshll.u32 %v2122, 16
      %v2337 = vrot.slane %v2335, 5
      %v2338 = vsel %vm720, %v2333, %v2337
      %v2340 = vshrl.u32 %v2123, 16
      %v2342 = vrot.slane %v2340, 4
      %v2343 = vshll.u32 %v2123, 16
      %v2345 = vrot.slane %v2343, 5
      %v2346 = vor.u32 %v2342, %v2345
      %v2347 = vrot.slane %v2346, 4
      %v2349 = vshll.u32 %v2124, 16
      %v2351 = vrot.slane %v2349, 5
      %v2352 = vsel %vm720, %v2347, %v2351
      %v2353 = vshrl.u32 %v2124, 16
      %v2355 = vrot.slane %v2353, 4
      %v2356 = vor.u32 %v2355, %v2351
      %v2357 = vrot.slane %v2356, 4
      %v2359 = vshll.u32 %v2125, 16
      %v2361 = vrot.slane %v2359, 5
      %v2362 = vsel %vm720, %v2357, %v2361
      %v2364 = vshrl.u32 %v2126, 16
      %v2366 = vrot.slane %v2364, 4
      %v2367 = vshll.u32 %v2126, 16
      %v2369 = vrot.slane %v2367, 5
      %v2370 = vor.u32 %v2366, %v2369
      %v2371 = vrot.slane %v2370, 4
      %v2373 = vshll.u32 %v2127, 16
      %v2375 = vrot.slane %v2373, 5
      %v2376 = vsel %vm720, %v2371, %v2375
      %v2377 = vshrl.u32 %v2127, 16
      %v2379 = vrot.slane %v2377, 4
      %v2380 = vor.u32 %v2379, %v2375
      %v2381 = vrot.slane %v2380, 4
      %v2383 = vshll.u32 %v2128, 16
      %v2385 = vrot.slane %v2383, 5
      %v2386 = vsel %vm720, %v2381, %v2385
      %v2388 = vshrl.u32 %v2129, 16
      %v2390 = vrot.slane %v2388, 4
      %v2391 = vshll.u32 %v2129, 16
      %v2393 = vrot.slane %v2391, 5
      %v2394 = vor.u32 %v2390, %v2393
      %v2395 = vrot.slane %v2394, 4
      %v2397 = vshll.u32 %v2130, 16
      %v2399 = vrot.slane %v2397, 5
      %v2400 = vsel %vm720, %v2395, %v2399
      %v2401 = vshrl.u32 %v2130, 16
      %v2403 = vrot.slane %v2401, 4
      %v2404 = vor.u32 %v2403, %v2399
      %v2405 = vrot.slane %v2404, 4
      %v2407 = vshll.u32 %v2131, 16
      %v2409 = vrot.slane %v2407, 5
      %v2410 = vsel %vm720, %v2405, %v2409
      %v2412 = vshrl.u32 %v2132, 16
      %v2414 = vrot.slane %v2412, 4
      %v2415 = vshll.u32 %v2132, 16
      %v2417 = vrot.slane %v2415, 5
      %v2418 = vor.u32 %v2414, %v2417
      %v2419 = vrot.slane %v2418, 4
      %v2421 = vshll.u32 %v2133, 16
      %v2423 = vrot.slane %v2421, 5
      %v2424 = vsel %vm720, %v2419, %v2423
      %v2425 = vshrl.u32 %v2133, 16
      %v2427 = vrot.slane %v2425, 4
      %v2428 = vor.u32 %v2427, %v2423
      %v2429 = vrot.slane %v2428, 4
      %v2431 = vshll.u32 %v2134, 16
      %v2433 = vrot.slane %v2431, 5
      %v2434 = vsel %vm720, %v2429, %v2433
      %v2436 = vshrl.u32 %v2135, 16
      %v2438 = vrot.slane %v2436, 4
      %v2439 = vshll.u32 %v2135, 16
      %v2441 = vrot.slane %v2439, 5
      %v2442 = vor.u32 %v2438, %v2441
      %v2443 = vrot.slane %v2442, 4
      %v2445 = vshll.u32 %v2136, 16
      %v2447 = vrot.slane %v2445, 5
      %v2448 = vsel %vm720, %v2443, %v2447
      %v2449 = vshrl.u32 %v2136, 16
      %v2451 = vrot.slane %v2449, 4
      %v2452 = vor.u32 %v2451, %v2447
      %v2453 = vrot.slane %v2452, 4
      %v2455 = vshll.u32 %v2137, 16
      %v2457 = vrot.slane %v2455, 5
      %v2458 = vsel %vm720, %v2453, %v2457
      %v2460 = vshrl.u32 %v2138, 16
      %v2462 = vrot.slane %v2460, 4
      %v2463 = vshll.u32 %v2138, 16
      %v2465 = vrot.slane %v2463, 5
      %v2466 = vor.u32 %v2462, %v2465
      %v2467 = vrot.slane %v2466, 4
      %v2469 = vshll.u32 %v2139, 16
      %v2471 = vrot.slane %v2469, 5
      %v2472 = vsel %vm720, %v2467, %v2471
      %v2473 = vshrl.u32 %v2139, 16
      %v2475 = vrot.slane %v2473, 4
      %v2476 = vor.u32 %v2475, %v2471
      %v2477 = vrot.slane %v2476, 4
      %v2479 = vshll.u32 %v2140, 16
      %v2481 = vrot.slane %v2479, 5
      %v2482 = vsel %vm720, %v2477, %v2481
      %v2484 = vshrl.u32 %v2141, 16
      %v2486 = vrot.slane %v2484, 4
      %v2487 = vshll.u32 %v2141, 16
      %v2489 = vrot.slane %v2487, 5
      %v2490 = vor.u32 %v2486, %v2489
      %v2491 = vrot.slane %v2490, 4
      %v2493 = vshll.u32 %v2142, 16
      %v2495 = vrot.slane %v2493, 5
      %v2496 = vsel %vm720, %v2491, %v2495
      %v2497 = vshrl.u32 %v2142, 16
      %v2499 = vrot.slane %v2497, 4
      %v2500 = vor.u32 %v2499, %v2495
      %v2501 = vrot.slane %v2500, 4
      %v2503 = vshll.u32 %v2143, 16
      %v2505 = vrot.slane %v2503, 5
      %v2506 = vsel %vm720, %v2501, %v2505
      %v2508 = vshrl.u32 %v2144, 16
      %v2510 = vrot.slane %v2508, 4
      %v2511 = vshll.u32 %v2144, 16
      %v2513 = vrot.slane %v2511, 5
      %v2514 = vor.u32 %v2510, %v2513
      %v2515 = vrot.slane %v2514, 4
      %v2517 = vshll.u32 %v2145, 16
      %v2519 = vrot.slane %v2517, 5
      %v2520 = vsel %vm720, %v2515, %v2519
      %v2521 = vshrl.u32 %v2145, 16
      %v2523 = vrot.slane %v2521, 4
      %v2524 = vor.u32 %v2523, %v2519
      %v2525 = vrot.slane %v2524, 4
      %v2527 = vshll.u32 %v2146, 16
      %v2529 = vrot.slane %v2527, 5
      %v2530 = vsel %vm720, %v2525, %v2529
      %s2531 = scalar_lea.vmem %s273, 256
      %v2532 = vld [vmem:[%s2531] sm:$0xf]
      %v2533 = vld [vmem:[%s2531 + $0x4] sm:$0xf]
      %v2534 = vld [vmem:[%s2531 + $0x8] sm:$0xf]
      %v2535 = vld [vmem:[%s2531 + $0xc] sm:$0xf]
      %v2536 = vld [vmem:[%s2531 + $0x10] sm:$0xf]
      %v2537 = vld [vmem:[%s2531 + $0x14] sm:$0xf]
      %v2538 = vld [vmem:[%s2531 + $0x18] sm:$0xf]
      %v2539 = vld [vmem:[%s2531 + $0x1c] sm:$0xf]
      %v2540 = vld [vmem:[%s2531 + $0x20] sm:$0xf]
      %v2541 = vld [vmem:[%s2531 + $0x24] sm:$0xf]
      %v2542 = vld [vmem:[%s2531 + $0x28] sm:$0xf]
      %v2543 = vld [vmem:[%s2531 + $0x2c] sm:$0xf]
      %v2544 = vld [vmem:[%s2531 + $0x30] sm:$0xf]
      %v2545 = vld [vmem:[%s2531 + $0x34] sm:$0xf]
      %v2546 = vld [vmem:[%s2531 + $0x38] sm:$0xf]
      %v2547 = vld [vmem:[%s2531 + $0x3c] sm:$0xf]
      %v2548 = vunpack.c.l.b16 %v2160
      %v2549 = vunpack.c.l.b16 %v2170
      %v2550 = vunpack.c.l.b16 %v2184
      %v2551 = vunpack.c.l.b16 %v2194
      %v2552 = vunpack.c.l.b16 %v2208
      %v2553 = vunpack.c.l.b16 %v2218
      %v2554 = vunpack.c.l.b16 %v2232
      %v2555 = vunpack.c.l.b16 %v2242
      %v2556 = vunpack.c.l.b16 %v2256
      %v2557 = vunpack.c.l.b16 %v2266
      %v2558 = vunpack.c.l.b16 %v2280
      %v2559 = vunpack.c.l.b16 %v2290
      %v2560 = vunpack.c.l.b16 %v2304
      %v2561 = vunpack.c.l.b16 %v2314
      %v2562 = vunpack.c.l.b16 %v2328
      %v2563 = vunpack.c.l.b16 %v2338
      %v2564 = vunpack.c.l.b16 %v2352
      %v2565 = vunpack.c.l.b16 %v2362
      %v2566 = vunpack.c.l.b16 %v2376
      %v2567 = vunpack.c.l.b16 %v2386
      %v2568 = vunpack.c.l.b16 %v2400
      %v2569 = vunpack.c.l.b16 %v2410
      %v2570 = vunpack.c.l.b16 %v2424
      %v2571 = vunpack.c.l.b16 %v2434
      %v2572 = vunpack.c.l.b16 %v2448
      %v2573 = vunpack.c.l.b16 %v2458
      %v2574 = vunpack.c.l.b16 %v2472
      %v2575 = vunpack.c.l.b16 %v2482
      %v2576 = vunpack.c.l.b16 %v2496
      %v2577 = vunpack.c.l.b16 %v2506
      %v2578 = vunpack.c.l.b16 %v2520
      %v2579 = vunpack.c.l.b16 %v2530
      %v2580 = vpack.c.b16 %v2549, %v2548
      %v2581 = vpack.c.b16 %v2551, %v2550
      %v2582 = vpack.c.b16 %v2553, %v2552
      %v2583 = vpack.c.b16 %v2555, %v2554
      %v2584 = vpack.c.b16 %v2557, %v2556
      %v2585 = vpack.c.b16 %v2559, %v2558
      %v2586 = vpack.c.b16 %v2561, %v2560
      %v2587 = vpack.c.b16 %v2563, %v2562
      %v2588 = vpack.c.b16 %v2565, %v2564
      %v2589 = vpack.c.b16 %v2567, %v2566
      %v2590 = vpack.c.b16 %v2569, %v2568
      %v2591 = vpack.c.b16 %v2571, %v2570
      %v2592 = vpack.c.b16 %v2573, %v2572
      %v2593 = vpack.c.b16 %v2575, %v2574
      %v2594 = vpack.c.b16 %v2577, %v2576
      %v2595 = vpack.c.b16 %v2579, %v2578
      %v2628 = vunpack.c.l.b16 %v2532
      %v2629 = vunpack.c.l.b16 %v2533
      %v2630 = vunpack.c.l.b16 %v2534
      %v2631 = vunpack.c.l.b16 %v2535
      %v2632 = vunpack.c.l.b16 %v2536
      %v2633 = vunpack.c.l.b16 %v2537
      %v2634 = vunpack.c.l.b16 %v2538
      %v2635 = vunpack.c.l.b16 %v2539
      %v2636 = vunpack.c.l.b16 %v2540
      %v2637 = vunpack.c.l.b16 %v2541
      %v2638 = vunpack.c.l.b16 %v2542
      %v2639 = vunpack.c.l.b16 %v2543
      %v2640 = vunpack.c.l.b16 %v2544
      %v2641 = vunpack.c.l.b16 %v2545
      %v2642 = vunpack.c.l.b16 %v2546
      %v2643 = vunpack.c.l.b16 %v2547
      %v2644 = vpack.c.b16 %v2629, %v2628
      %v2645 = vpack.c.b16 %v2631, %v2630
      %v2646 = vpack.c.b16 %v2633, %v2632
      %v2647 = vpack.c.b16 %v2635, %v2634
      %v2648 = vpack.c.b16 %v2637, %v2636
      %v2649 = vpack.c.b16 %v2639, %v2638
      %v2650 = vpack.c.b16 %v2641, %v2640
      %v2651 = vpack.c.b16 %v2643, %v2642
      %2660 = vmatpush.bf16.msra.mxu0 %v2651
      %2661 = vmatpush.bf16.msra.mxu0 %v2650
      %2662 = vmatpush.bf16.msra.mxu0 %v2649
      %2663 = vmatpush.bf16.msra.mxu0 %v2648
      %2664 = vmatpush.bf16.msra.mxu0 %v2647
      %2665 = vmatpush.bf16.msra.mxu0 %v2646
      %2666 = vmatpush.bf16.msra.mxu0 %v2645
      %2667 = vmatpush.bf16.msra.mxu0 %v2644
      %2668 = vmatmul.bf16.gmra.mxu0 %v2580
      %v2669 = vpop.f32.mrf.mxu0
      %v2670 = vadd.f32 0.0, %v2669
      %v2671 = vpop.f32.mrf.mxu0
      %v2672 = vadd.f32 0.0, %v2671
      %2673 = vmatmul.bf16.gmra.mxu0 %v2581
      %v2674 = vpop.f32.mrf.mxu0
      %v2675 = vadd.f32 0.0, %v2674
      %v2676 = vpop.f32.mrf.mxu0
      %v2677 = vadd.f32 0.0, %v2676
      %2678 = vmatmul.bf16.gmra.mxu0 %v2582
      %v2679 = vpop.f32.mrf.mxu0
      %v2680 = vadd.f32 0.0, %v2679
      %v2681 = vpop.f32.mrf.mxu0
      %v2682 = vadd.f32 0.0, %v2681
      %2683 = vmatmul.bf16.gmra.mxu0 %v2583
      %v2684 = vpop.f32.mrf.mxu0
      %v2685 = vadd.f32 0.0, %v2684
      %v2686 = vpop.f32.mrf.mxu0
      %v2687 = vadd.f32 0.0, %v2686
      %2688 = vmatmul.bf16.gmra.mxu0 %v2584
      %v2689 = vpop.f32.mrf.mxu0
      %v2690 = vadd.f32 0.0, %v2689
      %v2691 = vpop.f32.mrf.mxu0
      %v2692 = vadd.f32 0.0, %v2691
      %2693 = vmatmul.bf16.gmra.mxu0 %v2585
      %v2694 = vpop.f32.mrf.mxu0
      %v2695 = vadd.f32 0.0, %v2694
      %v2696 = vpop.f32.mrf.mxu0
      %v2697 = vadd.f32 0.0, %v2696
      %2698 = vmatmul.bf16.gmra.mxu0 %v2586
      %v2699 = vpop.f32.mrf.mxu0
      %v2700 = vadd.f32 0.0, %v2699
      %v2701 = vpop.f32.mrf.mxu0
      %v2702 = vadd.f32 0.0, %v2701
      %2703 = vmatmul.bf16.gmra.mxu0 %v2587
      %v2704 = vpop.f32.mrf.mxu0
      %v2705 = vadd.f32 0.0, %v2704
      %v2706 = vpop.f32.mrf.mxu0
      %v2707 = vadd.f32 0.0, %v2706
      %2708 = vmatmul.bf16.gmra.mxu0 %v2588
      %v2709 = vpop.f32.mrf.mxu0
      %v2710 = vadd.f32 0.0, %v2709
      %v2711 = vpop.f32.mrf.mxu0
      %v2712 = vadd.f32 0.0, %v2711
      %2713 = vmatmul.bf16.gmra.mxu0 %v2589
      %v2714 = vpop.f32.mrf.mxu0
      %v2715 = vadd.f32 0.0, %v2714
      %v2716 = vpop.f32.mrf.mxu0
      %v2717 = vadd.f32 0.0, %v2716
      %2718 = vmatmul.bf16.gmra.mxu0 %v2590
      %v2719 = vpop.f32.mrf.mxu0
      %v2720 = vadd.f32 0.0, %v2719
      %v2721 = vpop.f32.mrf.mxu0
      %v2722 = vadd.f32 0.0, %v2721
      %2723 = vmatmul.bf16.gmra.mxu0 %v2591
      %v2724 = vpop.f32.mrf.mxu0
      %v2725 = vadd.f32 0.0, %v2724
      %v2726 = vpop.f32.mrf.mxu0
      %v2727 = vadd.f32 0.0, %v2726
      %2728 = vmatmul.bf16.gmra.mxu0 %v2592
      %v2729 = vpop.f32.mrf.mxu0
      %v2730 = vadd.f32 0.0, %v2729
      %v2731 = vpop.f32.mrf.mxu0
      %v2732 = vadd.f32 0.0, %v2731
      %2733 = vmatmul.bf16.gmra.mxu0 %v2593
      %v2734 = vpop.f32.mrf.mxu0
      %v2735 = vadd.f32 0.0, %v2734
      %v2736 = vpop.f32.mrf.mxu0
      %v2737 = vadd.f32 0.0, %v2736
      %2738 = vmatmul.bf16.gmra.mxu0 %v2594
      %v2739 = vpop.f32.mrf.mxu0
      %v2740 = vadd.f32 0.0, %v2739
      %v2741 = vpop.f32.mrf.mxu0
      %v2742 = vadd.f32 0.0, %v2741
      %2743 = vmatmul.bf16.gmra.mxu0 %v2595
      %v2744 = vpop.f32.mrf.mxu0
      %v2745 = vadd.f32 0.0, %v2744
      %v2746 = vpop.f32.mrf.mxu0
      %v2747 = vadd.f32 0.0, %v2746
      %2748 = vdwg.mxu0
      %v2749 = vadd.f32 %v2067, %v2670
      %v2750 = vadd.f32 %v2068, %v2672
      %v2751 = vadd.f32 %v2069, %v2675
      %v2752 = vadd.f32 %v2070, %v2677
      %v2753 = vadd.f32 %v2071, %v2680
      %v2754 = vadd.f32 %v2072, %v2682
      %v2755 = vadd.f32 %v2073, %v2685
      %v2756 = vadd.f32 %v2074, %v2687
      %v2757 = vadd.f32 %v2075, %v2690
      %v2758 = vadd.f32 %v2076, %v2692
      %v2759 = vadd.f32 %v2077, %v2695
      %v2760 = vadd.f32 %v2078, %v2697
      %v2761 = vadd.f32 %v2079, %v2700
      %v2762 = vadd.f32 %v2080, %v2702
      %v2763 = vadd.f32 %v2081, %v2705
      %v2764 = vadd.f32 %v2082, %v2707
      %v2765 = vadd.f32 %v2083, %v2710
      %v2766 = vadd.f32 %v2084, %v2712
      %v2767 = vadd.f32 %v2085, %v2715
      %v2768 = vadd.f32 %v2086, %v2717
      %v2769 = vadd.f32 %v2087, %v2720
      %v2770 = vadd.f32 %v2088, %v2722
      %v2771 = vadd.f32 %v2089, %v2725
      %v2772 = vadd.f32 %v2090, %v2727
      %v2773 = vadd.f32 %v2091, %v2730
      %v2774 = vadd.f32 %v2092, %v2732
      %v2775 = vadd.f32 %v2093, %v2735
      %v2776 = vadd.f32 %v2094, %v2737
      %v2777 = vadd.f32 %v2095, %v2740
      %v2778 = vadd.f32 %v2096, %v2742
      %v2779 = vadd.f32 %v2097, %v2745
      %v2780 = vadd.f32 %v2098, %v2747
      %v2781 = vld [vmem:[%s1784] sm:$0xe]
      %v2782 = vld [vmem:[%s1784 + $0xc] sm:$0xe]
      %v2783 = vld [vmem:[%s1784 + $0x18] sm:$0xe]
      %v2784 = vld [vmem:[%s1784 + $0x24] sm:$0xe]
      %v2785 = vld [vmem:[%s1784 + $0x30] sm:$0xe]
      %v2786 = vld [vmem:[%s1784 + $0x3c] sm:$0xe]
      %v2787 = vld [vmem:[%s1784 + $0x48] sm:$0xe]
      %v2788 = vld [vmem:[%s1784 + $0x54] sm:$0xe]
      %v2789 = vld [vmem:[%s1784 + $0x60] sm:$0xe]
      %v2790 = vld [vmem:[%s1784 + $0x6c] sm:$0xe]
      %v2791 = vld [vmem:[%s1784 + $0x78] sm:$0xe]
      %v2792 = vld [vmem:[%s1784 + $0x84] sm:$0xe]
      %v2793 = vld [vmem:[%s1784 + $0x90] sm:$0xe]
      %v2794 = vld [vmem:[%s1784 + $0x9c] sm:$0xe]
      %v2795 = vld [vmem:[%s1784 + $0xa8] sm:$0xe]
      %v2796 = vld [vmem:[%s1784 + $0xb4] sm:$0xe]
      %v2845 = vrot.slane %v2781, 5
      %v2846 = vrot.slane %v2845, 4
      %v2847 = vrot.slane %v2100, 5
      %v2848 = vsel %vm1421, %v2846, %v2847
      %v2849 = vrot.slane %v2847, 4
      %v2850 = vrot.slane %v2101, 5
      %v2851 = vsel %vm1421, %v2849, %v2850
      %v2852 = vrot.slane %v2782, 5
      %v2853 = vrot.slane %v2852, 4
      %v2854 = vrot.slane %v2103, 5
      %v2855 = vsel %vm1421, %v2853, %v2854
      %v2856 = vrot.slane %v2854, 4
      %v2857 = vrot.slane %v2104, 5
      %v2858 = vsel %vm1421, %v2856, %v2857
      %v2859 = vrot.slane %v2783, 5
      %v2860 = vrot.slane %v2859, 4
      %v2861 = vrot.slane %v2106, 5
      %v2862 = vsel %vm1421, %v2860, %v2861
      %v2863 = vrot.slane %v2861, 4
      %v2864 = vrot.slane %v2107, 5
      %v2865 = vsel %vm1421, %v2863, %v2864
      %v2866 = vrot.slane %v2784, 5
      %v2867 = vrot.slane %v2866, 4
      %v2868 = vrot.slane %v2109, 5
      %v2869 = vsel %vm1421, %v2867, %v2868
      %v2870 = vrot.slane %v2868, 4
      %v2871 = vrot.slane %v2110, 5
      %v2872 = vsel %vm1421, %v2870, %v2871
      %v2873 = vrot.slane %v2785, 5
      %v2874 = vrot.slane %v2873, 4
      %v2875 = vrot.slane %v2112, 5
      %v2876 = vsel %vm1421, %v2874, %v2875
      %v2877 = vrot.slane %v2875, 4
      %v2878 = vrot.slane %v2113, 5
      %v2879 = vsel %vm1421, %v2877, %v2878
      %v2880 = vrot.slane %v2786, 5
      %v2881 = vrot.slane %v2880, 4
      %v2882 = vrot.slane %v2115, 5
      %v2883 = vsel %vm1421, %v2881, %v2882
      %v2884 = vrot.slane %v2882, 4
      %v2885 = vrot.slane %v2116, 5
      %v2886 = vsel %vm1421, %v2884, %v2885
      %v2887 = vrot.slane %v2787, 5
      %v2888 = vrot.slane %v2887, 4
      %v2889 = vrot.slane %v2118, 5
      %v2890 = vsel %vm1421, %v2888, %v2889
      %v2891 = vrot.slane %v2889, 4
      %v2892 = vrot.slane %v2119, 5
      %v2893 = vsel %vm1421, %v2891, %v2892
      %v2894 = vrot.slane %v2788, 5
      %v2895 = vrot.slane %v2894, 4
      %v2896 = vrot.slane %v2121, 5
      %v2897 = vsel %vm1421, %v2895, %v2896
      %v2898 = vrot.slane %v2896, 4
      %v2899 = vrot.slane %v2122, 5
      %v2900 = vsel %vm1421, %v2898, %v2899
      %v2901 = vrot.slane %v2789, 5
      %v2902 = vrot.slane %v2901, 4
      %v2903 = vrot.slane %v2124, 5
      %v2904 = vsel %vm1421, %v2902, %v2903
      %v2905 = vrot.slane %v2903, 4
      %v2906 = vrot.slane %v2125, 5
      %v2907 = vsel %vm1421, %v2905, %v2906
      %v2908 = vrot.slane %v2790, 5
      %v2909 = vrot.slane %v2908, 4
      %v2910 = vrot.slane %v2127, 5
      %v2911 = vsel %vm1421, %v2909, %v2910
      %v2912 = vrot.slane %v2910, 4
      %v2913 = vrot.slane %v2128, 5
      %v2914 = vsel %vm1421, %v2912, %v2913
      %v2915 = vrot.slane %v2791, 5
      %v2916 = vrot.slane %v2915, 4
      %v2917 = vrot.slane %v2130, 5
      %v2918 = vsel %vm1421, %v2916, %v2917
      %v2919 = vrot.slane %v2917, 4
      %v2920 = vrot.slane %v2131, 5
      %v2921 = vsel %vm1421, %v2919, %v2920
      %v2922 = vrot.slane %v2792, 5
      %v2923 = vrot.slane %v2922, 4
      %v2924 = vrot.slane %v2133, 5
      %v2925 = vsel %vm1421, %v2923, %v2924
      %v2926 = vrot.slane %v2924, 4
      %v2927 = vrot.slane %v2134, 5
      %v2928 = vsel %vm1421, %v2926, %v2927
      %v2929 = vrot.slane %v2793, 5
      %v2930 = vrot.slane %v2929, 4
      %v2931 = vrot.slane %v2136, 5
      %v2932 = vsel %vm1421, %v2930, %v2931
      %v2933 = vrot.slane %v2931, 4
      %v2934 = vrot.slane %v2137, 5
      %v2935 = vsel %vm1421, %v2933, %v2934
      %v2936 = vrot.slane %v2794, 5
      %v2937 = vrot.slane %v2936, 4
      %v2938 = vrot.slane %v2139, 5
      %v2939 = vsel %vm1421, %v2937, %v2938
      %v2940 = vrot.slane %v2938, 4
      %v2941 = vrot.slane %v2140, 5
      %v2942 = vsel %vm1421, %v2940, %v2941
      %v2943 = vrot.slane %v2795, 5
      %v2944 = vrot.slane %v2943, 4
      %v2945 = vrot.slane %v2142, 5
      %v2946 = vsel %vm1421, %v2944, %v2945
      %v2947 = vrot.slane %v2945, 4
      %v2948 = vrot.slane %v2143, 5
      %v2949 = vsel %vm1421, %v2947, %v2948
      %v2950 = vrot.slane %v2796, 5
      %v2951 = vrot.slane %v2950, 4
      %v2952 = vrot.slane %v2145, 5
      %v2953 = vsel %vm1421, %v2951, %v2952
      %v2954 = vrot.slane %v2952, 4
      %v2955 = vrot.slane %v2146, 5
      %v2956 = vsel %vm1421, %v2954, %v2955
      %s2957 = scalar_lea.vmem %s273, 320
      %v2958 = vld [vmem:[%s2957] sm:$0xf]
      %v2959 = vld [vmem:[%s2957 + $0x4] sm:$0xf]
      %v2960 = vld [vmem:[%s2957 + $0x8] sm:$0xf]
      %v2961 = vld [vmem:[%s2957 + $0xc] sm:$0xf]
      %v2962 = vld [vmem:[%s2957 + $0x10] sm:$0xf]
      %v2963 = vld [vmem:[%s2957 + $0x14] sm:$0xf]
      %v2964 = vld [vmem:[%s2957 + $0x18] sm:$0xf]
      %v2965 = vld [vmem:[%s2957 + $0x1c] sm:$0xf]
      %v2966 = vld [vmem:[%s2957 + $0x20] sm:$0xf]
      %v2967 = vld [vmem:[%s2957 + $0x24] sm:$0xf]
      %v2968 = vld [vmem:[%s2957 + $0x28] sm:$0xf]
      %v2969 = vld [vmem:[%s2957 + $0x2c] sm:$0xf]
      %v2970 = vld [vmem:[%s2957 + $0x30] sm:$0xf]
      %v2971 = vld [vmem:[%s2957 + $0x34] sm:$0xf]
      %v2972 = vld [vmem:[%s2957 + $0x38] sm:$0xf]
      %v2973 = vld [vmem:[%s2957 + $0x3c] sm:$0xf]
      %v2974 = vunpack.c.l.b16 %v2848
      %v2975 = vunpack.c.l.b16 %v2851
      %v2976 = vunpack.c.l.b16 %v2855
      %v2977 = vunpack.c.l.b16 %v2858
      %v2978 = vunpack.c.l.b16 %v2862
      %v2979 = vunpack.c.l.b16 %v2865
      %v2980 = vunpack.c.l.b16 %v2869
      %v2981 = vunpack.c.l.b16 %v2872
      %v2982 = vunpack.c.l.b16 %v2876
      %v2983 = vunpack.c.l.b16 %v2879
      %v2984 = vunpack.c.l.b16 %v2883
      %v2985 = vunpack.c.l.b16 %v2886
      %v2986 = vunpack.c.l.b16 %v2890
      %v2987 = vunpack.c.l.b16 %v2893
      %v2988 = vunpack.c.l.b16 %v2897
      %v2989 = vunpack.c.l.b16 %v2900
      %v2990 = vunpack.c.l.b16 %v2904
      %v2991 = vunpack.c.l.b16 %v2907
      %v2992 = vunpack.c.l.b16 %v2911
      %v2993 = vunpack.c.l.b16 %v2914
      %v2994 = vunpack.c.l.b16 %v2918
      %v2995 = vunpack.c.l.b16 %v2921
      %v2996 = vunpack.c.l.b16 %v2925
      %v2997 = vunpack.c.l.b16 %v2928
      %v2998 = vunpack.c.l.b16 %v2932
      %v2999 = vunpack.c.l.b16 %v2935
      %v3000 = vunpack.c.l.b16 %v2939
      %v3001 = vunpack.c.l.b16 %v2942
      %v3002 = vunpack.c.l.b16 %v2946
      %v3003 = vunpack.c.l.b16 %v2949
      %v3004 = vunpack.c.l.b16 %v2953
      %v3005 = vunpack.c.l.b16 %v2956
      %v3006 = vpack.c.b16 %v2975, %v2974
      %v3007 = vpack.c.b16 %v2977, %v2976
      %v3008 = vpack.c.b16 %v2979, %v2978
      %v3009 = vpack.c.b16 %v2981, %v2980
      %v3010 = vpack.c.b16 %v2983, %v2982
      %v3011 = vpack.c.b16 %v2985, %v2984
      %v3012 = vpack.c.b16 %v2987, %v2986
      %v3013 = vpack.c.b16 %v2989, %v2988
      %v3014 = vpack.c.b16 %v2991, %v2990
      %v3015 = vpack.c.b16 %v2993, %v2992
      %v3016 = vpack.c.b16 %v2995, %v2994
      %v3017 = vpack.c.b16 %v2997, %v2996
      %v3018 = vpack.c.b16 %v2999, %v2998
      %v3019 = vpack.c.b16 %v3001, %v3000
      %v3020 = vpack.c.b16 %v3003, %v3002
      %v3021 = vpack.c.b16 %v3005, %v3004
      %v3054 = vunpack.c.l.b16 %v2958
      %v3055 = vunpack.c.l.b16 %v2959
      %v3056 = vunpack.c.l.b16 %v2960
      %v3057 = vunpack.c.l.b16 %v2961
      %v3058 = vunpack.c.l.b16 %v2962
      %v3059 = vunpack.c.l.b16 %v2963
      %v3060 = vunpack.c.l.b16 %v2964
      %v3061 = vunpack.c.l.b16 %v2965
      %v3062 = vunpack.c.l.b16 %v2966
      %v3063 = vunpack.c.l.b16 %v2967
      %v3064 = vunpack.c.l.b16 %v2968
      %v3065 = vunpack.c.l.b16 %v2969
      %v3066 = vunpack.c.l.b16 %v2970
      %v3067 = vunpack.c.l.b16 %v2971
      %v3068 = vunpack.c.l.b16 %v2972
      %v3069 = vunpack.c.l.b16 %v2973
      %v3070 = vpack.c.b16 %v3055, %v3054
      %v3071 = vpack.c.b16 %v3057, %v3056
      %v3072 = vpack.c.b16 %v3059, %v3058
      %v3073 = vpack.c.b16 %v3061, %v3060
      %v3074 = vpack.c.b16 %v3063, %v3062
      %v3075 = vpack.c.b16 %v3065, %v3064
      %v3076 = vpack.c.b16 %v3067, %v3066
      %v3077 = vpack.c.b16 %v3069, %v3068
      %3086 = vmatpush.bf16.msra.mxu0 %v3077
      %3087 = vmatpush.bf16.msra.mxu0 %v3076
      %3088 = vmatpush.bf16.msra.mxu0 %v3075
      %3089 = vmatpush.bf16.msra.mxu0 %v3074
      %3090 = vmatpush.bf16.msra.mxu0 %v3073
      %3091 = vmatpush.bf16.msra.mxu0 %v3072
      %3092 = vmatpush.bf16.msra.mxu0 %v3071
      %3093 = vmatpush.bf16.msra.mxu0 %v3070
      %3094 = vmatmul.bf16.gmra.mxu0 %v3006
      %v3095 = vpop.f32.mrf.mxu0
      %v3096 = vadd.f32 0.0, %v3095
      %v3097 = vpop.f32.mrf.mxu0
      %v3098 = vadd.f32 0.0, %v3097
      %3099 = vmatmul.bf16.gmra.mxu0 %v3007
      %v3100 = vpop.f32.mrf.mxu0
      %v3101 = vadd.f32 0.0, %v3100
      %v3102 = vpop.f32.mrf.mxu0
      %v3103 = vadd.f32 0.0, %v3102
      %3104 = vmatmul.bf16.gmra.mxu0 %v3008
      %v3105 = vpop.f32.mrf.mxu0
      %v3106 = vadd.f32 0.0, %v3105
      %v3107 = vpop.f32.mrf.mxu0
      %v3108 = vadd.f32 0.0, %v3107
      %3109 = vmatmul.bf16.gmra.mxu0 %v3009
      %v3110 = vpop.f32.mrf.mxu0
      %v3111 = vadd.f32 0.0, %v3110
      %v3112 = vpop.f32.mrf.mxu0
      %v3113 = vadd.f32 0.0, %v3112
      %3114 = vmatmul.bf16.gmra.mxu0 %v3010
      %v3115 = vpop.f32.mrf.mxu0
      %v3116 = vadd.f32 0.0, %v3115
      %v3117 = vpop.f32.mrf.mxu0
      %v3118 = vadd.f32 0.0, %v3117
      %3119 = vmatmul.bf16.gmra.mxu0 %v3011
      %v3120 = vpop.f32.mrf.mxu0
      %v3121 = vadd.f32 0.0, %v3120
      %v3122 = vpop.f32.mrf.mxu0
      %v3123 = vadd.f32 0.0, %v3122
      %3124 = vmatmul.bf16.gmra.mxu0 %v3012
      %v3125 = vpop.f32.mrf.mxu0
      %v3126 = vadd.f32 0.0, %v3125
      %v3127 = vpop.f32.mrf.mxu0
      %v3128 = vadd.f32 0.0, %v3127
      %3129 = vmatmul.bf16.gmra.mxu0 %v3013
      %v3130 = vpop.f32.mrf.mxu0
      %v3131 = vadd.f32 0.0, %v3130
      %v3132 = vpop.f32.mrf.mxu0
      %v3133 = vadd.f32 0.0, %v3132
      %3134 = vmatmul.bf16.gmra.mxu0 %v3014
      %v3135 = vpop.f32.mrf.mxu0
      %v3136 = vadd.f32 0.0, %v3135
      %v3137 = vpop.f32.mrf.mxu0
      %v3138 = vadd.f32 0.0, %v3137
      %3139 = vmatmul.bf16.gmra.mxu0 %v3015
      %v3140 = vpop.f32.mrf.mxu0
      %v3141 = vadd.f32 0.0, %v3140
      %v3142 = vpop.f32.mrf.mxu0
      %v3143 = vadd.f32 0.0, %v3142
      %3144 = vmatmul.bf16.gmra.mxu0 %v3016
      %v3145 = vpop.f32.mrf.mxu0
      %v3146 = vadd.f32 0.0, %v3145
      %v3147 = vpop.f32.mrf.mxu0
      %v3148 = vadd.f32 0.0, %v3147
      %3149 = vmatmul.bf16.gmra.mxu0 %v3017
      %v3150 = vpop.f32.mrf.mxu0
      %v3151 = vadd.f32 0.0, %v3150
      %v3152 = vpop.f32.mrf.mxu0
      %v3153 = vadd.f32 0.0, %v3152
      %3154 = vmatmul.bf16.gmra.mxu0 %v3018
      %v3155 = vpop.f32.mrf.mxu0
      %v3156 = vadd.f32 0.0, %v3155
      %v3157 = vpop.f32.mrf.mxu0
      %v3158 = vadd.f32 0.0, %v3157
      %3159 = vmatmul.bf16.gmra.mxu0 %v3019
      %v3160 = vpop.f32.mrf.mxu0
      %v3161 = vadd.f32 0.0, %v3160
      %v3162 = vpop.f32.mrf.mxu0
      %v3163 = vadd.f32 0.0, %v3162
      %3164 = vmatmul.bf16.gmra.mxu0 %v3020
      %v3165 = vpop.f32.mrf.mxu0
      %v3166 = vadd.f32 0.0, %v3165
      %v3167 = vpop.f32.mrf.mxu0
      %v3168 = vadd.f32 0.0, %v3167
      %3169 = vmatmul.bf16.gmra.mxu0 %v3021
      %v3170 = vpop.f32.mrf.mxu0
      %v3171 = vadd.f32 0.0, %v3170
      %v3172 = vpop.f32.mrf.mxu0
      %v3173 = vadd.f32 0.0, %v3172
      %3174 = vdwg.mxu0
      %v3175 = vadd.f32 %v2749, %v3096
      %v3176 = vadd.f32 %v2750, %v3098
      %v3177 = vadd.f32 %v2751, %v3101
      %v3178 = vadd.f32 %v2752, %v3103
      %v3179 = vadd.f32 %v2753, %v3106
      %v3180 = vadd.f32 %v2754, %v3108
      %v3181 = vadd.f32 %v2755, %v3111
      %v3182 = vadd.f32 %v2756, %v3113
      %v3183 = vadd.f32 %v2757, %v3116
      %v3184 = vadd.f32 %v2758, %v3118
      %v3185 = vadd.f32 %v2759, %v3121
      %v3186 = vadd.f32 %v2760, %v3123
      %v3187 = vadd.f32 %v2761, %v3126
      %v3188 = vadd.f32 %v2762, %v3128
      %v3189 = vadd.f32 %v2763, %v3131
      %v3190 = vadd.f32 %v2764, %v3133
      %v3191 = vadd.f32 %v2765, %v3136
      %v3192 = vadd.f32 %v2766, %v3138
      %v3193 = vadd.f32 %v2767, %v3141
      %v3194 = vadd.f32 %v2768, %v3143
      %v3195 = vadd.f32 %v2769, %v3146
      %v3196 = vadd.f32 %v2770, %v3148
      %v3197 = vadd.f32 %v2771, %v3151
      %v3198 = vadd.f32 %v2772, %v3153
      %v3199 = vadd.f32 %v2773, %v3156
      %v3200 = vadd.f32 %v2774, %v3158
      %v3201 = vadd.f32 %v2775, %v3161
      %v3202 = vadd.f32 %v2776, %v3163
      %v3203 = vadd.f32 %v2777, %v3166
      %v3204 = vadd.f32 %v2778, %v3168
      %v3205 = vadd.f32 %v2779, %v3171
      %v3206 = vadd.f32 %v2780, %v3173
      %s3207 = scalar_lea.vmem %s267, 24
      %v3208 = vld [vmem:[%s3207] sm:$0xf]
      %v3209 = vld [vmem:[%s3207 + $0x4] sm:$0xf]
      %v3210 = vld [vmem:[%s3207 + $0xc] sm:$0xf]
      %v3211 = vld [vmem:[%s3207 + $0x10] sm:$0xf]
      %v3212 = vld [vmem:[%s3207 + $0x18] sm:$0xf]
      %v3213 = vld [vmem:[%s3207 + $0x1c] sm:$0xf]
      %v3214 = vld [vmem:[%s3207 + $0x24] sm:$0xf]
      %v3215 = vld [vmem:[%s3207 + $0x28] sm:$0xf]
      %v3216 = vld [vmem:[%s3207 + $0x30] sm:$0xf]
      %v3217 = vld [vmem:[%s3207 + $0x34] sm:$0xf]
      %v3218 = vld [vmem:[%s3207 + $0x3c] sm:$0xf]
      %v3219 = vld [vmem:[%s3207 + $0x40] sm:$0xf]
      %v3220 = vld [vmem:[%s3207 + $0x48] sm:$0xf]
      %v3221 = vld [vmem:[%s3207 + $0x4c] sm:$0xf]
      %v3222 = vld [vmem:[%s3207 + $0x54] sm:$0xf]
      %v3223 = vld [vmem:[%s3207 + $0x58] sm:$0xf]
      %v3224 = vld [vmem:[%s3207 + $0x60] sm:$0xf]
      %v3225 = vld [vmem:[%s3207 + $0x64] sm:$0xf]
      %v3226 = vld [vmem:[%s3207 + $0x6c] sm:$0xf]
      %v3227 = vld [vmem:[%s3207 + $0x70] sm:$0xf]
      %v3228 = vld [vmem:[%s3207 + $0x78] sm:$0xf]
      %v3229 = vld [vmem:[%s3207 + $0x7c] sm:$0xf]
      %v3230 = vld [vmem:[%s3207 + $0x84] sm:$0xf]
      %v3231 = vld [vmem:[%s3207 + $0x88] sm:$0xf]
      %v3232 = vld [vmem:[%s3207 + $0x90] sm:$0xf]
      %v3233 = vld [vmem:[%s3207 + $0x94] sm:$0xf]
      %v3234 = vld [vmem:[%s3207 + $0x9c] sm:$0xf]
      %v3235 = vld [vmem:[%s3207 + $0xa0] sm:$0xf]
      %v3236 = vld [vmem:[%s3207 + $0xa8] sm:$0xf]
      %v3237 = vld [vmem:[%s3207 + $0xac] sm:$0xf]
      %v3238 = vld [vmem:[%s3207 + $0xb4] sm:$0xf]
      %v3239 = vld [vmem:[%s3207 + $0xb8] sm:$0xf]
      %s3240 = scalar_lea.vmem %s273, 384
      %v3241 = vld [vmem:[%s3240] sm:$0xf]
      %v3242 = vld [vmem:[%s3240 + $0x4] sm:$0xf]
      %v3243 = vld [vmem:[%s3240 + $0x8] sm:$0xf]
      %v3244 = vld [vmem:[%s3240 + $0xc] sm:$0xf]
      %v3245 = vld [vmem:[%s3240 + $0x10] sm:$0xf]
      %v3246 = vld [vmem:[%s3240 + $0x14] sm:$0xf]
      %v3247 = vld [vmem:[%s3240 + $0x18] sm:$0xf]
      %v3248 = vld [vmem:[%s3240 + $0x1c] sm:$0xf]
      %v3249 = vld [vmem:[%s3240 + $0x20] sm:$0xf]
      %v3250 = vld [vmem:[%s3240 + $0x24] sm:$0xf]
      %v3251 = vld [vmem:[%s3240 + $0x28] sm:$0xf]
      %v3252 = vld [vmem:[%s3240 + $0x2c] sm:$0xf]
      %v3253 = vld [vmem:[%s3240 + $0x30] sm:$0xf]
      %v3254 = vld [vmem:[%s3240 + $0x34] sm:$0xf]
      %v3255 = vld [vmem:[%s3240 + $0x38] sm:$0xf]
      %v3256 = vld [vmem:[%s3240 + $0x3c] sm:$0xf]
      %v3289 = vunpack.c.l.b16 %v3208
      %v3290 = vunpack.c.l.b16 %v3209
      %v3291 = vunpack.c.l.b16 %v3210
      %v3292 = vunpack.c.l.b16 %v3211
      %v3293 = vunpack.c.l.b16 %v3212
      %v3294 = vunpack.c.l.b16 %v3213
      %v3295 = vunpack.c.l.b16 %v3214
      %v3296 = vunpack.c.l.b16 %v3215
      %v3297 = vunpack.c.l.b16 %v3216
      %v3298 = vunpack.c.l.b16 %v3217
      %v3299 = vunpack.c.l.b16 %v3218
      %v3300 = vunpack.c.l.b16 %v3219
      %v3301 = vunpack.c.l.b16 %v3220
      %v3302 = vunpack.c.l.b16 %v3221
      %v3303 = vunpack.c.l.b16 %v3222
      %v3304 = vunpack.c.l.b16 %v3223
      %v3305 = vunpack.c.l.b16 %v3224
      %v3306 = vunpack.c.l.b16 %v3225
      %v3307 = vunpack.c.l.b16 %v3226
      %v3308 = vunpack.c.l.b16 %v3227
      %v3309 = vunpack.c.l.b16 %v3228
      %v3310 = vunpack.c.l.b16 %v3229
      %v3311 = vunpack.c.l.b16 %v3230
      %v3312 = vunpack.c.l.b16 %v3231
      %v3313 = vunpack.c.l.b16 %v3232
      %v3314 = vunpack.c.l.b16 %v3233
      %v3315 = vunpack.c.l.b16 %v3234
      %v3316 = vunpack.c.l.b16 %v3235
      %v3317 = vunpack.c.l.b16 %v3236
      %v3318 = vunpack.c.l.b16 %v3237
      %v3319 = vunpack.c.l.b16 %v3238
      %v3320 = vunpack.c.l.b16 %v3239
      %v3321 = vpack.c.b16 %v3290, %v3289
      %v3322 = vpack.c.b16 %v3292, %v3291
      %v3323 = vpack.c.b16 %v3294, %v3293
      %v3324 = vpack.c.b16 %v3296, %v3295
      %v3325 = vpack.c.b16 %v3298, %v3297
      %v3326 = vpack.c.b16 %v3300, %v3299
      %v3327 = vpack.c.b16 %v3302, %v3301
      %v3328 = vpack.c.b16 %v3304, %v3303
      %v3329 = vpack.c.b16 %v3306, %v3305
      %v3330 = vpack.c.b16 %v3308, %v3307
      %v3331 = vpack.c.b16 %v3310, %v3309
      %v3332 = vpack.c.b16 %v3312, %v3311
      %v3333 = vpack.c.b16 %v3314, %v3313
      %v3334 = vpack.c.b16 %v3316, %v3315
      %v3335 = vpack.c.b16 %v3318, %v3317
      %v3336 = vpack.c.b16 %v3320, %v3319
      %v3369 = vunpack.c.l.b16 %v3241
      %v3370 = vunpack.c.l.b16 %v3242
      %v3371 = vunpack.c.l.b16 %v3243
      %v3372 = vunpack.c.l.b16 %v3244
      %v3373 = vunpack.c.l.b16 %v3245
      %v3374 = vunpack.c.l.b16 %v3246
      %v3375 = vunpack.c.l.b16 %v3247
      %v3376 = vunpack.c.l.b16 %v3248
      %v3377 = vunpack.c.l.b16 %v3249
      %v3378 = vunpack.c.l.b16 %v3250
      %v3379 = vunpack.c.l.b16 %v3251
      %v3380 = vunpack.c.l.b16 %v3252
      %v3381 = vunpack.c.l.b16 %v3253
      %v3382 = vunpack.c.l.b16 %v3254
      %v3383 = vunpack.c.l.b16 %v3255
      %v3384 = vunpack.c.l.b16 %v3256
      %v3385 = vpack.c.b16 %v3370, %v3369
      %v3386 = vpack.c.b16 %v3372, %v3371
      %v3387 = vpack.c.b16 %v3374, %v3373
      %v3388 = vpack.c.b16 %v3376, %v3375
      %v3389 = vpack.c.b16 %v3378, %v3377
      %v3390 = vpack.c.b16 %v3380, %v3379
      %v3391 = vpack.c.b16 %v3382, %v3381
      %v3392 = vpack.c.b16 %v3384, %v3383
      %3401 = vmatpush.bf16.msra.mxu0 %v3392
      %3402 = vmatpush.bf16.msra.mxu0 %v3391
      %3403 = vmatpush.bf16.msra.mxu0 %v3390
      %3404 = vmatpush.bf16.msra.mxu0 %v3389
      %3405 = vmatpush.bf16.msra.mxu0 %v3388
      %3406 = vmatpush.bf16.msra.mxu0 %v3387
      %3407 = vmatpush.bf16.msra.mxu0 %v3386
      %3408 = vmatpush.bf16.msra.mxu0 %v3385
      %3409 = vmatmul.bf16.gmra.mxu0 %v3321
      %v3410 = vpop.f32.mrf.mxu0
      %v3411 = vadd.f32 0.0, %v3410
      %v3412 = vpop.f32.mrf.mxu0
      %v3413 = vadd.f32 0.0, %v3412
      %3414 = vmatmul.bf16.gmra.mxu0 %v3322
      %v3415 = vpop.f32.mrf.mxu0
      %v3416 = vadd.f32 0.0, %v3415
      %v3417 = vpop.f32.mrf.mxu0
      %v3418 = vadd.f32 0.0, %v3417
      %3419 = vmatmul.bf16.gmra.mxu0 %v3323
      %v3420 = vpop.f32.mrf.mxu0
      %v3421 = vadd.f32 0.0, %v3420
      %v3422 = vpop.f32.mrf.mxu0
      %v3423 = vadd.f32 0.0, %v3422
      %3424 = vmatmul.bf16.gmra.mxu0 %v3324
      %v3425 = vpop.f32.mrf.mxu0
      %v3426 = vadd.f32 0.0, %v3425
      %v3427 = vpop.f32.mrf.mxu0
      %v3428 = vadd.f32 0.0, %v3427
      %3429 = vmatmul.bf16.gmra.mxu0 %v3325
      %v3430 = vpop.f32.mrf.mxu0
      %v3431 = vadd.f32 0.0, %v3430
      %v3432 = vpop.f32.mrf.mxu0
      %v3433 = vadd.f32 0.0, %v3432
      %3434 = vmatmul.bf16.gmra.mxu0 %v3326
      %v3435 = vpop.f32.mrf.mxu0
      %v3436 = vadd.f32 0.0, %v3435
      %v3437 = vpop.f32.mrf.mxu0
      %v3438 = vadd.f32 0.0, %v3437
      %3439 = vmatmul.bf16.gmra.mxu0 %v3327
      %v3440 = vpop.f32.mrf.mxu0
      %v3441 = vadd.f32 0.0, %v3440
      %v3442 = vpop.f32.mrf.mxu0
      %v3443 = vadd.f32 0.0, %v3442
      %3444 = vmatmul.bf16.gmra.mxu0 %v3328
      %v3445 = vpop.f32.mrf.mxu0
      %v3446 = vadd.f32 0.0, %v3445
      %v3447 = vpop.f32.mrf.mxu0
      %v3448 = vadd.f32 0.0, %v3447
      %3449 = vmatmul.bf16.gmra.mxu0 %v3329
      %v3450 = vpop.f32.mrf.mxu0
      %v3451 = vadd.f32 0.0, %v3450
      %v3452 = vpop.f32.mrf.mxu0
      %v3453 = vadd.f32 0.0, %v3452
      %3454 = vmatmul.bf16.gmra.mxu0 %v3330
      %v3455 = vpop.f32.mrf.mxu0
      %v3456 = vadd.f32 0.0, %v3455
      %v3457 = vpop.f32.mrf.mxu0
      %v3458 = vadd.f32 0.0, %v3457
      %3459 = vmatmul.bf16.gmra.mxu0 %v3331
      %v3460 = vpop.f32.mrf.mxu0
      %v3461 = vadd.f32 0.0, %v3460
      %v3462 = vpop.f32.mrf.mxu0
      %v3463 = vadd.f32 0.0, %v3462
      %3464 = vmatmul.bf16.gmra.mxu0 %v3332
      %v3465 = vpop.f32.mrf.mxu0
      %v3466 = vadd.f32 0.0, %v3465
      %v3467 = vpop.f32.mrf.mxu0
      %v3468 = vadd.f32 0.0, %v3467
      %3469 = vmatmul.bf16.gmra.mxu0 %v3333
      %v3470 = vpop.f32.mrf.mxu0
      %v3471 = vadd.f32 0.0, %v3470
      %v3472 = vpop.f32.mrf.mxu0
      %v3473 = vadd.f32 0.0, %v3472
      %3474 = vmatmul.bf16.gmra.mxu0 %v3334
      %v3475 = vpop.f32.mrf.mxu0
      %v3476 = vadd.f32 0.0, %v3475
      %v3477 = vpop.f32.mrf.mxu0
      %v3478 = vadd.f32 0.0, %v3477
      %3479 = vmatmul.bf16.gmra.mxu0 %v3335
      %v3480 = vpop.f32.mrf.mxu0
      %v3481 = vadd.f32 0.0, %v3480
      %v3482 = vpop.f32.mrf.mxu0
      %v3483 = vadd.f32 0.0, %v3482
      %3484 = vmatmul.bf16.gmra.mxu0 %v3336
      %v3485 = vpop.f32.mrf.mxu0
      %v3486 = vadd.f32 0.0, %v3485
      %v3487 = vpop.f32.mrf.mxu0
      %v3488 = vadd.f32 0.0, %v3487
      %3489 = vdwg.mxu0
      %v3490 = vadd.f32 %v3175, %v3411
      %v3491 = vadd.f32 %v3176, %v3413
      %v3492 = vadd.f32 %v3177, %v3416
      %v3493 = vadd.f32 %v3178, %v3418
      %v3494 = vadd.f32 %v3179, %v3421
      %v3495 = vadd.f32 %v3180, %v3423
      %v3496 = vadd.f32 %v3181, %v3426
      %v3497 = vadd.f32 %v3182, %v3428
      %v3498 = vadd.f32 %v3183, %v3431
      %v3499 = vadd.f32 %v3184, %v3433
      %v3500 = vadd.f32 %v3185, %v3436
      %v3501 = vadd.f32 %v3186, %v3438
      %v3502 = vadd.f32 %v3187, %v3441
      %v3503 = vadd.f32 %v3188, %v3443
      %v3504 = vadd.f32 %v3189, %v3446
      %v3505 = vadd.f32 %v3190, %v3448
      %v3506 = vadd.f32 %v3191, %v3451
      %v3507 = vadd.f32 %v3192, %v3453
      %v3508 = vadd.f32 %v3193, %v3456
      %v3509 = vadd.f32 %v3194, %v3458
      %v3510 = vadd.f32 %v3195, %v3461
      %v3511 = vadd.f32 %v3196, %v3463
      %v3512 = vadd.f32 %v3197, %v3466
      %v3513 = vadd.f32 %v3198, %v3468
      %v3514 = vadd.f32 %v3199, %v3471
      %v3515 = vadd.f32 %v3200, %v3473
      %v3516 = vadd.f32 %v3201, %v3476
      %v3517 = vadd.f32 %v3202, %v3478
      %v3518 = vadd.f32 %v3203, %v3481
      %v3519 = vadd.f32 %v3204, %v3483
      %v3520 = vadd.f32 %v3205, %v3486
      %v3521 = vadd.f32 %v3206, %v3488
      %v3522 = vld [vmem:[%s3207] sm:$0xf]
      %v3523 = vld [vmem:[%s3207 + $0x4] sm:$0xf]
      %v3524 = vld [vmem:[%s3207 + $0x8] sm:$0x1]
      %v3525 = vld [vmem:[%s3207 + $0xc] sm:$0xf]
      %v3526 = vld [vmem:[%s3207 + $0x10] sm:$0xf]
      %v3527 = vld [vmem:[%s3207 + $0x14] sm:$0x1]
      %v3528 = vld [vmem:[%s3207 + $0x18] sm:$0xf]
      %v3529 = vld [vmem:[%s3207 + $0x1c] sm:$0xf]
      %v3530 = vld [vmem:[%s3207 + $0x20] sm:$0x1]
      %v3531 = vld [vmem:[%s3207 + $0x24] sm:$0xf]
      %v3532 = vld [vmem:[%s3207 + $0x28] sm:$0xf]
      %v3533 = vld [vmem:[%s3207 + $0x2c] sm:$0x1]
      %v3534 = vld [vmem:[%s3207 + $0x30] sm:$0xf]
      %v3535 = vld [vmem:[%s3207 + $0x34] sm:$0xf]
      %v3536 = vld [vmem:[%s3207 + $0x38] sm:$0x1]
      %v3537 = vld [vmem:[%s3207 + $0x3c] sm:$0xf]
      %v3538 = vld [vmem:[%s3207 + $0x40] sm:$0xf]
      %v3539 = vld [vmem:[%s3207 + $0x44] sm:$0x1]
      %v3540 = vld [vmem:[%s3207 + $0x48] sm:$0xf]
      %v3541 = vld [vmem:[%s3207 + $0x4c] sm:$0xf]
      %v3542 = vld [vmem:[%s3207 + $0x50] sm:$0x1]
      %v3543 = vld [vmem:[%s3207 + $0x54] sm:$0xf]
      %v3544 = vld [vmem:[%s3207 + $0x58] sm:$0xf]
      %v3545 = vld [vmem:[%s3207 + $0x5c] sm:$0x1]
      %v3546 = vld [vmem:[%s3207 + $0x60] sm:$0xf]
      %v3547 = vld [vmem:[%s3207 + $0x64] sm:$0xf]
      %v3548 = vld [vmem:[%s3207 + $0x68] sm:$0x1]
      %v3549 = vld [vmem:[%s3207 + $0x6c] sm:$0xf]
      %v3550 = vld [vmem:[%s3207 + $0x70] sm:$0xf]
      %v3551 = vld [vmem:[%s3207 + $0x74] sm:$0x1]
      %v3552 = vld [vmem:[%s3207 + $0x78] sm:$0xf]
      %v3553 = vld [vmem:[%s3207 + $0x7c] sm:$0xf]
      %v3554 = vld [vmem:[%s3207 + $0x80] sm:$0x1]
      %v3555 = vld [vmem:[%s3207 + $0x84] sm:$0xf]
      %v3556 = vld [vmem:[%s3207 + $0x88] sm:$0xf]
      %v3557 = vld [vmem:[%s3207 + $0x8c] sm:$0x1]
      %v3558 = vld [vmem:[%s3207 + $0x90] sm:$0xf]
      %v3559 = vld [vmem:[%s3207 + $0x94] sm:$0xf]
      %v3560 = vld [vmem:[%s3207 + $0x98] sm:$0x1]
      %v3561 = vld [vmem:[%s3207 + $0x9c] sm:$0xf]
      %v3562 = vld [vmem:[%s3207 + $0xa0] sm:$0xf]
      %v3563 = vld [vmem:[%s3207 + $0xa4] sm:$0x1]
      %v3564 = vld [vmem:[%s3207 + $0xa8] sm:$0xf]
      %v3565 = vld [vmem:[%s3207 + $0xac] sm:$0xf]
      %v3566 = vld [vmem:[%s3207 + $0xb0] sm:$0x1]
      %v3567 = vld [vmem:[%s3207 + $0xb4] sm:$0xf]
      %v3568 = vld [vmem:[%s3207 + $0xb8] sm:$0xf]
      %v3569 = vld [vmem:[%s3207 + $0xbc] sm:$0x1]
      %v3571 = vshrl.u32 %v3522, 16
      %v3573 = vrot.slane %v3571, 4
      %v3574 = vshll.u32 %v3522, 16
      %v3576 = vrot.slane %v3574, 5
      %v3577 = vor.u32 %v3573, %v3576
      %v3578 = vrot.slane %v3577, 4
      %v3580 = vshll.u32 %v3523, 16
      %v3582 = vrot.slane %v3580, 5
      %v3583 = vsel %vm720, %v3578, %v3582
      %v3584 = vshrl.u32 %v3523, 16
      %v3586 = vrot.slane %v3584, 4
      %v3587 = vor.u32 %v3586, %v3582
      %v3588 = vrot.slane %v3587, 4
      %v3590 = vshll.u32 %v3524, 16
      %v3592 = vrot.slane %v3590, 5
      %v3593 = vsel %vm720, %v3588, %v3592
      %v3595 = vshrl.u32 %v3525, 16
      %v3597 = vrot.slane %v3595, 4
      %v3598 = vshll.u32 %v3525, 16
      %v3600 = vrot.slane %v3598, 5
      %v3601 = vor.u32 %v3597, %v3600
      %v3602 = vrot.slane %v3601, 4
      %v3604 = vshll.u32 %v3526, 16
      %v3606 = vrot.slane %v3604, 5
      %v3607 = vsel %vm720, %v3602, %v3606
      %v3608 = vshrl.u32 %v3526, 16
      %v3610 = vrot.slane %v3608, 4
      %v3611 = vor.u32 %v3610, %v3606
      %v3612 = vrot.slane %v3611, 4
      %v3614 = vshll.u32 %v3527, 16
      %v3616 = vrot.slane %v3614, 5
      %v3617 = vsel %vm720, %v3612, %v3616
      %v3619 = vshrl.u32 %v3528, 16
      %v3621 = vrot.slane %v3619, 4
      %v3622 = vshll.u32 %v3528, 16
      %v3624 = vrot.slane %v3622, 5
      %v3625 = vor.u32 %v3621, %v3624
      %v3626 = vrot.slane %v3625, 4
      %v3628 = vshll.u32 %v3529, 16
      %v3630 = vrot.slane %v3628, 5
      %v3631 = vsel %vm720, %v3626, %v3630
      %v3632 = vshrl.u32 %v3529, 16
      %v3634 = vrot.slane %v3632, 4
      %v3635 = vor.u32 %v3634, %v3630
      %v3636 = vrot.slane %v3635, 4
      %v3638 = vshll.u32 %v3530, 16
      %v3640 = vrot.slane %v3638, 5
      %v3641 = vsel %vm720, %v3636, %v3640
      %v3643 = vshrl.u32 %v3531, 16
      %v3645 = vrot.slane %v3643, 4
      %v3646 = vshll.u32 %v3531, 16
      %v3648 = vrot.slane %v3646, 5
      %v3649 = vor.u32 %v3645, %v3648
      %v3650 = vrot.slane %v3649, 4
      %v3652 = vshll.u32 %v3532, 16
      %v3654 = vrot.slane %v3652, 5
      %v3655 = vsel %vm720, %v3650, %v3654
      %v3656 = vshrl.u32 %v3532, 16
      %v3658 = vrot.slane %v3656, 4
      %v3659 = vor.u32 %v3658, %v3654
      %v3660 = vrot.slane %v3659, 4
      %v3662 = vshll.u32 %v3533, 16
      %v3664 = vrot.slane %v3662, 5
      %v3665 = vsel %vm720, %v3660, %v3664
      %v3667 = vshrl.u32 %v3534, 16
      %v3669 = vrot.slane %v3667, 4
      %v3670 = vshll.u32 %v3534, 16
      %v3672 = vrot.slane %v3670, 5
      %v3673 = vor.u32 %v3669, %v3672
      %v3674 = vrot.slane %v3673, 4
      %v3676 = vshll.u32 %v3535, 16
      %v3678 = vrot.slane %v3676, 5
      %v3679 = vsel %vm720, %v3674, %v3678
      %v3680 = vshrl.u32 %v3535, 16
      %v3682 = vrot.slane %v3680, 4
      %v3683 = vor.u32 %v3682, %v3678
      %v3684 = vrot.slane %v3683, 4
      %v3686 = vshll.u32 %v3536, 16
      %v3688 = vrot.slane %v3686, 5
      %v3689 = vsel %vm720, %v3684, %v3688
      %v3691 = vshrl.u32 %v3537, 16
      %v3693 = vrot.slane %v3691, 4
      %v3694 = vshll.u32 %v3537, 16
      %v3696 = vrot.slane %v3694, 5
      %v3697 = vor.u32 %v3693, %v3696
      %v3698 = vrot.slane %v3697, 4
      %v3700 = vshll.u32 %v3538, 16
      %v3702 = vrot.slane %v3700, 5
      %v3703 = vsel %vm720, %v3698, %v3702
      %v3704 = vshrl.u32 %v3538, 16
      %v3706 = vrot.slane %v3704, 4
      %v3707 = vor.u32 %v3706, %v3702
      %v3708 = vrot.slane %v3707, 4
      %v3710 = vshll.u32 %v3539, 16
      %v3712 = vrot.slane %v3710, 5
      %v3713 = vsel %vm720, %v3708, %v3712
      %v3715 = vshrl.u32 %v3540, 16
      %v3717 = vrot.slane %v3715, 4
      %v3718 = vshll.u32 %v3540, 16
      %v3720 = vrot.slane %v3718, 5
      %v3721 = vor.u32 %v3717, %v3720
      %v3722 = vrot.slane %v3721, 4
      %v3724 = vshll.u32 %v3541, 16
      %v3726 = vrot.slane %v3724, 5
      %v3727 = vsel %vm720, %v3722, %v3726
      %v3728 = vshrl.u32 %v3541, 16
      %v3730 = vrot.slane %v3728, 4
      %v3731 = vor.u32 %v3730, %v3726
      %v3732 = vrot.slane %v3731, 4
      %v3734 = vshll.u32 %v3542, 16
      %v3736 = vrot.slane %v3734, 5
      %v3737 = vsel %vm720, %v3732, %v3736
      %v3739 = vshrl.u32 %v3543, 16
      %v3741 = vrot.slane %v3739, 4
      %v3742 = vshll.u32 %v3543, 16
      %v3744 = vrot.slane %v3742, 5
      %v3745 = vor.u32 %v3741, %v3744
      %v3746 = vrot.slane %v3745, 4
      %v3748 = vshll.u32 %v3544, 16
      %v3750 = vrot.slane %v3748, 5
      %v3751 = vsel %vm720, %v3746, %v3750
      %v3752 = vshrl.u32 %v3544, 16
      %v3754 = vrot.slane %v3752, 4
      %v3755 = vor.u32 %v3754, %v3750
      %v3756 = vrot.slane %v3755, 4
      %v3758 = vshll.u32 %v3545, 16
      %v3760 = vrot.slane %v3758, 5
      %v3761 = vsel %vm720, %v3756, %v3760
      %v3763 = vshrl.u32 %v3546, 16
      %v3765 = vrot.slane %v3763, 4
      %v3766 = vshll.u32 %v3546, 16
      %v3768 = vrot.slane %v3766, 5
      %v3769 = vor.u32 %v3765, %v3768
      %v3770 = vrot.slane %v3769, 4
      %v3772 = vshll.u32 %v3547, 16
      %v3774 = vrot.slane %v3772, 5
      %v3775 = vsel %vm720, %v3770, %v3774
      %v3776 = vshrl.u32 %v3547, 16
      %v3778 = vrot.slane %v3776, 4
      %v3779 = vor.u32 %v3778, %v3774
      %v3780 = vrot.slane %v3779, 4
      %v3782 = vshll.u32 %v3548, 16
      %v3784 = vrot.slane %v3782, 5
      %v3785 = vsel %vm720, %v3780, %v3784
      %v3787 = vshrl.u32 %v3549, 16
      %v3789 = vrot.slane %v3787, 4
      %v3790 = vshll.u32 %v3549, 16
      %v3792 = vrot.slane %v3790, 5
      %v3793 = vor.u32 %v3789, %v3792
      %v3794 = vrot.slane %v3793, 4
      %v3796 = vshll.u32 %v3550, 16
      %v3798 = vrot.slane %v3796, 5
      %v3799 = vsel %vm720, %v3794, %v3798
      %v3800 = vshrl.u32 %v3550, 16
      %v3802 = vrot.slane %v3800, 4
      %v3803 = vor.u32 %v3802, %v3798
      %v3804 = vrot.slane %v3803, 4
      %v3806 = vshll.u32 %v3551, 16
      %v3808 = vrot.slane %v3806, 5
      %v3809 = vsel %vm720, %v3804, %v3808
      %v3811 = vshrl.u32 %v3552, 16
      %v3813 = vrot.slane %v3811, 4
      %v3814 = vshll.u32 %v3552, 16
      %v3816 = vrot.slane %v3814, 5
      %v3817 = vor.u32 %v3813, %v3816
      %v3818 = vrot.slane %v3817, 4
      %v3820 = vshll.u32 %v3553, 16
      %v3822 = vrot.slane %v3820, 5
      %v3823 = vsel %vm720, %v3818, %v3822
      %v3824 = vshrl.u32 %v3553, 16
      %v3826 = vrot.slane %v3824, 4
      %v3827 = vor.u32 %v3826, %v3822
      %v3828 = vrot.slane %v3827, 4
      %v3830 = vshll.u32 %v3554, 16
      %v3832 = vrot.slane %v3830, 5
      %v3833 = vsel %vm720, %v3828, %v3832
      %v3835 = vshrl.u32 %v3555, 16
      %v3837 = vrot.slane %v3835, 4
      %v3838 = vshll.u32 %v3555, 16
      %v3840 = vrot.slane %v3838, 5
      %v3841 = vor.u32 %v3837, %v3840
      %v3842 = vrot.slane %v3841, 4
      %v3844 = vshll.u32 %v3556, 16
      %v3846 = vrot.slane %v3844, 5
      %v3847 = vsel %vm720, %v3842, %v3846
      %v3848 = vshrl.u32 %v3556, 16
      %v3850 = vrot.slane %v3848, 4
      %v3851 = vor.u32 %v3850, %v3846
      %v3852 = vrot.slane %v3851, 4
      %v3854 = vshll.u32 %v3557, 16
      %v3856 = vrot.slane %v3854, 5
      %v3857 = vsel %vm720, %v3852, %v3856
      %v3859 = vshrl.u32 %v3558, 16
      %v3861 = vrot.slane %v3859, 4
      %v3862 = vshll.u32 %v3558, 16
      %v3864 = vrot.slane %v3862, 5
      %v3865 = vor.u32 %v3861, %v3864
      %v3866 = vrot.slane %v3865, 4
      %v3868 = vshll.u32 %v3559, 16
      %v3870 = vrot.slane %v3868, 5
      %v3871 = vsel %vm720, %v3866, %v3870
      %v3872 = vshrl.u32 %v3559, 16
      %v3874 = vrot.slane %v3872, 4
      %v3875 = vor.u32 %v3874, %v3870
      %v3876 = vrot.slane %v3875, 4
      %v3878 = vshll.u32 %v3560, 16
      %v3880 = vrot.slane %v3878, 5
      %v3881 = vsel %vm720, %v3876, %v3880
      %v3883 = vshrl.u32 %v3561, 16
      %v3885 = vrot.slane %v3883, 4
      %v3886 = vshll.u32 %v3561, 16
      %v3888 = vrot.slane %v3886, 5
      %v3889 = vor.u32 %v3885, %v3888
      %v3890 = vrot.slane %v3889, 4
      %v3892 = vshll.u32 %v3562, 16
      %v3894 = vrot.slane %v3892, 5
      %v3895 = vsel %vm720, %v3890, %v3894
      %v3896 = vshrl.u32 %v3562, 16
      %v3898 = vrot.slane %v3896, 4
      %v3899 = vor.u32 %v3898, %v3894
      %v3900 = vrot.slane %v3899, 4
      %v3902 = vshll.u32 %v3563, 16
      %v3904 = vrot.slane %v3902, 5
      %v3905 = vsel %vm720, %v3900, %v3904
      %v3907 = vshrl.u32 %v3564, 16
      %v3909 = vrot.slane %v3907, 4
      %v3910 = vshll.u32 %v3564, 16
      %v3912 = vrot.slane %v3910, 5
      %v3913 = vor.u32 %v3909, %v3912
      %v3914 = vrot.slane %v3913, 4
      %v3916 = vshll.u32 %v3565, 16
      %v3918 = vrot.slane %v3916, 5
      %v3919 = vsel %vm720, %v3914, %v3918
      %v3920 = vshrl.u32 %v3565, 16
      %v3922 = vrot.slane %v3920, 4
      %v3923 = vor.u32 %v3922, %v3918
      %v3924 = vrot.slane %v3923, 4
      %v3926 = vshll.u32 %v3566, 16
      %v3928 = vrot.slane %v3926, 5
      %v3929 = vsel %vm720, %v3924, %v3928
      %v3931 = vshrl.u32 %v3567, 16
      %v3933 = vrot.slane %v3931, 4
      %v3934 = vshll.u32 %v3567, 16
      %v3936 = vrot.slane %v3934, 5
      %v3937 = vor.u32 %v3933, %v3936
      %v3938 = vrot.slane %v3937, 4
      %v3940 = vshll.u32 %v3568, 16
      %v3942 = vrot.slane %v3940, 5
      %v3943 = vsel %vm720, %v3938, %v3942
      %v3944 = vshrl.u32 %v3568, 16
      %v3946 = vrot.slane %v3944, 4
      %v3947 = vor.u32 %v3946, %v3942
      %v3948 = vrot.slane %v3947, 4
      %v3950 = vshll.u32 %v3569, 16
      %v3952 = vrot.slane %v3950, 5
      %v3953 = vsel %vm720, %v3948, %v3952
      %s3954 = scalar_lea.vmem %s273, 448
      %v3955 = vld [vmem:[%s3954] sm:$0xf]
      %v3956 = vld [vmem:[%s3954 + $0x4] sm:$0xf]
      %v3957 = vld [vmem:[%s3954 + $0x8] sm:$0xf]
      %v3958 = vld [vmem:[%s3954 + $0xc] sm:$0xf]
      %v3959 = vld [vmem:[%s3954 + $0x10] sm:$0xf]
      %v3960 = vld [vmem:[%s3954 + $0x14] sm:$0xf]
      %v3961 = vld [vmem:[%s3954 + $0x18] sm:$0xf]
      %v3962 = vld [vmem:[%s3954 + $0x1c] sm:$0xf]
      %v3963 = vld [vmem:[%s3954 + $0x20] sm:$0xf]
      %v3964 = vld [vmem:[%s3954 + $0x24] sm:$0xf]
      %v3965 = vld [vmem:[%s3954 + $0x28] sm:$0xf]
      %v3966 = vld [vmem:[%s3954 + $0x2c] sm:$0xf]
      %v3967 = vld [vmem:[%s3954 + $0x30] sm:$0xf]
      %v3968 = vld [vmem:[%s3954 + $0x34] sm:$0xf]
      %v3969 = vld [vmem:[%s3954 + $0x38] sm:$0xf]
      %v3970 = vld [vmem:[%s3954 + $0x3c] sm:$0xf]
      %v3971 = vunpack.c.l.b16 %v3583
      %v3972 = vunpack.c.l.b16 %v3593
      %v3973 = vunpack.c.l.b16 %v3607
      %v3974 = vunpack.c.l.b16 %v3617
      %v3975 = vunpack.c.l.b16 %v3631
      %v3976 = vunpack.c.l.b16 %v3641
      %v3977 = vunpack.c.l.b16 %v3655
      %v3978 = vunpack.c.l.b16 %v3665
      %v3979 = vunpack.c.l.b16 %v3679
      %v3980 = vunpack.c.l.b16 %v3689
      %v3981 = vunpack.c.l.b16 %v3703
      %v3982 = vunpack.c.l.b16 %v3713
      %v3983 = vunpack.c.l.b16 %v3727
      %v3984 = vunpack.c.l.b16 %v3737
      %v3985 = vunpack.c.l.b16 %v3751
      %v3986 = vunpack.c.l.b16 %v3761
      %v3987 = vunpack.c.l.b16 %v3775
      %v3988 = vunpack.c.l.b16 %v3785
      %v3989 = vunpack.c.l.b16 %v3799
      %v3990 = vunpack.c.l.b16 %v3809
      %v3991 = vunpack.c.l.b16 %v3823
      %v3992 = vunpack.c.l.b16 %v3833
      %v3993 = vunpack.c.l.b16 %v3847
      %v3994 = vunpack.c.l.b16 %v3857
      %v3995 = vunpack.c.l.b16 %v3871
      %v3996 = vunpack.c.l.b16 %v3881
      %v3997 = vunpack.c.l.b16 %v3895
      %v3998 = vunpack.c.l.b16 %v3905
      %v3999 = vunpack.c.l.b16 %v3919
      %v4000 = vunpack.c.l.b16 %v3929
      %v4001 = vunpack.c.l.b16 %v3943
      %v4002 = vunpack.c.l.b16 %v3953
      %v4003 = vpack.c.b16 %v3972, %v3971
      %v4004 = vpack.c.b16 %v3974, %v3973
      %v4005 = vpack.c.b16 %v3976, %v3975
      %v4006 = vpack.c.b16 %v3978, %v3977
      %v4007 = vpack.c.b16 %v3980, %v3979
      %v4008 = vpack.c.b16 %v3982, %v3981
      %v4009 = vpack.c.b16 %v3984, %v3983
      %v4010 = vpack.c.b16 %v3986, %v3985
      %v4011 = vpack.c.b16 %v3988, %v3987
      %v4012 = vpack.c.b16 %v3990, %v3989
      %v4013 = vpack.c.b16 %v3992, %v3991
      %v4014 = vpack.c.b16 %v3994, %v3993
      %v4015 = vpack.c.b16 %v3996, %v3995
      %v4016 = vpack.c.b16 %v3998, %v3997
      %v4017 = vpack.c.b16 %v4000, %v3999
      %v4018 = vpack.c.b16 %v4002, %v4001
      %v4051 = vunpack.c.l.b16 %v3955
      %v4052 = vunpack.c.l.b16 %v3956
      %v4053 = vunpack.c.l.b16 %v3957
      %v4054 = vunpack.c.l.b16 %v3958
      %v4055 = vunpack.c.l.b16 %v3959
      %v4056 = vunpack.c.l.b16 %v3960
      %v4057 = vunpack.c.l.b16 %v3961
      %v4058 = vunpack.c.l.b16 %v3962
      %v4059 = vunpack.c.l.b16 %v3963
      %v4060 = vunpack.c.l.b16 %v3964
      %v4061 = vunpack.c.l.b16 %v3965
      %v4062 = vunpack.c.l.b16 %v3966
      %v4063 = vunpack.c.l.b16 %v3967
      %v4064 = vunpack.c.l.b16 %v3968
      %v4065 = vunpack.c.l.b16 %v3969
      %v4066 = vunpack.c.l.b16 %v3970
      %v4067 = vpack.c.b16 %v4052, %v4051
      %v4068 = vpack.c.b16 %v4054, %v4053
      %v4069 = vpack.c.b16 %v4056, %v4055
      %v4070 = vpack.c.b16 %v4058, %v4057
      %v4071 = vpack.c.b16 %v4060, %v4059
      %v4072 = vpack.c.b16 %v4062, %v4061
      %v4073 = vpack.c.b16 %v4064, %v4063
      %v4074 = vpack.c.b16 %v4066, %v4065
      %4083 = vmatpush.bf16.msra.mxu0 %v4074
      %4084 = vmatpush.bf16.msra.mxu0 %v4073
      %4085 = vmatpush.bf16.msra.mxu0 %v4072
      %4086 = vmatpush.bf16.msra.mxu0 %v4071
      %4087 = vmatpush.bf16.msra.mxu0 %v4070
      %4088 = vmatpush.bf16.msra.mxu0 %v4069
      %4089 = vmatpush.bf16.msra.mxu0 %v4068
      %4090 = vmatpush.bf16.msra.mxu0 %v4067
      %4091 = vmatmul.bf16.gmra.mxu0 %v4003
      %v4092 = vpop.f32.mrf.mxu0
      %v4093 = vadd.f32 0.0, %v4092
      %v4094 = vpop.f32.mrf.mxu0
      %v4095 = vadd.f32 0.0, %v4094
      %4096 = vmatmul.bf16.gmra.mxu0 %v4004
      %v4097 = vpop.f32.mrf.mxu0
      %v4098 = vadd.f32 0.0, %v4097
      %v4099 = vpop.f32.mrf.mxu0
      %v4100 = vadd.f32 0.0, %v4099
      %4101 = vmatmul.bf16.gmra.mxu0 %v4005
      %v4102 = vpop.f32.mrf.mxu0
      %v4103 = vadd.f32 0.0, %v4102
      %v4104 = vpop.f32.mrf.mxu0
      %v4105 = vadd.f32 0.0, %v4104
      %4106 = vmatmul.bf16.gmra.mxu0 %v4006
      %v4107 = vpop.f32.mrf.mxu0
      %v4108 = vadd.f32 0.0, %v4107
      %v4109 = vpop.f32.mrf.mxu0
      %v4110 = vadd.f32 0.0, %v4109
      %4111 = vmatmul.bf16.gmra.mxu0 %v4007
      %v4112 = vpop.f32.mrf.mxu0
      %v4113 = vadd.f32 0.0, %v4112
      %v4114 = vpop.f32.mrf.mxu0
      %v4115 = vadd.f32 0.0, %v4114
      %4116 = vmatmul.bf16.gmra.mxu0 %v4008
      %v4117 = vpop.f32.mrf.mxu0
      %v4118 = vadd.f32 0.0, %v4117
      %v4119 = vpop.f32.mrf.mxu0
      %v4120 = vadd.f32 0.0, %v4119
      %4121 = vmatmul.bf16.gmra.mxu0 %v4009
      %v4122 = vpop.f32.mrf.mxu0
      %v4123 = vadd.f32 0.0, %v4122
      %v4124 = vpop.f32.mrf.mxu0
      %v4125 = vadd.f32 0.0, %v4124
      %4126 = vmatmul.bf16.gmra.mxu0 %v4010
      %v4127 = vpop.f32.mrf.mxu0
      %v4128 = vadd.f32 0.0, %v4127
      %v4129 = vpop.f32.mrf.mxu0
      %v4130 = vadd.f32 0.0, %v4129
      %4131 = vmatmul.bf16.gmra.mxu0 %v4011
      %v4132 = vpop.f32.mrf.mxu0
      %v4133 = vadd.f32 0.0, %v4132
      %v4134 = vpop.f32.mrf.mxu0
      %v4135 = vadd.f32 0.0, %v4134
      %4136 = vmatmul.bf16.gmra.mxu0 %v4012
      %v4137 = vpop.f32.mrf.mxu0
      %v4138 = vadd.f32 0.0, %v4137
      %v4139 = vpop.f32.mrf.mxu0
      %v4140 = vadd.f32 0.0, %v4139
      %4141 = vmatmul.bf16.gmra.mxu0 %v4013
      %v4142 = vpop.f32.mrf.mxu0
      %v4143 = vadd.f32 0.0, %v4142
      %v4144 = vpop.f32.mrf.mxu0
      %v4145 = vadd.f32 0.0, %v4144
      %4146 = vmatmul.bf16.gmra.mxu0 %v4014
      %v4147 = vpop.f32.mrf.mxu0
      %v4148 = vadd.f32 0.0, %v4147
      %v4149 = vpop.f32.mrf.mxu0
      %v4150 = vadd.f32 0.0, %v4149
      %4151 = vmatmul.bf16.gmra.mxu0 %v4015
      %v4152 = vpop.f32.mrf.mxu0
      %v4153 = vadd.f32 0.0, %v4152
      %v4154 = vpop.f32.mrf.mxu0
      %v4155 = vadd.f32 0.0, %v4154
      %4156 = vmatmul.bf16.gmra.mxu0 %v4016
      %v4157 = vpop.f32.mrf.mxu0
      %v4158 = vadd.f32 0.0, %v4157
      %v4159 = vpop.f32.mrf.mxu0
      %v4160 = vadd.f32 0.0, %v4159
      %4161 = vmatmul.bf16.gmra.mxu0 %v4017
      %v4162 = vpop.f32.mrf.mxu0
      %v4163 = vadd.f32 0.0, %v4162
      %v4164 = vpop.f32.mrf.mxu0
      %v4165 = vadd.f32 0.0, %v4164
      %4166 = vmatmul.bf16.gmra.mxu0 %v4018
      %v4167 = vpop.f32.mrf.mxu0
      %v4168 = vadd.f32 0.0, %v4167
      %v4169 = vpop.f32.mrf.mxu0
      %v4170 = vadd.f32 0.0, %v4169
      %4171 = vdwg.mxu0
      %v4172 = vadd.f32 %v3490, %v4093
      %v4173 = vadd.f32 %v3491, %v4095
      %v4174 = vadd.f32 %v3492, %v4098
      %v4175 = vadd.f32 %v3493, %v4100
      %v4176 = vadd.f32 %v3494, %v4103
      %v4177 = vadd.f32 %v3495, %v4105
      %v4178 = vadd.f32 %v3496, %v4108
      %v4179 = vadd.f32 %v3497, %v4110
      %v4180 = vadd.f32 %v3498, %v4113
      %v4181 = vadd.f32 %v3499, %v4115
      %v4182 = vadd.f32 %v3500, %v4118
      %v4183 = vadd.f32 %v3501, %v4120
      %v4184 = vadd.f32 %v3502, %v4123
      %v4185 = vadd.f32 %v3503, %v4125
      %v4186 = vadd.f32 %v3504, %v4128
      %v4187 = vadd.f32 %v3505, %v4130
      %v4188 = vadd.f32 %v3506, %v4133
      %v4189 = vadd.f32 %v3507, %v4135
      %v4190 = vadd.f32 %v3508, %v4138
      %v4191 = vadd.f32 %v3509, %v4140
      %v4192 = vadd.f32 %v3510, %v4143
      %v4193 = vadd.f32 %v3511, %v4145
      %v4194 = vadd.f32 %v3512, %v4148
      %v4195 = vadd.f32 %v3513, %v4150
      %v4196 = vadd.f32 %v3514, %v4153
      %v4197 = vadd.f32 %v3515, %v4155
      %v4198 = vadd.f32 %v3516, %v4158
      %v4199 = vadd.f32 %v3517, %v4160
      %v4200 = vadd.f32 %v3518, %v4163
      %v4201 = vadd.f32 %v3519, %v4165
      %v4202 = vadd.f32 %v3520, %v4168
      %v4203 = vadd.f32 %v3521, %v4170
      %v4204 = vld [vmem:[%s3207] sm:$0xe]
      %v4205 = vld [vmem:[%s3207 + $0xc] sm:$0xe]
      %v4206 = vld [vmem:[%s3207 + $0x18] sm:$0xe]
      %v4207 = vld [vmem:[%s3207 + $0x24] sm:$0xe]
      %v4208 = vld [vmem:[%s3207 + $0x30] sm:$0xe]
      %v4209 = vld [vmem:[%s3207 + $0x3c] sm:$0xe]
      %v4210 = vld [vmem:[%s3207 + $0x48] sm:$0xe]
      %v4211 = vld [vmem:[%s3207 + $0x54] sm:$0xe]
      %v4212 = vld [vmem:[%s3207 + $0x60] sm:$0xe]
      %v4213 = vld [vmem:[%s3207 + $0x6c] sm:$0xe]
      %v4214 = vld [vmem:[%s3207 + $0x78] sm:$0xe]
      %v4215 = vld [vmem:[%s3207 + $0x84] sm:$0xe]
      %v4216 = vld [vmem:[%s3207 + $0x90] sm:$0xe]
      %v4217 = vld [vmem:[%s3207 + $0x9c] sm:$0xe]
      %v4218 = vld [vmem:[%s3207 + $0xa8] sm:$0xe]
      %v4219 = vld [vmem:[%s3207 + $0xb4] sm:$0xe]
      %v4268 = vrot.slane %v4204, 5
      %v4269 = vrot.slane %v4268, 4
      %v4270 = vrot.slane %v3523, 5
      %v4271 = vsel %vm1421, %v4269, %v4270
      %v4272 = vrot.slane %v4270, 4
      %v4273 = vrot.slane %v3524, 5
      %v4274 = vsel %vm1421, %v4272, %v4273
      %v4275 = vrot.slane %v4205, 5
      %v4276 = vrot.slane %v4275, 4
      %v4277 = vrot.slane %v3526, 5
      %v4278 = vsel %vm1421, %v4276, %v4277
      %v4279 = vrot.slane %v4277, 4
      %v4280 = vrot.slane %v3527, 5
      %v4281 = vsel %vm1421, %v4279, %v4280
      %v4282 = vrot.slane %v4206, 5
      %v4283 = vrot.slane %v4282, 4
      %v4284 = vrot.slane %v3529, 5
      %v4285 = vsel %vm1421, %v4283, %v4284
      %v4286 = vrot.slane %v4284, 4
      %v4287 = vrot.slane %v3530, 5
      %v4288 = vsel %vm1421, %v4286, %v4287
      %v4289 = vrot.slane %v4207, 5
      %v4290 = vrot.slane %v4289, 4
      %v4291 = vrot.slane %v3532, 5
      %v4292 = vsel %vm1421, %v4290, %v4291
      %v4293 = vrot.slane %v4291, 4
      %v4294 = vrot.slane %v3533, 5
      %v4295 = vsel %vm1421, %v4293, %v4294
      %v4296 = vrot.slane %v4208, 5
      %v4297 = vrot.slane %v4296, 4
      %v4298 = vrot.slane %v3535, 5
      %v4299 = vsel %vm1421, %v4297, %v4298
      %v4300 = vrot.slane %v4298, 4
      %v4301 = vrot.slane %v3536, 5
      %v4302 = vsel %vm1421, %v4300, %v4301
      %v4303 = vrot.slane %v4209, 5
      %v4304 = vrot.slane %v4303, 4
      %v4305 = vrot.slane %v3538, 5
      %v4306 = vsel %vm1421, %v4304, %v4305
      %v4307 = vrot.slane %v4305, 4
      %v4308 = vrot.slane %v3539, 5
      %v4309 = vsel %vm1421, %v4307, %v4308
      %v4310 = vrot.slane %v4210, 5
      %v4311 = vrot.slane %v4310, 4
      %v4312 = vrot.slane %v3541, 5
      %v4313 = vsel %vm1421, %v4311, %v4312
      %v4314 = vrot.slane %v4312, 4
      %v4315 = vrot.slane %v3542, 5
      %v4316 = vsel %vm1421, %v4314, %v4315
      %v4317 = vrot.slane %v4211, 5
      %v4318 = vrot.slane %v4317, 4
      %v4319 = vrot.slane %v3544, 5
      %v4320 = vsel %vm1421, %v4318, %v4319
      %v4321 = vrot.slane %v4319, 4
      %v4322 = vrot.slane %v3545, 5
      %v4323 = vsel %vm1421, %v4321, %v4322
      %v4324 = vrot.slane %v4212, 5
      %v4325 = vrot.slane %v4324, 4
      %v4326 = vrot.slane %v3547, 5
      %v4327 = vsel %vm1421, %v4325, %v4326
      %v4328 = vrot.slane %v4326, 4
      %v4329 = vrot.slane %v3548, 5
      %v4330 = vsel %vm1421, %v4328, %v4329
      %v4331 = vrot.slane %v4213, 5
      %v4332 = vrot.slane %v4331, 4
      %v4333 = vrot.slane %v3550, 5
      %v4334 = vsel %vm1421, %v4332, %v4333
      %v4335 = vrot.slane %v4333, 4
      %v4336 = vrot.slane %v3551, 5
      %v4337 = vsel %vm1421, %v4335, %v4336
      %v4338 = vrot.slane %v4214, 5
      %v4339 = vrot.slane %v4338, 4
      %v4340 = vrot.slane %v3553, 5
      %v4341 = vsel %vm1421, %v4339, %v4340
      %v4342 = vrot.slane %v4340, 4
      %v4343 = vrot.slane %v3554, 5
      %v4344 = vsel %vm1421, %v4342, %v4343
      %v4345 = vrot.slane %v4215, 5
      %v4346 = vrot.slane %v4345, 4
      %v4347 = vrot.slane %v3556, 5
      %v4348 = vsel %vm1421, %v4346, %v4347
      %v4349 = vrot.slane %v4347, 4
      %v4350 = vrot.slane %v3557, 5
      %v4351 = vsel %vm1421, %v4349, %v4350
      %v4352 = vrot.slane %v4216, 5
      %v4353 = vrot.slane %v4352, 4
      %v4354 = vrot.slane %v3559, 5
      %v4355 = vsel %vm1421, %v4353, %v4354
      %v4356 = vrot.slane %v4354, 4
      %v4357 = vrot.slane %v3560, 5
      %v4358 = vsel %vm1421, %v4356, %v4357
      %v4359 = vrot.slane %v4217, 5
      %v4360 = vrot.slane %v4359, 4
      %v4361 = vrot.slane %v3562, 5
      %v4362 = vsel %vm1421, %v4360, %v4361
      %v4363 = vrot.slane %v4361, 4
      %v4364 = vrot.slane %v3563, 5
      %v4365 = vsel %vm1421, %v4363, %v4364
      %v4366 = vrot.slane %v4218, 5
      %v4367 = vrot.slane %v4366, 4
      %v4368 = vrot.slane %v3565, 5
      %v4369 = vsel %vm1421, %v4367, %v4368
      %v4370 = vrot.slane %v4368, 4
      %v4371 = vrot.slane %v3566, 5
      %v4372 = vsel %vm1421, %v4370, %v4371
      %v4373 = vrot.slane %v4219, 5
      %v4374 = vrot.slane %v4373, 4
      %v4375 = vrot.slane %v3568, 5
      %v4376 = vsel %vm1421, %v4374, %v4375
      %v4377 = vrot.slane %v4375, 4
      %v4378 = vrot.slane %v3569, 5
      %v4379 = vsel %vm1421, %v4377, %v4378
      %s4380 = scalar_lea.vmem %s273, 512
      %v4381 = vld [vmem:[%s4380] sm:$0xf]
      %v4382 = vld [vmem:[%s4380 + $0x4] sm:$0xf]
      %v4383 = vld [vmem:[%s4380 + $0x8] sm:$0xf]
      %v4384 = vld [vmem:[%s4380 + $0xc] sm:$0xf]
      %v4385 = vld [vmem:[%s4380 + $0x10] sm:$0xf]
      %v4386 = vld [vmem:[%s4380 + $0x14] sm:$0xf]
      %v4387 = vld [vmem:[%s4380 + $0x18] sm:$0xf]
      %v4388 = vld [vmem:[%s4380 + $0x1c] sm:$0xf]
      %v4389 = vld [vmem:[%s4380 + $0x20] sm:$0xf]
      %v4390 = vld [vmem:[%s4380 + $0x24] sm:$0xf]
      %v4391 = vld [vmem:[%s4380 + $0x28] sm:$0xf]
      %v4392 = vld [vmem:[%s4380 + $0x2c] sm:$0xf]
      %v4393 = vld [vmem:[%s4380 + $0x30] sm:$0xf]
      %v4394 = vld [vmem:[%s4380 + $0x34] sm:$0xf]
      %v4395 = vld [vmem:[%s4380 + $0x38] sm:$0xf]
      %v4396 = vld [vmem:[%s4380 + $0x3c] sm:$0xf]
      %v4397 = vunpack.c.l.b16 %v4271
      %v4398 = vunpack.c.l.b16 %v4274
      %v4399 = vunpack.c.l.b16 %v4278
      %v4400 = vunpack.c.l.b16 %v4281
      %v4401 = vunpack.c.l.b16 %v4285
      %v4402 = vunpack.c.l.b16 %v4288
      %v4403 = vunpack.c.l.b16 %v4292
      %v4404 = vunpack.c.l.b16 %v4295
      %v4405 = vunpack.c.l.b16 %v4299
      %v4406 = vunpack.c.l.b16 %v4302
      %v4407 = vunpack.c.l.b16 %v4306
      %v4408 = vunpack.c.l.b16 %v4309
      %v4409 = vunpack.c.l.b16 %v4313
      %v4410 = vunpack.c.l.b16 %v4316
      %v4411 = vunpack.c.l.b16 %v4320
      %v4412 = vunpack.c.l.b16 %v4323
      %v4413 = vunpack.c.l.b16 %v4327
      %v4414 = vunpack.c.l.b16 %v4330
      %v4415 = vunpack.c.l.b16 %v4334
      %v4416 = vunpack.c.l.b16 %v4337
      %v4417 = vunpack.c.l.b16 %v4341
      %v4418 = vunpack.c.l.b16 %v4344
      %v4419 = vunpack.c.l.b16 %v4348
      %v4420 = vunpack.c.l.b16 %v4351
      %v4421 = vunpack.c.l.b16 %v4355
      %v4422 = vunpack.c.l.b16 %v4358
      %v4423 = vunpack.c.l.b16 %v4362
      %v4424 = vunpack.c.l.b16 %v4365
      %v4425 = vunpack.c.l.b16 %v4369
      %v4426 = vunpack.c.l.b16 %v4372
      %v4427 = vunpack.c.l.b16 %v4376
      %v4428 = vunpack.c.l.b16 %v4379
      %v4429 = vpack.c.b16 %v4398, %v4397
      %v4430 = vpack.c.b16 %v4400, %v4399
      %v4431 = vpack.c.b16 %v4402, %v4401
      %v4432 = vpack.c.b16 %v4404, %v4403
      %v4433 = vpack.c.b16 %v4406, %v4405
      %v4434 = vpack.c.b16 %v4408, %v4407
      %v4435 = vpack.c.b16 %v4410, %v4409
      %v4436 = vpack.c.b16 %v4412, %v4411
      %v4437 = vpack.c.b16 %v4414, %v4413
      %v4438 = vpack.c.b16 %v4416, %v4415
      %v4439 = vpack.c.b16 %v4418, %v4417
      %v4440 = vpack.c.b16 %v4420, %v4419
      %v4441 = vpack.c.b16 %v4422, %v4421
      %v4442 = vpack.c.b16 %v4424, %v4423
      %v4443 = vpack.c.b16 %v4426, %v4425
      %v4444 = vpack.c.b16 %v4428, %v4427
      %v4477 = vunpack.c.l.b16 %v4381
      %v4478 = vunpack.c.l.b16 %v4382
      %v4479 = vunpack.c.l.b16 %v4383
      %v4480 = vunpack.c.l.b16 %v4384
      %v4481 = vunpack.c.l.b16 %v4385
      %v4482 = vunpack.c.l.b16 %v4386
      %v4483 = vunpack.c.l.b16 %v4387
      %v4484 = vunpack.c.l.b16 %v4388
      %v4485 = vunpack.c.l.b16 %v4389
      %v4486 = vunpack.c.l.b16 %v4390
      %v4487 = vunpack.c.l.b16 %v4391
      %v4488 = vunpack.c.l.b16 %v4392
      %v4489 = vunpack.c.l.b16 %v4393
      %v4490 = vunpack.c.l.b16 %v4394
      %v4491 = vunpack.c.l.b16 %v4395
      %v4492 = vunpack.c.l.b16 %v4396
      %v4493 = vpack.c.b16 %v4478, %v4477
      %v4494 = vpack.c.b16 %v4480, %v4479
      %v4495 = vpack.c.b16 %v4482, %v4481
      %v4496 = vpack.c.b16 %v4484, %v4483
      %v4497 = vpack.c.b16 %v4486, %v4485
      %v4498 = vpack.c.b16 %v4488, %v4487
      %v4499 = vpack.c.b16 %v4490, %v4489
      %v4500 = vpack.c.b16 %v4492, %v4491
      %4509 = vmatpush.bf16.msra.mxu0 %v4500
      %4510 = vmatpush.bf16.msra.mxu0 %v4499
      %4511 = vmatpush.bf16.msra.mxu0 %v4498
      %4512 = vmatpush.bf16.msra.mxu0 %v4497
      %4513 = vmatpush.bf16.msra.mxu0 %v4496
      %4514 = vmatpush.bf16.msra.mxu0 %v4495
      %4515 = vmatpush.bf16.msra.mxu0 %v4494
      %4516 = vmatpush.bf16.msra.mxu0 %v4493
      %4517 = vmatmul.bf16.gmra.mxu0 %v4429
      %v4518 = vpop.f32.mrf.mxu0
      %v4519 = vadd.f32 0.0, %v4518
      %v4520 = vpop.f32.mrf.mxu0
      %v4521 = vadd.f32 0.0, %v4520
      %4522 = vmatmul.bf16.gmra.mxu0 %v4430
      %v4523 = vpop.f32.mrf.mxu0
      %v4524 = vadd.f32 0.0, %v4523
      %v4525 = vpop.f32.mrf.mxu0
      %v4526 = vadd.f32 0.0, %v4525
      %4527 = vmatmul.bf16.gmra.mxu0 %v4431
      %v4528 = vpop.f32.mrf.mxu0
      %v4529 = vadd.f32 0.0, %v4528
      %v4530 = vpop.f32.mrf.mxu0
      %v4531 = vadd.f32 0.0, %v4530
      %4532 = vmatmul.bf16.gmra.mxu0 %v4432
      %v4533 = vpop.f32.mrf.mxu0
      %v4534 = vadd.f32 0.0, %v4533
      %v4535 = vpop.f32.mrf.mxu0
      %v4536 = vadd.f32 0.0, %v4535
      %4537 = vmatmul.bf16.gmra.mxu0 %v4433
      %v4538 = vpop.f32.mrf.mxu0
      %v4539 = vadd.f32 0.0, %v4538
      %v4540 = vpop.f32.mrf.mxu0
      %v4541 = vadd.f32 0.0, %v4540
      %4542 = vmatmul.bf16.gmra.mxu0 %v4434
      %v4543 = vpop.f32.mrf.mxu0
      %v4544 = vadd.f32 0.0, %v4543
      %v4545 = vpop.f32.mrf.mxu0
      %v4546 = vadd.f32 0.0, %v4545
      %4547 = vmatmul.bf16.gmra.mxu0 %v4435
      %v4548 = vpop.f32.mrf.mxu0
      %v4549 = vadd.f32 0.0, %v4548
      %v4550 = vpop.f32.mrf.mxu0
      %v4551 = vadd.f32 0.0, %v4550
      %4552 = vmatmul.bf16.gmra.mxu0 %v4436
      %v4553 = vpop.f32.mrf.mxu0
      %v4554 = vadd.f32 0.0, %v4553
      %v4555 = vpop.f32.mrf.mxu0
      %v4556 = vadd.f32 0.0, %v4555
      %4557 = vmatmul.bf16.gmra.mxu0 %v4437
      %v4558 = vpop.f32.mrf.mxu0
      %v4559 = vadd.f32 0.0, %v4558
      %v4560 = vpop.f32.mrf.mxu0
      %v4561 = vadd.f32 0.0, %v4560
      %4562 = vmatmul.bf16.gmra.mxu0 %v4438
      %v4563 = vpop.f32.mrf.mxu0
      %v4564 = vadd.f32 0.0, %v4563
      %v4565 = vpop.f32.mrf.mxu0
      %v4566 = vadd.f32 0.0, %v4565
      %4567 = vmatmul.bf16.gmra.mxu0 %v4439
      %v4568 = vpop.f32.mrf.mxu0
      %v4569 = vadd.f32 0.0, %v4568
      %v4570 = vpop.f32.mrf.mxu0
      %v4571 = vadd.f32 0.0, %v4570
      %4572 = vmatmul.bf16.gmra.mxu0 %v4440
      %v4573 = vpop.f32.mrf.mxu0
      %v4574 = vadd.f32 0.0, %v4573
      %v4575 = vpop.f32.mrf.mxu0
      %v4576 = vadd.f32 0.0, %v4575
      %4577 = vmatmul.bf16.gmra.mxu0 %v4441
      %v4578 = vpop.f32.mrf.mxu0
      %v4579 = vadd.f32 0.0, %v4578
      %v4580 = vpop.f32.mrf.mxu0
      %v4581 = vadd.f32 0.0, %v4580
      %4582 = vmatmul.bf16.gmra.mxu0 %v4442
      %v4583 = vpop.f32.mrf.mxu0
      %v4584 = vadd.f32 0.0, %v4583
      %v4585 = vpop.f32.mrf.mxu0
      %v4586 = vadd.f32 0.0, %v4585
      %4587 = vmatmul.bf16.gmra.mxu0 %v4443
      %v4588 = vpop.f32.mrf.mxu0
      %v4589 = vadd.f32 0.0, %v4588
      %v4590 = vpop.f32.mrf.mxu0
      %v4591 = vadd.f32 0.0, %v4590
      %4592 = vmatmul.bf16.gmra.mxu0 %v4444
      %v4593 = vpop.f32.mrf.mxu0
      %v4594 = vadd.f32 0.0, %v4593
      %v4595 = vpop.f32.mrf.mxu0
      %v4596 = vadd.f32 0.0, %v4595
      %4597 = vdwg.mxu0
      %v4598 = vadd.f32 %v4172, %v4519
      %v4599 = vadd.f32 %v4173, %v4521
      %v4600 = vadd.f32 %v4174, %v4524
      %v4601 = vadd.f32 %v4175, %v4526
      %v4602 = vadd.f32 %v4176, %v4529
      %v4603 = vadd.f32 %v4177, %v4531
      %v4604 = vadd.f32 %v4178, %v4534
      %v4605 = vadd.f32 %v4179, %v4536
      %v4606 = vadd.f32 %v4180, %v4539
      %v4607 = vadd.f32 %v4181, %v4541
      %v4608 = vadd.f32 %v4182, %v4544
      %v4609 = vadd.f32 %v4183, %v4546
      %v4610 = vadd.f32 %v4184, %v4549
      %v4611 = vadd.f32 %v4185, %v4551
      %v4612 = vadd.f32 %v4186, %v4554
      %v4613 = vadd.f32 %v4187, %v4556
      %v4614 = vadd.f32 %v4188, %v4559
      %v4615 = vadd.f32 %v4189, %v4561
      %v4616 = vadd.f32 %v4190, %v4564
      %v4617 = vadd.f32 %v4191, %v4566
      %v4618 = vadd.f32 %v4192, %v4569
      %v4619 = vadd.f32 %v4193, %v4571
      %v4620 = vadd.f32 %v4194, %v4574
      %v4621 = vadd.f32 %v4195, %v4576
      %v4622 = vadd.f32 %v4196, %v4579
      %v4623 = vadd.f32 %v4197, %v4581
      %v4624 = vadd.f32 %v4198, %v4584
      %v4625 = vadd.f32 %v4199, %v4586
      %v4626 = vadd.f32 %v4200, %v4589
      %v4627 = vadd.f32 %v4201, %v4591
      %v4628 = vadd.f32 %v4202, %v4594
      %v4629 = vadd.f32 %v4203, %v4596
      %4630 = vst [vmem:[#allocation2] sm:$0xff] %v4598
      %4631 = vst [vmem:[#allocation2 + $0x8] sm:$0xff] %v4599
      %4632 = vst [vmem:[#allocation2 + $0x10] sm:$0xff] %v4600
      %4633 = vst [vmem:[#allocation2 + $0x18] sm:$0xff] %v4601
      %4634 = vst [vmem:[#allocation2 + $0x20] sm:$0xff] %v4602
      %4635 = vst [vmem:[#allocation2 + $0x28] sm:$0xff] %v4603
      %4636 = vst [vmem:[#allocation2 + $0x30] sm:$0xff] %v4604
      %4637 = vst [vmem:[#allocation2 + $0x38] sm:$0xff] %v4605
      %4638 = vst [vmem:[#allocation2 + $0x40] sm:$0xff] %v4606
      %4639 = vst [vmem:[#allocation2 + $0x48] sm:$0xff] %v4607
      %4640 = vst [vmem:[#allocation2 + $0x50] sm:$0xff] %v4608
      %4641 = vst [vmem:[#allocation2 + $0x58] sm:$0xff] %v4609
      %4642 = vst [vmem:[#allocation2 + $0x60] sm:$0xff] %v4610
      %4643 = vst [vmem:[#allocation2 + $0x68] sm:$0xff] %v4611
      %4644 = vst [vmem:[#allocation2 + $0x70] sm:$0xff] %v4612
      %4645 = vst [vmem:[#allocation2 + $0x78] sm:$0xff] %v4613
      %4646 = vst [vmem:[#allocation2 + $0x80] sm:$0xff] %v4614
      %4647 = vst [vmem:[#allocation2 + $0x88] sm:$0xff] %v4615
      %4648 = vst [vmem:[#allocation2 + $0x90] sm:$0xff] %v4616
      %4649 = vst [vmem:[#allocation2 + $0x98] sm:$0xff] %v4617
      %4650 = vst [vmem:[#allocation2 + $0xa0] sm:$0xff] %v4618
      %4651 = vst [vmem:[#allocation2 + $0xa8] sm:$0xff] %v4619
      %4652 = vst [vmem:[#allocation2 + $0xb0] sm:$0xff] %v4620
      %4653 = vst [vmem:[#allocation2 + $0xb8] sm:$0xff] %v4621
      %4654 = vst [vmem:[#allocation2 + $0xc0] sm:$0xff] %v4622
      %4655 = vst [vmem:[#allocation2 + $0xc8] sm:$0xff] %v4623
      %4656 = vst [vmem:[#allocation2 + $0xd0] sm:$0xff] %v4624
      %4657 = vst [vmem:[#allocation2 + $0xd8] sm:$0xff] %v4625
      %4658 = vst [vmem:[#allocation2 + $0xe0] sm:$0xff] %v4626
      %4659 = vst [vmem:[#allocation2 + $0xe8] sm:$0xff] %v4627
      %4660 = vst [vmem:[#allocation2 + $0xf0] sm:$0xff] %v4628
      %4661 = vst [vmem:[#allocation2 + $0xf8] sm:$0xff] %v4629
      // Predicated region
      $region41: #{basic_block_forward.3} parent=35 // pred_check
        %p4662 = pneg %p289
      $region42: #{basic_block_forward.3} parent=35 // pred_check_branch
        %4664 = sbr.rel (%p4662) target = $region44
      $region43: #{basic_block_forward.3} parent=35 // pred_region
        %v4665 = vld [vmem:[#allocation2] sm:$0xff]
        %v4666 = vld [vmem:[#allocation2 + $0x8] sm:$0xff]
        %v4667 = vld [vmem:[#allocation2 + $0x10] sm:$0xff]
        %v4668 = vld [vmem:[#allocation2 + $0x18] sm:$0xff]
        %v4669 = vld [vmem:[#allocation2 + $0x20] sm:$0xff]
        %v4670 = vld [vmem:[#allocation2 + $0x28] sm:$0xff]
        %v4671 = vld [vmem:[#allocation2 + $0x30] sm:$0xff]
        %v4672 = vld [vmem:[#allocation2 + $0x38] sm:$0xff]
        %v4673 = vld [vmem:[#allocation2 + $0x40] sm:$0xff]
        %v4674 = vld [vmem:[#allocation2 + $0x48] sm:$0xff]
        %v4675 = vld [vmem:[#allocation2 + $0x50] sm:$0xff]
        %v4676 = vld [vmem:[#allocation2 + $0x58] sm:$0xff]
        %v4677 = vld [vmem:[#allocation2 + $0x60] sm:$0xff]
        %v4678 = vld [vmem:[#allocation2 + $0x68] sm:$0xff]
        %v4679 = vld [vmem:[#allocation2 + $0x70] sm:$0xff]
        %v4680 = vld [vmem:[#allocation2 + $0x78] sm:$0xff]
        %v4681 = vld [vmem:[#allocation2 + $0x80] sm:$0xff]
        %v4682 = vld [vmem:[#allocation2 + $0x88] sm:$0xff]
        %v4683 = vld [vmem:[#allocation2 + $0x90] sm:$0xff]
        %v4684 = vld [vmem:[#allocation2 + $0x98] sm:$0xff]
        %v4685 = vld [vmem:[#allocation2 + $0xa0] sm:$0xff]
        %v4686 = vld [vmem:[#allocation2 + $0xa8] sm:$0xff]
        %v4687 = vld [vmem:[#allocation2 + $0xb0] sm:$0xff]
        %v4688 = vld [vmem:[#allocation2 + $0xb8] sm:$0xff]
        %v4689 = vld [vmem:[#allocation2 + $0xc0] sm:$0xff]
        %v4690 = vld [vmem:[#allocation2 + $0xc8] sm:$0xff]
        %v4691 = vld [vmem:[#allocation2 + $0xd0] sm:$0xff]
        %v4692 = vld [vmem:[#allocation2 + $0xd8] sm:$0xff]
        %v4693 = vld [vmem:[#allocation2 + $0xe0] sm:$0xff]
        %v4694 = vld [vmem:[#allocation2 + $0xe8] sm:$0xff]
        %v4695 = vld [vmem:[#allocation2 + $0xf0] sm:$0xff]
        %v4696 = vld [vmem:[#allocation2 + $0xf8] sm:$0xff]
        %v4697 = vld [vmem:[%s2] sm:$0x1]
        %v4699 = vperm.slane %v4697, 0
        %v4701 = vadd.f32 %v4665, %v4699
        %v4702 = vadd.f32 %v4666, %v4699
        %v4703 = vadd.f32 %v4667, %v4699
        %v4704 = vadd.f32 %v4668, %v4699
        %v4705 = vadd.f32 %v4669, %v4699
        %v4706 = vadd.f32 %v4670, %v4699
        %v4707 = vadd.f32 %v4671, %v4699
        %v4708 = vadd.f32 %v4672, %v4699
        %v4709 = vadd.f32 %v4673, %v4699
        %v4710 = vadd.f32 %v4674, %v4699
        %v4711 = vadd.f32 %v4675, %v4699
        %v4712 = vadd.f32 %v4676, %v4699
        %v4713 = vadd.f32 %v4677, %v4699
        %v4714 = vadd.f32 %v4678, %v4699
        %v4715 = vadd.f32 %v4679, %v4699
        %v4716 = vadd.f32 %v4680, %v4699
        %v4717 = vadd.f32 %v4681, %v4699
        %v4718 = vadd.f32 %v4682, %v4699
        %v4719 = vadd.f32 %v4683, %v4699
        %v4720 = vadd.f32 %v4684, %v4699
        %v4721 = vadd.f32 %v4685, %v4699
        %v4722 = vadd.f32 %v4686, %v4699
        %v4723 = vadd.f32 %v4687, %v4699
        %v4724 = vadd.f32 %v4688, %v4699
        %v4725 = vadd.f32 %v4689, %v4699
        %v4726 = vadd.f32 %v4690, %v4699
        %v4727 = vadd.f32 %v4691, %v4699
        %v4728 = vadd.f32 %v4692, %v4699
        %v4729 = vadd.f32 %v4693, %v4699
        %v4730 = vadd.f32 %v4694, %v4699
        %v4731 = vadd.f32 %v4695, %v4699
        %v4732 = vadd.f32 %v4696, %v4699
        %v4733 = vld [vmem:[%s280] sm:$0xff]
        %v4734 = vld [vmem:[%s280 + $0x8] sm:$0xff]
        %v4735 = vld [vmem:[%s280 + $0x10] sm:$0xff]
        %v4736 = vld [vmem:[%s280 + $0x18] sm:$0xff]
        %v4737 = vld [vmem:[%s280 + $0x20] sm:$0xff]
        %v4738 = vld [vmem:[%s280 + $0x28] sm:$0xff]
        %v4739 = vld [vmem:[%s280 + $0x30] sm:$0xff]
        %v4740 = vld [vmem:[%s280 + $0x38] sm:$0xff]
        %v4741 = vld [vmem:[%s280 + $0x40] sm:$0xff]
        %v4742 = vld [vmem:[%s280 + $0x48] sm:$0xff]
        %v4743 = vld [vmem:[%s280 + $0x50] sm:$0xff]
        %v4744 = vld [vmem:[%s280 + $0x58] sm:$0xff]
        %v4745 = vld [vmem:[%s280 + $0x60] sm:$0xff]
        %v4746 = vld [vmem:[%s280 + $0x68] sm:$0xff]
        %v4747 = vld [vmem:[%s280 + $0x70] sm:$0xff]
        %v4748 = vld [vmem:[%s280 + $0x78] sm:$0xff]
        %v4749 = vld [vmem:[%s280 + $0x80] sm:$0xff]
        %v4750 = vld [vmem:[%s280 + $0x88] sm:$0xff]
        %v4751 = vld [vmem:[%s280 + $0x90] sm:$0xff]
        %v4752 = vld [vmem:[%s280 + $0x98] sm:$0xff]
        %v4753 = vld [vmem:[%s280 + $0xa0] sm:$0xff]
        %v4754 = vld [vmem:[%s280 + $0xa8] sm:$0xff]
        %v4755 = vld [vmem:[%s280 + $0xb0] sm:$0xff]
        %v4756 = vld [vmem:[%s280 + $0xb8] sm:$0xff]
        %v4757 = vld [vmem:[%s280 + $0xc0] sm:$0xff]
        %v4758 = vld [vmem:[%s280 + $0xc8] sm:$0xff]
        %v4759 = vld [vmem:[%s280 + $0xd0] sm:$0xff]
        %v4760 = vld [vmem:[%s280 + $0xd8] sm:$0xff]
        %v4761 = vld [vmem:[%s280 + $0xe0] sm:$0xff]
        %v4762 = vld [vmem:[%s280 + $0xe8] sm:$0xff]
        %v4763 = vld [vmem:[%s280 + $0xf0] sm:$0xff]
        %v4764 = vld [vmem:[%s280 + $0xf8] sm:$0xff]
        %v4765 = vadd.f32 %v4701, %v4733
        %v4766 = vadd.f32 %v4702, %v4734
        %v4767 = vadd.f32 %v4703, %v4735
        %v4768 = vadd.f32 %v4704, %v4736
        %v4769 = vadd.f32 %v4705, %v4737
        %v4770 = vadd.f32 %v4706, %v4738
        %v4771 = vadd.f32 %v4707, %v4739
        %v4772 = vadd.f32 %v4708, %v4740
        %v4773 = vadd.f32 %v4709, %v4741
        %v4774 = vadd.f32 %v4710, %v4742
        %v4775 = vadd.f32 %v4711, %v4743
        %v4776 = vadd.f32 %v4712, %v4744
        %v4777 = vadd.f32 %v4713, %v4745
        %v4778 = vadd.f32 %v4714, %v4746
        %v4779 = vadd.f32 %v4715, %v4747
        %v4780 = vadd.f32 %v4716, %v4748
        %v4781 = vadd.f32 %v4717, %v4749
        %v4782 = vadd.f32 %v4718, %v4750
        %v4783 = vadd.f32 %v4719, %v4751
        %v4784 = vadd.f32 %v4720, %v4752
        %v4785 = vadd.f32 %v4721, %v4753
        %v4786 = vadd.f32 %v4722, %v4754
        %v4787 = vadd.f32 %v4723, %v4755
        %v4788 = vadd.f32 %v4724, %v4756
        %v4789 = vadd.f32 %v4725, %v4757
        %v4790 = vadd.f32 %v4726, %v4758
        %v4791 = vadd.f32 %v4727, %v4759
        %v4792 = vadd.f32 %v4728, %v4760
        %v4793 = vadd.f32 %v4729, %v4761
        %v4794 = vadd.f32 %v4730, %v4762
        %v4795 = vadd.f32 %v4731, %v4763
        %v4796 = vadd.f32 %v4732, %v4764
        %v4797 = vmax.f32 %v4765, 0.0
        %v4798 = vmax.f32 %v4766, 0.0
        %v4799 = vmax.f32 %v4767, 0.0
        %v4800 = vmax.f32 %v4768, 0.0
        %v4801 = vmax.f32 %v4769, 0.0
        %v4802 = vmax.f32 %v4770, 0.0
        %v4803 = vmax.f32 %v4771, 0.0
        %v4804 = vmax.f32 %v4772, 0.0
        %v4805 = vmax.f32 %v4773, 0.0
        %v4806 = vmax.f32 %v4774, 0.0
        %v4807 = vmax.f32 %v4775, 0.0
        %v4808 = vmax.f32 %v4776, 0.0
        %v4809 = vmax.f32 %v4777, 0.0
        %v4810 = vmax.f32 %v4778, 0.0
        %v4811 = vmax.f32 %v4779, 0.0
        %v4812 = vmax.f32 %v4780, 0.0
        %v4813 = vmax.f32 %v4781, 0.0
        %v4814 = vmax.f32 %v4782, 0.0
        %v4815 = vmax.f32 %v4783, 0.0
        %v4816 = vmax.f32 %v4784, 0.0
        %v4817 = vmax.f32 %v4785, 0.0
        %v4818 = vmax.f32 %v4786, 0.0
        %v4819 = vmax.f32 %v4787, 0.0
        %v4820 = vmax.f32 %v4788, 0.0
        %v4821 = vmax.f32 %v4789, 0.0
        %v4822 = vmax.f32 %v4790, 0.0
        %v4823 = vmax.f32 %v4791, 0.0
        %v4824 = vmax.f32 %v4792, 0.0
        %v4825 = vmax.f32 %v4793, 0.0
        %v4826 = vmax.f32 %v4794, 0.0
        %v4827 = vmax.f32 %v4795, 0.0
        %v4828 = vmax.f32 %v4796, 0.0
        %4829 = vst [vmem:[%s287] sm:$0xff] %v4797
        %4830 = vst [vmem:[%s287 + $0x8] sm:$0xff] %v4798
        %4831 = vst [vmem:[%s287 + $0x10] sm:$0xff] %v4799
        %4832 = vst [vmem:[%s287 + $0x18] sm:$0xff] %v4800
        %4833 = vst [vmem:[%s287 + $0x20] sm:$0xff] %v4801
        %4834 = vst [vmem:[%s287 + $0x28] sm:$0xff] %v4802
        %4835 = vst [vmem:[%s287 + $0x30] sm:$0xff] %v4803
        %4836 = vst [vmem:[%s287 + $0x38] sm:$0xff] %v4804
        %4837 = vst [vmem:[%s287 + $0x40] sm:$0xff] %v4805
        %4838 = vst [vmem:[%s287 + $0x48] sm:$0xff] %v4806
        %4839 = vst [vmem:[%s287 + $0x50] sm:$0xff] %v4807
        %4840 = vst [vmem:[%s287 + $0x58] sm:$0xff] %v4808
        %4841 = vst [vmem:[%s287 + $0x60] sm:$0xff] %v4809
        %4842 = vst [vmem:[%s287 + $0x68] sm:$0xff] %v4810
        %4843 = vst [vmem:[%s287 + $0x70] sm:$0xff] %v4811
        %4844 = vst [vmem:[%s287 + $0x78] sm:$0xff] %v4812
        %4845 = vst [vmem:[%s287 + $0x80] sm:$0xff] %v4813
        %4846 = vst [vmem:[%s287 + $0x88] sm:$0xff] %v4814
        %4847 = vst [vmem:[%s287 + $0x90] sm:$0xff] %v4815
        %4848 = vst [vmem:[%s287 + $0x98] sm:$0xff] %v4816
        %4849 = vst [vmem:[%s287 + $0xa0] sm:$0xff] %v4817
        %4850 = vst [vmem:[%s287 + $0xa8] sm:$0xff] %v4818
        %4851 = vst [vmem:[%s287 + $0xb0] sm:$0xff] %v4819
        %4852 = vst [vmem:[%s287 + $0xb8] sm:$0xff] %v4820
        %4853 = vst [vmem:[%s287 + $0xc0] sm:$0xff] %v4821
        %4854 = vst [vmem:[%s287 + $0xc8] sm:$0xff] %v4822
        %4855 = vst [vmem:[%s287 + $0xd0] sm:$0xff] %v4823
        %4856 = vst [vmem:[%s287 + $0xd8] sm:$0xff] %v4824
        %4857 = vst [vmem:[%s287 + $0xe0] sm:$0xff] %v4825
        %4858 = vst [vmem:[%s287 + $0xe8] sm:$0xff] %v4826
        %4859 = vst [vmem:[%s287 + $0xf0] sm:$0xff] %v4827
        %4860 = vst [vmem:[%s287 + $0xf8] sm:$0xff] %v4828
      $region44: #{basic_block_forward.3} parent=35 // pred_fallthru
        _
      %s4861 = sadd.s32 %s20, %s21
      %p4862 = scmp.lt.s32.totalorder %s4861, 1
      %s4863 = scalar_select %p4862, %s4861, 1
      %s4864 = smul.addr %s4863, 32
      %s4865 = smul.addr %s4864, 8
      %s4866 = scalar_lea.vmem %s4, %s4865
      // Predicated region
      $region45: #{basic_block_forward.3} parent=35 // pred_check
        %p4867 = pneg %p159
      $region46: #{basic_block_forward.3} parent=35 // pred_check_branch
        %4869 = sbr.rel (%p4867) target = $region48
      $region47: #{basic_block_forward.3} parent=35 // pred_region
        %s4870 = sadd.s32 %s20, %s21
      $region48: #{basic_block_forward.3} parent=35 // pred_fallthru
        _
    $region36: #{basic_block_forward.3} parent=5 // pred_fallthru
      _
    %p4871 = scmp.le.s32.totalorder 2, %s10
    // Predicated region
    $region49: #{basic_block_forward.3} parent=5 // pred_check
      %p4872 = pneg %p4871
    $region50: #{basic_block_forward.3} parent=5 // pred_check_branch
      %4874 = sbr.rel (%p4872) target = $region52
    $region51: #{basic_block_forward.3} parent=5 // pred_region
      %s4875 = ssub.s32 %s10, 2
      // Predicated region
      $region53: #{basic_block_forward.3} parent=51 // pred_check
        %p4876 = pneg %p165
      $region54: #{basic_block_forward.3} parent=51 // pred_check_branch
        %4878 = sbr.rel (%p4876) target = $region56
      $region55: #{basic_block_forward.3} parent=51 // pred_region
        %s4879 = sadd.s32 %s23, %s24
        %p4880 = scmp.lt.s32.totalorder %s4879, 1
        %s4881 = scalar_select %p4880, %s4879, 1
        %s4882 = smul.addr %s4881, 32
        %s4883 = smul.addr %s4882, 8
        %s4884 = scalar_lea.vmem %s4, %s4883
      $region56: #{basic_block_forward.3} parent=51 // pred_fallthru
        _
    $region52: #{basic_block_forward.3} parent=5 // pred_fallthru
      _
  $region6: #{basic_block_forward.3} parent=0 // loop_footer
    %s14 = sadd.s32 1, %s10
  $region7: #{basic_block_forward.3} parent=0 // loop_footer_branch
    %9 = sbr.rel target = $region3
  $region8: #{basic_block_forward.3} parent=0 // loop_exit
    _

</llo_original>
